<compile_context>
chip_gen: v6e
topology: v6e:2x2x1
jax: 0.10.0
libtpu: 0.0.40
codegen_flags: <defaults>
</compile_context>

<pallas_src>
import jax
import jax.numpy as jnp
from jax.experimental import pallas as pl
from jax.experimental.pallas import tpu as pltpu

# Original per-scale output widths and their 128-padded versions.
H1, H1P = 400, 512     # MultiChev   (conv1): ChebConv(*, 400, K=1/2/3)
H2, H2P = 100, 128     # MultiChev_B (conv2): ChebConv(*, 100, K=1/2/3)
BN_EPS = 1e-5


# ----------------------------------------------------------------------------
# In-kernel helpers (operate on values, not refs).
# ----------------------------------------------------------------------------
def _mm(a, w):
    """MXU matmul with f32 accumulation; LHS cast to the weight dtype (bf16)."""
    return jnp.dot(a.astype(w.dtype), w, preferred_element_type=jnp.float32)


def _multichev(x, L, wa, wb, wc, bias, fp):
    """Fused 3-scale ChebConv block -> concatenated (padded) [N, 3*fp] output.

    wa = [W1_T0 | W2_T0 | W3_T0]  (D, 3*fp)
    wb = [W2_T1 | W3_T1]          (D, 2*fp)
    wc = [W3_T2]                  (D,   fp)
    """
    tx1 = jnp.dot(L, x, preferred_element_type=jnp.float32)              # L_hat @ x
    tx2 = 2.0 * jnp.dot(L, tx1, preferred_element_type=jnp.float32) - x  # Cheb T2
    a = _mm(x, wa) + bias
    b = _mm(tx1, wb)
    c = _mm(tx2, wc)
    # Column offsets fp, 2*fp are multiples of 128 -> lane-aligned slices/adds.
    return jnp.concatenate(
        [a[:, :fp],
         a[:, fp:2 * fp] + b[:, :fp],
         a[:, 2 * fp:] + b[:, fp:] + c],
        axis=1)


def _batchnorm(x, gamma, beta):
    """BatchNorm1d training-mode forward (biased batch variance)."""
    mean = jnp.mean(x, axis=0, keepdims=True)
    var = jnp.mean((x - mean) * (x - mean), axis=0, keepdims=True)
    return (x - mean) * jax.lax.rsqrt(var + BN_EPS) * gamma + beta


# ----------------------------------------------------------------------------
# The single fused kernel.
# ----------------------------------------------------------------------------
def mrf_gcn_kernel(x_ref, L_ref,
                   c1wa_ref, c1wb_ref, c1wc_ref, c1b_ref, bn1g_ref, bn1b_ref,
                   c2wa_ref, c2wb_ref, c2wc_ref, c2b_ref, bn2g_ref, bn2b_ref,
                   lw_ref, lb_ref, o_ref):
    x = x_ref[...]
    L = L_ref[...]

    # conv1 (MultiChev) -> bn1 -> relu   (activation stays VMEM/vreg resident)
    h = _multichev(x, L, c1wa_ref[...], c1wb_ref[...], c1wc_ref[...],
                   c1b_ref[...], H1P)
    h = jnp.maximum(_batchnorm(h, bn1g_ref[...], bn1b_ref[...]), 0.0)

    # conv2 (MultiChev_B) -> bn2
    h = _multichev(h, L, c2wa_ref[...], c2wb_ref[...], c2wc_ref[...],
                   c2b_ref[...], H2P)
    h = _batchnorm(h, bn2g_ref[...], bn2b_ref[...])

    # layer1 (Linear) + log_softmax(dim=1)
    y = _mm(h, lw_ref[...]) + lb_ref[...]
    m = jnp.max(y, axis=1, keepdims=True)
    lse = m + jnp.log(jnp.sum(jnp.exp(y - m), axis=1, keepdims=True))
    o_ref[...] = y - lse


def mrf_gcn_forward(x, L, packed):
    args = (x, L,
            packed["c1_wa"], packed["c1_wb"], packed["c1_wc"], packed["c1_b"],
            packed["bn1_g"], packed["bn1_b"],
            packed["c2_wa"], packed["c2_wb"], packed["c2_wc"], packed["c2_b"],
            packed["bn2_g"], packed["bn2_b"],
            packed["lin_w"], packed["lin_b"])
    n = x.shape[0]
    out_dim = packed["lin_w"].shape[-1]
    vmem = pl.BlockSpec(memory_space=pltpu.MemorySpace.VMEM)
    # No grid: single invocation, all operands (≈2.5 MB, mostly bf16 weights)
    # live whole-array in VMEM; no double-buffering, no pipelining needed.
    return pl.pallas_call(
        mrf_gcn_kernel,
        out_shape=jax.ShapeDtypeStruct((n, out_dim), jnp.float32),
        in_specs=[vmem] * len(args),
        out_specs=vmem,
    )(*args)


# ----------------------------------------------------------------------------
# One-time (outside the hot path) parameter packing: pad per-scale widths to
# 128 multiples, concatenate the three scales' weights, cast big weights bf16.
# ----------------------------------------------------------------------------
def pack_params(raw, weight_dtype=jnp.bfloat16):
    def pad_cols(w, fp):                       # (r, f) -> (r, fp), zero columns
        return jnp.pad(w, ((0, 0), (0, fp - w.shape[-1])))

    def pad_vec(v, fp):                        # (f,) -> (fp,), zero tail
        return jnp.pad(v, (0, fp - v.shape[0]))

    def scatter_rows(w, f, fp):                # (3f, c) -> (3fp, c), blockwise
        c = w.shape[-1]
        out = jnp.zeros((3 * fp, c), w.dtype)
        for i in range(3):
            out = out.at[i * fp:i * fp + f].set(w[i * f:(i + 1) * f])
        return out

    p = {}
    # ---- conv1 = MultiChev(d_in) -------------------------------------------
    p["c1_wa"] = jnp.concatenate(
        [pad_cols(raw["c1_w1"][0], H1P), pad_cols(raw["c1_w2"][0], H1P),
         pad_cols(raw["c1_w3"][0], H1P)], axis=1).astype(weight_dtype)
    p["c1_wb"] = jnp.concatenate(
        [pad_cols(raw["c1_w2"][1], H1P),
         pad_cols(raw["c1_w3"][1], H1P)], axis=1).astype(weight_dtype)
    p["c1_wc"] = pad_cols(raw["c1_w3"][2], H1P).astype(weight_dtype)
    p["c1_b"] = jnp.concatenate(
        [pad_vec(raw["c1_b1"], H1P), pad_vec(raw["c1_b2"], H1P),
         pad_vec(raw["c1_b3"], H1P)])[None, :]

    # ---- bn1 = BatchNorm(1200) ----------------------------------------------
    p["bn1_g"] = jnp.concatenate(
        [pad_vec(raw["bn1_g"][i * H1:(i + 1) * H1], H1P) for i in range(3)])[None, :]
    p["bn1_b"] = jnp.concatenate(
        [pad_vec(raw["bn1_b"][i * H1:(i + 1) * H1], H1P) for i in range(3)])[None, :]

    # ---- conv2 = MultiChev_B(1200): rows follow the padded conv1 layout -----
    def prep2(w):                              # (1200, 100) -> (1536, 128)
        return scatter_rows(pad_cols(w, H2P), H1, H1P)

    p["c2_wa"] = jnp.concatenate(
        [prep2(raw["c2_w1"][0]), prep2(raw["c2_w2"][0]),
         prep2(raw["c2_w3"][0])], axis=1).astype(weight_dtype)
    p["c2_wb"] = jnp.concatenate(
        [prep2(raw["c2_w2"][1]), prep2(raw["c2_w3"][1])], axis=1).astype(weight_dtype)
    p["c2_wc"] = prep2(raw["c2_w3"][2]).astype(weight_dtype)
    p["c2_b"] = jnp.concatenate(
        [pad_vec(raw["c2_b1"], H2P), pad_vec(raw["c2_b2"], H2P),
         pad_vec(raw["c2_b3"], H2P)])[None, :]

    # ---- bn2 = BatchNorm(300) -------------------------------------------------
    p["bn2_g"] = jnp.concatenate(
        [pad_vec(raw["bn2_g"][i * H2:(i + 1) * H2], H2P) for i in range(3)])[None, :]
    p["bn2_b"] = jnp.concatenate(
        [pad_vec(raw["bn2_b"][i * H2:(i + 1) * H2], H2P) for i in range(3)])[None, :]

    # ---- layer1 = Linear(300, out_dim): tiny, kept f32 -------------------------
    p["lin_w"] = scatter_rows(raw["lin_w"], H2, H2P)
    p["lin_b"] = raw["lin_b"][None, :]
    return p


# ----------------------------------------------------------------------------
# Plain-JAX glue: dense scaled Laplacian as ChebConv.__norm__ builds it
# (sym normalization, lambda_max=2.0, self-loop fill_value=-1).
# ----------------------------------------------------------------------------
def cheb_norm_dense(edge_index, edge_weight, num_nodes, lambda_max=2.0):
    A = jnp.zeros((num_nodes, num_nodes), jnp.float32)
    A = A.at[edge_index[0], edge_index[1]].add(edge_weight)
    deg = jnp.sum(A, axis=1)
    dinv = jnp.where(deg > 0, jax.lax.rsqrt(jnp.where(deg > 0, deg, 1.0)), 0.0)
    Anorm = dinv[:, None] * A * dinv[None, :]
    eye = jnp.eye(num_nodes, dtype=jnp.float32)
    L = eye - Anorm                       # identity diagonal kept for all nodes
    return (2.0 / lambda_max) * L - eye   # scaled L_hat


# ----------------------------------------------------------------------------
# Pure-JAX reference (original unpadded math, matched weight precision).
# ----------------------------------------------------------------------------
def reference_forward(x, L, raw, weight_dtype=jnp.bfloat16):
    def mm(a, w):
        return jnp.dot(a.astype(weight_dtype), w.astype(weight_dtype),
                       preferred_element_type=jnp.float32)

    def cheb(xx, ws, b):
        tx1 = jnp.dot(L, xx, preferred_element_type=jnp.float32)
        tx2 = 2.0 * jnp.dot(L, tx1, preferred_element_type=jnp.float32) - xx
        terms = [xx, tx1, tx2]
        out = b[None, :]
        for k in range(ws.shape[0]):
            out = out + mm(terms[k], ws[k])
        return out

    def bn(xx, g, b):
        mean = jnp.mean(xx, axis=0, keepdims=True)
        var = jnp.mean((xx - mean) ** 2, axis=0, keepdims=True)
        return (xx - mean) * jax.lax.rsqrt(var + BN_EPS) * g[None, :] + b[None, :]

    h = jnp.concatenate([cheb(x, raw["c1_w1"], raw["c1_b1"]),
                         cheb(x, raw["c1_w2"], raw["c1_b2"]),
                         cheb(x, raw["c1_w3"], raw["c1_b3"])], axis=1)
    h = jnp.maximum(bn(h, raw["bn1_g"], raw["bn1_b"]), 0.0)
    h = jnp.concatenate([cheb(h, raw["c2_w1"], raw["c2_b1"]),
                         cheb(h, raw["c2_w2"], raw["c2_b2"]),
                         cheb(h, raw["c2_w3"], raw["c2_b3"])], axis=1)
    h = bn(h, raw["bn2_g"], raw["bn2_b"])
    y = jnp.dot(h, raw["lin_w"], preferred_element_type=jnp.float32) + raw["lin_b"][None, :]
    return jax.nn.log_softmax(y, axis=1)


if __name__ == "__main__":
    N, D_IN, OUT = 8, 16, 10

    key = jax.random.PRNGKey(0)
    ks = jax.random.split(key, 24)

    # Node features (data.x).
    x = jax.random.normal(ks[0], (N, D_IN), jnp.float32)

    # Symmetric ring graph (data.edge_index / data.edge_attr).
    src = jnp.arange(N)
    dst = (src + 1) % N
    edge_index = jnp.stack([jnp.concatenate([src, dst]),
                            jnp.concatenate([dst, src])])
    w = jax.random.uniform(ks[1], (N,), jnp.float32, 0.5, 1.5)
    edge_weight = jnp.concatenate([w, w])
    L = cheb_norm_dense(edge_index, edge_weight, N)

    def init(k, shape, scale=0.1):
        return scale * jax.random.normal(k, shape, jnp.float32)

    raw = {
        # conv1 = MultiChev(D_IN): ChebConv(D_IN, 400, K=1/2/3)
        "c1_w1": init(ks[2], (1, D_IN, H1)), "c1_b1": init(ks[3], (H1,)),
        "c1_w2": init(ks[4], (2, D_IN, H1)), "c1_b2": init(ks[5], (H1,)),
        "c1_w3": init(ks[6], (3, D_IN, H1)), "c1_b3": init(ks[7], (H1,)),
        # bn1 = BatchNorm(1200)
        "bn1_g": 1.0 + 0.1 * jax.random.normal(ks[8], (3 * H1,), jnp.float32),
        "bn1_b": init(ks[9], (3 * H1,)),
        # conv2 = MultiChev_B(1200): ChebConv(1200, 100, K=1/2/3)
        "c2_w1": init(ks[10], (1, 3 * H1, H2)), "c2_b1": init(ks[11], (H2,)),
        "c2_w2": init(ks[12], (2, 3 * H1, H2)), "c2_b2": init(ks[13], (H2,)),
        "c2_w3": init(ks[14], (3, 3 * H1, H2)), "c2_b3": init(ks[15], (H2,)),
        # bn2 = BatchNorm(300)
        "bn2_g": 1.0 + 0.1 * jax.random.normal(ks[16], (3 * H2,), jnp.float32),
        "bn2_b": init(ks[17], (3 * H2,)),
        # layer1 = Linear(300, OUT)
        "lin_w": init(ks[18], (3 * H2, OUT)),
        "lin_b": init(ks[19], (OUT,)),
    }

    packed = pack_params(raw, weight_dtype=jnp.bfloat16)

    out = jax.block_until_ready(mrf_gcn_forward(x, L, packed))
    assert out.shape == (N, OUT)

    # Sanity-check the fused/padded/packed kernel against the unpadded formula.
    ref = jax.block_until_ready(reference_forward(x, L, raw))
    max_err = float(jnp.max(jnp.abs(out - ref)))
    assert max_err < 1e-2, f"max |pallas - ref| = {max_err}"

    print("KERNEL_OK")
</pallas_src>

<mosaic_0001>
module attributes {stable_mosaic.version = 11 : i64} {
  func.func @mrf_gcn_kernel(%arg0: memref<8x16xf32, #tpu.memory_space<vmem>>, %arg1: memref<8x8xf32, #tpu.memory_space<vmem>>, %arg2: memref<16x1536xbf16, #tpu.memory_space<vmem>>, %arg3: memref<16x1024xbf16, #tpu.memory_space<vmem>>, %arg4: memref<16x512xbf16, #tpu.memory_space<vmem>>, %arg5: memref<1x1536xf32, #tpu.memory_space<vmem>>, %arg6: memref<1x1536xf32, #tpu.memory_space<vmem>>, %arg7: memref<1x1536xf32, #tpu.memory_space<vmem>>, %arg8: memref<1536x384xbf16, #tpu.memory_space<vmem>>, %arg9: memref<1536x256xbf16, #tpu.memory_space<vmem>>, %arg10: memref<1536x128xbf16, #tpu.memory_space<vmem>>, %arg11: memref<1x384xf32, #tpu.memory_space<vmem>>, %arg12: memref<1x384xf32, #tpu.memory_space<vmem>>, %arg13: memref<1x384xf32, #tpu.memory_space<vmem>>, %arg14: memref<384x10xf32, #tpu.memory_space<vmem>>, %arg15: memref<1x10xf32, #tpu.memory_space<vmem>>, %arg16: memref<8x10xf32, #tpu.memory_space<vmem>>) attributes {dimension_semantics = [], scalar_prefetch = 0 : i64, scratch_operands = 0 : i64, tpu.core_type = #tpu.core_type<tc>} {
    %c0 = arith.constant 0 : index
    %c0_0 = arith.constant 0 : index
    %0 = vector.load %arg0[%c0, %c0_0] : memref<8x16xf32, #tpu.memory_space<vmem>>, vector<8x16xf32>
    %c0_1 = arith.constant 0 : index
    %c0_2 = arith.constant 0 : index
    %1 = vector.load %arg1[%c0_1, %c0_2] : memref<8x8xf32, #tpu.memory_space<vmem>>, vector<8x8xf32>
    %c0_3 = arith.constant 0 : index
    %c0_4 = arith.constant 0 : index
    %2 = vector.load %arg2[%c0_3, %c0_4] : memref<16x1536xbf16, #tpu.memory_space<vmem>>, vector<16x1536xbf16>
    %c0_5 = arith.constant 0 : index
    %c0_6 = arith.constant 0 : index
    %3 = vector.load %arg3[%c0_5, %c0_6] : memref<16x1024xbf16, #tpu.memory_space<vmem>>, vector<16x1024xbf16>
    %c0_7 = arith.constant 0 : index
    %c0_8 = arith.constant 0 : index
    %4 = vector.load %arg4[%c0_7, %c0_8] : memref<16x512xbf16, #tpu.memory_space<vmem>>, vector<16x512xbf16>
    %c0_9 = arith.constant 0 : index
    %c0_10 = arith.constant 0 : index
    %5 = vector.load %arg5[%c0_9, %c0_10] : memref<1x1536xf32, #tpu.memory_space<vmem>>, vector<1x1536xf32>
    %cst = arith.constant dense<0.000000e+00> : vector<8x16xf32>
    %6 = tpu.matmul %1, %0, %cst {dimension_numbers = #tpu.dot_dimension_numbers<[1], [0], [0], [1], [0, 0, 1, 1], [], []>} : vector<8x8xf32>, vector<8x16xf32>, vector<8x16xf32> -> vector<8x16xf32>
    %cst_11 = arith.constant dense<0.000000e+00> : vector<8x16xf32>
    %7 = tpu.matmul %1, %6, %cst_11 {dimension_numbers = #tpu.dot_dimension_numbers<[1], [0], [0], [1], [0, 0, 1, 1], [], []>} : vector<8x8xf32>, vector<8x16xf32>, vector<8x16xf32> -> vector<8x16xf32>
    %cst_12 = arith.constant 2.000000e+00 : f32
    %8 = vector.broadcast %cst_12 : f32 to vector<8x16xf32>
    %9 = arith.mulf %8, %7 : vector<8x16xf32>
    %10 = arith.subf %9, %0 : vector<8x16xf32>
    %11 = arith.truncf %0 : vector<8x16xf32> to vector<8x16xbf16>
    %cst_13 = arith.constant dense<0.000000e+00> : vector<8x1536xf32>
    %12 = tpu.matmul %11, %2, %cst_13 {dimension_numbers = #tpu.dot_dimension_numbers<[1], [0], [0], [1], [0, 0, 1, 1], [], []>} : vector<8x16xbf16>, vector<16x1536xbf16>, vector<8x1536xf32> -> vector<8x1536xf32>
    %13 = vector.broadcast %5 : vector<1x1536xf32> to vector<8x1536xf32>
    %14 = arith.addf %12, %13 : vector<8x1536xf32>
    %15 = arith.truncf %6 : vector<8x16xf32> to vector<8x16xbf16>
    %cst_14 = arith.constant dense<0.000000e+00> : vector<8x1024xf32>
    %16 = tpu.matmul %15, %3, %cst_14 {dimension_numbers = #tpu.dot_dimension_numbers<[1], [0], [0], [1], [0, 0, 1, 1], [], []>} : vector<8x16xbf16>, vector<16x1024xbf16>, vector<8x1024xf32> -> vector<8x1024xf32>
    %17 = arith.truncf %10 : vector<8x16xf32> to vector<8x16xbf16>
    %cst_15 = arith.constant dense<0.000000e+00> : vector<8x512xf32>
    %18 = tpu.matmul %17, %4, %cst_15 {dimension_numbers = #tpu.dot_dimension_numbers<[1], [0], [0], [1], [0, 0, 1, 1], [], []>} : vector<8x16xbf16>, vector<16x512xbf16>, vector<8x512xf32> -> vector<8x512xf32>
    %19 = vector.extract_strided_slice %14 {offsets = [0, 0], sizes = [8, 512], strides = [1, 1]} : vector<8x1536xf32> to vector<8x512xf32>
    %20 = vector.extract_strided_slice %14 {offsets = [0, 512], sizes = [8, 512], strides = [1, 1]} : vector<8x1536xf32> to vector<8x512xf32>
    %21 = vector.extract_strided_slice %16 {offsets = [0, 0], sizes = [8, 512], strides = [1, 1]} : vector<8x1024xf32> to vector<8x512xf32>
    %22 = arith.addf %20, %21 : vector<8x512xf32>
    %23 = vector.extract_strided_slice %14 {offsets = [0, 1024], sizes = [8, 512], strides = [1, 1]} : vector<8x1536xf32> to vector<8x512xf32>
    %24 = vector.extract_strided_slice %16 {offsets = [0, 512], sizes = [8, 512], strides = [1, 1]} : vector<8x1024xf32> to vector<8x512xf32>
    %25 = arith.addf %23, %24 : vector<8x512xf32>
    %26 = arith.addf %25, %18 : vector<8x512xf32>
    %27 = tpu.concatenate %19, %22, %26 in 1 : vector<8x512xf32>, vector<8x512xf32>, vector<8x512xf32> -> vector<8x1536xf32>
    %c0_16 = arith.constant 0 : index
    %c0_17 = arith.constant 0 : index
    %28 = vector.load %arg6[%c0_16, %c0_17] : memref<1x1536xf32, #tpu.memory_space<vmem>>, vector<1x1536xf32>
    %c0_18 = arith.constant 0 : index
    %c0_19 = arith.constant 0 : index
    %29 = vector.load %arg7[%c0_18, %c0_19] : memref<1x1536xf32, #tpu.memory_space<vmem>>, vector<1x1536xf32>
    %cst_20 = arith.constant dense<0.000000e+00> : vector<1536xf32>
    %30 = vector.multi_reduction <add>, %27, %cst_20 [0] : vector<8x1536xf32> to vector<1536xf32>
    %31 = vector.shape_cast %30 : vector<1536xf32> to vector<1x1536xf32>
    %cst_21 = arith.constant 8.000000e+00 : f32
    %32 = vector.broadcast %cst_21 : f32 to vector<1x1536xf32>
    %33 = arith.divf %31, %32 : vector<1x1536xf32>
    %34 = vector.broadcast %33 : vector<1x1536xf32> to vector<8x1536xf32>
    %35 = arith.subf %27, %34 : vector<8x1536xf32>
    %36 = vector.broadcast %33 : vector<1x1536xf32> to vector<8x1536xf32>
    %37 = arith.subf %27, %36 : vector<8x1536xf32>
    %38 = arith.mulf %35, %37 : vector<8x1536xf32>
    %cst_22 = arith.constant dense<0.000000e+00> : vector<1536xf32>
    %39 = vector.multi_reduction <add>, %38, %cst_22 [0] : vector<8x1536xf32> to vector<1536xf32>
    %40 = vector.shape_cast %39 : vector<1536xf32> to vector<1x1536xf32>
    %cst_23 = arith.constant 8.000000e+00 : f32
    %41 = vector.broadcast %cst_23 : f32 to vector<1x1536xf32>
    %42 = arith.divf %40, %41 : vector<1x1536xf32>
    %43 = vector.broadcast %33 : vector<1x1536xf32> to vector<8x1536xf32>
    %44 = arith.subf %27, %43 : vector<8x1536xf32>
    %cst_24 = arith.constant 9.99999974E-6 : f32
    %45 = vector.broadcast %cst_24 : f32 to vector<1x1536xf32>
    %46 = arith.addf %42, %45 : vector<1x1536xf32>
    %47 = math.rsqrt %46 : vector<1x1536xf32>
    %48 = vector.broadcast %47 : vector<1x1536xf32> to vector<8x1536xf32>
    %49 = arith.mulf %44, %48 : vector<8x1536xf32>
    %50 = vector.broadcast %28 : vector<1x1536xf32> to vector<8x1536xf32>
    %51 = arith.mulf %49, %50 : vector<8x1536xf32>
    %52 = vector.broadcast %29 : vector<1x1536xf32> to vector<8x1536xf32>
    %53 = arith.addf %51, %52 : vector<8x1536xf32>
    %cst_25 = arith.constant 0.000000e+00 : f32
    %54 = vector.broadcast %cst_25 : f32 to vector<8x1536xf32>
    %55 = arith.maximumf %53, %54 : vector<8x1536xf32>
    %c0_26 = arith.constant 0 : index
    %c0_27 = arith.constant 0 : index
    %56 = vector.load %arg8[%c0_26, %c0_27] : memref<1536x384xbf16, #tpu.memory_space<vmem>>, vector<1536x384xbf16>
    %c0_28 = arith.constant 0 : index
    %c0_29 = arith.constant 0 : index
    %57 = vector.load %arg9[%c0_28, %c0_29] : memref<1536x256xbf16, #tpu.memory_space<vmem>>, vector<1536x256xbf16>
    %c0_30 = arith.constant 0 : index
    %c0_31 = arith.constant 0 : index
    %58 = vector.load %arg10[%c0_30, %c0_31] : memref<1536x128xbf16, #tpu.memory_space<vmem>>, vector<1536x128xbf16>
    %c0_32 = arith.constant 0 : index
    %c0_33 = arith.constant 0 : index
    %59 = vector.load %arg11[%c0_32, %c0_33] : memref<1x384xf32, #tpu.memory_space<vmem>>, vector<1x384xf32>
    %cst_34 = arith.constant dense<0.000000e+00> : vector<8x1536xf32>
    %60 = tpu.matmul %1, %55, %cst_34 {dimension_numbers = #tpu.dot_dimension_numbers<[1], [0], [0], [1], [0, 0, 1, 1], [], []>} : vector<8x8xf32>, vector<8x1536xf32>, vector<8x1536xf32> -> vector<8x1536xf32>
    %cst_35 = arith.constant dense<0.000000e+00> : vector<8x1536xf32>
    %61 = tpu.matmul %1, %60, %cst_35 {dimension_numbers = #tpu.dot_dimension_numbers<[1], [0], [0], [1], [0, 0, 1, 1], [], []>} : vector<8x8xf32>, vector<8x1536xf32>, vector<8x1536xf32> -> vector<8x1536xf32>
    %cst_36 = arith.constant 2.000000e+00 : f32
    %62 = vector.broadcast %cst_36 : f32 to vector<8x1536xf32>
    %63 = arith.mulf %62, %61 : vector<8x1536xf32>
    %64 = arith.subf %63, %55 : vector<8x1536xf32>
    %65 = arith.truncf %55 : vector<8x1536xf32> to vector<8x1536xbf16>
    %cst_37 = arith.constant dense<0.000000e+00> : vector<8x384xf32>
    %66 = tpu.matmul %65, %56, %cst_37 {dimension_numbers = #tpu.dot_dimension_numbers<[1], [0], [0], [1], [0, 0, 1, 1], [], []>} : vector<8x1536xbf16>, vector<1536x384xbf16>, vector<8x384xf32> -> vector<8x384xf32>
    %67 = vector.broadcast %59 : vector<1x384xf32> to vector<8x384xf32>
    %68 = arith.addf %66, %67 : vector<8x384xf32>
    %69 = arith.truncf %60 : vector<8x1536xf32> to vector<8x1536xbf16>
    %cst_38 = arith.constant dense<0.000000e+00> : vector<8x256xf32>
    %70 = tpu.matmul %69, %57, %cst_38 {dimension_numbers = #tpu.dot_dimension_numbers<[1], [0], [0], [1], [0, 0, 1, 1], [], []>} : vector<8x1536xbf16>, vector<1536x256xbf16>, vector<8x256xf32> -> vector<8x256xf32>
    %71 = arith.truncf %64 : vector<8x1536xf32> to vector<8x1536xbf16>
    %cst_39 = arith.constant dense<0.000000e+00> : vector<8x128xf32>
    %72 = tpu.matmul %71, %58, %cst_39 {dimension_numbers = #tpu.dot_dimension_numbers<[1], [0], [0], [1], [0, 0, 1, 1], [], []>} : vector<8x1536xbf16>, vector<1536x128xbf16>, vector<8x128xf32> -> vector<8x128xf32>
    %73 = vector.extract_strided_slice %68 {offsets = [0, 0], sizes = [8, 128], strides = [1, 1]} : vector<8x384xf32> to vector<8x128xf32>
    %74 = vector.extract_strided_slice %68 {offsets = [0, 128], sizes = [8, 128], strides = [1, 1]} : vector<8x384xf32> to vector<8x128xf32>
    %75 = vector.extract_strided_slice %70 {offsets = [0, 0], sizes = [8, 128], strides = [1, 1]} : vector<8x256xf32> to vector<8x128xf32>
    %76 = arith.addf %74, %75 : vector<8x128xf32>
    %77 = vector.extract_strided_slice %68 {offsets = [0, 256], sizes = [8, 128], strides = [1, 1]} : vector<8x384xf32> to vector<8x128xf32>
    %78 = vector.extract_strided_slice %70 {offsets = [0, 128], sizes = [8, 128], strides = [1, 1]} : vector<8x256xf32> to vector<8x128xf32>
    %79 = arith.addf %77, %78 : vector<8x128xf32>
    %80 = arith.addf %79, %72 : vector<8x128xf32>
    %81 = tpu.concatenate %73, %76, %80 in 1 : vector<8x128xf32>, vector<8x128xf32>, vector<8x128xf32> -> vector<8x384xf32>
    %c0_40 = arith.constant 0 : index
    %c0_41 = arith.constant 0 : index
    %82 = vector.load %arg12[%c0_40, %c0_41] : memref<1x384xf32, #tpu.memory_space<vmem>>, vector<1x384xf32>
    %c0_42 = arith.constant 0 : index
    %c0_43 = arith.constant 0 : index
    %83 = vector.load %arg13[%c0_42, %c0_43] : memref<1x384xf32, #tpu.memory_space<vmem>>, vector<1x384xf32>
    %cst_44 = arith.constant dense<0.000000e+00> : vector<384xf32>
    %84 = vector.multi_reduction <add>, %81, %cst_44 [0] : vector<8x384xf32> to vector<384xf32>
    %85 = vector.shape_cast %84 : vector<384xf32> to vector<1x384xf32>
    %cst_45 = arith.constant 8.000000e+00 : f32
    %86 = vector.broadcast %cst_45 : f32 to vector<1x384xf32>
    %87 = arith.divf %85, %86 : vector<1x384xf32>
    %88 = vector.broadcast %87 : vector<1x384xf32> to vector<8x384xf32>
    %89 = arith.subf %81, %88 : vector<8x384xf32>
    %90 = vector.broadcast %87 : vector<1x384xf32> to vector<8x384xf32>
    %91 = arith.subf %81, %90 : vector<8x384xf32>
    %92 = arith.mulf %89, %91 : vector<8x384xf32>
    %cst_46 = arith.constant dense<0.000000e+00> : vector<384xf32>
    %93 = vector.multi_reduction <add>, %92, %cst_46 [0] : vector<8x384xf32> to vector<384xf32>
    %94 = vector.shape_cast %93 : vector<384xf32> to vector<1x384xf32>
    %cst_47 = arith.constant 8.000000e+00 : f32
    %95 = vector.broadcast %cst_47 : f32 to vector<1x384xf32>
    %96 = arith.divf %94, %95 : vector<1x384xf32>
    %97 = vector.broadcast %87 : vector<1x384xf32> to vector<8x384xf32>
    %98 = arith.subf %81, %97 : vector<8x384xf32>
    %cst_48 = arith.constant 9.99999974E-6 : f32
    %99 = vector.broadcast %cst_48 : f32 to vector<1x384xf32>
    %100 = arith.addf %96, %99 : vector<1x384xf32>
    %101 = math.rsqrt %100 : vector<1x384xf32>
    %102 = vector.broadcast %101 : vector<1x384xf32> to vector<8x384xf32>
    %103 = arith.mulf %98, %102 : vector<8x384xf32>
    %104 = vector.broadcast %82 : vector<1x384xf32> to vector<8x384xf32>
    %105 = arith.mulf %103, %104 : vector<8x384xf32>
    %106 = vector.broadcast %83 : vector<1x384xf32> to vector<8x384xf32>
    %107 = arith.addf %105, %106 : vector<8x384xf32>
    %c0_49 = arith.constant 0 : index
    %c0_50 = arith.constant 0 : index
    %108 = vector.load %arg14[%c0_49, %c0_50] : memref<384x10xf32, #tpu.memory_space<vmem>>, vector<384x10xf32>
    %cst_51 = arith.constant dense<0.000000e+00> : vector<8x10xf32>
    %109 = tpu.matmul %107, %108, %cst_51 {dimension_numbers = #tpu.dot_dimension_numbers<[1], [0], [0], [1], [0, 0, 1, 1], [], []>} : vector<8x384xf32>, vector<384x10xf32>, vector<8x10xf32> -> vector<8x10xf32>
    %c0_52 = arith.constant 0 : index
    %c0_53 = arith.constant 0 : index
    %110 = vector.load %arg15[%c0_52, %c0_53] : memref<1x10xf32, #tpu.memory_space<vmem>>, vector<1x10xf32>
    %111 = vector.broadcast %110 : vector<1x10xf32> to vector<8x10xf32>
    %112 = arith.addf %109, %111 : vector<8x10xf32>
    %cst_54 = arith.constant dense<0xFF800000> : vector<8xf32>
    %113 = vector.multi_reduction <maximumf>, %112, %cst_54 [1] : vector<8x10xf32> to vector<8xf32>
    %114 = vector.shape_cast %113 : vector<8xf32> to vector<8x1xf32>
    %115 = vector.broadcast %114 : vector<8x1xf32> to vector<8x10xf32>
    %116 = arith.subf %112, %115 : vector<8x10xf32>
    %117 = math.exp %116 : vector<8x10xf32>
    %cst_55 = arith.constant dense<0.000000e+00> : vector<8xf32>
    %118 = vector.multi_reduction <add>, %117, %cst_55 [1] : vector<8x10xf32> to vector<8xf32>
    %119 = vector.shape_cast %118 : vector<8xf32> to vector<8x1xf32>
    %120 = math.log %119 : vector<8x1xf32>
    %121 = arith.addf %114, %120 : vector<8x1xf32>
    %122 = vector.broadcast %121 : vector<8x1xf32> to vector<8x10xf32>
    %123 = arith.subf %112, %122 : vector<8x10xf32>
    %c0_56 = arith.constant 0 : index
    %c0_57 = arith.constant 0 : index
    %124 = vector.load %arg16[%c0_56, %c0_57] : memref<8x10xf32, #tpu.memory_space<vmem>>, vector<8x10xf32>
    tpu.vector_store %arg16[%c0_56, %c0_57], %123 {strides = array<i32>} : memref<8x10xf32, #tpu.memory_space<vmem>>, vector<8x10xf32>,
    return
  }
}

</mosaic_0001>

<llo_original>
// kernel: tpu_custom_call.1
$region0: #{tpu_custom_call.1}
  #allocation0 [shape = 'u32[]', space=smem, size = 0x4, offset = 0x4, fixed_abs, tag = 'smem constant byte address 0x4 - core index']
  #allocation1 [shape = 'u32[144,128]{1,0:T(1,128)}', space=vmem, size = 0x12000, scoped, tag = 'internal scratch']
  %s0 = inlined_call_operand.hbm [shape: f32[8,16], index: 0, kind: input, shape index: {}]
  %s1 = inlined_call_operand.hbm [shape: f32[8,8], index: 1, kind: input, shape index: {}]
  %s2 = inlined_call_operand.hbm [shape: bf16[16,1536], index: 2, kind: input, shape index: {}]
  %s3 = inlined_call_operand.hbm [shape: bf16[16,1024], index: 3, kind: input, shape index: {}]
  %s4 = inlined_call_operand.hbm [shape: bf16[16,512], index: 4, kind: input, shape index: {}]
  %s5 = inlined_call_operand.hbm [shape: f32[1,1536], index: 5, kind: input, shape index: {}]
  %s6 = inlined_call_operand.hbm [shape: f32[1,1536], index: 6, kind: input, shape index: {}]
  %s7 = inlined_call_operand.hbm [shape: f32[1,1536], index: 7, kind: input, shape index: {}]
  %s8 = inlined_call_operand.hbm [shape: bf16[1536,384], index: 8, kind: input, shape index: {}]
  %s9 = inlined_call_operand.hbm [shape: bf16[1536,256], index: 9, kind: input, shape index: {}]
  %s10 = inlined_call_operand.hbm [shape: bf16[1536,128], index: 10, kind: input, shape index: {}]
  %s11 = inlined_call_operand.hbm [shape: f32[1,384], index: 11, kind: input, shape index: {}]
  %s12 = inlined_call_operand.hbm [shape: f32[1,384], index: 12, kind: input, shape index: {}]
  %s13 = inlined_call_operand.hbm [shape: f32[1,384], index: 13, kind: input, shape index: {}]
  %s14 = inlined_call_operand.vmem [shape: f32[384,10], index: 14, kind: input, shape index: {}]
  %s15 = inlined_call_operand.hbm [shape: f32[1,10], index: 15, kind: input, shape index: {}]
  %s16 = inlined_call_operand.hbm [shape: f32[8,10], index: 16, kind: output, shape index: {}]
  %s17 = sld [smem:[#allocation0]]
  $region134: #{tpu_custom_call.1} parent=0
    _
  %s19 = ssub.s32 1, %s17
  %s20 = scalar_select 0, %s19, %s17
  $region1: #{tpu_custom_call.1} parent=0
    #allocation2 [shape = 'u8[4096]{0}', space=vmem, size = 0x1000, scoped, tag = 'input window, operand 0, single buffered']
    #allocation3 [shape = 's32[1]{0}', space=sflag, size = 0x4, scoped, tag = 'scoped memory for tpu_custom_call.1']
    #allocation4 [shape = 's32[1]{0}', space=sflag, size = 0x4, scoped, tag = 'scoped memory for tpu_custom_call.1']
    #allocation5 [shape = 'u8[4096]{0}', space=vmem, size = 0x1000, scoped, tag = 'input window, operand 1, single buffered']
    #allocation6 [shape = 's32[1]{0}', space=sflag, size = 0x4, scoped, tag = 'scoped memory for tpu_custom_call.1']
    #allocation7 [shape = 'u8[49152]{0}', space=vmem, size = 0xc000, scoped, tag = 'input window, operand 2, single buffered']
    #allocation8 [shape = 'u8[32768]{0}', space=vmem, size = 0x8000, scoped, tag = 'input window, operand 3, single buffered']
    #allocation9 [shape = 's32[1]{0}', space=sflag, size = 0x4, scoped, tag = 'scoped memory for tpu_custom_call.1']
    #allocation10 [shape = 'u8[16384]{0}', space=vmem, size = 0x4000, scoped, tag = 'input window, operand 4, single buffered']
    #allocation11 [shape = 'u8[6144]{0}', space=vmem, size = 0x1800, scoped, tag = 'input window, operand 5, single buffered']
    #allocation12 [shape = 's32[1]{0}', space=sflag, size = 0x4, scoped, tag = 'scoped memory for tpu_custom_call.1']
    #allocation13 [shape = 'u8[6144]{0}', space=vmem, size = 0x1800, scoped, tag = 'input window, operand 6, single buffered']
    #allocation14 [shape = 'u8[6144]{0}', space=vmem, size = 0x1800, scoped, tag = 'input window, operand 7, single buffered']
    #allocation15 [shape = 's32[1]{0}', space=sflag, size = 0x4, scoped, tag = 'scoped memory for tpu_custom_call.1']
    #allocation16 [shape = 'u8[1179648]{0}', space=vmem, size = 0x120000, scoped, tag = 'input window, operand 8, single buffered']
    #allocation17 [shape = 'u8[786432]{0}', space=vmem, size = 0xc0000, scoped, tag = 'input window, operand 9, single buffered']
    #allocation18 [shape = 's32[1]{0}', space=sflag, size = 0x4, scoped, tag = 'scoped memory for tpu_custom_call.1']
    #allocation19 [shape = 'u8[393216]{0}', space=vmem, size = 0x60000, scoped, tag = 'input window, operand 10, single buffered']
    #allocation20 [shape = 'u8[1536]{0}', space=vmem, size = 0x800, scoped, tag = 'input window, operand 11, single buffered']
    #allocation21 [shape = 's32[1]{0}', space=sflag, size = 0x4, scoped, tag = 'scoped memory for tpu_custom_call.1']
    #allocation22 [shape = 'u8[1536]{0}', space=vmem, size = 0x800, scoped, tag = 'input window, operand 12, single buffered']
    #allocation23 [shape = 'u8[1536]{0}', space=vmem, size = 0x800, scoped, tag = 'input window, operand 13, single buffered']
    #allocation24 [shape = 's32[1]{0}', space=sflag, size = 0x4, scoped, tag = 'scoped memory for tpu_custom_call.1']
    #allocation25 [shape = 'u8[512]{0}', space=vmem, size = 0x400, scoped, tag = 'input window, operand 15, single buffered']
    #allocation26 [shape = 'u8[4096]{0}', space=vmem, size = 0x1000, scoped, tag = 'output window, operand 0, single buffered']
    %21 = vsyncpa [#allocation3], 0
    %22 = vsyncpa [#allocation6], 0
    %23 = vsyncpa [#allocation9], 0
    %24 = vsyncpa [#allocation12], 0
    %25 = vsyncpa [#allocation15], 0
    %26 = vsyncpa [#allocation18], 0
    %27 = vsyncpa [#allocation21], 0
    %28 = vsyncpa [#allocation24], 0
    %29 = vsyncpa [#allocation4], 0
    // Predicated region
    $region2: #{tpu_custom_call.1} parent=1 // pred_check
      _
    $region3: #{tpu_custom_call.1} parent=1 // pred_check_branch
      %31 = sbr.rel (0) target = $region5
    $region4: #{tpu_custom_call.1} parent=1 // pred_region
      %s33 = ssub.s32 128, 128
      %34 = vsyncadd [#allocation3], %s33
      %s36 = sshll.u32 [#allocation2], 4
      %s37 = int_to_ptr.vmem [resolvable:$true] %s36
      %39 = dma.hbm_to_vmem [thread:$0]  %s0, 128, %s37, [#allocation3]
    $region5: #{tpu_custom_call.1} parent=1 // pred_fallthru
      _
    // Predicated region
    $region6: #{tpu_custom_call.1} parent=1 // pred_check
      _
    $region7: #{tpu_custom_call.1} parent=1 // pred_check_branch
      %41 = sbr.rel (0) target = $region9
    $region8: #{tpu_custom_call.1} parent=1 // pred_region
      %s43 = ssub.s32 128, 128
      %44 = vsyncadd [#allocation6], %s43
      %s46 = sshll.u32 [#allocation5], 4
      %s47 = int_to_ptr.vmem [resolvable:$true] %s46
      %49 = dma.hbm_to_vmem [thread:$0]  %s1, 128, %s47, [#allocation6]
    $region9: #{tpu_custom_call.1} parent=1 // pred_fallthru
      _
    // Predicated region
    $region10: #{tpu_custom_call.1} parent=1 // pred_check
      _
    $region11: #{tpu_custom_call.1} parent=1 // pred_check_branch
      %51 = sbr.rel (0) target = $region13
    $region12: #{tpu_custom_call.1} parent=1 // pred_region
      %s53 = ssub.s32 1536, 1536
      %54 = vsyncadd [#allocation6], %s53
      %s55 = sshll.u32 [#allocation7], 4
      %s56 = int_to_ptr.vmem [resolvable:$true] %s55
      %61 = dma.hbm_to_vmem [thread:$0]  %s2, 1536, %s56, [#allocation6], 768, 768, 48
    $region13: #{tpu_custom_call.1} parent=1 // pred_fallthru
      _
    // Predicated region
    $region14: #{tpu_custom_call.1} parent=1 // pred_check
      _
    $region15: #{tpu_custom_call.1} parent=1 // pred_check_branch
      %63 = sbr.rel (0) target = $region17
    $region16: #{tpu_custom_call.1} parent=1 // pred_region
      %s65 = ssub.s32 1024, 1024
      %66 = vsyncadd [#allocation9], %s65
      %s67 = sshll.u32 [#allocation8], 4
      %s68 = int_to_ptr.vmem [resolvable:$true] %s67
      %73 = dma.hbm_to_vmem [thread:$0]  %s3, 1024, %s68, [#allocation9], 512, 512, 32
    $region17: #{tpu_custom_call.1} parent=1 // pred_fallthru
      _
    // Predicated region
    $region18: #{tpu_custom_call.1} parent=1 // pred_check
      _
    $region19: #{tpu_custom_call.1} parent=1 // pred_check_branch
      %75 = sbr.rel (0) target = $region21
    $region20: #{tpu_custom_call.1} parent=1 // pred_region
      %s77 = ssub.s32 512, 512
      %78 = vsyncadd [#allocation9], %s77
      %s79 = sshll.u32 [#allocation10], 4
      %s80 = int_to_ptr.vmem [resolvable:$true] %s79
      %85 = dma.hbm_to_vmem [thread:$0]  %s4, 512, %s80, [#allocation9], 256, 256, 16
    $region21: #{tpu_custom_call.1} parent=1 // pred_fallthru
      _
    // Predicated region
    $region22: #{tpu_custom_call.1} parent=1 // pred_check
      _
    $region23: #{tpu_custom_call.1} parent=1 // pred_check_branch
      %87 = sbr.rel (0) target = $region25
    $region24: #{tpu_custom_call.1} parent=1 // pred_region
      %s89 = ssub.s32 192, 192
      %90 = vsyncadd [#allocation12], %s89
      %s92 = sshll.u32 [#allocation11], 4
      %s93 = int_to_ptr.vmem [resolvable:$true] %s92
      %95 = dma.hbm_to_vmem [thread:$0]  %s5, 192, %s93, [#allocation12]
    $region25: #{tpu_custom_call.1} parent=1 // pred_fallthru
      _
    // Predicated region
    $region26: #{tpu_custom_call.1} parent=1 // pred_check
      _
    $region27: #{tpu_custom_call.1} parent=1 // pred_check_branch
      %97 = sbr.rel (0) target = $region29
    $region28: #{tpu_custom_call.1} parent=1 // pred_region
      %s99 = ssub.s32 192, 192
      %100 = vsyncadd [#allocation12], %s99
      %s102 = sshll.u32 [#allocation13], 4
      %s103 = int_to_ptr.vmem [resolvable:$true] %s102
      %105 = dma.hbm_to_vmem [thread:$0]  %s6, 192, %s103, [#allocation12]
    $region29: #{tpu_custom_call.1} parent=1 // pred_fallthru
      _
    // Predicated region
    $region30: #{tpu_custom_call.1} parent=1 // pred_check
      _
    $region31: #{tpu_custom_call.1} parent=1 // pred_check_branch
      %107 = sbr.rel (0) target = $region33
    $region32: #{tpu_custom_call.1} parent=1 // pred_region
      %s109 = ssub.s32 192, 192
      %110 = vsyncadd [#allocation15], %s109
      %s112 = sshll.u32 [#allocation14], 4
      %s113 = int_to_ptr.vmem [resolvable:$true] %s112
      %115 = dma.hbm_to_vmem [thread:$0]  %s7, 192, %s113, [#allocation15]
    $region33: #{tpu_custom_call.1} parent=1 // pred_fallthru
      _
    // Predicated region
    $region34: #{tpu_custom_call.1} parent=1 // pred_check
      _
    $region35: #{tpu_custom_call.1} parent=1 // pred_check_branch
      %117 = sbr.rel (0) target = $region37
    $region36: #{tpu_custom_call.1} parent=1 // pred_region
      %s119 = ssub.s32 36864, 36864
      %120 = vsyncadd [#allocation15], %s119
      %s121 = sshll.u32 [#allocation16], 4
      %s122 = int_to_ptr.vmem [resolvable:$true] %s121
      %127 = dma.hbm_to_vmem [thread:$0]  %s8, 36864, %s122, [#allocation15], 192, 192, 12
    $region37: #{tpu_custom_call.1} parent=1 // pred_fallthru
      _
    // Predicated region
    $region38: #{tpu_custom_call.1} parent=1 // pred_check
      _
    $region39: #{tpu_custom_call.1} parent=1 // pred_check_branch
      %129 = sbr.rel (0) target = $region41
    $region40: #{tpu_custom_call.1} parent=1 // pred_region
      %s131 = ssub.s32 24576, 24576
      %132 = vsyncadd [#allocation18], %s131
      %s133 = sshll.u32 [#allocation17], 4
      %s134 = int_to_ptr.vmem [resolvable:$true] %s133
      %139 = dma.hbm_to_vmem [thread:$0]  %s9, 24576, %s134, [#allocation18], 128, 128, 8
    $region41: #{tpu_custom_call.1} parent=1 // pred_fallthru
      _
    // Predicated region
    $region42: #{tpu_custom_call.1} parent=1 // pred_check
      _
    $region43: #{tpu_custom_call.1} parent=1 // pred_check_branch
      %141 = sbr.rel (0) target = $region45
    $region44: #{tpu_custom_call.1} parent=1 // pred_region
      %s143 = ssub.s32 12288, 12288
      %144 = vsyncadd [#allocation18], %s143
      %s145 = sshll.u32 [#allocation19], 4
      %s146 = int_to_ptr.vmem [resolvable:$true] %s145
      %151 = dma.hbm_to_vmem [thread:$0]  %s10, 12288, %s146, [#allocation18], 64, 64, 4
    $region45: #{tpu_custom_call.1} parent=1 // pred_fallthru
      _
    // Predicated region
    $region46: #{tpu_custom_call.1} parent=1 // pred_check
      _
    $region47: #{tpu_custom_call.1} parent=1 // pred_check_branch
      %153 = sbr.rel (0) target = $region49
    $region48: #{tpu_custom_call.1} parent=1 // pred_region
      %s155 = ssub.s32 48, 48
      %156 = vsyncadd [#allocation21], %s155
      %s158 = sshll.u32 [#allocation20], 4
      %s159 = int_to_ptr.vmem [resolvable:$true] %s158
      %161 = dma.hbm_to_vmem [thread:$0]  %s11, 48, %s159, [#allocation21]
    $region49: #{tpu_custom_call.1} parent=1 // pred_fallthru
      _
    // Predicated region
    $region50: #{tpu_custom_call.1} parent=1 // pred_check
      _
    $region51: #{tpu_custom_call.1} parent=1 // pred_check_branch
      %163 = sbr.rel (0) target = $region53
    $region52: #{tpu_custom_call.1} parent=1 // pred_region
      %s165 = ssub.s32 48, 48
      %166 = vsyncadd [#allocation21], %s165
      %s168 = sshll.u32 [#allocation22], 4
      %s169 = int_to_ptr.vmem [resolvable:$true] %s168
      %171 = dma.hbm_to_vmem [thread:$0]  %s12, 48, %s169, [#allocation21]
    $region53: #{tpu_custom_call.1} parent=1 // pred_fallthru
      _
    // Predicated region
    $region54: #{tpu_custom_call.1} parent=1 // pred_check
      _
    $region55: #{tpu_custom_call.1} parent=1 // pred_check_branch
      %173 = sbr.rel (0) target = $region57
    $region56: #{tpu_custom_call.1} parent=1 // pred_region
      %s175 = ssub.s32 48, 48
      %176 = vsyncadd [#allocation24], %s175
      %s178 = sshll.u32 [#allocation23], 4
      %s179 = int_to_ptr.vmem [resolvable:$true] %s178
      %181 = dma.hbm_to_vmem [thread:$0]  %s13, 48, %s179, [#allocation24]
    $region57: #{tpu_custom_call.1} parent=1 // pred_fallthru
      _
    // Predicated region
    $region58: #{tpu_custom_call.1} parent=1 // pred_check
      _
    $region59: #{tpu_custom_call.1} parent=1 // pred_check_branch
      %183 = sbr.rel (0) target = $region61
    $region60: #{tpu_custom_call.1} parent=1 // pred_region
      _
    $region61: #{tpu_custom_call.1} parent=1 // pred_fallthru
      _
    // Predicated region
    $region62: #{tpu_custom_call.1} parent=1 // pred_check
      _
    $region63: #{tpu_custom_call.1} parent=1 // pred_check_branch
      %185 = sbr.rel (0) target = $region65
    $region64: #{tpu_custom_call.1} parent=1 // pred_region
      %s187 = ssub.s32 16, 16
      %188 = vsyncadd [#allocation24], %s187
      %s190 = sshll.u32 [#allocation25], 4
      %s191 = int_to_ptr.vmem [resolvable:$true] %s190
      %193 = dma.hbm_to_vmem [thread:$0]  %s15, 16, %s191, [#allocation24]
    $region65: #{tpu_custom_call.1} parent=1 // pred_fallthru
      _
    // Predicated region
    $region66: #{tpu_custom_call.1} parent=1 // pred_check
      _
    $region67: #{tpu_custom_call.1} parent=1 // pred_check_branch
      %195 = sbr.rel (0) target = $region69
    $region68: #{tpu_custom_call.1} parent=1 // pred_region
      %196 = dma.done [#allocation3], 128
    $region69: #{tpu_custom_call.1} parent=1 // pred_fallthru
      _
    // Predicated region
    $region70: #{tpu_custom_call.1} parent=1 // pred_check
      _
    $region71: #{tpu_custom_call.1} parent=1 // pred_check_branch
      %198 = sbr.rel (0) target = $region73
    $region72: #{tpu_custom_call.1} parent=1 // pred_region
      %199 = dma.done [#allocation6], 128
    $region73: #{tpu_custom_call.1} parent=1 // pred_fallthru
      _
    // Predicated region
    $region74: #{tpu_custom_call.1} parent=1 // pred_check
      _
    $region75: #{tpu_custom_call.1} parent=1 // pred_check_branch
      %201 = sbr.rel (0) target = $region77
    $region76: #{tpu_custom_call.1} parent=1 // pred_region
      %202 = dma.done [#allocation6], 1536
    $region77: #{tpu_custom_call.1} parent=1 // pred_fallthru
      _
    // Predicated region
    $region78: #{tpu_custom_call.1} parent=1 // pred_check
      _
    $region79: #{tpu_custom_call.1} parent=1 // pred_check_branch
      %204 = sbr.rel (0) target = $region81
    $region80: #{tpu_custom_call.1} parent=1 // pred_region
      %205 = dma.done [#allocation9], 1024
    $region81: #{tpu_custom_call.1} parent=1 // pred_fallthru
      _
    // Predicated region
    $region82: #{tpu_custom_call.1} parent=1 // pred_check
      _
    $region83: #{tpu_custom_call.1} parent=1 // pred_check_branch
      %207 = sbr.rel (0) target = $region85
    $region84: #{tpu_custom_call.1} parent=1 // pred_region
      %208 = dma.done [#allocation9], 512
    $region85: #{tpu_custom_call.1} parent=1 // pred_fallthru
      _
    // Predicated region
    $region86: #{tpu_custom_call.1} parent=1 // pred_check
      _
    $region87: #{tpu_custom_call.1} parent=1 // pred_check_branch
      %210 = sbr.rel (0) target = $region89
    $region88: #{tpu_custom_call.1} parent=1 // pred_region
      %211 = dma.done [#allocation12], 192
    $region89: #{tpu_custom_call.1} parent=1 // pred_fallthru
      _
    // Predicated region
    $region90: #{tpu_custom_call.1} parent=1 // pred_check
      _
    $region91: #{tpu_custom_call.1} parent=1 // pred_check_branch
      %213 = sbr.rel (0) target = $region93
    $region92: #{tpu_custom_call.1} parent=1 // pred_region
      %214 = dma.done [#allocation12], 192
    $region93: #{tpu_custom_call.1} parent=1 // pred_fallthru
      _
    // Predicated region
    $region94: #{tpu_custom_call.1} parent=1 // pred_check
      _
    $region95: #{tpu_custom_call.1} parent=1 // pred_check_branch
      %216 = sbr.rel (0) target = $region97
    $region96: #{tpu_custom_call.1} parent=1 // pred_region
      %217 = dma.done [#allocation15], 192
    $region97: #{tpu_custom_call.1} parent=1 // pred_fallthru
      _
    // Predicated region
    $region98: #{tpu_custom_call.1} parent=1 // pred_check
      _
    $region99: #{tpu_custom_call.1} parent=1 // pred_check_branch
      %219 = sbr.rel (0) target = $region101
    $region100: #{tpu_custom_call.1} parent=1 // pred_region
      %220 = dma.done [#allocation15], 36864
    $region101: #{tpu_custom_call.1} parent=1 // pred_fallthru
      _
    // Predicated region
    $region102: #{tpu_custom_call.1} parent=1 // pred_check
      _
    $region103: #{tpu_custom_call.1} parent=1 // pred_check_branch
      %222 = sbr.rel (0) target = $region105
    $region104: #{tpu_custom_call.1} parent=1 // pred_region
      %223 = dma.done [#allocation18], 24576
    $region105: #{tpu_custom_call.1} parent=1 // pred_fallthru
      _
    // Predicated region
    $region106: #{tpu_custom_call.1} parent=1 // pred_check
      _
    $region107: #{tpu_custom_call.1} parent=1 // pred_check_branch
      %225 = sbr.rel (0) target = $region109
    $region108: #{tpu_custom_call.1} parent=1 // pred_region
      %226 = dma.done [#allocation18], 12288
    $region109: #{tpu_custom_call.1} parent=1 // pred_fallthru
      _
    // Predicated region
    $region110: #{tpu_custom_call.1} parent=1 // pred_check
      _
    $region111: #{tpu_custom_call.1} parent=1 // pred_check_branch
      %228 = sbr.rel (0) target = $region113
    $region112: #{tpu_custom_call.1} parent=1 // pred_region
      %229 = dma.done [#allocation21], 48
    $region113: #{tpu_custom_call.1} parent=1 // pred_fallthru
      _
    // Predicated region
    $region114: #{tpu_custom_call.1} parent=1 // pred_check
      _
    $region115: #{tpu_custom_call.1} parent=1 // pred_check_branch
      %231 = sbr.rel (0) target = $region117
    $region116: #{tpu_custom_call.1} parent=1 // pred_region
      %232 = dma.done [#allocation21], 48
    $region117: #{tpu_custom_call.1} parent=1 // pred_fallthru
      _
    // Predicated region
    $region118: #{tpu_custom_call.1} parent=1 // pred_check
      _
    $region119: #{tpu_custom_call.1} parent=1 // pred_check_branch
      %234 = sbr.rel (0) target = $region121
    $region120: #{tpu_custom_call.1} parent=1 // pred_region
      %235 = dma.done [#allocation24], 48
    $region121: #{tpu_custom_call.1} parent=1 // pred_fallthru
      _
    // Predicated region
    $region122: #{tpu_custom_call.1} parent=1 // pred_check
      _
    $region123: #{tpu_custom_call.1} parent=1 // pred_check_branch
      %237 = sbr.rel (0) target = $region125
    $region124: #{tpu_custom_call.1} parent=1 // pred_region
      %238 = dma.done [#allocation24], 16
    $region125: #{tpu_custom_call.1} parent=1 // pred_fallthru
      _
    %v240 = vld [vmem:[#allocation2] sm:$0xff]
    %v241 = vld [vmem:[#allocation5] sm:$0xff]
    %v242 = vld [vmem:[#allocation7] sm:$0xff]
    %v243 = vld [vmem:[#allocation7 + $0x8] sm:$0xff]
    %v244 = vld [vmem:[#allocation7 + $0x10] sm:$0xff]
    %v245 = vld [vmem:[#allocation7 + $0x18] sm:$0xff]
    %v246 = vld [vmem:[#allocation7 + $0x20] sm:$0xff]
    %v247 = vld [vmem:[#allocation7 + $0x28] sm:$0xff]
    %v248 = vld [vmem:[#allocation7 + $0x30] sm:$0xff]
    %v249 = vld [vmem:[#allocation7 + $0x38] sm:$0xff]
    %v250 = vld [vmem:[#allocation7 + $0x40] sm:$0xff]
    %v251 = vld [vmem:[#allocation7 + $0x48] sm:$0xff]
    %v252 = vld [vmem:[#allocation7 + $0x50] sm:$0xff]
    %v253 = vld [vmem:[#allocation7 + $0x58] sm:$0xff]
    %v254 = vld [vmem:[#allocation8] sm:$0xff]
    %v255 = vld [vmem:[#allocation8 + $0x8] sm:$0xff]
    %v256 = vld [vmem:[#allocation8 + $0x10] sm:$0xff]
    %v257 = vld [vmem:[#allocation8 + $0x18] sm:$0xff]
    %v258 = vld [vmem:[#allocation8 + $0x20] sm:$0xff]
    %v259 = vld [vmem:[#allocation8 + $0x28] sm:$0xff]
    %v260 = vld [vmem:[#allocation8 + $0x30] sm:$0xff]
    %v261 = vld [vmem:[#allocation8 + $0x38] sm:$0xff]
    %v262 = vld [vmem:[#allocation10] sm:$0xff]
    %v263 = vld [vmem:[#allocation10 + $0x8] sm:$0xff]
    %v264 = vld [vmem:[#allocation10 + $0x10] sm:$0xff]
    %v265 = vld [vmem:[#allocation10 + $0x18] sm:$0xff]
    %v266 = vld [vmem:[#allocation11] sm:$0xff]
    %v267 = vld [vmem:[#allocation11 + $0x8] sm:$0xf]
    %vm268 = vcmask 64512
    %v270 = vsel %vm268, %v241, 0
    %272 = vmatprep.subr.mxu0 0.0
    %273 = vmatpush1.msra.mxu0 0.0
    %274 = vmatprep.subr.mxu0 0.0
    %275 = vmatpush1.msra.mxu0 0.0
    %276 = vmatprep.subr.mxu0 0.0
    %277 = vmatpush1.msra.mxu0 0.0
    %278 = vmatprep.subr.mxu0 0.0
    %279 = vmatpush1.msra.mxu0 0.0
    %280 = vmatprep.subr.mxu0 0.0
    %281 = vmatpush1.msra.mxu0 0.0
    %282 = vmatprep.subr.mxu0 0.0
    %283 = vmatpush1.msra.mxu0 0.0
    %284 = vmatprep.subr.mxu0 0.0
    %285 = vmatpush1.msra.mxu0 0.0
    %286 = vmatprep.subr.mxu0 0.0
    %287 = vmatpush1.msra.mxu0 0.0
    %288 = vmatprep.subr.mxu0 0.0
    %289 = vmatpush1.msra.mxu0 0.0
    %290 = vmatprep.subr.mxu0 0.0
    %291 = vmatpush1.msra.mxu0 0.0
    %292 = vmatprep.subr.mxu0 0.0
    %293 = vmatpush1.msra.mxu0 0.0
    %294 = vmatprep.subr.mxu0 0.0
    %295 = vmatpush1.msra.mxu0 0.0
    %296 = vmatprep.subr.mxu0 0.0
    %297 = vmatpush1.msra.mxu0 0.0
    %298 = vmatprep.subr.mxu0 0.0
    %299 = vmatpush1.msra.mxu0 0.0
    %300 = vmatprep.subr.mxu0 0.0
    %301 = vmatpush1.msra.mxu0 0.0
    %302 = vmatprep.subr.mxu0 0.0
    %303 = vmatpush1.msra.mxu0 %v240
    %304 = vmatprep.subr.mxu0 0.0
    %305 = vmatpush2.msra.mxu0 0.0
    %306 = vmatprep.subr.mxu0 0.0
    %307 = vmatpush2.msra.mxu0 0.0
    %308 = vmatprep.subr.mxu0 0.0
    %309 = vmatpush2.msra.mxu0 0.0
    %310 = vmatprep.subr.mxu0 0.0
    %311 = vmatpush2.msra.mxu0 0.0
    %312 = vmatprep.subr.mxu0 0.0
    %313 = vmatpush2.msra.mxu0 0.0
    %314 = vmatprep.subr.mxu0 0.0
    %315 = vmatpush2.msra.mxu0 0.0
    %316 = vmatprep.subr.mxu0 0.0
    %317 = vmatpush2.msra.mxu0 0.0
    %318 = vmatprep.subr.mxu0 0.0
    %319 = vmatpush2.msra.mxu0 0.0
    %320 = vmatprep.subr.mxu0 0.0
    %321 = vmatpush2.msra.mxu0 0.0
    %322 = vmatprep.subr.mxu0 0.0
    %323 = vmatpush2.msra.mxu0 0.0
    %324 = vmatprep.subr.mxu0 0.0
    %325 = vmatpush2.msra.mxu0 0.0
    %326 = vmatprep.subr.mxu0 0.0
    %327 = vmatpush2.msra.mxu0 0.0
    %328 = vmatprep.subr.mxu0 0.0
    %329 = vmatpush2.msra.mxu0 0.0
    %330 = vmatprep.subr.mxu0 0.0
    %331 = vmatpush2.msra.mxu0 0.0
    %332 = vmatprep.subr.mxu0 0.0
    %333 = vmatpush2.msra.mxu0 0.0
    %334 = vmatprep.subr.mxu0 0.0
    %335 = vmatpush2.msra.mxu0 0.0
    %336 = vmatprep.mubr.f32.mxu0 0.0
    %337 = vmatmul.mubr.f32.gmra.mxu0 %v270
    %v338 = vpop.f32.mrf.mxu0
    %v339 = vadd.f32 0.0, %v338
    %v340 = vpop.f32.mrf.mxu0
    %341 = vdwg.mxu0
    %342 = vmatprep.subr.mxu0 0.0
    %343 = vmatpush1.msra.mxu0 0.0
    %344 = vmatprep.subr.mxu0 0.0
    %345 = vmatpush1.msra.mxu0 0.0
    %346 = vmatprep.subr.mxu0 0.0
    %347 = vmatpush1.msra.mxu0 0.0
    %348 = vmatprep.subr.mxu0 0.0
    %349 = vmatpush1.msra.mxu0 0.0
    %350 = vmatprep.subr.mxu0 0.0
    %351 = vmatpush1.msra.mxu0 0.0
    %352 = vmatprep.subr.mxu0 0.0
    %353 = vmatpush1.msra.mxu0 0.0
    %354 = vmatprep.subr.mxu0 0.0
    %355 = vmatpush1.msra.mxu0 0.0
    %356 = vmatprep.subr.mxu0 0.0
    %357 = vmatpush1.msra.mxu0 0.0
    %358 = vmatprep.subr.mxu0 0.0
    %359 = vmatpush1.msra.mxu0 0.0
    %360 = vmatprep.subr.mxu0 0.0
    %361 = vmatpush1.msra.mxu0 0.0
    %362 = vmatprep.subr.mxu0 0.0
    %363 = vmatpush1.msra.mxu0 0.0
    %364 = vmatprep.subr.mxu0 0.0
    %365 = vmatpush1.msra.mxu0 0.0
    %366 = vmatprep.subr.mxu0 0.0
    %367 = vmatpush1.msra.mxu0 0.0
    %368 = vmatprep.subr.mxu0 0.0
    %369 = vmatpush1.msra.mxu0 0.0
    %370 = vmatprep.subr.mxu0 0.0
    %371 = vmatpush1.msra.mxu0 0.0
    %372 = vmatprep.subr.mxu0 0.0
    %373 = vmatpush1.msra.mxu0 %v339
    %374 = vmatprep.subr.mxu0 0.0
    %375 = vmatpush2.msra.mxu0 0.0
    %376 = vmatprep.subr.mxu0 0.0
    %377 = vmatpush2.msra.mxu0 0.0
    %378 = vmatprep.subr.mxu0 0.0
    %379 = vmatpush2.msra.mxu0 0.0
    %380 = vmatprep.subr.mxu0 0.0
    %381 = vmatpush2.msra.mxu0 0.0
    %382 = vmatprep.subr.mxu0 0.0
    %383 = vmatpush2.msra.mxu0 0.0
    %384 = vmatprep.subr.mxu0 0.0
    %385 = vmatpush2.msra.mxu0 0.0
    %386 = vmatprep.subr.mxu0 0.0
    %387 = vmatpush2.msra.mxu0 0.0
    %388 = vmatprep.subr.mxu0 0.0
    %389 = vmatpush2.msra.mxu0 0.0
    %390 = vmatprep.subr.mxu0 0.0
    %391 = vmatpush2.msra.mxu0 0.0
    %392 = vmatprep.subr.mxu0 0.0
    %393 = vmatpush2.msra.mxu0 0.0
    %394 = vmatprep.subr.mxu0 0.0
    %395 = vmatpush2.msra.mxu0 0.0
    %396 = vmatprep.subr.mxu0 0.0
    %397 = vmatpush2.msra.mxu0 0.0
    %398 = vmatprep.subr.mxu0 0.0
    %399 = vmatpush2.msra.mxu0 0.0
    %400 = vmatprep.subr.mxu0 0.0
    %401 = vmatpush2.msra.mxu0 0.0
    %402 = vmatprep.subr.mxu0 0.0
    %403 = vmatpush2.msra.mxu0 0.0
    %404 = vmatprep.subr.mxu0 0.0
    %405 = vmatpush2.msra.mxu0 0.0
    %406 = vmatprep.mubr.f32.mxu0 0.0
    %407 = vmatmul.mubr.f32.gmra.mxu0 %v270
    %v408 = vpop.f32.mrf.mxu0
    %v409 = vadd.f32 0.0, %v408
    %v410 = vpop.f32.mrf.mxu0
    %411 = vdwg.mxu0
    %v412 = vmul.f32 %v409, 2.0
    %v413 = vsub.f32 %v412, %v240
    %v414 = vpack.c.bf16 %v240, %v240
    %v417 = vlaneseq
    %v418 = vshrl.u32 %v417, 7
    %v419 = vsub.s32 0, %v418
    %v420 = vrot.slane %v266, %v419
    %v421 = vlaneseq
    %v422 = vshrl.u32 %v421, 7
    %v423 = vsub.s32 1, %v422
    %v424 = vrot.slane %v266, %v423
    %v425 = vlaneseq
    %v426 = vshrl.u32 %v425, 7
    %v427 = vsub.s32 2, %v426
    %v428 = vrot.slane %v266, %v427
    %v429 = vlaneseq
    %v430 = vshrl.u32 %v429, 7
    %v431 = vsub.s32 3, %v430
    %v432 = vrot.slane %v266, %v431
    %v433 = vlaneseq
    %v434 = vshrl.u32 %v433, 7
    %v435 = vsub.s32 4, %v434
    %v436 = vrot.slane %v266, %v435
    %v437 = vlaneseq
    %v438 = vshrl.u32 %v437, 7
    %v439 = vsub.s32 5, %v438
    %v440 = vrot.slane %v266, %v439
    %v441 = vlaneseq
    %v442 = vshrl.u32 %v441, 7
    %v443 = vsub.s32 6, %v442
    %v444 = vrot.slane %v266, %v443
    %v445 = vlaneseq
    %v446 = vshrl.u32 %v445, 7
    %v447 = vsub.s32 7, %v446
    %v448 = vrot.slane %v266, %v447
    %v449 = vlaneseq
    %v450 = vshrl.u32 %v449, 7
    %v451 = vsub.s32 0, %v450
    %v452 = vrot.slane %v267, %v451
    %v453 = vlaneseq
    %v454 = vshrl.u32 %v453, 7
    %v455 = vsub.s32 1, %v454
    %v456 = vrot.slane %v267, %v455
    %v457 = vlaneseq
    %v458 = vshrl.u32 %v457, 7
    %v459 = vsub.s32 2, %v458
    %v460 = vrot.slane %v267, %v459
    %v461 = vlaneseq
    %v462 = vshrl.u32 %v461, 7
    %v463 = vsub.s32 3, %v462
    %v464 = vrot.slane %v267, %v463
    %v489 = vunpack.c.l.b16 %v242
    %v490 = vunpack.c.h.b16 %v242
    %v491 = vunpack.c.l.b16 %v243
    %v492 = vunpack.c.h.b16 %v243
    %v493 = vunpack.c.l.b16 %v244
    %v494 = vunpack.c.h.b16 %v244
    %v495 = vunpack.c.l.b16 %v245
    %v496 = vunpack.c.h.b16 %v245
    %v497 = vunpack.c.l.b16 %v246
    %v498 = vunpack.c.h.b16 %v246
    %v499 = vunpack.c.l.b16 %v247
    %v500 = vunpack.c.h.b16 %v247
    %v501 = vunpack.c.l.b16 %v248
    %v502 = vunpack.c.h.b16 %v248
    %v503 = vunpack.c.l.b16 %v249
    %v504 = vunpack.c.h.b16 %v249
    %v505 = vunpack.c.l.b16 %v250
    %v506 = vunpack.c.h.b16 %v250
    %v507 = vunpack.c.l.b16 %v251
    %v508 = vunpack.c.h.b16 %v251
    %v509 = vunpack.c.l.b16 %v252
    %v510 = vunpack.c.h.b16 %v252
    %v511 = vunpack.c.l.b16 %v253
    %v512 = vunpack.c.h.b16 %v253
    %v513 = vpack.c.b16 %v501, %v489
    %v514 = vpack.c.b16 %v502, %v490
    %v515 = vpack.c.b16 %v503, %v491
    %v516 = vpack.c.b16 %v504, %v492
    %v517 = vpack.c.b16 %v505, %v493
    %v518 = vpack.c.b16 %v506, %v494
    %v519 = vpack.c.b16 %v507, %v495
    %v520 = vpack.c.b16 %v508, %v496
    %v521 = vpack.c.b16 %v509, %v497
    %v522 = vpack.c.b16 %v510, %v498
    %v523 = vpack.c.b16 %v511, %v499
    %v524 = vpack.c.b16 %v512, %v500
    %vm537 = vcmask 130048
    %v539 = vsel %vm537, %v414, 0
    %541 = vmatprep.subr.bf16.mxu0 0
    %542 = vmatpush1.bf16.msra.mxu0 0
    %543 = vmatprep.subr.bf16.mxu0 0
    %544 = vmatpush1.bf16.msra.mxu0 0
    %545 = vmatprep.subr.bf16.mxu0 0
    %546 = vmatpush1.bf16.msra.mxu0 0
    %547 = vmatprep.subr.bf16.mxu0 0
    %548 = vmatpush1.bf16.msra.mxu0 0
    %549 = vmatprep.subr.bf16.mxu0 0
    %550 = vmatpush1.bf16.msra.mxu0 0
    %551 = vmatprep.subr.bf16.mxu0 0
    %552 = vmatpush1.bf16.msra.mxu0 0
    %553 = vmatprep.subr.bf16.mxu0 0
    %554 = vmatpush1.bf16.msra.mxu0 0
    %555 = vmatprep.subr.bf16.mxu0 %v514
    %556 = vmatpush1.bf16.msra.mxu0 %v513
    %557 = vmatprep.subr.bf16.mxu0 0
    %558 = vmatpush2.bf16.msra.mxu0 0
    %559 = vmatprep.subr.bf16.mxu0 0
    %560 = vmatpush2.bf16.msra.mxu0 0
    %561 = vmatprep.subr.bf16.mxu0 0
    %562 = vmatpush2.bf16.msra.mxu0 0
    %563 = vmatprep.subr.bf16.mxu0 0
    %564 = vmatpush2.bf16.msra.mxu0 0
    %565 = vmatprep.subr.bf16.mxu0 0
    %566 = vmatpush2.bf16.msra.mxu0 0
    %567 = vmatprep.subr.bf16.mxu0 0
    %568 = vmatpush2.bf16.msra.mxu0 0
    %569 = vmatprep.subr.bf16.mxu0 0
    %570 = vmatpush2.bf16.msra.mxu0 0
    %571 = vmatprep.subr.bf16.mxu0 0
    %572 = vmatpush2.bf16.msra.mxu0 0
    %573 = vmatprep.mubr.bf16.mxu0 0
    %574 = vmatmul.mubr.bf16.gmra.mxu0 %v539
    %v575 = vpop.f32.mrf.mxu0
    %v576 = vadd.f32 %v420, %v575
    %v577 = vpop.f32.mrf.mxu0
    %v578 = vadd.f32 %v424, %v577
    %v579 = vpop.f32.mrf.mxu0
    %v580 = vpop.f32.mrf.mxu0
    %581 = vdwg.mxu0
    %582 = vmatprep.subr.bf16.mxu0 0
    %583 = vmatpush1.bf16.msra.mxu0 0
    %584 = vmatprep.subr.bf16.mxu0 0
    %585 = vmatpush1.bf16.msra.mxu0 0
    %586 = vmatprep.subr.bf16.mxu0 0
    %587 = vmatpush1.bf16.msra.mxu0 0
    %588 = vmatprep.subr.bf16.mxu0 0
    %589 = vmatpush1.bf16.msra.mxu0 0
    %590 = vmatprep.subr.bf16.mxu0 0
    %591 = vmatpush1.bf16.msra.mxu0 0
    %592 = vmatprep.subr.bf16.mxu0 0
    %593 = vmatpush1.bf16.msra.mxu0 0
    %594 = vmatprep.subr.bf16.mxu0 0
    %595 = vmatpush1.bf16.msra.mxu0 0
    %596 = vmatprep.subr.bf16.mxu0 %v516
    %597 = vmatpush1.bf16.msra.mxu0 %v515
    %598 = vmatprep.subr.bf16.mxu0 0
    %599 = vmatpush2.bf16.msra.mxu0 0
    %600 = vmatprep.subr.bf16.mxu0 0
    %601 = vmatpush2.bf16.msra.mxu0 0
    %602 = vmatprep.subr.bf16.mxu0 0
    %603 = vmatpush2.bf16.msra.mxu0 0
    %604 = vmatprep.subr.bf16.mxu0 0
    %605 = vmatpush2.bf16.msra.mxu0 0
    %606 = vmatprep.subr.bf16.mxu0 0
    %607 = vmatpush2.bf16.msra.mxu0 0
    %608 = vmatprep.subr.bf16.mxu0 0
    %609 = vmatpush2.bf16.msra.mxu0 0
    %610 = vmatprep.subr.bf16.mxu0 0
    %611 = vmatpush2.bf16.msra.mxu0 0
    %612 = vmatprep.subr.bf16.mxu0 0
    %613 = vmatpush2.bf16.msra.mxu0 0
    %614 = vmatprep.mubr.bf16.mxu0 0
    %615 = vmatmul.mubr.bf16.gmra.mxu0 %v539
    %v616 = vpop.f32.mrf.mxu0
    %v617 = vadd.f32 %v428, %v616
    %v618 = vpop.f32.mrf.mxu0
    %v619 = vadd.f32 %v432, %v618
    %v620 = vpop.f32.mrf.mxu0
    %v621 = vpop.f32.mrf.mxu0
    %622 = vdwg.mxu0
    %623 = vmatprep.subr.bf16.mxu0 0
    %624 = vmatpush1.bf16.msra.mxu0 0
    %625 = vmatprep.subr.bf16.mxu0 0
    %626 = vmatpush1.bf16.msra.mxu0 0
    %627 = vmatprep.subr.bf16.mxu0 0
    %628 = vmatpush1.bf16.msra.mxu0 0
    %629 = vmatprep.subr.bf16.mxu0 0
    %630 = vmatpush1.bf16.msra.mxu0 0
    %631 = vmatprep.subr.bf16.mxu0 0
    %632 = vmatpush1.bf16.msra.mxu0 0
    %633 = vmatprep.subr.bf16.mxu0 0
    %634 = vmatpush1.bf16.msra.mxu0 0
    %635 = vmatprep.subr.bf16.mxu0 0
    %636 = vmatpush1.bf16.msra.mxu0 0
    %637 = vmatprep.subr.bf16.mxu0 %v518
    %638 = vmatpush1.bf16.msra.mxu0 %v517
    %639 = vmatprep.subr.bf16.mxu0 0
    %640 = vmatpush2.bf16.msra.mxu0 0
    %641 = vmatprep.subr.bf16.mxu0 0
    %642 = vmatpush2.bf16.msra.mxu0 0
    %643 = vmatprep.subr.bf16.mxu0 0
    %644 = vmatpush2.bf16.msra.mxu0 0
    %645 = vmatprep.subr.bf16.mxu0 0
    %646 = vmatpush2.bf16.msra.mxu0 0
    %647 = vmatprep.subr.bf16.mxu0 0
    %648 = vmatpush2.bf16.msra.mxu0 0
    %649 = vmatprep.subr.bf16.mxu0 0
    %650 = vmatpush2.bf16.msra.mxu0 0
    %651 = vmatprep.subr.bf16.mxu0 0
    %652 = vmatpush2.bf16.msra.mxu0 0
    %653 = vmatprep.subr.bf16.mxu0 0
    %654 = vmatpush2.bf16.msra.mxu0 0
    %655 = vmatprep.mubr.bf16.mxu0 0
    %656 = vmatmul.mubr.bf16.gmra.mxu0 %v539
    %v657 = vpop.f32.mrf.mxu0
    %v658 = vadd.f32 %v436, %v657
    %v659 = vpop.f32.mrf.mxu0
    %v660 = vadd.f32 %v440, %v659
    %v661 = vpop.f32.mrf.mxu0
    %v662 = vpop.f32.mrf.mxu0
    %663 = vdwg.mxu0
    %664 = vmatprep.subr.bf16.mxu0 0
    %665 = vmatpush1.bf16.msra.mxu0 0
    %666 = vmatprep.subr.bf16.mxu0 0
    %667 = vmatpush1.bf16.msra.mxu0 0
    %668 = vmatprep.subr.bf16.mxu0 0
    %669 = vmatpush1.bf16.msra.mxu0 0
    %670 = vmatprep.subr.bf16.mxu0 0
    %671 = vmatpush1.bf16.msra.mxu0 0
    %672 = vmatprep.subr.bf16.mxu0 0
    %673 = vmatpush1.bf16.msra.mxu0 0
    %674 = vmatprep.subr.bf16.mxu0 0
    %675 = vmatpush1.bf16.msra.mxu0 0
    %676 = vmatprep.subr.bf16.mxu0 0
    %677 = vmatpush1.bf16.msra.mxu0 0
    %678 = vmatprep.subr.bf16.mxu0 %v520
    %679 = vmatpush1.bf16.msra.mxu0 %v519
    %680 = vmatprep.subr.bf16.mxu0 0
    %681 = vmatpush2.bf16.msra.mxu0 0
    %682 = vmatprep.subr.bf16.mxu0 0
    %683 = vmatpush2.bf16.msra.mxu0 0
    %684 = vmatprep.subr.bf16.mxu0 0
    %685 = vmatpush2.bf16.msra.mxu0 0
    %686 = vmatprep.subr.bf16.mxu0 0
    %687 = vmatpush2.bf16.msra.mxu0 0
    %688 = vmatprep.subr.bf16.mxu0 0
    %689 = vmatpush2.bf16.msra.mxu0 0
    %690 = vmatprep.subr.bf16.mxu0 0
    %691 = vmatpush2.bf16.msra.mxu0 0
    %692 = vmatprep.subr.bf16.mxu0 0
    %693 = vmatpush2.bf16.msra.mxu0 0
    %694 = vmatprep.subr.bf16.mxu0 0
    %695 = vmatpush2.bf16.msra.mxu0 0
    %696 = vmatprep.mubr.bf16.mxu0 0
    %697 = vmatmul.mubr.bf16.gmra.mxu0 %v539
    %v698 = vpop.f32.mrf.mxu0
    %v699 = vadd.f32 %v444, %v698
    %v700 = vpop.f32.mrf.mxu0
    %v701 = vadd.f32 %v448, %v700
    %v702 = vpop.f32.mrf.mxu0
    %v703 = vpop.f32.mrf.mxu0
    %704 = vdwg.mxu0
    %705 = vmatprep.subr.bf16.mxu0 0
    %706 = vmatpush1.bf16.msra.mxu0 0
    %707 = vmatprep.subr.bf16.mxu0 0
    %708 = vmatpush1.bf16.msra.mxu0 0
    %709 = vmatprep.subr.bf16.mxu0 0
    %710 = vmatpush1.bf16.msra.mxu0 0
    %711 = vmatprep.subr.bf16.mxu0 0
    %712 = vmatpush1.bf16.msra.mxu0 0
    %713 = vmatprep.subr.bf16.mxu0 0
    %714 = vmatpush1.bf16.msra.mxu0 0
    %715 = vmatprep.subr.bf16.mxu0 0
    %716 = vmatpush1.bf16.msra.mxu0 0
    %717 = vmatprep.subr.bf16.mxu0 0
    %718 = vmatpush1.bf16.msra.mxu0 0
    %719 = vmatprep.subr.bf16.mxu0 %v522
    %720 = vmatpush1.bf16.msra.mxu0 %v521
    %721 = vmatprep.subr.bf16.mxu0 0
    %722 = vmatpush2.bf16.msra.mxu0 0
    %723 = vmatprep.subr.bf16.mxu0 0
    %724 = vmatpush2.bf16.msra.mxu0 0
    %725 = vmatprep.subr.bf16.mxu0 0
    %726 = vmatpush2.bf16.msra.mxu0 0
    %727 = vmatprep.subr.bf16.mxu0 0
    %728 = vmatpush2.bf16.msra.mxu0 0
    %729 = vmatprep.subr.bf16.mxu0 0
    %730 = vmatpush2.bf16.msra.mxu0 0
    %731 = vmatprep.subr.bf16.mxu0 0
    %732 = vmatpush2.bf16.msra.mxu0 0
    %733 = vmatprep.subr.bf16.mxu0 0
    %734 = vmatpush2.bf16.msra.mxu0 0
    %735 = vmatprep.subr.bf16.mxu0 0
    %736 = vmatpush2.bf16.msra.mxu0 0
    %737 = vmatprep.mubr.bf16.mxu0 0
    %738 = vmatmul.mubr.bf16.gmra.mxu0 %v539
    %v739 = vpop.f32.mrf.mxu0
    %v740 = vadd.f32 %v452, %v739
    %v741 = vpop.f32.mrf.mxu0
    %v742 = vadd.f32 %v456, %v741
    %v743 = vpop.f32.mrf.mxu0
    %v744 = vpop.f32.mrf.mxu0
    %745 = vdwg.mxu0
    %746 = vmatprep.subr.bf16.mxu0 0
    %747 = vmatpush1.bf16.msra.mxu0 0
    %748 = vmatprep.subr.bf16.mxu0 0
    %749 = vmatpush1.bf16.msra.mxu0 0
    %750 = vmatprep.subr.bf16.mxu0 0
    %751 = vmatpush1.bf16.msra.mxu0 0
    %752 = vmatprep.subr.bf16.mxu0 0
    %753 = vmatpush1.bf16.msra.mxu0 0
    %754 = vmatprep.subr.bf16.mxu0 0
    %755 = vmatpush1.bf16.msra.mxu0 0
    %756 = vmatprep.subr.bf16.mxu0 0
    %757 = vmatpush1.bf16.msra.mxu0 0
    %758 = vmatprep.subr.bf16.mxu0 0
    %759 = vmatpush1.bf16.msra.mxu0 0
    %760 = vmatprep.subr.bf16.mxu0 %v524
    %761 = vmatpush1.bf16.msra.mxu0 %v523
    %762 = vmatprep.subr.bf16.mxu0 0
    %763 = vmatpush2.bf16.msra.mxu0 0
    %764 = vmatprep.subr.bf16.mxu0 0
    %765 = vmatpush2.bf16.msra.mxu0 0
    %766 = vmatprep.subr.bf16.mxu0 0
    %767 = vmatpush2.bf16.msra.mxu0 0
    %768 = vmatprep.subr.bf16.mxu0 0
    %769 = vmatpush2.bf16.msra.mxu0 0
    %770 = vmatprep.subr.bf16.mxu0 0
    %771 = vmatpush2.bf16.msra.mxu0 0
    %772 = vmatprep.subr.bf16.mxu0 0
    %773 = vmatpush2.bf16.msra.mxu0 0
    %774 = vmatprep.subr.bf16.mxu0 0
    %775 = vmatpush2.bf16.msra.mxu0 0
    %776 = vmatprep.subr.bf16.mxu0 0
    %777 = vmatpush2.bf16.msra.mxu0 0
    %778 = vmatprep.mubr.bf16.mxu0 0
    %779 = vmatmul.mubr.bf16.gmra.mxu0 %v539
    %v780 = vpop.f32.mrf.mxu0
    %v781 = vadd.f32 %v460, %v780
    %v782 = vpop.f32.mrf.mxu0
    %v783 = vadd.f32 %v464, %v782
    %v784 = vpop.f32.mrf.mxu0
    %v785 = vpop.f32.mrf.mxu0
    %786 = vdwg.mxu0
    %v787 = vpack.c.bf16 %v339, %v339
    %v796 = vunpack.c.l.b16 %v254
    %v797 = vunpack.c.h.b16 %v254
    %v798 = vunpack.c.l.b16 %v255
    %v799 = vunpack.c.h.b16 %v255
    %v800 = vunpack.c.l.b16 %v256
    %v801 = vunpack.c.h.b16 %v256
    %v802 = vunpack.c.l.b16 %v257
    %v803 = vunpack.c.h.b16 %v257
    %v804 = vunpack.c.l.b16 %v258
    %v805 = vunpack.c.h.b16 %v258
    %v806 = vunpack.c.l.b16 %v259
    %v807 = vunpack.c.h.b16 %v259
    %v808 = vunpack.c.l.b16 %v260
    %v809 = vunpack.c.h.b16 %v260
    %v810 = vunpack.c.l.b16 %v261
    %v811 = vunpack.c.h.b16 %v261
    %v812 = vpack.c.b16 %v804, %v796
    %v813 = vpack.c.b16 %v805, %v797
    %v814 = vpack.c.b16 %v806, %v798
    %v815 = vpack.c.b16 %v807, %v799
    %v816 = vpack.c.b16 %v808, %v800
    %v817 = vpack.c.b16 %v809, %v801
    %v818 = vpack.c.b16 %v810, %v802
    %v819 = vpack.c.b16 %v811, %v803
    %v829 = vsel %vm537, %v787, 0
    %831 = vmatprep.subr.bf16.mxu0 0
    %832 = vmatpush1.bf16.msra.mxu0 0
    %833 = vmatprep.subr.bf16.mxu0 0
    %834 = vmatpush1.bf16.msra.mxu0 0
    %835 = vmatprep.subr.bf16.mxu0 0
    %836 = vmatpush1.bf16.msra.mxu0 0
    %837 = vmatprep.subr.bf16.mxu0 0
    %838 = vmatpush1.bf16.msra.mxu0 0
    %839 = vmatprep.subr.bf16.mxu0 0
    %840 = vmatpush1.bf16.msra.mxu0 0
    %841 = vmatprep.subr.bf16.mxu0 0
    %842 = vmatpush1.bf16.msra.mxu0 0
    %843 = vmatprep.subr.bf16.mxu0 0
    %844 = vmatpush1.bf16.msra.mxu0 0
    %845 = vmatprep.subr.bf16.mxu0 %v813
    %846 = vmatpush1.bf16.msra.mxu0 %v812
    %847 = vmatprep.subr.bf16.mxu0 0
    %848 = vmatpush2.bf16.msra.mxu0 0
    %849 = vmatprep.subr.bf16.mxu0 0
    %850 = vmatpush2.bf16.msra.mxu0 0
    %851 = vmatprep.subr.bf16.mxu0 0
    %852 = vmatpush2.bf16.msra.mxu0 0
    %853 = vmatprep.subr.bf16.mxu0 0
    %854 = vmatpush2.bf16.msra.mxu0 0
    %855 = vmatprep.subr.bf16.mxu0 0
    %856 = vmatpush2.bf16.msra.mxu0 0
    %857 = vmatprep.subr.bf16.mxu0 0
    %858 = vmatpush2.bf16.msra.mxu0 0
    %859 = vmatprep.subr.bf16.mxu0 0
    %860 = vmatpush2.bf16.msra.mxu0 0
    %861 = vmatprep.subr.bf16.mxu0 0
    %862 = vmatpush2.bf16.msra.mxu0 0
    %863 = vmatprep.mubr.bf16.mxu0 0
    %864 = vmatmul.mubr.bf16.gmra.mxu0 %v829
    %v865 = vpop.f32.mrf.mxu0
    %v866 = vadd.f32 0.0, %v865
    %v867 = vpop.f32.mrf.mxu0
    %v868 = vadd.f32 0.0, %v867
    %v869 = vpop.f32.mrf.mxu0
    %v870 = vpop.f32.mrf.mxu0
    %871 = vdwg.mxu0
    %872 = vmatprep.subr.bf16.mxu0 0
    %873 = vmatpush1.bf16.msra.mxu0 0
    %874 = vmatprep.subr.bf16.mxu0 0
    %875 = vmatpush1.bf16.msra.mxu0 0
    %876 = vmatprep.subr.bf16.mxu0 0
    %877 = vmatpush1.bf16.msra.mxu0 0
    %878 = vmatprep.subr.bf16.mxu0 0
    %879 = vmatpush1.bf16.msra.mxu0 0
    %880 = vmatprep.subr.bf16.mxu0 0
    %881 = vmatpush1.bf16.msra.mxu0 0
    %882 = vmatprep.subr.bf16.mxu0 0
    %883 = vmatpush1.bf16.msra.mxu0 0
    %884 = vmatprep.subr.bf16.mxu0 0
    %885 = vmatpush1.bf16.msra.mxu0 0
    %886 = vmatprep.subr.bf16.mxu0 %v815
    %887 = vmatpush1.bf16.msra.mxu0 %v814
    %888 = vmatprep.subr.bf16.mxu0 0
    %889 = vmatpush2.bf16.msra.mxu0 0
    %890 = vmatprep.subr.bf16.mxu0 0
    %891 = vmatpush2.bf16.msra.mxu0 0
    %892 = vmatprep.subr.bf16.mxu0 0
    %893 = vmatpush2.bf16.msra.mxu0 0
    %894 = vmatprep.subr.bf16.mxu0 0
    %895 = vmatpush2.bf16.msra.mxu0 0
    %896 = vmatprep.subr.bf16.mxu0 0
    %897 = vmatpush2.bf16.msra.mxu0 0
    %898 = vmatprep.subr.bf16.mxu0 0
    %899 = vmatpush2.bf16.msra.mxu0 0
    %900 = vmatprep.subr.bf16.mxu0 0
    %901 = vmatpush2.bf16.msra.mxu0 0
    %902 = vmatprep.subr.bf16.mxu0 0
    %903 = vmatpush2.bf16.msra.mxu0 0
    %904 = vmatprep.mubr.bf16.mxu0 0
    %905 = vmatmul.mubr.bf16.gmra.mxu0 %v829
    %v906 = vpop.f32.mrf.mxu0
    %v907 = vadd.f32 0.0, %v906
    %v908 = vpop.f32.mrf.mxu0
    %v909 = vadd.f32 0.0, %v908
    %v910 = vpop.f32.mrf.mxu0
    %v911 = vpop.f32.mrf.mxu0
    %912 = vdwg.mxu0
    %913 = vmatprep.subr.bf16.mxu0 0
    %914 = vmatpush1.bf16.msra.mxu0 0
    %915 = vmatprep.subr.bf16.mxu0 0
    %916 = vmatpush1.bf16.msra.mxu0 0
    %917 = vmatprep.subr.bf16.mxu0 0
    %918 = vmatpush1.bf16.msra.mxu0 0
    %919 = vmatprep.subr.bf16.mxu0 0
    %920 = vmatpush1.bf16.msra.mxu0 0
    %921 = vmatprep.subr.bf16.mxu0 0
    %922 = vmatpush1.bf16.msra.mxu0 0
    %923 = vmatprep.subr.bf16.mxu0 0
    %924 = vmatpush1.bf16.msra.mxu0 0
    %925 = vmatprep.subr.bf16.mxu0 0
    %926 = vmatpush1.bf16.msra.mxu0 0
    %927 = vmatprep.subr.bf16.mxu0 %v817
    %928 = vmatpush1.bf16.msra.mxu0 %v816
    %929 = vmatprep.subr.bf16.mxu0 0
    %930 = vmatpush2.bf16.msra.mxu0 0
    %931 = vmatprep.subr.bf16.mxu0 0
    %932 = vmatpush2.bf16.msra.mxu0 0
    %933 = vmatprep.subr.bf16.mxu0 0
    %934 = vmatpush2.bf16.msra.mxu0 0
    %935 = vmatprep.subr.bf16.mxu0 0
    %936 = vmatpush2.bf16.msra.mxu0 0
    %937 = vmatprep.subr.bf16.mxu0 0
    %938 = vmatpush2.bf16.msra.mxu0 0
    %939 = vmatprep.subr.bf16.mxu0 0
    %940 = vmatpush2.bf16.msra.mxu0 0
    %941 = vmatprep.subr.bf16.mxu0 0
    %942 = vmatpush2.bf16.msra.mxu0 0
    %943 = vmatprep.subr.bf16.mxu0 0
    %944 = vmatpush2.bf16.msra.mxu0 0
    %945 = vmatprep.mubr.bf16.mxu0 0
    %946 = vmatmul.mubr.bf16.gmra.mxu0 %v829
    %v947 = vpop.f32.mrf.mxu0
    %v948 = vadd.f32 0.0, %v947
    %v949 = vpop.f32.mrf.mxu0
    %v950 = vadd.f32 0.0, %v949
    %v951 = vpop.f32.mrf.mxu0
    %v952 = vpop.f32.mrf.mxu0
    %953 = vdwg.mxu0
    %954 = vmatprep.subr.bf16.mxu0 0
    %955 = vmatpush1.bf16.msra.mxu0 0
    %956 = vmatprep.subr.bf16.mxu0 0
    %957 = vmatpush1.bf16.msra.mxu0 0
    %958 = vmatprep.subr.bf16.mxu0 0
    %959 = vmatpush1.bf16.msra.mxu0 0
    %960 = vmatprep.subr.bf16.mxu0 0
    %961 = vmatpush1.bf16.msra.mxu0 0
    %962 = vmatprep.subr.bf16.mxu0 0
    %963 = vmatpush1.bf16.msra.mxu0 0
    %964 = vmatprep.subr.bf16.mxu0 0
    %965 = vmatpush1.bf16.msra.mxu0 0
    %966 = vmatprep.subr.bf16.mxu0 0
    %967 = vmatpush1.bf16.msra.mxu0 0
    %968 = vmatprep.subr.bf16.mxu0 %v819
    %969 = vmatpush1.bf16.msra.mxu0 %v818
    %970 = vmatprep.subr.bf16.mxu0 0
    %971 = vmatpush2.bf16.msra.mxu0 0
    %972 = vmatprep.subr.bf16.mxu0 0
    %973 = vmatpush2.bf16.msra.mxu0 0
    %974 = vmatprep.subr.bf16.mxu0 0
    %975 = vmatpush2.bf16.msra.mxu0 0
    %976 = vmatprep.subr.bf16.mxu0 0
    %977 = vmatpush2.bf16.msra.mxu0 0
    %978 = vmatprep.subr.bf16.mxu0 0
    %979 = vmatpush2.bf16.msra.mxu0 0
    %980 = vmatprep.subr.bf16.mxu0 0
    %981 = vmatpush2.bf16.msra.mxu0 0
    %982 = vmatprep.subr.bf16.mxu0 0
    %983 = vmatpush2.bf16.msra.mxu0 0
    %984 = vmatprep.subr.bf16.mxu0 0
    %985 = vmatpush2.bf16.msra.mxu0 0
    %986 = vmatprep.mubr.bf16.mxu0 0
    %987 = vmatmul.mubr.bf16.gmra.mxu0 %v829
    %v988 = vpop.f32.mrf.mxu0
    %v989 = vadd.f32 0.0, %v988
    %v990 = vpop.f32.mrf.mxu0
    %v991 = vadd.f32 0.0, %v990
    %v992 = vpop.f32.mrf.mxu0
    %v993 = vpop.f32.mrf.mxu0
    %994 = vdwg.mxu0
    %v995 = vpack.c.bf16 %v413, %v413
    %v1000 = vunpack.c.l.b16 %v262
    %v1001 = vunpack.c.h.b16 %v262
    %v1002 = vunpack.c.l.b16 %v263
    %v1003 = vunpack.c.h.b16 %v263
    %v1004 = vunpack.c.l.b16 %v264
    %v1005 = vunpack.c.h.b16 %v264
    %v1006 = vunpack.c.l.b16 %v265
    %v1007 = vunpack.c.h.b16 %v265
    %v1008 = vpack.c.b16 %v1004, %v1000
    %v1009 = vpack.c.b16 %v1005, %v1001
    %v1010 = vpack.c.b16 %v1006, %v1002
    %v1011 = vpack.c.b16 %v1007, %v1003
    %v1017 = vsel %vm537, %v995, 0
    %1019 = vmatprep.subr.bf16.mxu0 0
    %1020 = vmatpush1.bf16.msra.mxu0 0
    %1021 = vmatprep.subr.bf16.mxu0 0
    %1022 = vmatpush1.bf16.msra.mxu0 0
    %1023 = vmatprep.subr.bf16.mxu0 0
    %1024 = vmatpush1.bf16.msra.mxu0 0
    %1025 = vmatprep.subr.bf16.mxu0 0
    %1026 = vmatpush1.bf16.msra.mxu0 0
    %1027 = vmatprep.subr.bf16.mxu0 0
    %1028 = vmatpush1.bf16.msra.mxu0 0
    %1029 = vmatprep.subr.bf16.mxu0 0
    %1030 = vmatpush1.bf16.msra.mxu0 0
    %1031 = vmatprep.subr.bf16.mxu0 0
    %1032 = vmatpush1.bf16.msra.mxu0 0
    %1033 = vmatprep.subr.bf16.mxu0 %v1009
    %1034 = vmatpush1.bf16.msra.mxu0 %v1008
    %1035 = vmatprep.subr.bf16.mxu0 0
    %1036 = vmatpush2.bf16.msra.mxu0 0
    %1037 = vmatprep.subr.bf16.mxu0 0
    %1038 = vmatpush2.bf16.msra.mxu0 0
    %1039 = vmatprep.subr.bf16.mxu0 0
    %1040 = vmatpush2.bf16.msra.mxu0 0
    %1041 = vmatprep.subr.bf16.mxu0 0
    %1042 = vmatpush2.bf16.msra.mxu0 0
    %1043 = vmatprep.subr.bf16.mxu0 0
    %1044 = vmatpush2.bf16.msra.mxu0 0
    %1045 = vmatprep.subr.bf16.mxu0 0
    %1046 = vmatpush2.bf16.msra.mxu0 0
    %1047 = vmatprep.subr.bf16.mxu0 0
    %1048 = vmatpush2.bf16.msra.mxu0 0
    %1049 = vmatprep.subr.bf16.mxu0 0
    %1050 = vmatpush2.bf16.msra.mxu0 0
    %1051 = vmatprep.mubr.bf16.mxu0 0
    %1052 = vmatmul.mubr.bf16.gmra.mxu0 %v1017
    %v1053 = vpop.f32.mrf.mxu0
    %v1054 = vadd.f32 0.0, %v1053
    %v1055 = vpop.f32.mrf.mxu0
    %v1056 = vadd.f32 0.0, %v1055
    %v1057 = vpop.f32.mrf.mxu0
    %v1058 = vpop.f32.mrf.mxu0
    %1059 = vdwg.mxu0
    %1060 = vmatprep.subr.bf16.mxu0 0
    %1061 = vmatpush1.bf16.msra.mxu0 0
    %1062 = vmatprep.subr.bf16.mxu0 0
    %1063 = vmatpush1.bf16.msra.mxu0 0
    %1064 = vmatprep.subr.bf16.mxu0 0
    %1065 = vmatpush1.bf16.msra.mxu0 0
    %1066 = vmatprep.subr.bf16.mxu0 0
    %1067 = vmatpush1.bf16.msra.mxu0 0
    %1068 = vmatprep.subr.bf16.mxu0 0
    %1069 = vmatpush1.bf16.msra.mxu0 0
    %1070 = vmatprep.subr.bf16.mxu0 0
    %1071 = vmatpush1.bf16.msra.mxu0 0
    %1072 = vmatprep.subr.bf16.mxu0 0
    %1073 = vmatpush1.bf16.msra.mxu0 0
    %1074 = vmatprep.subr.bf16.mxu0 %v1011
    %1075 = vmatpush1.bf16.msra.mxu0 %v1010
    %1076 = vmatprep.subr.bf16.mxu0 0
    %1077 = vmatpush2.bf16.msra.mxu0 0
    %1078 = vmatprep.subr.bf16.mxu0 0
    %1079 = vmatpush2.bf16.msra.mxu0 0
    %1080 = vmatprep.subr.bf16.mxu0 0
    %1081 = vmatpush2.bf16.msra.mxu0 0
    %1082 = vmatprep.subr.bf16.mxu0 0
    %1083 = vmatpush2.bf16.msra.mxu0 0
    %1084 = vmatprep.subr.bf16.mxu0 0
    %1085 = vmatpush2.bf16.msra.mxu0 0
    %1086 = vmatprep.subr.bf16.mxu0 0
    %1087 = vmatpush2.bf16.msra.mxu0 0
    %1088 = vmatprep.subr.bf16.mxu0 0
    %1089 = vmatpush2.bf16.msra.mxu0 0
    %1090 = vmatprep.subr.bf16.mxu0 0
    %1091 = vmatpush2.bf16.msra.mxu0 0
    %1092 = vmatprep.mubr.bf16.mxu0 0
    %1093 = vmatmul.mubr.bf16.gmra.mxu0 %v1017
    %v1094 = vpop.f32.mrf.mxu0
    %v1095 = vadd.f32 0.0, %v1094
    %v1096 = vpop.f32.mrf.mxu0
    %v1097 = vadd.f32 0.0, %v1096
    %v1098 = vpop.f32.mrf.mxu0
    %v1099 = vpop.f32.mrf.mxu0
    %1100 = vdwg.mxu0
    %v1101 = vadd.f32 %v658, %v866
    %v1102 = vadd.f32 %v660, %v868
    %v1103 = vadd.f32 %v699, %v907
    %v1104 = vadd.f32 %v701, %v909
    %v1105 = vadd.f32 %v740, %v948
    %v1106 = vadd.f32 %v742, %v950
    %v1107 = vadd.f32 %v781, %v989
    %v1108 = vadd.f32 %v783, %v991
    %v1109 = vadd.f32 %v1105, %v1054
    %v1110 = vadd.f32 %v1106, %v1056
    %v1111 = vadd.f32 %v1107, %v1095
    %v1112 = vadd.f32 %v1108, %v1097
    %v1113 = vld [vmem:[#allocation13] sm:$0xff]
    %v1114 = vld [vmem:[#allocation13 + $0x8] sm:$0xf]
    %v1115 = vld [vmem:[#allocation14] sm:$0xff]
    %v1116 = vld [vmem:[#allocation14 + $0x8] sm:$0xf]
    %v1117 = vrot.slane %v576, 4
    %v1118 = vadd.f32 %v576, %v1117
    %v1119 = vrot.slane %v1118, 2
    %v1120 = vadd.f32 %v1118, %v1119
    %v1121 = vrot.slane %v1120, 1
    %v1122 = vadd.f32 %v1120, %v1121
    %v1123 = vrot.slane %v578, 4
    %v1124 = vadd.f32 %v578, %v1123
    %v1125 = vrot.slane %v1124, 2
    %v1126 = vadd.f32 %v1124, %v1125
    %v1127 = vrot.slane %v1126, 1
    %v1128 = vadd.f32 %v1126, %v1127
    %v1129 = vrot.slane %v617, 4
    %v1130 = vadd.f32 %v617, %v1129
    %v1131 = vrot.slane %v1130, 2
    %v1132 = vadd.f32 %v1130, %v1131
    %v1133 = vrot.slane %v1132, 1
    %v1134 = vadd.f32 %v1132, %v1133
    %v1135 = vrot.slane %v619, 4
    %v1136 = vadd.f32 %v619, %v1135
    %v1137 = vrot.slane %v1136, 2
    %v1138 = vadd.f32 %v1136, %v1137
    %v1139 = vrot.slane %v1138, 1
    %v1140 = vadd.f32 %v1138, %v1139
    %v1141 = vrot.slane %v1101, 4
    %v1142 = vadd.f32 %v1101, %v1141
    %v1143 = vrot.slane %v1142, 2
    %v1144 = vadd.f32 %v1142, %v1143
    %v1145 = vrot.slane %v1144, 1
    %v1146 = vadd.f32 %v1144, %v1145
    %v1147 = vrot.slane %v1102, 4
    %v1148 = vadd.f32 %v1102, %v1147
    %v1149 = vrot.slane %v1148, 2
    %v1150 = vadd.f32 %v1148, %v1149
    %v1151 = vrot.slane %v1150, 1
    %v1152 = vadd.f32 %v1150, %v1151
    %v1153 = vrot.slane %v1103, 4
    %v1154 = vadd.f32 %v1103, %v1153
    %v1155 = vrot.slane %v1154, 2
    %v1156 = vadd.f32 %v1154, %v1155
    %v1157 = vrot.slane %v1156, 1
    %v1158 = vadd.f32 %v1156, %v1157
    %v1159 = vrot.slane %v1104, 4
    %v1160 = vadd.f32 %v1104, %v1159
    %v1161 = vrot.slane %v1160, 2
    %v1162 = vadd.f32 %v1160, %v1161
    %v1163 = vrot.slane %v1162, 1
    %v1164 = vadd.f32 %v1162, %v1163
    %v1165 = vrot.slane %v1109, 4
    %v1166 = vadd.f32 %v1109, %v1165
    %v1167 = vrot.slane %v1166, 2
    %v1168 = vadd.f32 %v1166, %v1167
    %v1169 = vrot.slane %v1168, 1
    %v1170 = vadd.f32 %v1168, %v1169
    %v1171 = vrot.slane %v1110, 4
    %v1172 = vadd.f32 %v1110, %v1171
    %v1173 = vrot.slane %v1172, 2
    %v1174 = vadd.f32 %v1172, %v1173
    %v1175 = vrot.slane %v1174, 1
    %v1176 = vadd.f32 %v1174, %v1175
    %v1177 = vrot.slane %v1111, 4
    %v1178 = vadd.f32 %v1111, %v1177
    %v1179 = vrot.slane %v1178, 2
    %v1180 = vadd.f32 %v1178, %v1179
    %v1181 = vrot.slane %v1180, 1
    %v1182 = vadd.f32 %v1180, %v1181
    %v1183 = vrot.slane %v1112, 4
    %v1184 = vadd.f32 %v1112, %v1183
    %v1185 = vrot.slane %v1184, 2
    %v1186 = vadd.f32 %v1184, %v1185
    %v1187 = vrot.slane %v1186, 1
    %v1188 = vadd.f32 %v1186, %v1187
    %v1189 = vrcp.pop 8.0
    %v1190 = vmul.f32 %v1122, %v1189
    %v1191 = vmul.f32 %v1128, %v1189
    %v1192 = vmul.f32 %v1134, %v1189
    %v1193 = vmul.f32 %v1140, %v1189
    %v1194 = vmul.f32 %v1146, %v1189
    %v1195 = vmul.f32 %v1152, %v1189
    %v1196 = vmul.f32 %v1158, %v1189
    %v1197 = vmul.f32 %v1164, %v1189
    %v1198 = vmul.f32 %v1170, %v1189
    %v1199 = vmul.f32 %v1176, %v1189
    %v1200 = vmul.f32 %v1182, %v1189
    %v1201 = vmul.f32 %v1188, %v1189
    %v1202 = vsub.f32 %v576, %v1190
    %v1203 = vsub.f32 %v578, %v1191
    %v1204 = vsub.f32 %v617, %v1192
    %v1205 = vsub.f32 %v619, %v1193
    %v1206 = vsub.f32 %v1101, %v1194
    %v1207 = vsub.f32 %v1102, %v1195
    %v1208 = vsub.f32 %v1103, %v1196
    %v1209 = vsub.f32 %v1104, %v1197
    %v1210 = vsub.f32 %v1109, %v1198
    %v1211 = vsub.f32 %v1110, %v1199
    %v1212 = vsub.f32 %v1111, %v1200
    %v1213 = vsub.f32 %v1112, %v1201
    %v1214 = vmul.f32 %v1202, %v1202
    %v1215 = vmul.f32 %v1203, %v1203
    %v1216 = vmul.f32 %v1204, %v1204
    %v1217 = vmul.f32 %v1205, %v1205
    %v1218 = vmul.f32 %v1206, %v1206
    %v1219 = vmul.f32 %v1207, %v1207
    %v1220 = vmul.f32 %v1208, %v1208
    %v1221 = vmul.f32 %v1209, %v1209
    %v1222 = vmul.f32 %v1210, %v1210
    %v1223 = vmul.f32 %v1211, %v1211
    %v1224 = vmul.f32 %v1212, %v1212
    %v1225 = vmul.f32 %v1213, %v1213
    %v1226 = vrot.slane %v1214, 4
    %v1227 = vadd.f32 %v1214, %v1226
    %v1228 = vrot.slane %v1227, 2
    %v1229 = vadd.f32 %v1227, %v1228
    %v1230 = vrot.slane %v1229, 1
    %v1231 = vadd.f32 %v1229, %v1230
    %v1232 = vrot.slane %v1215, 4
    %v1233 = vadd.f32 %v1215, %v1232
    %v1234 = vrot.slane %v1233, 2
    %v1235 = vadd.f32 %v1233, %v1234
    %v1236 = vrot.slane %v1235, 1
    %v1237 = vadd.f32 %v1235, %v1236
    %v1238 = vrot.slane %v1216, 4
    %v1239 = vadd.f32 %v1216, %v1238
    %v1240 = vrot.slane %v1239, 2
    %v1241 = vadd.f32 %v1239, %v1240
    %v1242 = vrot.slane %v1241, 1
    %v1243 = vadd.f32 %v1241, %v1242
    %v1244 = vrot.slane %v1217, 4
    %v1245 = vadd.f32 %v1217, %v1244
    %v1246 = vrot.slane %v1245, 2
    %v1247 = vadd.f32 %v1245, %v1246
    %v1248 = vrot.slane %v1247, 1
    %v1249 = vadd.f32 %v1247, %v1248
    %v1250 = vrot.slane %v1218, 4
    %v1251 = vadd.f32 %v1218, %v1250
    %v1252 = vrot.slane %v1251, 2
    %v1253 = vadd.f32 %v1251, %v1252
    %v1254 = vrot.slane %v1253, 1
    %v1255 = vadd.f32 %v1253, %v1254
    %v1256 = vrot.slane %v1219, 4
    %v1257 = vadd.f32 %v1219, %v1256
    %v1258 = vrot.slane %v1257, 2
    %v1259 = vadd.f32 %v1257, %v1258
    %v1260 = vrot.slane %v1259, 1
    %v1261 = vadd.f32 %v1259, %v1260
    %v1262 = vrot.slane %v1220, 4
    %v1263 = vadd.f32 %v1220, %v1262
    %v1264 = vrot.slane %v1263, 2
    %v1265 = vadd.f32 %v1263, %v1264
    %v1266 = vrot.slane %v1265, 1
    %v1267 = vadd.f32 %v1265, %v1266
    %v1268 = vrot.slane %v1221, 4
    %v1269 = vadd.f32 %v1221, %v1268
    %v1270 = vrot.slane %v1269, 2
    %v1271 = vadd.f32 %v1269, %v1270
    %v1272 = vrot.slane %v1271, 1
    %v1273 = vadd.f32 %v1271, %v1272
    %v1274 = vrot.slane %v1222, 4
    %v1275 = vadd.f32 %v1222, %v1274
    %v1276 = vrot.slane %v1275, 2
    %v1277 = vadd.f32 %v1275, %v1276
    %v1278 = vrot.slane %v1277, 1
    %v1279 = vadd.f32 %v1277, %v1278
    %v1280 = vrot.slane %v1223, 4
    %v1281 = vadd.f32 %v1223, %v1280
    %v1282 = vrot.slane %v1281, 2
    %v1283 = vadd.f32 %v1281, %v1282
    %v1284 = vrot.slane %v1283, 1
    %v1285 = vadd.f32 %v1283, %v1284
    %v1286 = vrot.slane %v1224, 4
    %v1287 = vadd.f32 %v1224, %v1286
    %v1288 = vrot.slane %v1287, 2
    %v1289 = vadd.f32 %v1287, %v1288
    %v1290 = vrot.slane %v1289, 1
    %v1291 = vadd.f32 %v1289, %v1290
    %v1292 = vrot.slane %v1225, 4
    %v1293 = vadd.f32 %v1225, %v1292
    %v1294 = vrot.slane %v1293, 2
    %v1295 = vadd.f32 %v1293, %v1294
    %v1296 = vrot.slane %v1295, 1
    %v1297 = vadd.f32 %v1295, %v1296
    %v1298 = vmul.f32 %v1231, %v1189
    %v1299 = vmul.f32 %v1237, %v1189
    %v1300 = vmul.f32 %v1243, %v1189
    %v1301 = vmul.f32 %v1249, %v1189
    %v1302 = vmul.f32 %v1255, %v1189
    %v1303 = vmul.f32 %v1261, %v1189
    %v1304 = vmul.f32 %v1267, %v1189
    %v1305 = vmul.f32 %v1273, %v1189
    %v1306 = vmul.f32 %v1279, %v1189
    %v1307 = vmul.f32 %v1285, %v1189
    %v1308 = vmul.f32 %v1291, %v1189
    %v1309 = vmul.f32 %v1297, %v1189
    %v1310 = vadd.f32 %v1298, 1e-05
    %v1311 = vadd.f32 %v1299, 1e-05
    %v1312 = vadd.f32 %v1300, 1e-05
    %v1313 = vadd.f32 %v1301, 1e-05
    %v1314 = vadd.f32 %v1302, 1e-05
    %v1315 = vadd.f32 %v1303, 1e-05
    %v1316 = vadd.f32 %v1304, 1e-05
    %v1317 = vadd.f32 %v1305, 1e-05
    %v1318 = vadd.f32 %v1306, 1e-05
    %v1319 = vadd.f32 %v1307, 1e-05
    %v1320 = vadd.f32 %v1308, 1e-05
    %v1321 = vadd.f32 %v1309, 1e-05
    %v1322 = vrsqrt.pop %v1310
    %v1323 = vrsqrt.pop %v1311
    %v1324 = vrsqrt.pop %v1312
    %v1325 = vrsqrt.pop %v1313
    %v1326 = vrsqrt.pop %v1314
    %v1327 = vrsqrt.pop %v1315
    %v1328 = vrsqrt.pop %v1316
    %v1329 = vrsqrt.pop %v1317
    %v1330 = vrsqrt.pop %v1318
    %v1331 = vrsqrt.pop %v1319
    %v1332 = vrsqrt.pop %v1320
    %v1333 = vrsqrt.pop %v1321
    %v1334 = vmul.f32 %v1202, %v1322
    %v1335 = vmul.f32 %v1203, %v1323
    %v1336 = vmul.f32 %v1204, %v1324
    %v1337 = vmul.f32 %v1205, %v1325
    %v1338 = vmul.f32 %v1206, %v1326
    %v1339 = vmul.f32 %v1207, %v1327
    %v1340 = vmul.f32 %v1208, %v1328
    %v1341 = vmul.f32 %v1209, %v1329
    %v1342 = vmul.f32 %v1210, %v1330
    %v1343 = vmul.f32 %v1211, %v1331
    %v1344 = vmul.f32 %v1212, %v1332
    %v1345 = vmul.f32 %v1213, %v1333
    %v1348 = vlaneseq
    %v1349 = vshrl.u32 %v1348, 7
    %v1350 = vsub.s32 0, %v1349
    %v1351 = vrot.slane %v1113, %v1350
    %v1352 = vlaneseq
    %v1353 = vshrl.u32 %v1352, 7
    %v1354 = vsub.s32 1, %v1353
    %v1355 = vrot.slane %v1113, %v1354
    %v1356 = vlaneseq
    %v1357 = vshrl.u32 %v1356, 7
    %v1358 = vsub.s32 2, %v1357
    %v1359 = vrot.slane %v1113, %v1358
    %v1360 = vlaneseq
    %v1361 = vshrl.u32 %v1360, 7
    %v1362 = vsub.s32 3, %v1361
    %v1363 = vrot.slane %v1113, %v1362
    %v1364 = vlaneseq
    %v1365 = vshrl.u32 %v1364, 7
    %v1366 = vsub.s32 4, %v1365
    %v1367 = vrot.slane %v1113, %v1366
    %v1368 = vlaneseq
    %v1369 = vshrl.u32 %v1368, 7
    %v1370 = vsub.s32 5, %v1369
    %v1371 = vrot.slane %v1113, %v1370
    %v1372 = vlaneseq
    %v1373 = vshrl.u32 %v1372, 7
    %v1374 = vsub.s32 6, %v1373
    %v1375 = vrot.slane %v1113, %v1374
    %v1376 = vlaneseq
    %v1377 = vshrl.u32 %v1376, 7
    %v1378 = vsub.s32 7, %v1377
    %v1379 = vrot.slane %v1113, %v1378
    %v1380 = vlaneseq
    %v1381 = vshrl.u32 %v1380, 7
    %v1382 = vsub.s32 0, %v1381
    %v1383 = vrot.slane %v1114, %v1382
    %v1384 = vlaneseq
    %v1385 = vshrl.u32 %v1384, 7
    %v1386 = vsub.s32 1, %v1385
    %v1387 = vrot.slane %v1114, %v1386
    %v1388 = vlaneseq
    %v1389 = vshrl.u32 %v1388, 7
    %v1390 = vsub.s32 2, %v1389
    %v1391 = vrot.slane %v1114, %v1390
    %v1392 = vlaneseq
    %v1393 = vshrl.u32 %v1392, 7
    %v1394 = vsub.s32 3, %v1393
    %v1395 = vrot.slane %v1114, %v1394
    %v1408 = vmul.f32 %v1334, %v1351
    %v1409 = vmul.f32 %v1335, %v1355
    %v1410 = vmul.f32 %v1336, %v1359
    %v1411 = vmul.f32 %v1337, %v1363
    %v1412 = vmul.f32 %v1338, %v1367
    %v1413 = vmul.f32 %v1339, %v1371
    %v1414 = vmul.f32 %v1340, %v1375
    %v1415 = vmul.f32 %v1341, %v1379
    %v1416 = vmul.f32 %v1342, %v1383
    %v1417 = vmul.f32 %v1343, %v1387
    %v1418 = vmul.f32 %v1344, %v1391
    %v1419 = vmul.f32 %v1345, %v1395
    %v1422 = vlaneseq
    %v1423 = vshrl.u32 %v1422, 7
    %v1424 = vsub.s32 0, %v1423
    %v1425 = vrot.slane %v1115, %v1424
    %v1426 = vlaneseq
    %v1427 = vshrl.u32 %v1426, 7
    %v1428 = vsub.s32 1, %v1427
    %v1429 = vrot.slane %v1115, %v1428
    %v1430 = vlaneseq
    %v1431 = vshrl.u32 %v1430, 7
    %v1432 = vsub.s32 2, %v1431
    %v1433 = vrot.slane %v1115, %v1432
    %v1434 = vlaneseq
    %v1435 = vshrl.u32 %v1434, 7
    %v1436 = vsub.s32 3, %v1435
    %v1437 = vrot.slane %v1115, %v1436
    %v1438 = vlaneseq
    %v1439 = vshrl.u32 %v1438, 7
    %v1440 = vsub.s32 4, %v1439
    %v1441 = vrot.slane %v1115, %v1440
    %v1442 = vlaneseq
    %v1443 = vshrl.u32 %v1442, 7
    %v1444 = vsub.s32 5, %v1443
    %v1445 = vrot.slane %v1115, %v1444
    %v1446 = vlaneseq
    %v1447 = vshrl.u32 %v1446, 7
    %v1448 = vsub.s32 6, %v1447
    %v1449 = vrot.slane %v1115, %v1448
    %v1450 = vlaneseq
    %v1451 = vshrl.u32 %v1450, 7
    %v1452 = vsub.s32 7, %v1451
    %v1453 = vrot.slane %v1115, %v1452
    %v1454 = vlaneseq
    %v1455 = vshrl.u32 %v1454, 7
    %v1456 = vsub.s32 0, %v1455
    %v1457 = vrot.slane %v1116, %v1456
    %v1458 = vlaneseq
    %v1459 = vshrl.u32 %v1458, 7
    %v1460 = vsub.s32 1, %v1459
    %v1461 = vrot.slane %v1116, %v1460
    %v1462 = vlaneseq
    %v1463 = vshrl.u32 %v1462, 7
    %v1464 = vsub.s32 2, %v1463
    %v1465 = vrot.slane %v1116, %v1464
    %v1466 = vlaneseq
    %v1467 = vshrl.u32 %v1466, 7
    %v1468 = vsub.s32 3, %v1467
    %v1469 = vrot.slane %v1116, %v1468
    %v1482 = vadd.f32 %v1408, %v1425
    %v1483 = vadd.f32 %v1409, %v1429
    %v1484 = vadd.f32 %v1410, %v1433
    %v1485 = vadd.f32 %v1411, %v1437
    %v1486 = vadd.f32 %v1412, %v1441
    %v1487 = vadd.f32 %v1413, %v1445
    %v1488 = vadd.f32 %v1414, %v1449
    %v1489 = vadd.f32 %v1415, %v1453
    %v1490 = vadd.f32 %v1416, %v1457
    %v1491 = vadd.f32 %v1417, %v1461
    %v1492 = vadd.f32 %v1418, %v1465
    %v1493 = vadd.f32 %v1419, %v1469
    %v1494 = vmax.f32 %v1482, 0.0
    %v1495 = vmax.f32 %v1483, 0.0
    %v1496 = vmax.f32 %v1484, 0.0
    %v1497 = vmax.f32 %v1485, 0.0
    %v1498 = vmax.f32 %v1486, 0.0
    %v1499 = vmax.f32 %v1487, 0.0
    %v1500 = vmax.f32 %v1488, 0.0
    %v1501 = vmax.f32 %v1489, 0.0
    %v1502 = vmax.f32 %v1490, 0.0
    %v1503 = vmax.f32 %v1491, 0.0
    %v1504 = vmax.f32 %v1492, 0.0
    %v1505 = vmax.f32 %v1493, 0.0
    %v1506 = vld [vmem:[#allocation16] sm:$0xff]
    %v1507 = vld [vmem:[#allocation16 + $0x8] sm:$0xf]
    %v1508 = vld [vmem:[#allocation16 + $0xc] sm:$0xff]
    %v1509 = vld [vmem:[#allocation16 + $0x14] sm:$0xf]
    %v1510 = vld [vmem:[#allocation16 + $0x18] sm:$0xff]
    %v1511 = vld [vmem:[#allocation16 + $0x20] sm:$0xf]
    %v1512 = vld [vmem:[#allocation16 + $0x24] sm:$0xff]
    %v1513 = vld [vmem:[#allocation16 + $0x2c] sm:$0xf]
    %v1514 = vld [vmem:[#allocation16 + $0x30] sm:$0xff]
    %v1515 = vld [vmem:[#allocation16 + $0x38] sm:$0xf]
    %v1516 = vld [vmem:[#allocation16 + $0x3c] sm:$0xff]
    %v1517 = vld [vmem:[#allocation16 + $0x44] sm:$0xf]
    %v1518 = vld [vmem:[#allocation16 + $0x48] sm:$0xff]
    %v1519 = vld [vmem:[#allocation16 + $0x50] sm:$0xf]
    %v1520 = vld [vmem:[#allocation16 + $0x54] sm:$0xff]
    %v1521 = vld [vmem:[#allocation16 + $0x5c] sm:$0xf]
    %v1522 = vld [vmem:[#allocation16 + $0x60] sm:$0xff]
    %v1523 = vld [vmem:[#allocation16 + $0x68] sm:$0xf]
    %v1524 = vld [vmem:[#allocation16 + $0x6c] sm:$0xff]
    %v1525 = vld [vmem:[#allocation16 + $0x74] sm:$0xf]
    %v1526 = vld [vmem:[#allocation16 + $0x78] sm:$0xff]
    %v1527 = vld [vmem:[#allocation16 + $0x80] sm:$0xf]
    %v1528 = vld [vmem:[#allocation16 + $0x84] sm:$0xff]
    %v1529 = vld [vmem:[#allocation16 + $0x8c] sm:$0xf]
    %v1530 = vld [vmem:[#allocation16 + $0x90] sm:$0xff]
    %v1531 = vld [vmem:[#allocation16 + $0x98] sm:$0xf]
    %v1532 = vld [vmem:[#allocation16 + $0x9c] sm:$0xff]
    %v1533 = vld [vmem:[#allocation16 + $0xa4] sm:$0xf]
    %v1534 = vld [vmem:[#allocation16 + $0xa8] sm:$0xff]
    %v1535 = vld [vmem:[#allocation16 + $0xb0] sm:$0xf]
    %v1536 = vld [vmem:[#allocation16 + $0xb4] sm:$0xff]
    %v1537 = vld [vmem:[#allocation16 + $0xbc] sm:$0xf]
    %v1538 = vld [vmem:[#allocation16 + $0xc0] sm:$0xff]
    %v1539 = vld [vmem:[#allocation16 + $0xc8] sm:$0xf]
    %v1540 = vld [vmem:[#allocation16 + $0xcc] sm:$0xff]
    %v1541 = vld [vmem:[#allocation16 + $0xd4] sm:$0xf]
    %v1542 = vld [vmem:[#allocation16 + $0xd8] sm:$0xff]
    %v1543 = vld [vmem:[#allocation16 + $0xe0] sm:$0xf]
    %v1544 = vld [vmem:[#allocation16 + $0xe4] sm:$0xff]
    %v1545 = vld [vmem:[#allocation16 + $0xec] sm:$0xf]
    %v1546 = vld [vmem:[#allocation16 + $0xf0] sm:$0xff]
    %v1547 = vld [vmem:[#allocation16 + $0xf8] sm:$0xf]
    %v1548 = vld [vmem:[#allocation16 + $0xfc] sm:$0xff]
    %v1549 = vld [vmem:[#allocation16 + $0x104] sm:$0xf]
    %v1550 = vld [vmem:[#allocation16 + $0x108] sm:$0xff]
    %v1551 = vld [vmem:[#allocation16 + $0x110] sm:$0xf]
    %v1552 = vld [vmem:[#allocation16 + $0x114] sm:$0xff]
    %v1553 = vld [vmem:[#allocation16 + $0x11c] sm:$0xf]
    %v1554 = vld [vmem:[#allocation16 + $0x120] sm:$0xff]
    %v1555 = vld [vmem:[#allocation16 + $0x128] sm:$0xf]
    %v1556 = vld [vmem:[#allocation16 + $0x12c] sm:$0xff]
    %v1557 = vld [vmem:[#allocation16 + $0x134] sm:$0xf]
    %v1558 = vld [vmem:[#allocation16 + $0x138] sm:$0xff]
    %v1559 = vld [vmem:[#allocation16 + $0x140] sm:$0xf]
    %v1560 = vld [vmem:[#allocation16 + $0x144] sm:$0xff]
    %v1561 = vld [vmem:[#allocation16 + $0x14c] sm:$0xf]
    %v1562 = vld [vmem:[#allocation16 + $0x150] sm:$0xff]
    %v1563 = vld [vmem:[#allocation16 + $0x158] sm:$0xf]
    %v1564 = vld [vmem:[#allocation16 + $0x15c] sm:$0xff]
    %v1565 = vld [vmem:[#allocation16 + $0x164] sm:$0xf]
    %v1566 = vld [vmem:[#allocation16 + $0x168] sm:$0xff]
    %v1567 = vld [vmem:[#allocation16 + $0x170] sm:$0xf]
    %v1568 = vld [vmem:[#allocation16 + $0x174] sm:$0xff]
    %v1569 = vld [vmem:[#allocation16 + $0x17c] sm:$0xf]
    %v1570 = vld [vmem:[#allocation16 + $0x180] sm:$0xff]
    %v1571 = vld [vmem:[#allocation16 + $0x188] sm:$0xf]
    %v1572 = vld [vmem:[#allocation16 + $0x18c] sm:$0xff]
    %v1573 = vld [vmem:[#allocation16 + $0x194] sm:$0xf]
    %v1574 = vld [vmem:[#allocation16 + $0x198] sm:$0xff]
    %v1575 = vld [vmem:[#allocation16 + $0x1a0] sm:$0xf]
    %v1576 = vld [vmem:[#allocation16 + $0x1a4] sm:$0xff]
    %v1577 = vld [vmem:[#allocation16 + $0x1ac] sm:$0xf]
    %v1578 = vld [vmem:[#allocation16 + $0x1b0] sm:$0xff]
    %v1579 = vld [vmem:[#allocation16 + $0x1b8] sm:$0xf]
    %v1580 = vld [vmem:[#allocation16 + $0x1bc] sm:$0xff]
    %v1581 = vld [vmem:[#allocation16 + $0x1c4] sm:$0xf]
    %v1582 = vld [vmem:[#allocation16 + $0x1c8] sm:$0xff]
    %v1583 = vld [vmem:[#allocation16 + $0x1d0] sm:$0xf]
    %v1584 = vld [vmem:[#allocation16 + $0x1d4] sm:$0xff]
    %v1585 = vld [vmem:[#allocation16 + $0x1dc] sm:$0xf]
    %v1586 = vld [vmem:[#allocation16 + $0x1e0] sm:$0xff]
    %v1587 = vld [vmem:[#allocation16 + $0x1e8] sm:$0xf]
    %v1588 = vld [vmem:[#allocation16 + $0x1ec] sm:$0xff]
    %v1589 = vld [vmem:[#allocation16 + $0x1f4] sm:$0xf]
    %v1590 = vld [vmem:[#allocation16 + $0x1f8] sm:$0xff]
    %v1591 = vld [vmem:[#allocation16 + $0x200] sm:$0xf]
    %v1592 = vld [vmem:[#allocation16 + $0x204] sm:$0xff]
    %v1593 = vld [vmem:[#allocation16 + $0x20c] sm:$0xf]
    %v1594 = vld [vmem:[#allocation16 + $0x210] sm:$0xff]
    %v1595 = vld [vmem:[#allocation16 + $0x218] sm:$0xf]
    %v1596 = vld [vmem:[#allocation16 + $0x21c] sm:$0xff]
    %v1597 = vld [vmem:[#allocation16 + $0x224] sm:$0xf]
    %v1598 = vld [vmem:[#allocation16 + $0x228] sm:$0xff]
    %v1599 = vld [vmem:[#allocation16 + $0x230] sm:$0xf]
    %v1600 = vld [vmem:[#allocation16 + $0x234] sm:$0xff]
    %v1601 = vld [vmem:[#allocation16 + $0x23c] sm:$0xf]
    %v1602 = vld [vmem:[#allocation16 + $0x240] sm:$0xff]
    %v1603 = vld [vmem:[#allocation16 + $0x248] sm:$0xf]
    %v1604 = vld [vmem:[#allocation16 + $0x24c] sm:$0xff]
    %v1605 = vld [vmem:[#allocation16 + $0x254] sm:$0xf]
    %v1606 = vld [vmem:[#allocation16 + $0x258] sm:$0xff]
    %v1607 = vld [vmem:[#allocation16 + $0x260] sm:$0xf]
    %v1608 = vld [vmem:[#allocation16 + $0x264] sm:$0xff]
    %v1609 = vld [vmem:[#allocation16 + $0x26c] sm:$0xf]
    %v1610 = vld [vmem:[#allocation16 + $0x270] sm:$0xff]
    %v1611 = vld [vmem:[#allocation16 + $0x278] sm:$0xf]
    %v1612 = vld [vmem:[#allocation16 + $0x27c] sm:$0xff]
    %v1613 = vld [vmem:[#allocation16 + $0x284] sm:$0xf]
    %v1614 = vld [vmem:[#allocation16 + $0x288] sm:$0xff]
    %v1615 = vld [vmem:[#allocation16 + $0x290] sm:$0xf]
    %v1616 = vld [vmem:[#allocation16 + $0x294] sm:$0xff]
    %v1617 = vld [vmem:[#allocation16 + $0x29c] sm:$0xf]
    %v1618 = vld [vmem:[#allocation16 + $0x2a0] sm:$0xff]
    %v1619 = vld [vmem:[#allocation16 + $0x2a8] sm:$0xf]
    %v1620 = vld [vmem:[#allocation16 + $0x2ac] sm:$0xff]
    %v1621 = vld [vmem:[#allocation16 + $0x2b4] sm:$0xf]
    %v1622 = vld [vmem:[#allocation16 + $0x2b8] sm:$0xff]
    %v1623 = vld [vmem:[#allocation16 + $0x2c0] sm:$0xf]
    %v1624 = vld [vmem:[#allocation16 + $0x2c4] sm:$0xff]
    %v1625 = vld [vmem:[#allocation16 + $0x2cc] sm:$0xf]
    %v1626 = vld [vmem:[#allocation16 + $0x2d0] sm:$0xff]
    %v1627 = vld [vmem:[#allocation16 + $0x2d8] sm:$0xf]
    %v1628 = vld [vmem:[#allocation16 + $0x2dc] sm:$0xff]
    %v1629 = vld [vmem:[#allocation16 + $0x2e4] sm:$0xf]
    %v1630 = vld [vmem:[#allocation16 + $0x2e8] sm:$0xff]
    %v1631 = vld [vmem:[#allocation16 + $0x2f0] sm:$0xf]
    %v1632 = vld [vmem:[#allocation16 + $0x2f4] sm:$0xff]
    %v1633 = vld [vmem:[#allocation16 + $0x2fc] sm:$0xf]
    %v1634 = vld [vmem:[#allocation16 + $0x300] sm:$0xff]
    %v1635 = vld [vmem:[#allocation16 + $0x308] sm:$0xf]
    %v1636 = vld [vmem:[#allocation16 + $0x30c] sm:$0xff]
    %v1637 = vld [vmem:[#allocation16 + $0x314] sm:$0xf]
    %v1638 = vld [vmem:[#allocation16 + $0x318] sm:$0xff]
    %v1639 = vld [vmem:[#allocation16 + $0x320] sm:$0xf]
    %v1640 = vld [vmem:[#allocation16 + $0x324] sm:$0xff]
    %v1641 = vld [vmem:[#allocation16 + $0x32c] sm:$0xf]
    %v1642 = vld [vmem:[#allocation16 + $0x330] sm:$0xff]
    %v1643 = vld [vmem:[#allocation16 + $0x338] sm:$0xf]
    %v1644 = vld [vmem:[#allocation16 + $0x33c] sm:$0xff]
    %v1645 = vld [vmem:[#allocation16 + $0x344] sm:$0xf]
    %v1646 = vld [vmem:[#allocation16 + $0x348] sm:$0xff]
    %v1647 = vld [vmem:[#allocation16 + $0x350] sm:$0xf]
    %v1648 = vld [vmem:[#allocation16 + $0x354] sm:$0xff]
    %v1649 = vld [vmem:[#allocation16 + $0x35c] sm:$0xf]
    %v1650 = vld [vmem:[#allocation16 + $0x360] sm:$0xff]
    %v1651 = vld [vmem:[#allocation16 + $0x368] sm:$0xf]
    %v1652 = vld [vmem:[#allocation16 + $0x36c] sm:$0xff]
    %v1653 = vld [vmem:[#allocation16 + $0x374] sm:$0xf]
    %v1654 = vld [vmem:[#allocation16 + $0x378] sm:$0xff]
    %v1655 = vld [vmem:[#allocation16 + $0x380] sm:$0xf]
    %v1656 = vld [vmem:[#allocation16 + $0x384] sm:$0xff]
    %v1657 = vld [vmem:[#allocation16 + $0x38c] sm:$0xf]
    %v1658 = vld [vmem:[#allocation16 + $0x390] sm:$0xff]
    %v1659 = vld [vmem:[#allocation16 + $0x398] sm:$0xf]
    %v1660 = vld [vmem:[#allocation16 + $0x39c] sm:$0xff]
    %v1661 = vld [vmem:[#allocation16 + $0x3a4] sm:$0xf]
    %v1662 = vld [vmem:[#allocation16 + $0x3a8] sm:$0xff]
    %v1663 = vld [vmem:[#allocation16 + $0x3b0] sm:$0xf]
    %v1664 = vld [vmem:[#allocation16 + $0x3b4] sm:$0xff]
    %v1665 = vld [vmem:[#allocation16 + $0x3bc] sm:$0xf]
    %v1666 = vld [vmem:[#allocation16 + $0x3c0] sm:$0xff]
    %v1667 = vld [vmem:[#allocation16 + $0x3c8] sm:$0xf]
    %v1668 = vld [vmem:[#allocation16 + $0x3cc] sm:$0xff]
    %v1669 = vld [vmem:[#allocation16 + $0x3d4] sm:$0xf]
    %v1670 = vld [vmem:[#allocation16 + $0x3d8] sm:$0xff]
    %v1671 = vld [vmem:[#allocation16 + $0x3e0] sm:$0xf]
    %v1672 = vld [vmem:[#allocation16 + $0x3e4] sm:$0xff]
    %v1673 = vld [vmem:[#allocation16 + $0x3ec] sm:$0xf]
    %v1674 = vld [vmem:[#allocation16 + $0x3f0] sm:$0xff]
    %v1675 = vld [vmem:[#allocation16 + $0x3f8] sm:$0xf]
    %v1676 = vld [vmem:[#allocation16 + $0x3fc] sm:$0xff]
    %v1677 = vld [vmem:[#allocation16 + $0x404] sm:$0xf]
    %v1678 = vld [vmem:[#allocation16 + $0x408] sm:$0xff]
    %v1679 = vld [vmem:[#allocation16 + $0x410] sm:$0xf]
    %v1680 = vld [vmem:[#allocation16 + $0x414] sm:$0xff]
    %v1681 = vld [vmem:[#allocation16 + $0x41c] sm:$0xf]
    %v1682 = vld [vmem:[#allocation16 + $0x420] sm:$0xff]
    %v1683 = vld [vmem:[#allocation16 + $0x428] sm:$0xf]
    %v1684 = vld [vmem:[#allocation16 + $0x42c] sm:$0xff]
    %v1685 = vld [vmem:[#allocation16 + $0x434] sm:$0xf]
    %v1686 = vld [vmem:[#allocation16 + $0x438] sm:$0xff]
    %v1687 = vld [vmem:[#allocation16 + $0x440] sm:$0xf]
    %v1688 = vld [vmem:[#allocation16 + $0x444] sm:$0xff]
    %v1689 = vld [vmem:[#allocation16 + $0x44c] sm:$0xf]
    %v1690 = vld [vmem:[#allocation16 + $0x450] sm:$0xff]
    %v1691 = vld [vmem:[#allocation16 + $0x458] sm:$0xf]
    %v1692 = vld [vmem:[#allocation16 + $0x45c] sm:$0xff]
    %v1693 = vld [vmem:[#allocation16 + $0x464] sm:$0xf]
    %v1694 = vld [vmem:[#allocation16 + $0x468] sm:$0xff]
    %v1695 = vld [vmem:[#allocation16 + $0x470] sm:$0xf]
    %v1696 = vld [vmem:[#allocation16 + $0x474] sm:$0xff]
    %v1697 = vld [vmem:[#allocation16 + $0x47c] sm:$0xf]
    %v1698 = vld [vmem:[#allocation16 + $0x480] sm:$0xff]
    %v1699 = vld [vmem:[#allocation16 + $0x488] sm:$0xf]
    %v1700 = vld [vmem:[#allocation16 + $0x48c] sm:$0xff]
    %v1701 = vld [vmem:[#allocation16 + $0x494] sm:$0xf]
    %v1702 = vld [vmem:[#allocation16 + $0x498] sm:$0xff]
    %v1703 = vld [vmem:[#allocation16 + $0x4a0] sm:$0xf]
    %v1704 = vld [vmem:[#allocation16 + $0x4a4] sm:$0xff]
    %v1705 = vld [vmem:[#allocation16 + $0x4ac] sm:$0xf]
    %v1706 = vld [vmem:[#allocation16 + $0x4b0] sm:$0xff]
    %v1707 = vld [vmem:[#allocation16 + $0x4b8] sm:$0xf]
    %v1708 = vld [vmem:[#allocation16 + $0x4bc] sm:$0xff]
    %v1709 = vld [vmem:[#allocation16 + $0x4c4] sm:$0xf]
    %v1710 = vld [vmem:[#allocation16 + $0x4c8] sm:$0xff]
    %v1711 = vld [vmem:[#allocation16 + $0x4d0] sm:$0xf]
    %v1712 = vld [vmem:[#allocation16 + $0x4d4] sm:$0xff]
    %v1713 = vld [vmem:[#allocation16 + $0x4dc] sm:$0xf]
    %v1714 = vld [vmem:[#allocation16 + $0x4e0] sm:$0xff]
    %v1715 = vld [vmem:[#allocation16 + $0x4e8] sm:$0xf]
    %v1716 = vld [vmem:[#allocation16 + $0x4ec] sm:$0xff]
    %v1717 = vld [vmem:[#allocation16 + $0x4f4] sm:$0xf]
    %v1718 = vld [vmem:[#allocation16 + $0x4f8] sm:$0xff]
    %v1719 = vld [vmem:[#allocation16 + $0x500] sm:$0xf]
    %v1720 = vld [vmem:[#allocation16 + $0x504] sm:$0xff]
    %v1721 = vld [vmem:[#allocation16 + $0x50c] sm:$0xf]
    %v1722 = vld [vmem:[#allocation16 + $0x510] sm:$0xff]
    %v1723 = vld [vmem:[#allocation16 + $0x518] sm:$0xf]
    %v1724 = vld [vmem:[#allocation16 + $0x51c] sm:$0xff]
    %v1725 = vld [vmem:[#allocation16 + $0x524] sm:$0xf]
    %v1726 = vld [vmem:[#allocation16 + $0x528] sm:$0xff]
    %v1727 = vld [vmem:[#allocation16 + $0x530] sm:$0xf]
    %v1728 = vld [vmem:[#allocation16 + $0x534] sm:$0xff]
    %v1729 = vld [vmem:[#allocation16 + $0x53c] sm:$0xf]
    %v1730 = vld [vmem:[#allocation16 + $0x540] sm:$0xff]
    %v1731 = vld [vmem:[#allocation16 + $0x548] sm:$0xf]
    %v1732 = vld [vmem:[#allocation16 + $0x54c] sm:$0xff]
    %v1733 = vld [vmem:[#allocation16 + $0x554] sm:$0xf]
    %v1734 = vld [vmem:[#allocation16 + $0x558] sm:$0xff]
    %v1735 = vld [vmem:[#allocation16 + $0x560] sm:$0xf]
    %v1736 = vld [vmem:[#allocation16 + $0x564] sm:$0xff]
    %v1737 = vld [vmem:[#allocation16 + $0x56c] sm:$0xf]
    %v1738 = vld [vmem:[#allocation16 + $0x570] sm:$0xff]
    %v1739 = vld [vmem:[#allocation16 + $0x578] sm:$0xf]
    %v1740 = vld [vmem:[#allocation16 + $0x57c] sm:$0xff]
    %v1741 = vld [vmem:[#allocation16 + $0x584] sm:$0xf]
    %v1742 = vld [vmem:[#allocation16 + $0x588] sm:$0xff]
    %v1743 = vld [vmem:[#allocation16 + $0x590] sm:$0xf]
    %v1744 = vld [vmem:[#allocation16 + $0x594] sm:$0xff]
    %v1745 = vld [vmem:[#allocation16 + $0x59c] sm:$0xf]
    %v1746 = vld [vmem:[#allocation16 + $0x5a0] sm:$0xff]
    %v1747 = vld [vmem:[#allocation16 + $0x5a8] sm:$0xf]
    %v1748 = vld [vmem:[#allocation16 + $0x5ac] sm:$0xff]
    %v1749 = vld [vmem:[#allocation16 + $0x5b4] sm:$0xf]
    %v1750 = vld [vmem:[#allocation16 + $0x5b8] sm:$0xff]
    %v1751 = vld [vmem:[#allocation16 + $0x5c0] sm:$0xf]
    %v1752 = vld [vmem:[#allocation16 + $0x5c4] sm:$0xff]
    %v1753 = vld [vmem:[#allocation16 + $0x5cc] sm:$0xf]
    %v1754 = vld [vmem:[#allocation16 + $0x5d0] sm:$0xff]
    %v1755 = vld [vmem:[#allocation16 + $0x5d8] sm:$0xf]
    %v1756 = vld [vmem:[#allocation16 + $0x5dc] sm:$0xff]
    %v1757 = vld [vmem:[#allocation16 + $0x5e4] sm:$0xf]
    %v1758 = vld [vmem:[#allocation16 + $0x5e8] sm:$0xff]
    %v1759 = vld [vmem:[#allocation16 + $0x5f0] sm:$0xf]
    %v1760 = vld [vmem:[#allocation16 + $0x5f4] sm:$0xff]
    %v1761 = vld [vmem:[#allocation16 + $0x5fc] sm:$0xf]
    %v1762 = vld [vmem:[#allocation16 + $0x600] sm:$0xff]
    %v1763 = vld [vmem:[#allocation16 + $0x608] sm:$0xf]
    %v1764 = vld [vmem:[#allocation16 + $0x60c] sm:$0xff]
    %v1765 = vld [vmem:[#allocation16 + $0x614] sm:$0xf]
    %v1766 = vld [vmem:[#allocation16 + $0x618] sm:$0xff]
    %v1767 = vld [vmem:[#allocation16 + $0x620] sm:$0xf]
    %v1768 = vld [vmem:[#allocation16 + $0x624] sm:$0xff]
    %v1769 = vld [vmem:[#allocation16 + $0x62c] sm:$0xf]
    %v1770 = vld [vmem:[#allocation16 + $0x630] sm:$0xff]
    %v1771 = vld [vmem:[#allocation16 + $0x638] sm:$0xf]
    %v1772 = vld [vmem:[#allocation16 + $0x63c] sm:$0xff]
    %v1773 = vld [vmem:[#allocation16 + $0x644] sm:$0xf]
    %v1774 = vld [vmem:[#allocation16 + $0x648] sm:$0xff]
    %v1775 = vld [vmem:[#allocation16 + $0x650] sm:$0xf]
    %v1776 = vld [vmem:[#allocation16 + $0x654] sm:$0xff]
    %v1777 = vld [vmem:[#allocation16 + $0x65c] sm:$0xf]
    %v1778 = vld [vmem:[#allocation16 + $0x660] sm:$0xff]
    %v1779 = vld [vmem:[#allocation16 + $0x668] sm:$0xf]
    %v1780 = vld [vmem:[#allocation16 + $0x66c] sm:$0xff]
    %v1781 = vld [vmem:[#allocation16 + $0x674] sm:$0xf]
    %v1782 = vld [vmem:[#allocation16 + $0x678] sm:$0xff]
    %v1783 = vld [vmem:[#allocation16 + $0x680] sm:$0xf]
    %v1784 = vld [vmem:[#allocation16 + $0x684] sm:$0xff]
    %v1785 = vld [vmem:[#allocation16 + $0x68c] sm:$0xf]
    %v1786 = vld [vmem:[#allocation16 + $0x690] sm:$0xff]
    %v1787 = vld [vmem:[#allocation16 + $0x698] sm:$0xf]
    %v1788 = vld [vmem:[#allocation16 + $0x69c] sm:$0xff]
    %v1789 = vld [vmem:[#allocation16 + $0x6a4] sm:$0xf]
    %v1790 = vld [vmem:[#allocation16 + $0x6a8] sm:$0xff]
    %v1791 = vld [vmem:[#allocation16 + $0x6b0] sm:$0xf]
    %v1792 = vld [vmem:[#allocation16 + $0x6b4] sm:$0xff]
    %v1793 = vld [vmem:[#allocation16 + $0x6bc] sm:$0xf]
    %v1794 = vld [vmem:[#allocation16 + $0x6c0] sm:$0xff]
    %v1795 = vld [vmem:[#allocation16 + $0x6c8] sm:$0xf]
    %v1796 = vld [vmem:[#allocation16 + $0x6cc] sm:$0xff]
    %v1797 = vld [vmem:[#allocation16 + $0x6d4] sm:$0xf]
    %v1798 = vld [vmem:[#allocation16 + $0x6d8] sm:$0xff]
    %v1799 = vld [vmem:[#allocation16 + $0x6e0] sm:$0xf]
    %v1800 = vld [vmem:[#allocation16 + $0x6e4] sm:$0xff]
    %v1801 = vld [vmem:[#allocation16 + $0x6ec] sm:$0xf]
    %v1802 = vld [vmem:[#allocation16 + $0x6f0] sm:$0xff]
    %v1803 = vld [vmem:[#allocation16 + $0x6f8] sm:$0xf]
    %v1804 = vld [vmem:[#allocation16 + $0x6fc] sm:$0xff]
    %v1805 = vld [vmem:[#allocation16 + $0x704] sm:$0xf]
    %v1806 = vld [vmem:[#allocation16 + $0x708] sm:$0xff]
    %v1807 = vld [vmem:[#allocation16 + $0x710] sm:$0xf]
    %v1808 = vld [vmem:[#allocation16 + $0x714] sm:$0xff]
    %v1809 = vld [vmem:[#allocation16 + $0x71c] sm:$0xf]
    %v1810 = vld [vmem:[#allocation16 + $0x720] sm:$0xff]
    %v1811 = vld [vmem:[#allocation16 + $0x728] sm:$0xf]
    %v1812 = vld [vmem:[#allocation16 + $0x72c] sm:$0xff]
    %v1813 = vld [vmem:[#allocation16 + $0x734] sm:$0xf]
    %v1814 = vld [vmem:[#allocation16 + $0x738] sm:$0xff]
    %v1815 = vld [vmem:[#allocation16 + $0x740] sm:$0xf]
    %v1816 = vld [vmem:[#allocation16 + $0x744] sm:$0xff]
    %v1817 = vld [vmem:[#allocation16 + $0x74c] sm:$0xf]
    %v1818 = vld [vmem:[#allocation16 + $0x750] sm:$0xff]
    %v1819 = vld [vmem:[#allocation16 + $0x758] sm:$0xf]
    %v1820 = vld [vmem:[#allocation16 + $0x75c] sm:$0xff]
    %v1821 = vld [vmem:[#allocation16 + $0x764] sm:$0xf]
    %v1822 = vld [vmem:[#allocation16 + $0x768] sm:$0xff]
    %v1823 = vld [vmem:[#allocation16 + $0x770] sm:$0xf]
    %v1824 = vld [vmem:[#allocation16 + $0x774] sm:$0xff]
    %v1825 = vld [vmem:[#allocation16 + $0x77c] sm:$0xf]
    %v1826 = vld [vmem:[#allocation16 + $0x780] sm:$0xff]
    %v1827 = vld [vmem:[#allocation16 + $0x788] sm:$0xf]
    %v1828 = vld [vmem:[#allocation16 + $0x78c] sm:$0xff]
    %v1829 = vld [vmem:[#allocation16 + $0x794] sm:$0xf]
    %v1830 = vld [vmem:[#allocation16 + $0x798] sm:$0xff]
    %v1831 = vld [vmem:[#allocation16 + $0x7a0] sm:$0xf]
    %v1832 = vld [vmem:[#allocation16 + $0x7a4] sm:$0xff]
    %v1833 = vld [vmem:[#allocation16 + $0x7ac] sm:$0xf]
    %v1834 = vld [vmem:[#allocation16 + $0x7b0] sm:$0xff]
    %v1835 = vld [vmem:[#allocation16 + $0x7b8] sm:$0xf]
    %v1836 = vld [vmem:[#allocation16 + $0x7bc] sm:$0xff]
    %v1837 = vld [vmem:[#allocation16 + $0x7c4] sm:$0xf]
    %v1838 = vld [vmem:[#allocation16 + $0x7c8] sm:$0xff]
    %v1839 = vld [vmem:[#allocation16 + $0x7d0] sm:$0xf]
    %v1840 = vld [vmem:[#allocation16 + $0x7d4] sm:$0xff]
    %v1841 = vld [vmem:[#allocation16 + $0x7dc] sm:$0xf]
    %v1842 = vld [vmem:[#allocation16 + $0x7e0] sm:$0xff]
    %v1843 = vld [vmem:[#allocation16 + $0x7e8] sm:$0xf]
    %v1844 = vld [vmem:[#allocation16 + $0x7ec] sm:$0xff]
    %v1845 = vld [vmem:[#allocation16 + $0x7f4] sm:$0xf]
    %v1846 = vld [vmem:[#allocation16 + $0x7f8] sm:$0xff]
    %v1847 = vld [vmem:[#allocation16 + $0x800] sm:$0xf]
    %v1848 = vld [vmem:[#allocation16 + $0x804] sm:$0xff]
    %v1849 = vld [vmem:[#allocation16 + $0x80c] sm:$0xf]
    %v1850 = vld [vmem:[#allocation16 + $0x810] sm:$0xff]
    %v1851 = vld [vmem:[#allocation16 + $0x818] sm:$0xf]
    %v1852 = vld [vmem:[#allocation16 + $0x81c] sm:$0xff]
    %v1853 = vld [vmem:[#allocation16 + $0x824] sm:$0xf]
    %v1854 = vld [vmem:[#allocation16 + $0x828] sm:$0xff]
    %v1855 = vld [vmem:[#allocation16 + $0x830] sm:$0xf]
    %v1856 = vld [vmem:[#allocation16 + $0x834] sm:$0xff]
    %v1857 = vld [vmem:[#allocation16 + $0x83c] sm:$0xf]
    %v1858 = vld [vmem:[#allocation16 + $0x840] sm:$0xff]
    %v1859 = vld [vmem:[#allocation16 + $0x848] sm:$0xf]
    %v1860 = vld [vmem:[#allocation16 + $0x84c] sm:$0xff]
    %v1861 = vld [vmem:[#allocation16 + $0x854] sm:$0xf]
    %v1862 = vld [vmem:[#allocation16 + $0x858] sm:$0xff]
    %v1863 = vld [vmem:[#allocation16 + $0x860] sm:$0xf]
    %v1864 = vld [vmem:[#allocation16 + $0x864] sm:$0xff]
    %v1865 = vld [vmem:[#allocation16 + $0x86c] sm:$0xf]
    %v1866 = vld [vmem:[#allocation16 + $0x870] sm:$0xff]
    %v1867 = vld [vmem:[#allocation16 + $0x878] sm:$0xf]
    %v1868 = vld [vmem:[#allocation16 + $0x87c] sm:$0xff]
    %v1869 = vld [vmem:[#allocation16 + $0x884] sm:$0xf]
    %v1870 = vld [vmem:[#allocation16 + $0x888] sm:$0xff]
    %v1871 = vld [vmem:[#allocation16 + $0x890] sm:$0xf]
    %v1872 = vld [vmem:[#allocation16 + $0x894] sm:$0xff]
    %v1873 = vld [vmem:[#allocation16 + $0x89c] sm:$0xf]
    %v1874 = vld [vmem:[#allocation16 + $0x8a0] sm:$0xff]
    %v1875 = vld [vmem:[#allocation16 + $0x8a8] sm:$0xf]
    %v1876 = vld [vmem:[#allocation16 + $0x8ac] sm:$0xff]
    %v1877 = vld [vmem:[#allocation16 + $0x8b4] sm:$0xf]
    %v1878 = vld [vmem:[#allocation16 + $0x8b8] sm:$0xff]
    %v1879 = vld [vmem:[#allocation16 + $0x8c0] sm:$0xf]
    %v1880 = vld [vmem:[#allocation16 + $0x8c4] sm:$0xff]
    %v1881 = vld [vmem:[#allocation16 + $0x8cc] sm:$0xf]
    %v1882 = vld [vmem:[#allocation16 + $0x8d0] sm:$0xff]
    %v1883 = vld [vmem:[#allocation16 + $0x8d8] sm:$0xf]
    %v1884 = vld [vmem:[#allocation16 + $0x8dc] sm:$0xff]
    %v1885 = vld [vmem:[#allocation16 + $0x8e4] sm:$0xf]
    %v1886 = vld [vmem:[#allocation16 + $0x8e8] sm:$0xff]
    %v1887 = vld [vmem:[#allocation16 + $0x8f0] sm:$0xf]
    %v1888 = vld [vmem:[#allocation16 + $0x8f4] sm:$0xff]
    %v1889 = vld [vmem:[#allocation16 + $0x8fc] sm:$0xf]
    %v1890 = vld [vmem:[#allocation17] sm:$0xff]
    %v1891 = vld [vmem:[#allocation17 + $0x8] sm:$0xff]
    %v1892 = vld [vmem:[#allocation17 + $0x10] sm:$0xff]
    %v1893 = vld [vmem:[#allocation17 + $0x18] sm:$0xff]
    %v1894 = vld [vmem:[#allocation17 + $0x20] sm:$0xff]
    %v1895 = vld [vmem:[#allocation17 + $0x28] sm:$0xff]
    %v1896 = vld [vmem:[#allocation17 + $0x30] sm:$0xff]
    %v1897 = vld [vmem:[#allocation17 + $0x38] sm:$0xff]
    %v1898 = vld [vmem:[#allocation17 + $0x40] sm:$0xff]
    %v1899 = vld [vmem:[#allocation17 + $0x48] sm:$0xff]
    %v1900 = vld [vmem:[#allocation17 + $0x50] sm:$0xff]
    %v1901 = vld [vmem:[#allocation17 + $0x58] sm:$0xff]
    %v1902 = vld [vmem:[#allocation17 + $0x60] sm:$0xff]
    %v1903 = vld [vmem:[#allocation17 + $0x68] sm:$0xff]
    %v1904 = vld [vmem:[#allocation17 + $0x70] sm:$0xff]
    %v1905 = vld [vmem:[#allocation17 + $0x78] sm:$0xff]
    %v1906 = vld [vmem:[#allocation17 + $0x80] sm:$0xff]
    %v1907 = vld [vmem:[#allocation17 + $0x88] sm:$0xff]
    %v1908 = vld [vmem:[#allocation17 + $0x90] sm:$0xff]
    %v1909 = vld [vmem:[#allocation17 + $0x98] sm:$0xff]
    %v1910 = vld [vmem:[#allocation17 + $0xa0] sm:$0xff]
    %v1911 = vld [vmem:[#allocation17 + $0xa8] sm:$0xff]
    %v1912 = vld [vmem:[#allocation17 + $0xb0] sm:$0xff]
    %v1913 = vld [vmem:[#allocation17 + $0xb8] sm:$0xff]
    %v1914 = vld [vmem:[#allocation17 + $0xc0] sm:$0xff]
    %v1915 = vld [vmem:[#allocation17 + $0xc8] sm:$0xff]
    %v1916 = vld [vmem:[#allocation17 + $0xd0] sm:$0xff]
    %v1917 = vld [vmem:[#allocation17 + $0xd8] sm:$0xff]
    %v1918 = vld [vmem:[#allocation17 + $0xe0] sm:$0xff]
    %v1919 = vld [vmem:[#allocation17 + $0xe8] sm:$0xff]
    %v1920 = vld [vmem:[#allocation17 + $0xf0] sm:$0xff]
    %v1921 = vld [vmem:[#allocation17 + $0xf8] sm:$0xff]
    %v1922 = vld [vmem:[#allocation17 + $0x100] sm:$0xff]
    %v1923 = vld [vmem:[#allocation17 + $0x108] sm:$0xff]
    %v1924 = vld [vmem:[#allocation17 + $0x110] sm:$0xff]
    %v1925 = vld [vmem:[#allocation17 + $0x118] sm:$0xff]
    %v1926 = vld [vmem:[#allocation17 + $0x120] sm:$0xff]
    %v1927 = vld [vmem:[#allocation17 + $0x128] sm:$0xff]
    %v1928 = vld [vmem:[#allocation17 + $0x130] sm:$0xff]
    %v1929 = vld [vmem:[#allocation17 + $0x138] sm:$0xff]
    %v1930 = vld [vmem:[#allocation17 + $0x140] sm:$0xff]
    %v1931 = vld [vmem:[#allocation17 + $0x148] sm:$0xff]
    %v1932 = vld [vmem:[#allocation17 + $0x150] sm:$0xff]
    %v1933 = vld [vmem:[#allocation17 + $0x158] sm:$0xff]
    %v1934 = vld [vmem:[#allocation17 + $0x160] sm:$0xff]
    %v1935 = vld [vmem:[#allocation17 + $0x168] sm:$0xff]
    %v1936 = vld [vmem:[#allocation17 + $0x170] sm:$0xff]
    %v1937 = vld [vmem:[#allocation17 + $0x178] sm:$0xff]
    %v1938 = vld [vmem:[#allocation17 + $0x180] sm:$0xff]
    %v1939 = vld [vmem:[#allocation17 + $0x188] sm:$0xff]
    %v1940 = vld [vmem:[#allocation17 + $0x190] sm:$0xff]
    %v1941 = vld [vmem:[#allocation17 + $0x198] sm:$0xff]
    %v1942 = vld [vmem:[#allocation17 + $0x1a0] sm:$0xff]
    %v1943 = vld [vmem:[#allocation17 + $0x1a8] sm:$0xff]
    %v1944 = vld [vmem:[#allocation17 + $0x1b0] sm:$0xff]
    %v1945 = vld [vmem:[#allocation17 + $0x1b8] sm:$0xff]
    %v1946 = vld [vmem:[#allocation17 + $0x1c0] sm:$0xff]
    %v1947 = vld [vmem:[#allocation17 + $0x1c8] sm:$0xff]
    %v1948 = vld [vmem:[#allocation17 + $0x1d0] sm:$0xff]
    %v1949 = vld [vmem:[#allocation17 + $0x1d8] sm:$0xff]
    %v1950 = vld [vmem:[#allocation17 + $0x1e0] sm:$0xff]
    %v1951 = vld [vmem:[#allocation17 + $0x1e8] sm:$0xff]
    %v1952 = vld [vmem:[#allocation17 + $0x1f0] sm:$0xff]
    %v1953 = vld [vmem:[#allocation17 + $0x1f8] sm:$0xff]
    %v1954 = vld [vmem:[#allocation17 + $0x200] sm:$0xff]
    %v1955 = vld [vmem:[#allocation17 + $0x208] sm:$0xff]
    %v1956 = vld [vmem:[#allocation17 + $0x210] sm:$0xff]
    %v1957 = vld [vmem:[#allocation17 + $0x218] sm:$0xff]
    %v1958 = vld [vmem:[#allocation17 + $0x220] sm:$0xff]
    %v1959 = vld [vmem:[#allocation17 + $0x228] sm:$0xff]
    %v1960 = vld [vmem:[#allocation17 + $0x230] sm:$0xff]
    %v1961 = vld [vmem:[#allocation17 + $0x238] sm:$0xff]
    %v1962 = vld [vmem:[#allocation17 + $0x240] sm:$0xff]
    %v1963 = vld [vmem:[#allocation17 + $0x248] sm:$0xff]
    %v1964 = vld [vmem:[#allocation17 + $0x250] sm:$0xff]
    %v1965 = vld [vmem:[#allocation17 + $0x258] sm:$0xff]
    %v1966 = vld [vmem:[#allocation17 + $0x260] sm:$0xff]
    %v1967 = vld [vmem:[#allocation17 + $0x268] sm:$0xff]
    %v1968 = vld [vmem:[#allocation17 + $0x270] sm:$0xff]
    %v1969 = vld [vmem:[#allocation17 + $0x278] sm:$0xff]
    %v1970 = vld [vmem:[#allocation17 + $0x280] sm:$0xff]
    %v1971 = vld [vmem:[#allocation17 + $0x288] sm:$0xff]
    %v1972 = vld [vmem:[#allocation17 + $0x290] sm:$0xff]
    %v1973 = vld [vmem:[#allocation17 + $0x298] sm:$0xff]
    %v1974 = vld [vmem:[#allocation17 + $0x2a0] sm:$0xff]
    %v1975 = vld [vmem:[#allocation17 + $0x2a8] sm:$0xff]
    %v1976 = vld [vmem:[#allocation17 + $0x2b0] sm:$0xff]
    %v1977 = vld [vmem:[#allocation17 + $0x2b8] sm:$0xff]
    %v1978 = vld [vmem:[#allocation17 + $0x2c0] sm:$0xff]
    %v1979 = vld [vmem:[#allocation17 + $0x2c8] sm:$0xff]
    %v1980 = vld [vmem:[#allocation17 + $0x2d0] sm:$0xff]
    %v1981 = vld [vmem:[#allocation17 + $0x2d8] sm:$0xff]
    %v1982 = vld [vmem:[#allocation17 + $0x2e0] sm:$0xff]
    %v1983 = vld [vmem:[#allocation17 + $0x2e8] sm:$0xff]
    %v1984 = vld [vmem:[#allocation17 + $0x2f0] sm:$0xff]
    %v1985 = vld [vmem:[#allocation17 + $0x2f8] sm:$0xff]
    %v1986 = vld [vmem:[#allocation17 + $0x300] sm:$0xff]
    %v1987 = vld [vmem:[#allocation17 + $0x308] sm:$0xff]
    %v1988 = vld [vmem:[#allocation17 + $0x310] sm:$0xff]
    %v1989 = vld [vmem:[#allocation17 + $0x318] sm:$0xff]
    %v1990 = vld [vmem:[#allocation17 + $0x320] sm:$0xff]
    %v1991 = vld [vmem:[#allocation17 + $0x328] sm:$0xff]
    %v1992 = vld [vmem:[#allocation17 + $0x330] sm:$0xff]
    %v1993 = vld [vmem:[#allocation17 + $0x338] sm:$0xff]
    %v1994 = vld [vmem:[#allocation17 + $0x340] sm:$0xff]
    %v1995 = vld [vmem:[#allocation17 + $0x348] sm:$0xff]
    %v1996 = vld [vmem:[#allocation17 + $0x350] sm:$0xff]
    %v1997 = vld [vmem:[#allocation17 + $0x358] sm:$0xff]
    %v1998 = vld [vmem:[#allocation17 + $0x360] sm:$0xff]
    %v1999 = vld [vmem:[#allocation17 + $0x368] sm:$0xff]
    %v2000 = vld [vmem:[#allocation17 + $0x370] sm:$0xff]
    %v2001 = vld [vmem:[#allocation17 + $0x378] sm:$0xff]
    %v2002 = vld [vmem:[#allocation17 + $0x380] sm:$0xff]
    %v2003 = vld [vmem:[#allocation17 + $0x388] sm:$0xff]
    %v2004 = vld [vmem:[#allocation17 + $0x390] sm:$0xff]
    %v2005 = vld [vmem:[#allocation17 + $0x398] sm:$0xff]
    %v2006 = vld [vmem:[#allocation17 + $0x3a0] sm:$0xff]
    %v2007 = vld [vmem:[#allocation17 + $0x3a8] sm:$0xff]
    %v2008 = vld [vmem:[#allocation17 + $0x3b0] sm:$0xff]
    %v2009 = vld [vmem:[#allocation17 + $0x3b8] sm:$0xff]
    %v2010 = vld [vmem:[#allocation17 + $0x3c0] sm:$0xff]
    %v2011 = vld [vmem:[#allocation17 + $0x3c8] sm:$0xff]
    %v2012 = vld [vmem:[#allocation17 + $0x3d0] sm:$0xff]
    %v2013 = vld [vmem:[#allocation17 + $0x3d8] sm:$0xff]
    %v2014 = vld [vmem:[#allocation17 + $0x3e0] sm:$0xff]
    %v2015 = vld [vmem:[#allocation17 + $0x3e8] sm:$0xff]
    %v2016 = vld [vmem:[#allocation17 + $0x3f0] sm:$0xff]
    %v2017 = vld [vmem:[#allocation17 + $0x3f8] sm:$0xff]
    %v2018 = vld [vmem:[#allocation17 + $0x400] sm:$0xff]
    %v2019 = vld [vmem:[#allocation17 + $0x408] sm:$0xff]
    %v2020 = vld [vmem:[#allocation17 + $0x410] sm:$0xff]
    %v2021 = vld [vmem:[#allocation17 + $0x418] sm:$0xff]
    %v2022 = vld [vmem:[#allocation17 + $0x420] sm:$0xff]
    %v2023 = vld [vmem:[#allocation17 + $0x428] sm:$0xff]
    %v2024 = vld [vmem:[#allocation17 + $0x430] sm:$0xff]
    %v2025 = vld [vmem:[#allocation17 + $0x438] sm:$0xff]
    %v2026 = vld [vmem:[#allocation17 + $0x440] sm:$0xff]
    %v2027 = vld [vmem:[#allocation17 + $0x448] sm:$0xff]
    %v2028 = vld [vmem:[#allocation17 + $0x450] sm:$0xff]
    %v2029 = vld [vmem:[#allocation17 + $0x458] sm:$0xff]
    %v2030 = vld [vmem:[#allocation17 + $0x460] sm:$0xff]
    %v2031 = vld [vmem:[#allocation17 + $0x468] sm:$0xff]
    %v2032 = vld [vmem:[#allocation17 + $0x470] sm:$0xff]
    %v2033 = vld [vmem:[#allocation17 + $0x478] sm:$0xff]
    %v2034 = vld [vmem:[#allocation17 + $0x480] sm:$0xff]
    %v2035 = vld [vmem:[#allocation17 + $0x488] sm:$0xff]
    %v2036 = vld [vmem:[#allocation17 + $0x490] sm:$0xff]
    %v2037 = vld [vmem:[#allocation17 + $0x498] sm:$0xff]
    %v2038 = vld [vmem:[#allocation17 + $0x4a0] sm:$0xff]
    %v2039 = vld [vmem:[#allocation17 + $0x4a8] sm:$0xff]
    %v2040 = vld [vmem:[#allocation17 + $0x4b0] sm:$0xff]
    %v2041 = vld [vmem:[#allocation17 + $0x4b8] sm:$0xff]
    %v2042 = vld [vmem:[#allocation17 + $0x4c0] sm:$0xff]
    %v2043 = vld [vmem:[#allocation17 + $0x4c8] sm:$0xff]
    %v2044 = vld [vmem:[#allocation17 + $0x4d0] sm:$0xff]
    %v2045 = vld [vmem:[#allocation17 + $0x4d8] sm:$0xff]
    %v2046 = vld [vmem:[#allocation17 + $0x4e0] sm:$0xff]
    %v2047 = vld [vmem:[#allocation17 + $0x4e8] sm:$0xff]
    %v2048 = vld [vmem:[#allocation17 + $0x4f0] sm:$0xff]
    %v2049 = vld [vmem:[#allocation17 + $0x4f8] sm:$0xff]
    %v2050 = vld [vmem:[#allocation17 + $0x500] sm:$0xff]
    %v2051 = vld [vmem:[#allocation17 + $0x508] sm:$0xff]
    %v2052 = vld [vmem:[#allocation17 + $0x510] sm:$0xff]
    %v2053 = vld [vmem:[#allocation17 + $0x518] sm:$0xff]
    %v2054 = vld [vmem:[#allocation17 + $0x520] sm:$0xff]
    %v2055 = vld [vmem:[#allocation17 + $0x528] sm:$0xff]
    %v2056 = vld [vmem:[#allocation17 + $0x530] sm:$0xff]
    %v2057 = vld [vmem:[#allocation17 + $0x538] sm:$0xff]
    %v2058 = vld [vmem:[#allocation17 + $0x540] sm:$0xff]
    %v2059 = vld [vmem:[#allocation17 + $0x548] sm:$0xff]
    %v2060 = vld [vmem:[#allocation17 + $0x550] sm:$0xff]
    %v2061 = vld [vmem:[#allocation17 + $0x558] sm:$0xff]
    %v2062 = vld [vmem:[#allocation17 + $0x560] sm:$0xff]
    %v2063 = vld [vmem:[#allocation17 + $0x568] sm:$0xff]
    %v2064 = vld [vmem:[#allocation17 + $0x570] sm:$0xff]
    %v2065 = vld [vmem:[#allocation17 + $0x578] sm:$0xff]
    %v2066 = vld [vmem:[#allocation17 + $0x580] sm:$0xff]
    %v2067 = vld [vmem:[#allocation17 + $0x588] sm:$0xff]
    %v2068 = vld [vmem:[#allocation17 + $0x590] sm:$0xff]
    %v2069 = vld [vmem:[#allocation17 + $0x598] sm:$0xff]
    %v2070 = vld [vmem:[#allocation17 + $0x5a0] sm:$0xff]
    %v2071 = vld [vmem:[#allocation17 + $0x5a8] sm:$0xff]
    %v2072 = vld [vmem:[#allocation17 + $0x5b0] sm:$0xff]
    %v2073 = vld [vmem:[#allocation17 + $0x5b8] sm:$0xff]
    %v2074 = vld [vmem:[#allocation17 + $0x5c0] sm:$0xff]
    %v2075 = vld [vmem:[#allocation17 + $0x5c8] sm:$0xff]
    %v2076 = vld [vmem:[#allocation17 + $0x5d0] sm:$0xff]
    %v2077 = vld [vmem:[#allocation17 + $0x5d8] sm:$0xff]
    %v2078 = vld [vmem:[#allocation17 + $0x5e0] sm:$0xff]
    %v2079 = vld [vmem:[#allocation17 + $0x5e8] sm:$0xff]
    %v2080 = vld [vmem:[#allocation17 + $0x5f0] sm:$0xff]
    %v2081 = vld [vmem:[#allocation17 + $0x5f8] sm:$0xff]
    %v2082 = vld [vmem:[#allocation19] sm:$0xf]
    %v2083 = vld [vmem:[#allocation19 + $0x4] sm:$0xf]
    %v2084 = vld [vmem:[#allocation19 + $0x8] sm:$0xf]
    %v2085 = vld [vmem:[#allocation19 + $0xc] sm:$0xf]
    %v2086 = vld [vmem:[#allocation19 + $0x10] sm:$0xf]
    %v2087 = vld [vmem:[#allocation19 + $0x14] sm:$0xf]
    %v2088 = vld [vmem:[#allocation19 + $0x18] sm:$0xf]
    %v2089 = vld [vmem:[#allocation19 + $0x1c] sm:$0xf]
    %v2090 = vld [vmem:[#allocation19 + $0x20] sm:$0xf]
    %v2091 = vld [vmem:[#allocation19 + $0x24] sm:$0xf]
    %v2092 = vld [vmem:[#allocation19 + $0x28] sm:$0xf]
    %v2093 = vld [vmem:[#allocation19 + $0x2c] sm:$0xf]
    %v2094 = vld [vmem:[#allocation19 + $0x30] sm:$0xf]
    %v2095 = vld [vmem:[#allocation19 + $0x34] sm:$0xf]
    %v2096 = vld [vmem:[#allocation19 + $0x38] sm:$0xf]
    %v2097 = vld [vmem:[#allocation19 + $0x3c] sm:$0xf]
    %v2098 = vld [vmem:[#allocation19 + $0x40] sm:$0xf]
    %v2099 = vld [vmem:[#allocation19 + $0x44] sm:$0xf]
    %v2100 = vld [vmem:[#allocation19 + $0x48] sm:$0xf]
    %v2101 = vld [vmem:[#allocation19 + $0x4c] sm:$0xf]
    %v2102 = vld [vmem:[#allocation19 + $0x50] sm:$0xf]
    %v2103 = vld [vmem:[#allocation19 + $0x54] sm:$0xf]
    %v2104 = vld [vmem:[#allocation19 + $0x58] sm:$0xf]
    %v2105 = vld [vmem:[#allocation19 + $0x5c] sm:$0xf]
    %v2106 = vld [vmem:[#allocation19 + $0x60] sm:$0xf]
    %v2107 = vld [vmem:[#allocation19 + $0x64] sm:$0xf]
    %v2108 = vld [vmem:[#allocation19 + $0x68] sm:$0xf]
    %v2109 = vld [vmem:[#allocation19 + $0x6c] sm:$0xf]
    %v2110 = vld [vmem:[#allocation19 + $0x70] sm:$0xf]
    %v2111 = vld [vmem:[#allocation19 + $0x74] sm:$0xf]
    %v2112 = vld [vmem:[#allocation19 + $0x78] sm:$0xf]
    %v2113 = vld [vmem:[#allocation19 + $0x7c] sm:$0xf]
    %v2114 = vld [vmem:[#allocation19 + $0x80] sm:$0xf]
    %v2115 = vld [vmem:[#allocation19 + $0x84] sm:$0xf]
    %v2116 = vld [vmem:[#allocation19 + $0x88] sm:$0xf]
    %v2117 = vld [vmem:[#allocation19 + $0x8c] sm:$0xf]
    %v2118 = vld [vmem:[#allocation19 + $0x90] sm:$0xf]
    %v2119 = vld [vmem:[#allocation19 + $0x94] sm:$0xf]
    %v2120 = vld [vmem:[#allocation19 + $0x98] sm:$0xf]
    %v2121 = vld [vmem:[#allocation19 + $0x9c] sm:$0xf]
    %v2122 = vld [vmem:[#allocation19 + $0xa0] sm:$0xf]
    %v2123 = vld [vmem:[#allocation19 + $0xa4] sm:$0xf]
    %v2124 = vld [vmem:[#allocation19 + $0xa8] sm:$0xf]
    %v2125 = vld [vmem:[#allocation19 + $0xac] sm:$0xf]
    %v2126 = vld [vmem:[#allocation19 + $0xb0] sm:$0xf]
    %v2127 = vld [vmem:[#allocation19 + $0xb4] sm:$0xf]
    %v2128 = vld [vmem:[#allocation19 + $0xb8] sm:$0xf]
    %v2129 = vld [vmem:[#allocation19 + $0xbc] sm:$0xf]
    %v2130 = vld [vmem:[#allocation19 + $0xc0] sm:$0xf]
    %v2131 = vld [vmem:[#allocation19 + $0xc4] sm:$0xf]
    %v2132 = vld [vmem:[#allocation19 + $0xc8] sm:$0xf]
    %v2133 = vld [vmem:[#allocation19 + $0xcc] sm:$0xf]
    %v2134 = vld [vmem:[#allocation19 + $0xd0] sm:$0xf]
    %v2135 = vld [vmem:[#allocation19 + $0xd4] sm:$0xf]
    %v2136 = vld [vmem:[#allocation19 + $0xd8] sm:$0xf]
    %v2137 = vld [vmem:[#allocation19 + $0xdc] sm:$0xf]
    %v2138 = vld [vmem:[#allocation19 + $0xe0] sm:$0xf]
    %v2139 = vld [vmem:[#allocation19 + $0xe4] sm:$0xf]
    %v2140 = vld [vmem:[#allocation19 + $0xe8] sm:$0xf]
    %v2141 = vld [vmem:[#allocation19 + $0xec] sm:$0xf]
    %v2142 = vld [vmem:[#allocation19 + $0xf0] sm:$0xf]
    %v2143 = vld [vmem:[#allocation19 + $0xf4] sm:$0xf]
    %v2144 = vld [vmem:[#allocation19 + $0xf8] sm:$0xf]
    %v2145 = vld [vmem:[#allocation19 + $0xfc] sm:$0xf]
    %v2146 = vld [vmem:[#allocation19 + $0x100] sm:$0xf]
    %v2147 = vld [vmem:[#allocation19 + $0x104] sm:$0xf]
    %v2148 = vld [vmem:[#allocation19 + $0x108] sm:$0xf]
    %v2149 = vld [vmem:[#allocation19 + $0x10c] sm:$0xf]
    %v2150 = vld [vmem:[#allocation19 + $0x110] sm:$0xf]
    %v2151 = vld [vmem:[#allocation19 + $0x114] sm:$0xf]
    %v2152 = vld [vmem:[#allocation19 + $0x118] sm:$0xf]
    %v2153 = vld [vmem:[#allocation19 + $0x11c] sm:$0xf]
    %v2154 = vld [vmem:[#allocation19 + $0x120] sm:$0xf]
    %v2155 = vld [vmem:[#allocation19 + $0x124] sm:$0xf]
    %v2156 = vld [vmem:[#allocation19 + $0x128] sm:$0xf]
    %v2157 = vld [vmem:[#allocation19 + $0x12c] sm:$0xf]
    %v2158 = vld [vmem:[#allocation19 + $0x130] sm:$0xf]
    %v2159 = vld [vmem:[#allocation19 + $0x134] sm:$0xf]
    %v2160 = vld [vmem:[#allocation19 + $0x138] sm:$0xf]
    %v2161 = vld [vmem:[#allocation19 + $0x13c] sm:$0xf]
    %v2162 = vld [vmem:[#allocation19 + $0x140] sm:$0xf]
    %v2163 = vld [vmem:[#allocation19 + $0x144] sm:$0xf]
    %v2164 = vld [vmem:[#allocation19 + $0x148] sm:$0xf]
    %v2165 = vld [vmem:[#allocation19 + $0x14c] sm:$0xf]
    %v2166 = vld [vmem:[#allocation19 + $0x150] sm:$0xf]
    %v2167 = vld [vmem:[#allocation19 + $0x154] sm:$0xf]
    %v2168 = vld [vmem:[#allocation19 + $0x158] sm:$0xf]
    %v2169 = vld [vmem:[#allocation19 + $0x15c] sm:$0xf]
    %v2170 = vld [vmem:[#allocation19 + $0x160] sm:$0xf]
    %v2171 = vld [vmem:[#allocation19 + $0x164] sm:$0xf]
    %v2172 = vld [vmem:[#allocation19 + $0x168] sm:$0xf]
    %v2173 = vld [vmem:[#allocation19 + $0x16c] sm:$0xf]
    %v2174 = vld [vmem:[#allocation19 + $0x170] sm:$0xf]
    %v2175 = vld [vmem:[#allocation19 + $0x174] sm:$0xf]
    %v2176 = vld [vmem:[#allocation19 + $0x178] sm:$0xf]
    %v2177 = vld [vmem:[#allocation19 + $0x17c] sm:$0xf]
    %v2178 = vld [vmem:[#allocation19 + $0x180] sm:$0xf]
    %v2179 = vld [vmem:[#allocation19 + $0x184] sm:$0xf]
    %v2180 = vld [vmem:[#allocation19 + $0x188] sm:$0xf]
    %v2181 = vld [vmem:[#allocation19 + $0x18c] sm:$0xf]
    %v2182 = vld [vmem:[#allocation19 + $0x190] sm:$0xf]
    %v2183 = vld [vmem:[#allocation19 + $0x194] sm:$0xf]
    %v2184 = vld [vmem:[#allocation19 + $0x198] sm:$0xf]
    %v2185 = vld [vmem:[#allocation19 + $0x19c] sm:$0xf]
    %v2186 = vld [vmem:[#allocation19 + $0x1a0] sm:$0xf]
    %v2187 = vld [vmem:[#allocation19 + $0x1a4] sm:$0xf]
    %v2188 = vld [vmem:[#allocation19 + $0x1a8] sm:$0xf]
    %v2189 = vld [vmem:[#allocation19 + $0x1ac] sm:$0xf]
    %v2190 = vld [vmem:[#allocation19 + $0x1b0] sm:$0xf]
    %v2191 = vld [vmem:[#allocation19 + $0x1b4] sm:$0xf]
    %v2192 = vld [vmem:[#allocation19 + $0x1b8] sm:$0xf]
    %v2193 = vld [vmem:[#allocation19 + $0x1bc] sm:$0xf]
    %v2194 = vld [vmem:[#allocation19 + $0x1c0] sm:$0xf]
    %v2195 = vld [vmem:[#allocation19 + $0x1c4] sm:$0xf]
    %v2196 = vld [vmem:[#allocation19 + $0x1c8] sm:$0xf]
    %v2197 = vld [vmem:[#allocation19 + $0x1cc] sm:$0xf]
    %v2198 = vld [vmem:[#allocation19 + $0x1d0] sm:$0xf]
    %v2199 = vld [vmem:[#allocation19 + $0x1d4] sm:$0xf]
    %v2200 = vld [vmem:[#allocation19 + $0x1d8] sm:$0xf]
    %v2201 = vld [vmem:[#allocation19 + $0x1dc] sm:$0xf]
    %v2202 = vld [vmem:[#allocation19 + $0x1e0] sm:$0xf]
    %v2203 = vld [vmem:[#allocation19 + $0x1e4] sm:$0xf]
    %v2204 = vld [vmem:[#allocation19 + $0x1e8] sm:$0xf]
    %v2205 = vld [vmem:[#allocation19 + $0x1ec] sm:$0xf]
    %v2206 = vld [vmem:[#allocation19 + $0x1f0] sm:$0xf]
    %v2207 = vld [vmem:[#allocation19 + $0x1f4] sm:$0xf]
    %v2208 = vld [vmem:[#allocation19 + $0x1f8] sm:$0xf]
    %v2209 = vld [vmem:[#allocation19 + $0x1fc] sm:$0xf]
    %v2210 = vld [vmem:[#allocation19 + $0x200] sm:$0xf]
    %v2211 = vld [vmem:[#allocation19 + $0x204] sm:$0xf]
    %v2212 = vld [vmem:[#allocation19 + $0x208] sm:$0xf]
    %v2213 = vld [vmem:[#allocation19 + $0x20c] sm:$0xf]
    %v2214 = vld [vmem:[#allocation19 + $0x210] sm:$0xf]
    %v2215 = vld [vmem:[#allocation19 + $0x214] sm:$0xf]
    %v2216 = vld [vmem:[#allocation19 + $0x218] sm:$0xf]
    %v2217 = vld [vmem:[#allocation19 + $0x21c] sm:$0xf]
    %v2218 = vld [vmem:[#allocation19 + $0x220] sm:$0xf]
    %v2219 = vld [vmem:[#allocation19 + $0x224] sm:$0xf]
    %v2220 = vld [vmem:[#allocation19 + $0x228] sm:$0xf]
    %v2221 = vld [vmem:[#allocation19 + $0x22c] sm:$0xf]
    %v2222 = vld [vmem:[#allocation19 + $0x230] sm:$0xf]
    %v2223 = vld [vmem:[#allocation19 + $0x234] sm:$0xf]
    %v2224 = vld [vmem:[#allocation19 + $0x238] sm:$0xf]
    %v2225 = vld [vmem:[#allocation19 + $0x23c] sm:$0xf]
    %v2226 = vld [vmem:[#allocation19 + $0x240] sm:$0xf]
    %v2227 = vld [vmem:[#allocation19 + $0x244] sm:$0xf]
    %v2228 = vld [vmem:[#allocation19 + $0x248] sm:$0xf]
    %v2229 = vld [vmem:[#allocation19 + $0x24c] sm:$0xf]
    %v2230 = vld [vmem:[#allocation19 + $0x250] sm:$0xf]
    %v2231 = vld [vmem:[#allocation19 + $0x254] sm:$0xf]
    %v2232 = vld [vmem:[#allocation19 + $0x258] sm:$0xf]
    %v2233 = vld [vmem:[#allocation19 + $0x25c] sm:$0xf]
    %v2234 = vld [vmem:[#allocation19 + $0x260] sm:$0xf]
    %v2235 = vld [vmem:[#allocation19 + $0x264] sm:$0xf]
    %v2236 = vld [vmem:[#allocation19 + $0x268] sm:$0xf]
    %v2237 = vld [vmem:[#allocation19 + $0x26c] sm:$0xf]
    %v2238 = vld [vmem:[#allocation19 + $0x270] sm:$0xf]
    %v2239 = vld [vmem:[#allocation19 + $0x274] sm:$0xf]
    %v2240 = vld [vmem:[#allocation19 + $0x278] sm:$0xf]
    %v2241 = vld [vmem:[#allocation19 + $0x27c] sm:$0xf]
    %v2242 = vld [vmem:[#allocation19 + $0x280] sm:$0xf]
    %v2243 = vld [vmem:[#allocation19 + $0x284] sm:$0xf]
    %v2244 = vld [vmem:[#allocation19 + $0x288] sm:$0xf]
    %v2245 = vld [vmem:[#allocation19 + $0x28c] sm:$0xf]
    %v2246 = vld [vmem:[#allocation19 + $0x290] sm:$0xf]
    %v2247 = vld [vmem:[#allocation19 + $0x294] sm:$0xf]
    %v2248 = vld [vmem:[#allocation19 + $0x298] sm:$0xf]
    %v2249 = vld [vmem:[#allocation19 + $0x29c] sm:$0xf]
    %v2250 = vld [vmem:[#allocation19 + $0x2a0] sm:$0xf]
    %v2251 = vld [vmem:[#allocation19 + $0x2a4] sm:$0xf]
    %v2252 = vld [vmem:[#allocation19 + $0x2a8] sm:$0xf]
    %v2253 = vld [vmem:[#allocation19 + $0x2ac] sm:$0xf]
    %v2254 = vld [vmem:[#allocation19 + $0x2b0] sm:$0xf]
    %v2255 = vld [vmem:[#allocation19 + $0x2b4] sm:$0xf]
    %v2256 = vld [vmem:[#allocation19 + $0x2b8] sm:$0xf]
    %v2257 = vld [vmem:[#allocation19 + $0x2bc] sm:$0xf]
    %v2258 = vld [vmem:[#allocation19 + $0x2c0] sm:$0xf]
    %v2259 = vld [vmem:[#allocation19 + $0x2c4] sm:$0xf]
    %v2260 = vld [vmem:[#allocation19 + $0x2c8] sm:$0xf]
    %v2261 = vld [vmem:[#allocation19 + $0x2cc] sm:$0xf]
    %v2262 = vld [vmem:[#allocation19 + $0x2d0] sm:$0xf]
    %v2263 = vld [vmem:[#allocation19 + $0x2d4] sm:$0xf]
    %v2264 = vld [vmem:[#allocation19 + $0x2d8] sm:$0xf]
    %v2265 = vld [vmem:[#allocation19 + $0x2dc] sm:$0xf]
    %v2266 = vld [vmem:[#allocation19 + $0x2e0] sm:$0xf]
    %v2267 = vld [vmem:[#allocation19 + $0x2e4] sm:$0xf]
    %v2268 = vld [vmem:[#allocation19 + $0x2e8] sm:$0xf]
    %v2269 = vld [vmem:[#allocation19 + $0x2ec] sm:$0xf]
    %v2270 = vld [vmem:[#allocation19 + $0x2f0] sm:$0xf]
    %v2271 = vld [vmem:[#allocation19 + $0x2f4] sm:$0xf]
    %v2272 = vld [vmem:[#allocation19 + $0x2f8] sm:$0xf]
    %v2273 = vld [vmem:[#allocation19 + $0x2fc] sm:$0xf]
    %v2274 = vld [vmem:[#allocation20] sm:$0x7]
    %2275 = vmatprep.subr.mxu0 0.0
    %2276 = vmatpush1.msra.mxu0 0.0
    %2277 = vmatprep.subr.mxu0 0.0
    %2278 = vmatpush1.msra.mxu0 0.0
    %2279 = vmatprep.subr.mxu0 0.0
    %2280 = vmatpush1.msra.mxu0 0.0
    %2281 = vmatprep.subr.mxu0 0.0
    %2282 = vmatpush1.msra.mxu0 0.0
    %2283 = vmatprep.subr.mxu0 0.0
    %2284 = vmatpush1.msra.mxu0 0.0
    %2285 = vmatprep.subr.mxu0 0.0
    %2286 = vmatpush1.msra.mxu0 0.0
    %2287 = vmatprep.subr.mxu0 0.0
    %2288 = vmatpush1.msra.mxu0 0.0
    %2289 = vmatprep.subr.mxu0 0.0
    %2290 = vmatpush1.msra.mxu0 0.0
    %2291 = vmatprep.subr.mxu0 0.0
    %2292 = vmatpush1.msra.mxu0 0.0
    %2293 = vmatprep.subr.mxu0 0.0
    %2294 = vmatpush1.msra.mxu0 0.0
    %2295 = vmatprep.subr.mxu0 0.0
    %2296 = vmatpush1.msra.mxu0 0.0
    %2297 = vmatprep.subr.mxu0 0.0
    %2298 = vmatpush1.msra.mxu0 0.0
    %2299 = vmatprep.subr.mxu0 0.0
    %2300 = vmatpush1.msra.mxu0 0.0
    %2301 = vmatprep.subr.mxu0 0.0
    %2302 = vmatpush1.msra.mxu0 0.0
    %2303 = vmatprep.subr.mxu0 0.0
    %2304 = vmatpush1.msra.mxu0 0.0
    %2305 = vmatprep.subr.mxu0 %v1495
    %2306 = vmatpush1.msra.mxu0 %v1494
    %2307 = vmatprep.subr.mxu0 0.0
    %2308 = vmatpush2.msra.mxu0 0.0
    %2309 = vmatprep.subr.mxu0 0.0
    %2310 = vmatpush2.msra.mxu0 0.0
    %2311 = vmatprep.subr.mxu0 0.0
    %2312 = vmatpush2.msra.mxu0 0.0
    %2313 = vmatprep.subr.mxu0 0.0
    %2314 = vmatpush2.msra.mxu0 0.0
    %2315 = vmatprep.subr.mxu0 0.0
    %2316 = vmatpush2.msra.mxu0 0.0
    %2317 = vmatprep.subr.mxu0 0.0
    %2318 = vmatpush2.msra.mxu0 0.0
    %2319 = vmatprep.subr.mxu0 0.0
    %2320 = vmatpush2.msra.mxu0 0.0
    %2321 = vmatprep.subr.mxu0 0.0
    %2322 = vmatpush2.msra.mxu0 0.0
    %2323 = vmatprep.subr.mxu0 0.0
    %2324 = vmatpush2.msra.mxu0 0.0
    %2325 = vmatprep.subr.mxu0 0.0
    %2326 = vmatpush2.msra.mxu0 0.0
    %2327 = vmatprep.subr.mxu0 0.0
    %2328 = vmatpush2.msra.mxu0 0.0
    %2329 = vmatprep.subr.mxu0 0.0
    %2330 = vmatpush2.msra.mxu0 0.0
    %2331 = vmatprep.subr.mxu0 0.0
    %2332 = vmatpush2.msra.mxu0 0.0
    %2333 = vmatprep.subr.mxu0 0.0
    %2334 = vmatpush2.msra.mxu0 0.0
    %2335 = vmatprep.subr.mxu0 0.0
    %2336 = vmatpush2.msra.mxu0 0.0
    %2337 = vmatprep.subr.mxu0 0.0
    %2338 = vmatpush2.msra.mxu0 0.0
    %2339 = vmatprep.mubr.f32.mxu0 0.0
    %2340 = vmatmul.mubr.f32.gmra.mxu0 %v270
    %v2341 = vpop.f32.mrf.mxu0
    %v2342 = vadd.f32 0.0, %v2341
    %v2343 = vpop.f32.mrf.mxu0
    %v2344 = vadd.f32 0.0, %v2343
    %2345 = vdwg.mxu0
    %2346 = vmatprep.subr.mxu0 0.0
    %2347 = vmatpush1.msra.mxu0 0.0
    %2348 = vmatprep.subr.mxu0 0.0
    %2349 = vmatpush1.msra.mxu0 0.0
    %2350 = vmatprep.subr.mxu0 0.0
    %2351 = vmatpush1.msra.mxu0 0.0
    %2352 = vmatprep.subr.mxu0 0.0
    %2353 = vmatpush1.msra.mxu0 0.0
    %2354 = vmatprep.subr.mxu0 0.0
    %2355 = vmatpush1.msra.mxu0 0.0
    %2356 = vmatprep.subr.mxu0 0.0
    %2357 = vmatpush1.msra.mxu0 0.0
    %2358 = vmatprep.subr.mxu0 0.0
    %2359 = vmatpush1.msra.mxu0 0.0
    %2360 = vmatprep.subr.mxu0 0.0
    %2361 = vmatpush1.msra.mxu0 0.0
    %2362 = vmatprep.subr.mxu0 0.0
    %2363 = vmatpush1.msra.mxu0 0.0
    %2364 = vmatprep.subr.mxu0 0.0
    %2365 = vmatpush1.msra.mxu0 0.0
    %2366 = vmatprep.subr.mxu0 0.0
    %2367 = vmatpush1.msra.mxu0 0.0
    %2368 = vmatprep.subr.mxu0 0.0
    %2369 = vmatpush1.msra.mxu0 0.0
    %2370 = vmatprep.subr.mxu0 0.0
    %2371 = vmatpush1.msra.mxu0 0.0
    %2372 = vmatprep.subr.mxu0 0.0
    %2373 = vmatpush1.msra.mxu0 0.0
    %2374 = vmatprep.subr.mxu0 0.0
    %2375 = vmatpush1.msra.mxu0 0.0
    %2376 = vmatprep.subr.mxu0 %v1497
    %2377 = vmatpush1.msra.mxu0 %v1496
    %2378 = vmatprep.subr.mxu0 0.0
    %2379 = vmatpush2.msra.mxu0 0.0
    %2380 = vmatprep.subr.mxu0 0.0
    %2381 = vmatpush2.msra.mxu0 0.0
    %2382 = vmatprep.subr.mxu0 0.0
    %2383 = vmatpush2.msra.mxu0 0.0
    %2384 = vmatprep.subr.mxu0 0.0
    %2385 = vmatpush2.msra.mxu0 0.0
    %2386 = vmatprep.subr.mxu0 0.0
    %2387 = vmatpush2.msra.mxu0 0.0
    %2388 = vmatprep.subr.mxu0 0.0
    %2389 = vmatpush2.msra.mxu0 0.0
    %2390 = vmatprep.subr.mxu0 0.0
    %2391 = vmatpush2.msra.mxu0 0.0
    %2392 = vmatprep.subr.mxu0 0.0
    %2393 = vmatpush2.msra.mxu0 0.0
    %2394 = vmatprep.subr.mxu0 0.0
    %2395 = vmatpush2.msra.mxu0 0.0
    %2396 = vmatprep.subr.mxu0 0.0
    %2397 = vmatpush2.msra.mxu0 0.0
    %2398 = vmatprep.subr.mxu0 0.0
    %2399 = vmatpush2.msra.mxu0 0.0
    %2400 = vmatprep.subr.mxu0 0.0
    %2401 = vmatpush2.msra.mxu0 0.0
    %2402 = vmatprep.subr.mxu0 0.0
    %2403 = vmatpush2.msra.mxu0 0.0
    %2404 = vmatprep.subr.mxu0 0.0
    %2405 = vmatpush2.msra.mxu0 0.0
    %2406 = vmatprep.subr.mxu0 0.0
    %2407 = vmatpush2.msra.mxu0 0.0
    %2408 = vmatprep.subr.mxu0 0.0
    %2409 = vmatpush2.msra.mxu0 0.0
    %2410 = vmatprep.mubr.f32.mxu0 0.0
    %2411 = vmatmul.mubr.f32.gmra.mxu0 %v270
    %v2412 = vpop.f32.mrf.mxu0
    %v2413 = vadd.f32 0.0, %v2412
    %v2414 = vpop.f32.mrf.mxu0
    %v2415 = vadd.f32 0.0, %v2414
    %2416 = vdwg.mxu0
    %2417 = vmatprep.subr.mxu0 0.0
    %2418 = vmatpush1.msra.mxu0 0.0
    %2419 = vmatprep.subr.mxu0 0.0
    %2420 = vmatpush1.msra.mxu0 0.0
    %2421 = vmatprep.subr.mxu0 0.0
    %2422 = vmatpush1.msra.mxu0 0.0
    %2423 = vmatprep.subr.mxu0 0.0
    %2424 = vmatpush1.msra.mxu0 0.0
    %2425 = vmatprep.subr.mxu0 0.0
    %2426 = vmatpush1.msra.mxu0 0.0
    %2427 = vmatprep.subr.mxu0 0.0
    %2428 = vmatpush1.msra.mxu0 0.0
    %2429 = vmatprep.subr.mxu0 0.0
    %2430 = vmatpush1.msra.mxu0 0.0
    %2431 = vmatprep.subr.mxu0 0.0
    %2432 = vmatpush1.msra.mxu0 0.0
    %2433 = vmatprep.subr.mxu0 0.0
    %2434 = vmatpush1.msra.mxu0 0.0
    %2435 = vmatprep.subr.mxu0 0.0
    %2436 = vmatpush1.msra.mxu0 0.0
    %2437 = vmatprep.subr.mxu0 0.0
    %2438 = vmatpush1.msra.mxu0 0.0
    %2439 = vmatprep.subr.mxu0 0.0
    %2440 = vmatpush1.msra.mxu0 0.0
    %2441 = vmatprep.subr.mxu0 0.0
    %2442 = vmatpush1.msra.mxu0 0.0
    %2443 = vmatprep.subr.mxu0 0.0
    %2444 = vmatpush1.msra.mxu0 0.0
    %2445 = vmatprep.subr.mxu0 0.0
    %2446 = vmatpush1.msra.mxu0 0.0
    %2447 = vmatprep.subr.mxu0 %v1499
    %2448 = vmatpush1.msra.mxu0 %v1498
    %2449 = vmatprep.subr.mxu0 0.0
    %2450 = vmatpush2.msra.mxu0 0.0
    %2451 = vmatprep.subr.mxu0 0.0
    %2452 = vmatpush2.msra.mxu0 0.0
    %2453 = vmatprep.subr.mxu0 0.0
    %2454 = vmatpush2.msra.mxu0 0.0
    %2455 = vmatprep.subr.mxu0 0.0
    %2456 = vmatpush2.msra.mxu0 0.0
    %2457 = vmatprep.subr.mxu0 0.0
    %2458 = vmatpush2.msra.mxu0 0.0
    %2459 = vmatprep.subr.mxu0 0.0
    %2460 = vmatpush2.msra.mxu0 0.0
    %2461 = vmatprep.subr.mxu0 0.0
    %2462 = vmatpush2.msra.mxu0 0.0
    %2463 = vmatprep.subr.mxu0 0.0
    %2464 = vmatpush2.msra.mxu0 0.0
    %2465 = vmatprep.subr.mxu0 0.0
    %2466 = vmatpush2.msra.mxu0 0.0
    %2467 = vmatprep.subr.mxu0 0.0
    %2468 = vmatpush2.msra.mxu0 0.0
    %2469 = vmatprep.subr.mxu0 0.0
    %2470 = vmatpush2.msra.mxu0 0.0
    %2471 = vmatprep.subr.mxu0 0.0
    %2472 = vmatpush2.msra.mxu0 0.0
    %2473 = vmatprep.subr.mxu0 0.0
    %2474 = vmatpush2.msra.mxu0 0.0
    %2475 = vmatprep.subr.mxu0 0.0
    %2476 = vmatpush2.msra.mxu0 0.0
    %2477 = vmatprep.subr.mxu0 0.0
    %2478 = vmatpush2.msra.mxu0 0.0
    %2479 = vmatprep.subr.mxu0 0.0
    %2480 = vmatpush2.msra.mxu0 0.0
    %2481 = vmatprep.mubr.f32.mxu0 0.0
    %2482 = vmatmul.mubr.f32.gmra.mxu0 %v270
    %v2483 = vpop.f32.mrf.mxu0
    %v2484 = vadd.f32 0.0, %v2483
    %v2485 = vpop.f32.mrf.mxu0
    %v2486 = vadd.f32 0.0, %v2485
    %2487 = vdwg.mxu0
    %2488 = vmatprep.subr.mxu0 0.0
    %2489 = vmatpush1.msra.mxu0 0.0
    %2490 = vmatprep.subr.mxu0 0.0
    %2491 = vmatpush1.msra.mxu0 0.0
    %2492 = vmatprep.subr.mxu0 0.0
    %2493 = vmatpush1.msra.mxu0 0.0
    %2494 = vmatprep.subr.mxu0 0.0
    %2495 = vmatpush1.msra.mxu0 0.0
    %2496 = vmatprep.subr.mxu0 0.0
    %2497 = vmatpush1.msra.mxu0 0.0
    %2498 = vmatprep.subr.mxu0 0.0
    %2499 = vmatpush1.msra.mxu0 0.0
    %2500 = vmatprep.subr.mxu0 0.0
    %2501 = vmatpush1.msra.mxu0 0.0
    %2502 = vmatprep.subr.mxu0 0.0
    %2503 = vmatpush1.msra.mxu0 0.0
    %2504 = vmatprep.subr.mxu0 0.0
    %2505 = vmatpush1.msra.mxu0 0.0
    %2506 = vmatprep.subr.mxu0 0.0
    %2507 = vmatpush1.msra.mxu0 0.0
    %2508 = vmatprep.subr.mxu0 0.0
    %2509 = vmatpush1.msra.mxu0 0.0
    %2510 = vmatprep.subr.mxu0 0.0
    %2511 = vmatpush1.msra.mxu0 0.0
    %2512 = vmatprep.subr.mxu0 0.0
    %2513 = vmatpush1.msra.mxu0 0.0
    %2514 = vmatprep.subr.mxu0 0.0
    %2515 = vmatpush1.msra.mxu0 0.0
    %2516 = vmatprep.subr.mxu0 0.0
    %2517 = vmatpush1.msra.mxu0 0.0
    %2518 = vmatprep.subr.mxu0 %v1501
    %2519 = vmatpush1.msra.mxu0 %v1500
    %2520 = vmatprep.subr.mxu0 0.0
    %2521 = vmatpush2.msra.mxu0 0.0
    %2522 = vmatprep.subr.mxu0 0.0
    %2523 = vmatpush2.msra.mxu0 0.0
    %2524 = vmatprep.subr.mxu0 0.0
    %2525 = vmatpush2.msra.mxu0 0.0
    %2526 = vmatprep.subr.mxu0 0.0
    %2527 = vmatpush2.msra.mxu0 0.0
    %2528 = vmatprep.subr.mxu0 0.0
    %2529 = vmatpush2.msra.mxu0 0.0
    %2530 = vmatprep.subr.mxu0 0.0
    %2531 = vmatpush2.msra.mxu0 0.0
    %2532 = vmatprep.subr.mxu0 0.0
    %2533 = vmatpush2.msra.mxu0 0.0
    %2534 = vmatprep.subr.mxu0 0.0
    %2535 = vmatpush2.msra.mxu0 0.0
    %2536 = vmatprep.subr.mxu0 0.0
    %2537 = vmatpush2.msra.mxu0 0.0
    %2538 = vmatprep.subr.mxu0 0.0
    %2539 = vmatpush2.msra.mxu0 0.0
    %2540 = vmatprep.subr.mxu0 0.0
    %2541 = vmatpush2.msra.mxu0 0.0
    %2542 = vmatprep.subr.mxu0 0.0
    %2543 = vmatpush2.msra.mxu0 0.0
    %2544 = vmatprep.subr.mxu0 0.0
    %2545 = vmatpush2.msra.mxu0 0.0
    %2546 = vmatprep.subr.mxu0 0.0
    %2547 = vmatpush2.msra.mxu0 0.0
    %2548 = vmatprep.subr.mxu0 0.0
    %2549 = vmatpush2.msra.mxu0 0.0
    %2550 = vmatprep.subr.mxu0 0.0
    %2551 = vmatpush2.msra.mxu0 0.0
    %2552 = vmatprep.mubr.f32.mxu0 0.0
    %2553 = vmatmul.mubr.f32.gmra.mxu0 %v270
    %v2554 = vpop.f32.mrf.mxu0
    %v2555 = vadd.f32 0.0, %v2554
    %v2556 = vpop.f32.mrf.mxu0
    %v2557 = vadd.f32 0.0, %v2556
    %2558 = vdwg.mxu0
    %2559 = vmatprep.subr.mxu0 0.0
    %2560 = vmatpush1.msra.mxu0 0.0
    %2561 = vmatprep.subr.mxu0 0.0
    %2562 = vmatpush1.msra.mxu0 0.0
    %2563 = vmatprep.subr.mxu0 0.0
    %2564 = vmatpush1.msra.mxu0 0.0
    %2565 = vmatprep.subr.mxu0 0.0
    %2566 = vmatpush1.msra.mxu0 0.0
    %2567 = vmatprep.subr.mxu0 0.0
    %2568 = vmatpush1.msra.mxu0 0.0
    %2569 = vmatprep.subr.mxu0 0.0
    %2570 = vmatpush1.msra.mxu0 0.0
    %2571 = vmatprep.subr.mxu0 0.0
    %2572 = vmatpush1.msra.mxu0 0.0
    %2573 = vmatprep.subr.mxu0 0.0
    %2574 = vmatpush1.msra.mxu0 0.0
    %2575 = vmatprep.subr.mxu0 0.0
    %2576 = vmatpush1.msra.mxu0 0.0
    %2577 = vmatprep.subr.mxu0 0.0
    %2578 = vmatpush1.msra.mxu0 0.0
    %2579 = vmatprep.subr.mxu0 0.0
    %2580 = vmatpush1.msra.mxu0 0.0
    %2581 = vmatprep.subr.mxu0 0.0
    %2582 = vmatpush1.msra.mxu0 0.0
    %2583 = vmatprep.subr.mxu0 0.0
    %2584 = vmatpush1.msra.mxu0 0.0
    %2585 = vmatprep.subr.mxu0 0.0
    %2586 = vmatpush1.msra.mxu0 0.0
    %2587 = vmatprep.subr.mxu0 0.0
    %2588 = vmatpush1.msra.mxu0 0.0
    %2589 = vmatprep.subr.mxu0 %v1503
    %2590 = vmatpush1.msra.mxu0 %v1502
    %2591 = vmatprep.subr.mxu0 0.0
    %2592 = vmatpush2.msra.mxu0 0.0
    %2593 = vmatprep.subr.mxu0 0.0
    %2594 = vmatpush2.msra.mxu0 0.0
    %2595 = vmatprep.subr.mxu0 0.0
    %2596 = vmatpush2.msra.mxu0 0.0
    %2597 = vmatprep.subr.mxu0 0.0
    %2598 = vmatpush2.msra.mxu0 0.0
    %2599 = vmatprep.subr.mxu0 0.0
    %2600 = vmatpush2.msra.mxu0 0.0
    %2601 = vmatprep.subr.mxu0 0.0
    %2602 = vmatpush2.msra.mxu0 0.0
    %2603 = vmatprep.subr.mxu0 0.0
    %2604 = vmatpush2.msra.mxu0 0.0
    %2605 = vmatprep.subr.mxu0 0.0
    %2606 = vmatpush2.msra.mxu0 0.0
    %2607 = vmatprep.subr.mxu0 0.0
    %2608 = vmatpush2.msra.mxu0 0.0
    %2609 = vmatprep.subr.mxu0 0.0
    %2610 = vmatpush2.msra.mxu0 0.0
    %2611 = vmatprep.subr.mxu0 0.0
    %2612 = vmatpush2.msra.mxu0 0.0
    %2613 = vmatprep.subr.mxu0 0.0
    %2614 = vmatpush2.msra.mxu0 0.0
    %2615 = vmatprep.subr.mxu0 0.0
    %2616 = vmatpush2.msra.mxu0 0.0
    %2617 = vmatprep.subr.mxu0 0.0
    %2618 = vmatpush2.msra.mxu0 0.0
    %2619 = vmatprep.subr.mxu0 0.0
    %2620 = vmatpush2.msra.mxu0 0.0
    %2621 = vmatprep.subr.mxu0 0.0
    %2622 = vmatpush2.msra.mxu0 0.0
    %2623 = vmatprep.mubr.f32.mxu0 0.0
    %2624 = vmatmul.mubr.f32.gmra.mxu0 %v270
    %v2625 = vpop.f32.mrf.mxu0
    %v2626 = vadd.f32 0.0, %v2625
    %v2627 = vpop.f32.mrf.mxu0
    %v2628 = vadd.f32 0.0, %v2627
    %2629 = vdwg.mxu0
    %2630 = vmatprep.subr.mxu0 0.0
    %2631 = vmatpush1.msra.mxu0 0.0
    %2632 = vmatprep.subr.mxu0 0.0
    %2633 = vmatpush1.msra.mxu0 0.0
    %2634 = vmatprep.subr.mxu0 0.0
    %2635 = vmatpush1.msra.mxu0 0.0
    %2636 = vmatprep.subr.mxu0 0.0
    %2637 = vmatpush1.msra.mxu0 0.0
    %2638 = vmatprep.subr.mxu0 0.0
    %2639 = vmatpush1.msra.mxu0 0.0
    %2640 = vmatprep.subr.mxu0 0.0
    %2641 = vmatpush1.msra.mxu0 0.0
    %2642 = vmatprep.subr.mxu0 0.0
    %2643 = vmatpush1.msra.mxu0 0.0
    %2644 = vmatprep.subr.mxu0 0.0
    %2645 = vmatpush1.msra.mxu0 0.0
    %2646 = vmatprep.subr.mxu0 0.0
    %2647 = vmatpush1.msra.mxu0 0.0
    %2648 = vmatprep.subr.mxu0 0.0
    %2649 = vmatpush1.msra.mxu0 0.0
    %2650 = vmatprep.subr.mxu0 0.0
    %2651 = vmatpush1.msra.mxu0 0.0
    %2652 = vmatprep.subr.mxu0 0.0
    %2653 = vmatpush1.msra.mxu0 0.0
    %2654 = vmatprep.subr.mxu0 0.0
    %2655 = vmatpush1.msra.mxu0 0.0
    %2656 = vmatprep.subr.mxu0 0.0
    %2657 = vmatpush1.msra.mxu0 0.0
    %2658 = vmatprep.subr.mxu0 0.0
    %2659 = vmatpush1.msra.mxu0 0.0
    %2660 = vmatprep.subr.mxu0 %v1505
    %2661 = vmatpush1.msra.mxu0 %v1504
    %2662 = vmatprep.subr.mxu0 0.0
    %2663 = vmatpush2.msra.mxu0 0.0
    %2664 = vmatprep.subr.mxu0 0.0
    %2665 = vmatpush2.msra.mxu0 0.0
    %2666 = vmatprep.subr.mxu0 0.0
    %2667 = vmatpush2.msra.mxu0 0.0
    %2668 = vmatprep.subr.mxu0 0.0
    %2669 = vmatpush2.msra.mxu0 0.0
    %2670 = vmatprep.subr.mxu0 0.0
    %2671 = vmatpush2.msra.mxu0 0.0
    %2672 = vmatprep.subr.mxu0 0.0
    %2673 = vmatpush2.msra.mxu0 0.0
    %2674 = vmatprep.subr.mxu0 0.0
    %2675 = vmatpush2.msra.mxu0 0.0
    %2676 = vmatprep.subr.mxu0 0.0
    %2677 = vmatpush2.msra.mxu0 0.0
    %2678 = vmatprep.subr.mxu0 0.0
    %2679 = vmatpush2.msra.mxu0 0.0
    %2680 = vmatprep.subr.mxu0 0.0
    %2681 = vmatpush2.msra.mxu0 0.0
    %2682 = vmatprep.subr.mxu0 0.0
    %2683 = vmatpush2.msra.mxu0 0.0
    %2684 = vmatprep.subr.mxu0 0.0
    %2685 = vmatpush2.msra.mxu0 0.0
    %2686 = vmatprep.subr.mxu0 0.0
    %2687 = vmatpush2.msra.mxu0 0.0
    %2688 = vmatprep.subr.mxu0 0.0
    %2689 = vmatpush2.msra.mxu0 0.0
    %2690 = vmatprep.subr.mxu0 0.0
    %2691 = vmatpush2.msra.mxu0 0.0
    %2692 = vmatprep.subr.mxu0 0.0
    %2693 = vmatpush2.msra.mxu0 0.0
    %2694 = vmatprep.mubr.f32.mxu0 0.0
    %2695 = vmatmul.mubr.f32.gmra.mxu0 %v270
    %v2696 = vpop.f32.mrf.mxu0
    %v2697 = vadd.f32 0.0, %v2696
    %v2698 = vpop.f32.mrf.mxu0
    %v2699 = vadd.f32 0.0, %v2698
    %2700 = vdwg.mxu0
    %2701 = vmatprep.subr.mxu0 0.0
    %2702 = vmatpush1.msra.mxu0 0.0
    %2703 = vmatprep.subr.mxu0 0.0
    %2704 = vmatpush1.msra.mxu0 0.0
    %2705 = vmatprep.subr.mxu0 0.0
    %2706 = vmatpush1.msra.mxu0 0.0
    %2707 = vmatprep.subr.mxu0 0.0
    %2708 = vmatpush1.msra.mxu0 0.0
    %2709 = vmatprep.subr.mxu0 0.0
    %2710 = vmatpush1.msra.mxu0 0.0
    %2711 = vmatprep.subr.mxu0 0.0
    %2712 = vmatpush1.msra.mxu0 0.0
    %2713 = vmatprep.subr.mxu0 0.0
    %2714 = vmatpush1.msra.mxu0 0.0
    %2715 = vmatprep.subr.mxu0 0.0
    %2716 = vmatpush1.msra.mxu0 0.0
    %2717 = vmatprep.subr.mxu0 0.0
    %2718 = vmatpush1.msra.mxu0 0.0
    %2719 = vmatprep.subr.mxu0 0.0
    %2720 = vmatpush1.msra.mxu0 0.0
    %2721 = vmatprep.subr.mxu0 0.0
    %2722 = vmatpush1.msra.mxu0 0.0
    %2723 = vmatprep.subr.mxu0 0.0
    %2724 = vmatpush1.msra.mxu0 0.0
    %2725 = vmatprep.subr.mxu0 0.0
    %2726 = vmatpush1.msra.mxu0 0.0
    %2727 = vmatprep.subr.mxu0 0.0
    %2728 = vmatpush1.msra.mxu0 0.0
    %2729 = vmatprep.subr.mxu0 0.0
    %2730 = vmatpush1.msra.mxu0 0.0
    %2731 = vmatprep.subr.mxu0 %v2344
    %2732 = vmatpush1.msra.mxu0 %v2342
    %2733 = vmatprep.subr.mxu0 0.0
    %2734 = vmatpush2.msra.mxu0 0.0
    %2735 = vmatprep.subr.mxu0 0.0
    %2736 = vmatpush2.msra.mxu0 0.0
    %2737 = vmatprep.subr.mxu0 0.0
    %2738 = vmatpush2.msra.mxu0 0.0
    %2739 = vmatprep.subr.mxu0 0.0
    %2740 = vmatpush2.msra.mxu0 0.0
    %2741 = vmatprep.subr.mxu0 0.0
    %2742 = vmatpush2.msra.mxu0 0.0
    %2743 = vmatprep.subr.mxu0 0.0
    %2744 = vmatpush2.msra.mxu0 0.0
    %2745 = vmatprep.subr.mxu0 0.0
    %2746 = vmatpush2.msra.mxu0 0.0
    %2747 = vmatprep.subr.mxu0 0.0
    %2748 = vmatpush2.msra.mxu0 0.0
    %2749 = vmatprep.subr.mxu0 0.0
    %2750 = vmatpush2.msra.mxu0 0.0
    %2751 = vmatprep.subr.mxu0 0.0
    %2752 = vmatpush2.msra.mxu0 0.0
    %2753 = vmatprep.subr.mxu0 0.0
    %2754 = vmatpush2.msra.mxu0 0.0
    %2755 = vmatprep.subr.mxu0 0.0
    %2756 = vmatpush2.msra.mxu0 0.0
    %2757 = vmatprep.subr.mxu0 0.0
    %2758 = vmatpush2.msra.mxu0 0.0
    %2759 = vmatprep.subr.mxu0 0.0
    %2760 = vmatpush2.msra.mxu0 0.0
    %2761 = vmatprep.subr.mxu0 0.0
    %2762 = vmatpush2.msra.mxu0 0.0
    %2763 = vmatprep.subr.mxu0 0.0
    %2764 = vmatpush2.msra.mxu0 0.0
    %2765 = vmatprep.mubr.f32.mxu0 0.0
    %2766 = vmatmul.mubr.f32.gmra.mxu0 %v270
    %v2767 = vpop.f32.mrf.mxu0
    %v2768 = vadd.f32 0.0, %v2767
    %v2769 = vpop.f32.mrf.mxu0
    %v2770 = vadd.f32 0.0, %v2769
    %2771 = vdwg.mxu0
    %2772 = vmatprep.subr.mxu0 0.0
    %2773 = vmatpush1.msra.mxu0 0.0
    %2774 = vmatprep.subr.mxu0 0.0
    %2775 = vmatpush1.msra.mxu0 0.0
    %2776 = vmatprep.subr.mxu0 0.0
    %2777 = vmatpush1.msra.mxu0 0.0
    %2778 = vmatprep.subr.mxu0 0.0
    %2779 = vmatpush1.msra.mxu0 0.0
    %2780 = vmatprep.subr.mxu0 0.0
    %2781 = vmatpush1.msra.mxu0 0.0
    %2782 = vmatprep.subr.mxu0 0.0
    %2783 = vmatpush1.msra.mxu0 0.0
    %2784 = vmatprep.subr.mxu0 0.0
    %2785 = vmatpush1.msra.mxu0 0.0
    %2786 = vmatprep.subr.mxu0 0.0
    %2787 = vmatpush1.msra.mxu0 0.0
    %2788 = vmatprep.subr.mxu0 0.0
    %2789 = vmatpush1.msra.mxu0 0.0
    %2790 = vmatprep.subr.mxu0 0.0
    %2791 = vmatpush1.msra.mxu0 0.0
    %2792 = vmatprep.subr.mxu0 0.0
    %2793 = vmatpush1.msra.mxu0 0.0
    %2794 = vmatprep.subr.mxu0 0.0
    %2795 = vmatpush1.msra.mxu0 0.0
    %2796 = vmatprep.subr.mxu0 0.0
    %2797 = vmatpush1.msra.mxu0 0.0
    %2798 = vmatprep.subr.mxu0 0.0
    %2799 = vmatpush1.msra.mxu0 0.0
    %2800 = vmatprep.subr.mxu0 0.0
    %2801 = vmatpush1.msra.mxu0 0.0
    %2802 = vmatprep.subr.mxu0 %v2415
    %2803 = vmatpush1.msra.mxu0 %v2413
    %2804 = vmatprep.subr.mxu0 0.0
    %2805 = vmatpush2.msra.mxu0 0.0
    %2806 = vmatprep.subr.mxu0 0.0
    %2807 = vmatpush2.msra.mxu0 0.0
    %2808 = vmatprep.subr.mxu0 0.0
    %2809 = vmatpush2.msra.mxu0 0.0
    %2810 = vmatprep.subr.mxu0 0.0
    %2811 = vmatpush2.msra.mxu0 0.0
    %2812 = vmatprep.subr.mxu0 0.0
    %2813 = vmatpush2.msra.mxu0 0.0
    %2814 = vmatprep.subr.mxu0 0.0
    %2815 = vmatpush2.msra.mxu0 0.0
    %2816 = vmatprep.subr.mxu0 0.0
    %2817 = vmatpush2.msra.mxu0 0.0
    %2818 = vmatprep.subr.mxu0 0.0
    %2819 = vmatpush2.msra.mxu0 0.0
    %2820 = vmatprep.subr.mxu0 0.0
    %2821 = vmatpush2.msra.mxu0 0.0
    %2822 = vmatprep.subr.mxu0 0.0
    %2823 = vmatpush2.msra.mxu0 0.0
    %2824 = vmatprep.subr.mxu0 0.0
    %2825 = vmatpush2.msra.mxu0 0.0
    %2826 = vmatprep.subr.mxu0 0.0
    %2827 = vmatpush2.msra.mxu0 0.0
    %2828 = vmatprep.subr.mxu0 0.0
    %2829 = vmatpush2.msra.mxu0 0.0
    %2830 = vmatprep.subr.mxu0 0.0
    %2831 = vmatpush2.msra.mxu0 0.0
    %2832 = vmatprep.subr.mxu0 0.0
    %2833 = vmatpush2.msra.mxu0 0.0
    %2834 = vmatprep.subr.mxu0 0.0
    %2835 = vmatpush2.msra.mxu0 0.0
    %2836 = vmatprep.mubr.f32.mxu0 0.0
    %2837 = vmatmul.mubr.f32.gmra.mxu0 %v270
    %v2838 = vpop.f32.mrf.mxu0
    %v2839 = vadd.f32 0.0, %v2838
    %v2840 = vpop.f32.mrf.mxu0
    %v2841 = vadd.f32 0.0, %v2840
    %2842 = vdwg.mxu0
    %2843 = vmatprep.subr.mxu0 0.0
    %2844 = vmatpush1.msra.mxu0 0.0
    %2845 = vmatprep.subr.mxu0 0.0
    %2846 = vmatpush1.msra.mxu0 0.0
    %2847 = vmatprep.subr.mxu0 0.0
    %2848 = vmatpush1.msra.mxu0 0.0
    %2849 = vmatprep.subr.mxu0 0.0
    %2850 = vmatpush1.msra.mxu0 0.0
    %2851 = vmatprep.subr.mxu0 0.0
    %2852 = vmatpush1.msra.mxu0 0.0
    %2853 = vmatprep.subr.mxu0 0.0
    %2854 = vmatpush1.msra.mxu0 0.0
    %2855 = vmatprep.subr.mxu0 0.0
    %2856 = vmatpush1.msra.mxu0 0.0
    %2857 = vmatprep.subr.mxu0 0.0
    %2858 = vmatpush1.msra.mxu0 0.0
    %2859 = vmatprep.subr.mxu0 0.0
    %2860 = vmatpush1.msra.mxu0 0.0
    %2861 = vmatprep.subr.mxu0 0.0
    %2862 = vmatpush1.msra.mxu0 0.0
    %2863 = vmatprep.subr.mxu0 0.0
    %2864 = vmatpush1.msra.mxu0 0.0
    %2865 = vmatprep.subr.mxu0 0.0
    %2866 = vmatpush1.msra.mxu0 0.0
    %2867 = vmatprep.subr.mxu0 0.0
    %2868 = vmatpush1.msra.mxu0 0.0
    %2869 = vmatprep.subr.mxu0 0.0
    %2870 = vmatpush1.msra.mxu0 0.0
    %2871 = vmatprep.subr.mxu0 0.0
    %2872 = vmatpush1.msra.mxu0 0.0
    %2873 = vmatprep.subr.mxu0 %v2486
    %2874 = vmatpush1.msra.mxu0 %v2484
    %2875 = vmatprep.subr.mxu0 0.0
    %2876 = vmatpush2.msra.mxu0 0.0
    %2877 = vmatprep.subr.mxu0 0.0
    %2878 = vmatpush2.msra.mxu0 0.0
    %2879 = vmatprep.subr.mxu0 0.0
    %2880 = vmatpush2.msra.mxu0 0.0
    %2881 = vmatprep.subr.mxu0 0.0
    %2882 = vmatpush2.msra.mxu0 0.0
    %2883 = vmatprep.subr.mxu0 0.0
    %2884 = vmatpush2.msra.mxu0 0.0
    %2885 = vmatprep.subr.mxu0 0.0
    %2886 = vmatpush2.msra.mxu0 0.0
    %2887 = vmatprep.subr.mxu0 0.0
    %2888 = vmatpush2.msra.mxu0 0.0
    %2889 = vmatprep.subr.mxu0 0.0
    %2890 = vmatpush2.msra.mxu0 0.0
    %2891 = vmatprep.subr.mxu0 0.0
    %2892 = vmatpush2.msra.mxu0 0.0
    %2893 = vmatprep.subr.mxu0 0.0
    %2894 = vmatpush2.msra.mxu0 0.0
    %2895 = vmatprep.subr.mxu0 0.0
    %2896 = vmatpush2.msra.mxu0 0.0
    %2897 = vmatprep.subr.mxu0 0.0
    %2898 = vmatpush2.msra.mxu0 0.0
    %2899 = vmatprep.subr.mxu0 0.0
    %2900 = vmatpush2.msra.mxu0 0.0
    %2901 = vmatprep.subr.mxu0 0.0
    %2902 = vmatpush2.msra.mxu0 0.0
    %2903 = vmatprep.subr.mxu0 0.0
    %2904 = vmatpush2.msra.mxu0 0.0
    %2905 = vmatprep.subr.mxu0 0.0
    %2906 = vmatpush2.msra.mxu0 0.0
    %2907 = vmatprep.mubr.f32.mxu0 0.0
    %2908 = vmatmul.mubr.f32.gmra.mxu0 %v270
    %v2909 = vpop.f32.mrf.mxu0
    %v2910 = vadd.f32 0.0, %v2909
    %v2911 = vpop.f32.mrf.mxu0
    %v2912 = vadd.f32 0.0, %v2911
    %2913 = vdwg.mxu0
    %2914 = vmatprep.subr.mxu0 0.0
    %2915 = vmatpush1.msra.mxu0 0.0
    %2916 = vmatprep.subr.mxu0 0.0
    %2917 = vmatpush1.msra.mxu0 0.0
    %2918 = vmatprep.subr.mxu0 0.0
    %2919 = vmatpush1.msra.mxu0 0.0
    %2920 = vmatprep.subr.mxu0 0.0
    %2921 = vmatpush1.msra.mxu0 0.0
    %2922 = vmatprep.subr.mxu0 0.0
    %2923 = vmatpush1.msra.mxu0 0.0
    %2924 = vmatprep.subr.mxu0 0.0
    %2925 = vmatpush1.msra.mxu0 0.0
    %2926 = vmatprep.subr.mxu0 0.0
    %2927 = vmatpush1.msra.mxu0 0.0
    %2928 = vmatprep.subr.mxu0 0.0
    %2929 = vmatpush1.msra.mxu0 0.0
    %2930 = vmatprep.subr.mxu0 0.0
    %2931 = vmatpush1.msra.mxu0 0.0
    %2932 = vmatprep.subr.mxu0 0.0
    %2933 = vmatpush1.msra.mxu0 0.0
    %2934 = vmatprep.subr.mxu0 0.0
    %2935 = vmatpush1.msra.mxu0 0.0
    %2936 = vmatprep.subr.mxu0 0.0
    %2937 = vmatpush1.msra.mxu0 0.0
    %2938 = vmatprep.subr.mxu0 0.0
    %2939 = vmatpush1.msra.mxu0 0.0
    %2940 = vmatprep.subr.mxu0 0.0
    %2941 = vmatpush1.msra.mxu0 0.0
    %2942 = vmatprep.subr.mxu0 0.0
    %2943 = vmatpush1.msra.mxu0 0.0
    %2944 = vmatprep.subr.mxu0 %v2557
    %2945 = vmatpush1.msra.mxu0 %v2555
    %2946 = vmatprep.subr.mxu0 0.0
    %2947 = vmatpush2.msra.mxu0 0.0
    %2948 = vmatprep.subr.mxu0 0.0
    %2949 = vmatpush2.msra.mxu0 0.0
    %2950 = vmatprep.subr.mxu0 0.0
    %2951 = vmatpush2.msra.mxu0 0.0
    %2952 = vmatprep.subr.mxu0 0.0
    %2953 = vmatpush2.msra.mxu0 0.0
    %2954 = vmatprep.subr.mxu0 0.0
    %2955 = vmatpush2.msra.mxu0 0.0
    %2956 = vmatprep.subr.mxu0 0.0
    %2957 = vmatpush2.msra.mxu0 0.0
    %2958 = vmatprep.subr.mxu0 0.0
    %2959 = vmatpush2.msra.mxu0 0.0
    %2960 = vmatprep.subr.mxu0 0.0
    %2961 = vmatpush2.msra.mxu0 0.0
    %2962 = vmatprep.subr.mxu0 0.0
    %2963 = vmatpush2.msra.mxu0 0.0
    %2964 = vmatprep.subr.mxu0 0.0
    %2965 = vmatpush2.msra.mxu0 0.0
    %2966 = vmatprep.subr.mxu0 0.0
    %2967 = vmatpush2.msra.mxu0 0.0
    %2968 = vmatprep.subr.mxu0 0.0
    %2969 = vmatpush2.msra.mxu0 0.0
    %2970 = vmatprep.subr.mxu0 0.0
    %2971 = vmatpush2.msra.mxu0 0.0
    %2972 = vmatprep.subr.mxu0 0.0
    %2973 = vmatpush2.msra.mxu0 0.0
    %2974 = vmatprep.subr.mxu0 0.0
    %2975 = vmatpush2.msra.mxu0 0.0
    %2976 = vmatprep.subr.mxu0 0.0
    %2977 = vmatpush2.msra.mxu0 0.0
    %2978 = vmatprep.mubr.f32.mxu0 0.0
    %2979 = vmatmul.mubr.f32.gmra.mxu0 %v270
    %v2980 = vpop.f32.mrf.mxu0
    %v2981 = vadd.f32 0.0, %v2980
    %v2982 = vpop.f32.mrf.mxu0
    %v2983 = vadd.f32 0.0, %v2982
    %2984 = vdwg.mxu0
    %2985 = vmatprep.subr.mxu0 0.0
    %2986 = vmatpush1.msra.mxu0 0.0
    %2987 = vmatprep.subr.mxu0 0.0
    %2988 = vmatpush1.msra.mxu0 0.0
    %2989 = vmatprep.subr.mxu0 0.0
    %2990 = vmatpush1.msra.mxu0 0.0
    %2991 = vmatprep.subr.mxu0 0.0
    %2992 = vmatpush1.msra.mxu0 0.0
    %2993 = vmatprep.subr.mxu0 0.0
    %2994 = vmatpush1.msra.mxu0 0.0
    %2995 = vmatprep.subr.mxu0 0.0
    %2996 = vmatpush1.msra.mxu0 0.0
    %2997 = vmatprep.subr.mxu0 0.0
    %2998 = vmatpush1.msra.mxu0 0.0
    %2999 = vmatprep.subr.mxu0 0.0
    %3000 = vmatpush1.msra.mxu0 0.0
    %3001 = vmatprep.subr.mxu0 0.0
    %3002 = vmatpush1.msra.mxu0 0.0
    %3003 = vmatprep.subr.mxu0 0.0
    %3004 = vmatpush1.msra.mxu0 0.0
    %3005 = vmatprep.subr.mxu0 0.0
    %3006 = vmatpush1.msra.mxu0 0.0
    %3007 = vmatprep.subr.mxu0 0.0
    %3008 = vmatpush1.msra.mxu0 0.0
    %3009 = vmatprep.subr.mxu0 0.0
    %3010 = vmatpush1.msra.mxu0 0.0
    %3011 = vmatprep.subr.mxu0 0.0
    %3012 = vmatpush1.msra.mxu0 0.0
    %3013 = vmatprep.subr.mxu0 0.0
    %3014 = vmatpush1.msra.mxu0 0.0
    %3015 = vmatprep.subr.mxu0 %v2628
    %3016 = vmatpush1.msra.mxu0 %v2626
    %3017 = vmatprep.subr.mxu0 0.0
    %3018 = vmatpush2.msra.mxu0 0.0
    %3019 = vmatprep.subr.mxu0 0.0
    %3020 = vmatpush2.msra.mxu0 0.0
    %3021 = vmatprep.subr.mxu0 0.0
    %3022 = vmatpush2.msra.mxu0 0.0
    %3023 = vmatprep.subr.mxu0 0.0
    %3024 = vmatpush2.msra.mxu0 0.0
    %3025 = vmatprep.subr.mxu0 0.0
    %3026 = vmatpush2.msra.mxu0 0.0
    %3027 = vmatprep.subr.mxu0 0.0
    %3028 = vmatpush2.msra.mxu0 0.0
    %3029 = vmatprep.subr.mxu0 0.0
    %3030 = vmatpush2.msra.mxu0 0.0
    %3031 = vmatprep.subr.mxu0 0.0
    %3032 = vmatpush2.msra.mxu0 0.0
    %3033 = vmatprep.subr.mxu0 0.0
    %3034 = vmatpush2.msra.mxu0 0.0
    %3035 = vmatprep.subr.mxu0 0.0
    %3036 = vmatpush2.msra.mxu0 0.0
    %3037 = vmatprep.subr.mxu0 0.0
    %3038 = vmatpush2.msra.mxu0 0.0
    %3039 = vmatprep.subr.mxu0 0.0
    %3040 = vmatpush2.msra.mxu0 0.0
    %3041 = vmatprep.subr.mxu0 0.0
    %3042 = vmatpush2.msra.mxu0 0.0
    %3043 = vmatprep.subr.mxu0 0.0
    %3044 = vmatpush2.msra.mxu0 0.0
    %3045 = vmatprep.subr.mxu0 0.0
    %3046 = vmatpush2.msra.mxu0 0.0
    %3047 = vmatprep.subr.mxu0 0.0
    %3048 = vmatpush2.msra.mxu0 0.0
    %3049 = vmatprep.mubr.f32.mxu0 0.0
    %3050 = vmatmul.mubr.f32.gmra.mxu0 %v270
    %v3051 = vpop.f32.mrf.mxu0
    %v3052 = vadd.f32 0.0, %v3051
    %v3053 = vpop.f32.mrf.mxu0
    %v3054 = vadd.f32 0.0, %v3053
    %3055 = vdwg.mxu0
    %3056 = vmatprep.subr.mxu0 0.0
    %3057 = vmatpush1.msra.mxu0 0.0
    %3058 = vmatprep.subr.mxu0 0.0
    %3059 = vmatpush1.msra.mxu0 0.0
    %3060 = vmatprep.subr.mxu0 0.0
    %3061 = vmatpush1.msra.mxu0 0.0
    %3062 = vmatprep.subr.mxu0 0.0
    %3063 = vmatpush1.msra.mxu0 0.0
    %3064 = vmatprep.subr.mxu0 0.0
    %3065 = vmatpush1.msra.mxu0 0.0
    %3066 = vmatprep.subr.mxu0 0.0
    %3067 = vmatpush1.msra.mxu0 0.0
    %3068 = vmatprep.subr.mxu0 0.0
    %3069 = vmatpush1.msra.mxu0 0.0
    %3070 = vmatprep.subr.mxu0 0.0
    %3071 = vmatpush1.msra.mxu0 0.0
    %3072 = vmatprep.subr.mxu0 0.0
    %3073 = vmatpush1.msra.mxu0 0.0
    %3074 = vmatprep.subr.mxu0 0.0
    %3075 = vmatpush1.msra.mxu0 0.0
    %3076 = vmatprep.subr.mxu0 0.0
    %3077 = vmatpush1.msra.mxu0 0.0
    %3078 = vmatprep.subr.mxu0 0.0
    %3079 = vmatpush1.msra.mxu0 0.0
    %3080 = vmatprep.subr.mxu0 0.0
    %3081 = vmatpush1.msra.mxu0 0.0
    %3082 = vmatprep.subr.mxu0 0.0
    %3083 = vmatpush1.msra.mxu0 0.0
    %3084 = vmatprep.subr.mxu0 0.0
    %3085 = vmatpush1.msra.mxu0 0.0
    %3086 = vmatprep.subr.mxu0 %v2699
    %3087 = vmatpush1.msra.mxu0 %v2697
    %3088 = vmatprep.subr.mxu0 0.0
    %3089 = vmatpush2.msra.mxu0 0.0
    %3090 = vmatprep.subr.mxu0 0.0
    %3091 = vmatpush2.msra.mxu0 0.0
    %3092 = vmatprep.subr.mxu0 0.0
    %3093 = vmatpush2.msra.mxu0 0.0
    %3094 = vmatprep.subr.mxu0 0.0
    %3095 = vmatpush2.msra.mxu0 0.0
    %3096 = vmatprep.subr.mxu0 0.0
    %3097 = vmatpush2.msra.mxu0 0.0
    %3098 = vmatprep.subr.mxu0 0.0
    %3099 = vmatpush2.msra.mxu0 0.0
    %3100 = vmatprep.subr.mxu0 0.0
    %3101 = vmatpush2.msra.mxu0 0.0
    %3102 = vmatprep.subr.mxu0 0.0
    %3103 = vmatpush2.msra.mxu0 0.0
    %3104 = vmatprep.subr.mxu0 0.0
    %3105 = vmatpush2.msra.mxu0 0.0
    %3106 = vmatprep.subr.mxu0 0.0
    %3107 = vmatpush2.msra.mxu0 0.0
    %3108 = vmatprep.subr.mxu0 0.0
    %3109 = vmatpush2.msra.mxu0 0.0
    %3110 = vmatprep.subr.mxu0 0.0
    %3111 = vmatpush2.msra.mxu0 0.0
    %3112 = vmatprep.subr.mxu0 0.0
    %3113 = vmatpush2.msra.mxu0 0.0
    %3114 = vmatprep.subr.mxu0 0.0
    %3115 = vmatpush2.msra.mxu0 0.0
    %3116 = vmatprep.subr.mxu0 0.0
    %3117 = vmatpush2.msra.mxu0 0.0
    %3118 = vmatprep.subr.mxu0 0.0
    %3119 = vmatpush2.msra.mxu0 0.0
    %3120 = vmatprep.mubr.f32.mxu0 0.0
    %3121 = vmatmul.mubr.f32.gmra.mxu0 %v270
    %v3122 = vpop.f32.mrf.mxu0
    %v3123 = vadd.f32 0.0, %v3122
    %v3124 = vpop.f32.mrf.mxu0
    %v3125 = vadd.f32 0.0, %v3124
    %3126 = vdwg.mxu0
    %v3127 = vmul.f32 %v2768, 2.0
    %v3128 = vmul.f32 %v2770, 2.0
    %v3129 = vmul.f32 %v2839, 2.0
    %v3130 = vmul.f32 %v2841, 2.0
    %v3131 = vmul.f32 %v2910, 2.0
    %v3132 = vmul.f32 %v2912, 2.0
    %v3133 = vmul.f32 %v2981, 2.0
    %v3134 = vmul.f32 %v2983, 2.0
    %v3135 = vmul.f32 %v3052, 2.0
    %v3136 = vmul.f32 %v3054, 2.0
    %v3137 = vmul.f32 %v3123, 2.0
    %v3138 = vmul.f32 %v3125, 2.0
    %v3139 = vsub.f32 %v3127, %v1494
    %v3140 = vsub.f32 %v3128, %v1495
    %v3141 = vsub.f32 %v3129, %v1496
    %v3142 = vsub.f32 %v3130, %v1497
    %v3143 = vsub.f32 %v3131, %v1498
    %v3144 = vsub.f32 %v3132, %v1499
    %v3145 = vsub.f32 %v3133, %v1500
    %v3146 = vsub.f32 %v3134, %v1501
    %v3147 = vsub.f32 %v3135, %v1502
    %v3148 = vsub.f32 %v3136, %v1503
    %v3149 = vsub.f32 %v3137, %v1504
    %v3150 = vsub.f32 %v3138, %v1505
    %v3151 = vpack.c.bf16 %v1494, %v1494
    %v3152 = vpack.c.bf16 %v1495, %v1495
    %v3153 = vpack.c.bf16 %v1496, %v1496
    %v3154 = vpack.c.bf16 %v1497, %v1497
    %v3155 = vpack.c.bf16 %v1498, %v1498
    %v3156 = vpack.c.bf16 %v1499, %v1499
    %v3157 = vpack.c.bf16 %v1500, %v1500
    %v3158 = vpack.c.bf16 %v1501, %v1501
    %v3159 = vpack.c.bf16 %v1502, %v1502
    %v3160 = vpack.c.bf16 %v1503, %v1503
    %v3161 = vpack.c.bf16 %v1504, %v1504
    %v3162 = vpack.c.bf16 %v1505, %v1505
    %v3164 = vlaneseq
    %v3165 = vshrl.u32 %v3164, 7
    %v3166 = vsub.s32 0, %v3165
    %v3167 = vrot.slane %v2274, %v3166
    %v3168 = vlaneseq
    %v3169 = vshrl.u32 %v3168, 7
    %v3170 = vsub.s32 1, %v3169
    %v3171 = vrot.slane %v2274, %v3170
    %v3172 = vlaneseq
    %v3173 = vshrl.u32 %v3172, 7
    %v3174 = vsub.s32 2, %v3173
    %v3175 = vrot.slane %v2274, %v3174
    %v3563 = vunpack.c.l.b16 %v1506
    %v3564 = vunpack.c.h.b16 %v1506
    %v3565 = vunpack.c.l.b16 %v1507
    %v3566 = vunpack.c.l.b16 %v1508
    %v3567 = vunpack.c.h.b16 %v1508
    %v3568 = vunpack.c.l.b16 %v1509
    %v3569 = vunpack.c.l.b16 %v1510
    %v3570 = vunpack.c.h.b16 %v1510
    %v3571 = vunpack.c.l.b16 %v1511
    %v3572 = vunpack.c.l.b16 %v1512
    %v3573 = vunpack.c.h.b16 %v1512
    %v3574 = vunpack.c.l.b16 %v1513
    %v3575 = vunpack.c.l.b16 %v1514
    %v3576 = vunpack.c.h.b16 %v1514
    %v3577 = vunpack.c.l.b16 %v1515
    %v3578 = vunpack.c.l.b16 %v1516
    %v3579 = vunpack.c.h.b16 %v1516
    %v3580 = vunpack.c.l.b16 %v1517
    %v3581 = vunpack.c.l.b16 %v1518
    %v3582 = vunpack.c.h.b16 %v1518
    %v3583 = vunpack.c.l.b16 %v1519
    %v3584 = vunpack.c.l.b16 %v1520
    %v3585 = vunpack.c.h.b16 %v1520
    %v3586 = vunpack.c.l.b16 %v1521
    %v3587 = vunpack.c.l.b16 %v1522
    %v3588 = vunpack.c.h.b16 %v1522
    %v3589 = vunpack.c.l.b16 %v1523
    %v3590 = vunpack.c.l.b16 %v1524
    %v3591 = vunpack.c.h.b16 %v1524
    %v3592 = vunpack.c.l.b16 %v1525
    %v3593 = vunpack.c.l.b16 %v1526
    %v3594 = vunpack.c.h.b16 %v1526
    %v3595 = vunpack.c.l.b16 %v1527
    %v3596 = vunpack.c.l.b16 %v1528
    %v3597 = vunpack.c.h.b16 %v1528
    %v3598 = vunpack.c.l.b16 %v1529
    %v3599 = vunpack.c.l.b16 %v1530
    %v3600 = vunpack.c.h.b16 %v1530
    %v3601 = vunpack.c.l.b16 %v1531
    %v3602 = vunpack.c.l.b16 %v1532
    %v3603 = vunpack.c.h.b16 %v1532
    %v3604 = vunpack.c.l.b16 %v1533
    %v3605 = vunpack.c.l.b16 %v1534
    %v3606 = vunpack.c.h.b16 %v1534
    %v3607 = vunpack.c.l.b16 %v1535
    %v3608 = vunpack.c.l.b16 %v1536
    %v3609 = vunpack.c.h.b16 %v1536
    %v3610 = vunpack.c.l.b16 %v1537
    %v3611 = vunpack.c.l.b16 %v1538
    %v3612 = vunpack.c.h.b16 %v1538
    %v3613 = vunpack.c.l.b16 %v1539
    %v3614 = vunpack.c.l.b16 %v1540
    %v3615 = vunpack.c.h.b16 %v1540
    %v3616 = vunpack.c.l.b16 %v1541
    %v3617 = vunpack.c.l.b16 %v1542
    %v3618 = vunpack.c.h.b16 %v1542
    %v3619 = vunpack.c.l.b16 %v1543
    %v3620 = vunpack.c.l.b16 %v1544
    %v3621 = vunpack.c.h.b16 %v1544
    %v3622 = vunpack.c.l.b16 %v1545
    %v3623 = vunpack.c.l.b16 %v1546
    %v3624 = vunpack.c.h.b16 %v1546
    %v3625 = vunpack.c.l.b16 %v1547
    %v3626 = vunpack.c.l.b16 %v1548
    %v3627 = vunpack.c.h.b16 %v1548
    %v3628 = vunpack.c.l.b16 %v1549
    %v3629 = vunpack.c.l.b16 %v1550
    %v3630 = vunpack.c.h.b16 %v1550
    %v3631 = vunpack.c.l.b16 %v1551
    %v3632 = vunpack.c.l.b16 %v1552
    %v3633 = vunpack.c.h.b16 %v1552
    %v3634 = vunpack.c.l.b16 %v1553
    %v3635 = vunpack.c.l.b16 %v1554
    %v3636 = vunpack.c.h.b16 %v1554
    %v3637 = vunpack.c.l.b16 %v1555
    %v3638 = vunpack.c.l.b16 %v1556
    %v3639 = vunpack.c.h.b16 %v1556
    %v3640 = vunpack.c.l.b16 %v1557
    %v3641 = vunpack.c.l.b16 %v1558
    %v3642 = vunpack.c.h.b16 %v1558
    %v3643 = vunpack.c.l.b16 %v1559
    %v3644 = vunpack.c.l.b16 %v1560
    %v3645 = vunpack.c.h.b16 %v1560
    %v3646 = vunpack.c.l.b16 %v1561
    %v3647 = vunpack.c.l.b16 %v1562
    %v3648 = vunpack.c.h.b16 %v1562
    %v3649 = vunpack.c.l.b16 %v1563
    %v3650 = vunpack.c.l.b16 %v1564
    %v3651 = vunpack.c.h.b16 %v1564
    %v3652 = vunpack.c.l.b16 %v1565
    %v3653 = vunpack.c.l.b16 %v1566
    %v3654 = vunpack.c.h.b16 %v1566
    %v3655 = vunpack.c.l.b16 %v1567
    %v3656 = vunpack.c.l.b16 %v1568
    %v3657 = vunpack.c.h.b16 %v1568
    %v3658 = vunpack.c.l.b16 %v1569
    %v3659 = vunpack.c.l.b16 %v1570
    %v3660 = vunpack.c.h.b16 %v1570
    %v3661 = vunpack.c.l.b16 %v1571
    %v3662 = vunpack.c.l.b16 %v1572
    %v3663 = vunpack.c.h.b16 %v1572
    %v3664 = vunpack.c.l.b16 %v1573
    %v3665 = vunpack.c.l.b16 %v1574
    %v3666 = vunpack.c.h.b16 %v1574
    %v3667 = vunpack.c.l.b16 %v1575
    %v3668 = vunpack.c.l.b16 %v1576
    %v3669 = vunpack.c.h.b16 %v1576
    %v3670 = vunpack.c.l.b16 %v1577
    %v3671 = vunpack.c.l.b16 %v1578
    %v3672 = vunpack.c.h.b16 %v1578
    %v3673 = vunpack.c.l.b16 %v1579
    %v3674 = vunpack.c.l.b16 %v1580
    %v3675 = vunpack.c.h.b16 %v1580
    %v3676 = vunpack.c.l.b16 %v1581
    %v3677 = vunpack.c.l.b16 %v1582
    %v3678 = vunpack.c.h.b16 %v1582
    %v3679 = vunpack.c.l.b16 %v1583
    %v3680 = vunpack.c.l.b16 %v1584
    %v3681 = vunpack.c.h.b16 %v1584
    %v3682 = vunpack.c.l.b16 %v1585
    %v3683 = vunpack.c.l.b16 %v1586
    %v3684 = vunpack.c.h.b16 %v1586
    %v3685 = vunpack.c.l.b16 %v1587
    %v3686 = vunpack.c.l.b16 %v1588
    %v3687 = vunpack.c.h.b16 %v1588
    %v3688 = vunpack.c.l.b16 %v1589
    %v3689 = vunpack.c.l.b16 %v1590
    %v3690 = vunpack.c.h.b16 %v1590
    %v3691 = vunpack.c.l.b16 %v1591
    %v3692 = vunpack.c.l.b16 %v1592
    %v3693 = vunpack.c.h.b16 %v1592
    %v3694 = vunpack.c.l.b16 %v1593
    %v3695 = vunpack.c.l.b16 %v1594
    %v3696 = vunpack.c.h.b16 %v1594
    %v3697 = vunpack.c.l.b16 %v1595
    %v3698 = vunpack.c.l.b16 %v1596
    %v3699 = vunpack.c.h.b16 %v1596
    %v3700 = vunpack.c.l.b16 %v1597
    %v3701 = vunpack.c.l.b16 %v1598
    %v3702 = vunpack.c.h.b16 %v1598
    %v3703 = vunpack.c.l.b16 %v1599
    %v3704 = vunpack.c.l.b16 %v1600
    %v3705 = vunpack.c.h.b16 %v1600
    %v3706 = vunpack.c.l.b16 %v1601
    %v3707 = vunpack.c.l.b16 %v1602
    %v3708 = vunpack.c.h.b16 %v1602
    %v3709 = vunpack.c.l.b16 %v1603
    %v3710 = vunpack.c.l.b16 %v1604
    %v3711 = vunpack.c.h.b16 %v1604
    %v3712 = vunpack.c.l.b16 %v1605
    %v3713 = vunpack.c.l.b16 %v1606
    %v3714 = vunpack.c.h.b16 %v1606
    %v3715 = vunpack.c.l.b16 %v1607
    %v3716 = vunpack.c.l.b16 %v1608
    %v3717 = vunpack.c.h.b16 %v1608
    %v3718 = vunpack.c.l.b16 %v1609
    %v3719 = vunpack.c.l.b16 %v1610
    %v3720 = vunpack.c.h.b16 %v1610
    %v3721 = vunpack.c.l.b16 %v1611
    %v3722 = vunpack.c.l.b16 %v1612
    %v3723 = vunpack.c.h.b16 %v1612
    %v3724 = vunpack.c.l.b16 %v1613
    %v3725 = vunpack.c.l.b16 %v1614
    %v3726 = vunpack.c.h.b16 %v1614
    %v3727 = vunpack.c.l.b16 %v1615
    %v3728 = vunpack.c.l.b16 %v1616
    %v3729 = vunpack.c.h.b16 %v1616
    %v3730 = vunpack.c.l.b16 %v1617
    %v3731 = vunpack.c.l.b16 %v1618
    %v3732 = vunpack.c.h.b16 %v1618
    %v3733 = vunpack.c.l.b16 %v1619
    %v3734 = vunpack.c.l.b16 %v1620
    %v3735 = vunpack.c.h.b16 %v1620
    %v3736 = vunpack.c.l.b16 %v1621
    %v3737 = vunpack.c.l.b16 %v1622
    %v3738 = vunpack.c.h.b16 %v1622
    %v3739 = vunpack.c.l.b16 %v1623
    %v3740 = vunpack.c.l.b16 %v1624
    %v3741 = vunpack.c.h.b16 %v1624
    %v3742 = vunpack.c.l.b16 %v1625
    %v3743 = vunpack.c.l.b16 %v1626
    %v3744 = vunpack.c.h.b16 %v1626
    %v3745 = vunpack.c.l.b16 %v1627
    %v3746 = vunpack.c.l.b16 %v1628
    %v3747 = vunpack.c.h.b16 %v1628
    %v3748 = vunpack.c.l.b16 %v1629
    %v3749 = vunpack.c.l.b16 %v1630
    %v3750 = vunpack.c.h.b16 %v1630
    %v3751 = vunpack.c.l.b16 %v1631
    %v3752 = vunpack.c.l.b16 %v1632
    %v3753 = vunpack.c.h.b16 %v1632
    %v3754 = vunpack.c.l.b16 %v1633
    %v3755 = vunpack.c.l.b16 %v1634
    %v3756 = vunpack.c.h.b16 %v1634
    %v3757 = vunpack.c.l.b16 %v1635
    %v3758 = vunpack.c.l.b16 %v1636
    %v3759 = vunpack.c.h.b16 %v1636
    %v3760 = vunpack.c.l.b16 %v1637
    %v3761 = vunpack.c.l.b16 %v1638
    %v3762 = vunpack.c.h.b16 %v1638
    %v3763 = vunpack.c.l.b16 %v1639
    %v3764 = vunpack.c.l.b16 %v1640
    %v3765 = vunpack.c.h.b16 %v1640
    %v3766 = vunpack.c.l.b16 %v1641
    %v3767 = vunpack.c.l.b16 %v1642
    %v3768 = vunpack.c.h.b16 %v1642
    %v3769 = vunpack.c.l.b16 %v1643
    %v3770 = vunpack.c.l.b16 %v1644
    %v3771 = vunpack.c.h.b16 %v1644
    %v3772 = vunpack.c.l.b16 %v1645
    %v3773 = vunpack.c.l.b16 %v1646
    %v3774 = vunpack.c.h.b16 %v1646
    %v3775 = vunpack.c.l.b16 %v1647
    %v3776 = vunpack.c.l.b16 %v1648
    %v3777 = vunpack.c.h.b16 %v1648
    %v3778 = vunpack.c.l.b16 %v1649
    %v3779 = vunpack.c.l.b16 %v1650
    %v3780 = vunpack.c.h.b16 %v1650
    %v3781 = vunpack.c.l.b16 %v1651
    %v3782 = vunpack.c.l.b16 %v1652
    %v3783 = vunpack.c.h.b16 %v1652
    %v3784 = vunpack.c.l.b16 %v1653
    %v3785 = vunpack.c.l.b16 %v1654
    %v3786 = vunpack.c.h.b16 %v1654
    %v3787 = vunpack.c.l.b16 %v1655
    %v3788 = vunpack.c.l.b16 %v1656
    %v3789 = vunpack.c.h.b16 %v1656
    %v3790 = vunpack.c.l.b16 %v1657
    %v3791 = vunpack.c.l.b16 %v1658
    %v3792 = vunpack.c.h.b16 %v1658
    %v3793 = vunpack.c.l.b16 %v1659
    %v3794 = vunpack.c.l.b16 %v1660
    %v3795 = vunpack.c.h.b16 %v1660
    %v3796 = vunpack.c.l.b16 %v1661
    %v3797 = vunpack.c.l.b16 %v1662
    %v3798 = vunpack.c.h.b16 %v1662
    %v3799 = vunpack.c.l.b16 %v1663
    %v3800 = vunpack.c.l.b16 %v1664
    %v3801 = vunpack.c.h.b16 %v1664
    %v3802 = vunpack.c.l.b16 %v1665
    %v3803 = vunpack.c.l.b16 %v1666
    %v3804 = vunpack.c.h.b16 %v1666
    %v3805 = vunpack.c.l.b16 %v1667
    %v3806 = vunpack.c.l.b16 %v1668
    %v3807 = vunpack.c.h.b16 %v1668
    %v3808 = vunpack.c.l.b16 %v1669
    %v3809 = vunpack.c.l.b16 %v1670
    %v3810 = vunpack.c.h.b16 %v1670
    %v3811 = vunpack.c.l.b16 %v1671
    %v3812 = vunpack.c.l.b16 %v1672
    %v3813 = vunpack.c.h.b16 %v1672
    %v3814 = vunpack.c.l.b16 %v1673
    %v3815 = vunpack.c.l.b16 %v1674
    %v3816 = vunpack.c.h.b16 %v1674
    %v3817 = vunpack.c.l.b16 %v1675
    %v3818 = vunpack.c.l.b16 %v1676
    %v3819 = vunpack.c.h.b16 %v1676
    %v3820 = vunpack.c.l.b16 %v1677
    %v3821 = vunpack.c.l.b16 %v1678
    %v3822 = vunpack.c.h.b16 %v1678
    %v3823 = vunpack.c.l.b16 %v1679
    %v3824 = vunpack.c.l.b16 %v1680
    %v3825 = vunpack.c.h.b16 %v1680
    %v3826 = vunpack.c.l.b16 %v1681
    %v3827 = vunpack.c.l.b16 %v1682
    %v3828 = vunpack.c.h.b16 %v1682
    %v3829 = vunpack.c.l.b16 %v1683
    %v3830 = vunpack.c.l.b16 %v1684
    %v3831 = vunpack.c.h.b16 %v1684
    %v3832 = vunpack.c.l.b16 %v1685
    %v3833 = vunpack.c.l.b16 %v1686
    %v3834 = vunpack.c.h.b16 %v1686
    %v3835 = vunpack.c.l.b16 %v1687
    %v3836 = vunpack.c.l.b16 %v1688
    %v3837 = vunpack.c.h.b16 %v1688
    %v3838 = vunpack.c.l.b16 %v1689
    %v3839 = vunpack.c.l.b16 %v1690
    %v3840 = vunpack.c.h.b16 %v1690
    %v3841 = vunpack.c.l.b16 %v1691
    %v3842 = vunpack.c.l.b16 %v1692
    %v3843 = vunpack.c.h.b16 %v1692
    %v3844 = vunpack.c.l.b16 %v1693
    %v3845 = vunpack.c.l.b16 %v1694
    %v3846 = vunpack.c.h.b16 %v1694
    %v3847 = vunpack.c.l.b16 %v1695
    %v3848 = vunpack.c.l.b16 %v1696
    %v3849 = vunpack.c.h.b16 %v1696
    %v3850 = vunpack.c.l.b16 %v1697
    %v3851 = vunpack.c.l.b16 %v1698
    %v3852 = vunpack.c.h.b16 %v1698
    %v3853 = vunpack.c.l.b16 %v1699
    %v3854 = vunpack.c.l.b16 %v1700
    %v3855 = vunpack.c.h.b16 %v1700
    %v3856 = vunpack.c.l.b16 %v1701
    %v3857 = vunpack.c.l.b16 %v1702
    %v3858 = vunpack.c.h.b16 %v1702
    %v3859 = vunpack.c.l.b16 %v1703
    %v3860 = vunpack.c.l.b16 %v1704
    %v3861 = vunpack.c.h.b16 %v1704
    %v3862 = vunpack.c.l.b16 %v1705
    %v3863 = vunpack.c.l.b16 %v1706
    %v3864 = vunpack.c.h.b16 %v1706
    %v3865 = vunpack.c.l.b16 %v1707
    %v3866 = vunpack.c.l.b16 %v1708
    %v3867 = vunpack.c.h.b16 %v1708
    %v3868 = vunpack.c.l.b16 %v1709
    %v3869 = vunpack.c.l.b16 %v1710
    %v3870 = vunpack.c.h.b16 %v1710
    %v3871 = vunpack.c.l.b16 %v1711
    %v3872 = vunpack.c.l.b16 %v1712
    %v3873 = vunpack.c.h.b16 %v1712
    %v3874 = vunpack.c.l.b16 %v1713
    %v3875 = vunpack.c.l.b16 %v1714
    %v3876 = vunpack.c.h.b16 %v1714
    %v3877 = vunpack.c.l.b16 %v1715
    %v3878 = vunpack.c.l.b16 %v1716
    %v3879 = vunpack.c.h.b16 %v1716
    %v3880 = vunpack.c.l.b16 %v1717
    %v3881 = vunpack.c.l.b16 %v1718
    %v3882 = vunpack.c.h.b16 %v1718
    %v3883 = vunpack.c.l.b16 %v1719
    %v3884 = vunpack.c.l.b16 %v1720
    %v3885 = vunpack.c.h.b16 %v1720
    %v3886 = vunpack.c.l.b16 %v1721
    %v3887 = vunpack.c.l.b16 %v1722
    %v3888 = vunpack.c.h.b16 %v1722
    %v3889 = vunpack.c.l.b16 %v1723
    %v3890 = vunpack.c.l.b16 %v1724
    %v3891 = vunpack.c.h.b16 %v1724
    %v3892 = vunpack.c.l.b16 %v1725
    %v3893 = vunpack.c.l.b16 %v1726
    %v3894 = vunpack.c.h.b16 %v1726
    %v3895 = vunpack.c.l.b16 %v1727
    %v3896 = vunpack.c.l.b16 %v1728
    %v3897 = vunpack.c.h.b16 %v1728
    %v3898 = vunpack.c.l.b16 %v1729
    %v3899 = vunpack.c.l.b16 %v1730
    %v3900 = vunpack.c.h.b16 %v1730
    %v3901 = vunpack.c.l.b16 %v1731
    %v3902 = vunpack.c.l.b16 %v1732
    %v3903 = vunpack.c.h.b16 %v1732
    %v3904 = vunpack.c.l.b16 %v1733
    %v3905 = vunpack.c.l.b16 %v1734
    %v3906 = vunpack.c.h.b16 %v1734
    %v3907 = vunpack.c.l.b16 %v1735
    %v3908 = vunpack.c.l.b16 %v1736
    %v3909 = vunpack.c.h.b16 %v1736
    %v3910 = vunpack.c.l.b16 %v1737
    %v3911 = vunpack.c.l.b16 %v1738
    %v3912 = vunpack.c.h.b16 %v1738
    %v3913 = vunpack.c.l.b16 %v1739
    %v3914 = vunpack.c.l.b16 %v1740
    %v3915 = vunpack.c.h.b16 %v1740
    %v3916 = vunpack.c.l.b16 %v1741
    %v3917 = vunpack.c.l.b16 %v1742
    %v3918 = vunpack.c.h.b16 %v1742
    %v3919 = vunpack.c.l.b16 %v1743
    %v3920 = vunpack.c.l.b16 %v1744
    %v3921 = vunpack.c.h.b16 %v1744
    %v3922 = vunpack.c.l.b16 %v1745
    %v3923 = vunpack.c.l.b16 %v1746
    %v3924 = vunpack.c.h.b16 %v1746
    %v3925 = vunpack.c.l.b16 %v1747
    %v3926 = vunpack.c.l.b16 %v1748
    %v3927 = vunpack.c.h.b16 %v1748
    %v3928 = vunpack.c.l.b16 %v1749
    %v3929 = vunpack.c.l.b16 %v1750
    %v3930 = vunpack.c.h.b16 %v1750
    %v3931 = vunpack.c.l.b16 %v1751
    %v3932 = vunpack.c.l.b16 %v1752
    %v3933 = vunpack.c.h.b16 %v1752
    %v3934 = vunpack.c.l.b16 %v1753
    %v3935 = vunpack.c.l.b16 %v1754
    %v3936 = vunpack.c.h.b16 %v1754
    %v3937 = vunpack.c.l.b16 %v1755
    %v3938 = vunpack.c.l.b16 %v1756
    %v3939 = vunpack.c.h.b16 %v1756
    %v3940 = vunpack.c.l.b16 %v1757
    %v3941 = vunpack.c.l.b16 %v1758
    %v3942 = vunpack.c.h.b16 %v1758
    %v3943 = vunpack.c.l.b16 %v1759
    %v3944 = vunpack.c.l.b16 %v1760
    %v3945 = vunpack.c.h.b16 %v1760
    %v3946 = vunpack.c.l.b16 %v1761
    %v3947 = vunpack.c.l.b16 %v1762
    %v3948 = vunpack.c.h.b16 %v1762
    %v3949 = vunpack.c.l.b16 %v1763
    %v3950 = vunpack.c.l.b16 %v1764
    %v3951 = vunpack.c.h.b16 %v1764
    %v3952 = vunpack.c.l.b16 %v1765
    %v3953 = vunpack.c.l.b16 %v1766
    %v3954 = vunpack.c.h.b16 %v1766
    %v3955 = vunpack.c.l.b16 %v1767
    %v3956 = vunpack.c.l.b16 %v1768
    %v3957 = vunpack.c.h.b16 %v1768
    %v3958 = vunpack.c.l.b16 %v1769
    %v3959 = vunpack.c.l.b16 %v1770
    %v3960 = vunpack.c.h.b16 %v1770
    %v3961 = vunpack.c.l.b16 %v1771
    %v3962 = vunpack.c.l.b16 %v1772
    %v3963 = vunpack.c.h.b16 %v1772
    %v3964 = vunpack.c.l.b16 %v1773
    %v3965 = vunpack.c.l.b16 %v1774
    %v3966 = vunpack.c.h.b16 %v1774
    %v3967 = vunpack.c.l.b16 %v1775
    %v3968 = vunpack.c.l.b16 %v1776
    %v3969 = vunpack.c.h.b16 %v1776
    %v3970 = vunpack.c.l.b16 %v1777
    %v3971 = vunpack.c.l.b16 %v1778
    %v3972 = vunpack.c.h.b16 %v1778
    %v3973 = vunpack.c.l.b16 %v1779
    %v3974 = vunpack.c.l.b16 %v1780
    %v3975 = vunpack.c.h.b16 %v1780
    %v3976 = vunpack.c.l.b16 %v1781
    %v3977 = vunpack.c.l.b16 %v1782
    %v3978 = vunpack.c.h.b16 %v1782
    %v3979 = vunpack.c.l.b16 %v1783
    %v3980 = vunpack.c.l.b16 %v1784
    %v3981 = vunpack.c.h.b16 %v1784
    %v3982 = vunpack.c.l.b16 %v1785
    %v3983 = vunpack.c.l.b16 %v1786
    %v3984 = vunpack.c.h.b16 %v1786
    %v3985 = vunpack.c.l.b16 %v1787
    %v3986 = vunpack.c.l.b16 %v1788
    %v3987 = vunpack.c.h.b16 %v1788
    %v3988 = vunpack.c.l.b16 %v1789
    %v3989 = vunpack.c.l.b16 %v1790
    %v3990 = vunpack.c.h.b16 %v1790
    %v3991 = vunpack.c.l.b16 %v1791
    %v3992 = vunpack.c.l.b16 %v1792
    %v3993 = vunpack.c.h.b16 %v1792
    %v3994 = vunpack.c.l.b16 %v1793
    %v3995 = vunpack.c.l.b16 %v1794
    %v3996 = vunpack.c.h.b16 %v1794
    %v3997 = vunpack.c.l.b16 %v1795
    %v3998 = vunpack.c.l.b16 %v1796
    %v3999 = vunpack.c.h.b16 %v1796
    %v4000 = vunpack.c.l.b16 %v1797
    %v4001 = vunpack.c.l.b16 %v1798
    %v4002 = vunpack.c.h.b16 %v1798
    %v4003 = vunpack.c.l.b16 %v1799
    %v4004 = vunpack.c.l.b16 %v1800
    %v4005 = vunpack.c.h.b16 %v1800
    %v4006 = vunpack.c.l.b16 %v1801
    %v4007 = vunpack.c.l.b16 %v1802
    %v4008 = vunpack.c.h.b16 %v1802
    %v4009 = vunpack.c.l.b16 %v1803
    %v4010 = vunpack.c.l.b16 %v1804
    %v4011 = vunpack.c.h.b16 %v1804
    %v4012 = vunpack.c.l.b16 %v1805
    %v4013 = vunpack.c.l.b16 %v1806
    %v4014 = vunpack.c.h.b16 %v1806
    %v4015 = vunpack.c.l.b16 %v1807
    %v4016 = vunpack.c.l.b16 %v1808
    %v4017 = vunpack.c.h.b16 %v1808
    %v4018 = vunpack.c.l.b16 %v1809
    %v4019 = vunpack.c.l.b16 %v1810
    %v4020 = vunpack.c.h.b16 %v1810
    %v4021 = vunpack.c.l.b16 %v1811
    %v4022 = vunpack.c.l.b16 %v1812
    %v4023 = vunpack.c.h.b16 %v1812
    %v4024 = vunpack.c.l.b16 %v1813
    %v4025 = vunpack.c.l.b16 %v1814
    %v4026 = vunpack.c.h.b16 %v1814
    %v4027 = vunpack.c.l.b16 %v1815
    %v4028 = vunpack.c.l.b16 %v1816
    %v4029 = vunpack.c.h.b16 %v1816
    %v4030 = vunpack.c.l.b16 %v1817
    %v4031 = vunpack.c.l.b16 %v1818
    %v4032 = vunpack.c.h.b16 %v1818
    %v4033 = vunpack.c.l.b16 %v1819
    %v4034 = vunpack.c.l.b16 %v1820
    %v4035 = vunpack.c.h.b16 %v1820
    %v4036 = vunpack.c.l.b16 %v1821
    %v4037 = vunpack.c.l.b16 %v1822
    %v4038 = vunpack.c.h.b16 %v1822
    %v4039 = vunpack.c.l.b16 %v1823
    %v4040 = vunpack.c.l.b16 %v1824
    %v4041 = vunpack.c.h.b16 %v1824
    %v4042 = vunpack.c.l.b16 %v1825
    %v4043 = vunpack.c.l.b16 %v1826
    %v4044 = vunpack.c.h.b16 %v1826
    %v4045 = vunpack.c.l.b16 %v1827
    %v4046 = vunpack.c.l.b16 %v1828
    %v4047 = vunpack.c.h.b16 %v1828
    %v4048 = vunpack.c.l.b16 %v1829
    %v4049 = vunpack.c.l.b16 %v1830
    %v4050 = vunpack.c.h.b16 %v1830
    %v4051 = vunpack.c.l.b16 %v1831
    %v4052 = vunpack.c.l.b16 %v1832
    %v4053 = vunpack.c.h.b16 %v1832
    %v4054 = vunpack.c.l.b16 %v1833
    %v4055 = vunpack.c.l.b16 %v1834
    %v4056 = vunpack.c.h.b16 %v1834
    %v4057 = vunpack.c.l.b16 %v1835
    %v4058 = vunpack.c.l.b16 %v1836
    %v4059 = vunpack.c.h.b16 %v1836
    %v4060 = vunpack.c.l.b16 %v1837
    %v4061 = vunpack.c.l.b16 %v1838
    %v4062 = vunpack.c.h.b16 %v1838
    %v4063 = vunpack.c.l.b16 %v1839
    %v4064 = vunpack.c.l.b16 %v1840
    %v4065 = vunpack.c.h.b16 %v1840
    %v4066 = vunpack.c.l.b16 %v1841
    %v4067 = vunpack.c.l.b16 %v1842
    %v4068 = vunpack.c.h.b16 %v1842
    %v4069 = vunpack.c.l.b16 %v1843
    %v4070 = vunpack.c.l.b16 %v1844
    %v4071 = vunpack.c.h.b16 %v1844
    %v4072 = vunpack.c.l.b16 %v1845
    %v4073 = vunpack.c.l.b16 %v1846
    %v4074 = vunpack.c.h.b16 %v1846
    %v4075 = vunpack.c.l.b16 %v1847
    %v4076 = vunpack.c.l.b16 %v1848
    %v4077 = vunpack.c.h.b16 %v1848
    %v4078 = vunpack.c.l.b16 %v1849
    %v4079 = vunpack.c.l.b16 %v1850
    %v4080 = vunpack.c.h.b16 %v1850
    %v4081 = vunpack.c.l.b16 %v1851
    %v4082 = vunpack.c.l.b16 %v1852
    %v4083 = vunpack.c.h.b16 %v1852
    %v4084 = vunpack.c.l.b16 %v1853
    %v4085 = vunpack.c.l.b16 %v1854
    %v4086 = vunpack.c.h.b16 %v1854
    %v4087 = vunpack.c.l.b16 %v1855
    %v4088 = vunpack.c.l.b16 %v1856
    %v4089 = vunpack.c.h.b16 %v1856
    %v4090 = vunpack.c.l.b16 %v1857
    %v4091 = vunpack.c.l.b16 %v1858
    %v4092 = vunpack.c.h.b16 %v1858
    %v4093 = vunpack.c.l.b16 %v1859
    %v4094 = vunpack.c.l.b16 %v1860
    %v4095 = vunpack.c.h.b16 %v1860
    %v4096 = vunpack.c.l.b16 %v1861
    %v4097 = vunpack.c.l.b16 %v1862
    %v4098 = vunpack.c.h.b16 %v1862
    %v4099 = vunpack.c.l.b16 %v1863
    %v4100 = vunpack.c.l.b16 %v1864
    %v4101 = vunpack.c.h.b16 %v1864
    %v4102 = vunpack.c.l.b16 %v1865
    %v4103 = vunpack.c.l.b16 %v1866
    %v4104 = vunpack.c.h.b16 %v1866
    %v4105 = vunpack.c.l.b16 %v1867
    %v4106 = vunpack.c.l.b16 %v1868
    %v4107 = vunpack.c.h.b16 %v1868
    %v4108 = vunpack.c.l.b16 %v1869
    %v4109 = vunpack.c.l.b16 %v1870
    %v4110 = vunpack.c.h.b16 %v1870
    %v4111 = vunpack.c.l.b16 %v1871
    %v4112 = vunpack.c.l.b16 %v1872
    %v4113 = vunpack.c.h.b16 %v1872
    %v4114 = vunpack.c.l.b16 %v1873
    %v4115 = vunpack.c.l.b16 %v1874
    %v4116 = vunpack.c.h.b16 %v1874
    %v4117 = vunpack.c.l.b16 %v1875
    %v4118 = vunpack.c.l.b16 %v1876
    %v4119 = vunpack.c.h.b16 %v1876
    %v4120 = vunpack.c.l.b16 %v1877
    %v4121 = vunpack.c.l.b16 %v1878
    %v4122 = vunpack.c.h.b16 %v1878
    %v4123 = vunpack.c.l.b16 %v1879
    %v4124 = vunpack.c.l.b16 %v1880
    %v4125 = vunpack.c.h.b16 %v1880
    %v4126 = vunpack.c.l.b16 %v1881
    %v4127 = vunpack.c.l.b16 %v1882
    %v4128 = vunpack.c.h.b16 %v1882
    %v4129 = vunpack.c.l.b16 %v1883
    %v4130 = vunpack.c.l.b16 %v1884
    %v4131 = vunpack.c.h.b16 %v1884
    %v4132 = vunpack.c.l.b16 %v1885
    %v4133 = vunpack.c.l.b16 %v1886
    %v4134 = vunpack.c.h.b16 %v1886
    %v4135 = vunpack.c.l.b16 %v1887
    %v4136 = vunpack.c.l.b16 %v1888
    %v4137 = vunpack.c.h.b16 %v1888
    %v4138 = vunpack.c.l.b16 %v1889
    %v4139 = vpack.c.b16 %v3566, %v3563
    %v4140 = vpack.c.b16 %v3567, %v3564
    %v4141 = vpack.c.b16 %v3568, %v3565
    %v4142 = vpack.c.b16 %v3572, %v3569
    %v4143 = vpack.c.b16 %v3573, %v3570
    %v4144 = vpack.c.b16 %v3574, %v3571
    %v4145 = vpack.c.b16 %v3578, %v3575
    %v4146 = vpack.c.b16 %v3579, %v3576
    %v4147 = vpack.c.b16 %v3580, %v3577
    %v4148 = vpack.c.b16 %v3584, %v3581
    %v4149 = vpack.c.b16 %v3585, %v3582
    %v4150 = vpack.c.b16 %v3586, %v3583
    %v4151 = vpack.c.b16 %v3590, %v3587
    %v4152 = vpack.c.b16 %v3591, %v3588
    %v4153 = vpack.c.b16 %v3592, %v3589
    %v4154 = vpack.c.b16 %v3596, %v3593
    %v4155 = vpack.c.b16 %v3597, %v3594
    %v4156 = vpack.c.b16 %v3598, %v3595
    %v4157 = vpack.c.b16 %v3602, %v3599
    %v4158 = vpack.c.b16 %v3603, %v3600
    %v4159 = vpack.c.b16 %v3604, %v3601
    %v4160 = vpack.c.b16 %v3608, %v3605
    %v4161 = vpack.c.b16 %v3609, %v3606
    %v4162 = vpack.c.b16 %v3610, %v3607
    %v4163 = vpack.c.b16 %v3614, %v3611
    %v4164 = vpack.c.b16 %v3615, %v3612
    %v4165 = vpack.c.b16 %v3616, %v3613
    %v4166 = vpack.c.b16 %v3620, %v3617
    %v4167 = vpack.c.b16 %v3621, %v3618
    %v4168 = vpack.c.b16 %v3622, %v3619
    %v4169 = vpack.c.b16 %v3626, %v3623
    %v4170 = vpack.c.b16 %v3627, %v3624
    %v4171 = vpack.c.b16 %v3628, %v3625
    %v4172 = vpack.c.b16 %v3632, %v3629
    %v4173 = vpack.c.b16 %v3633, %v3630
    %v4174 = vpack.c.b16 %v3634, %v3631
    %v4175 = vpack.c.b16 %v3638, %v3635
    %v4176 = vpack.c.b16 %v3639, %v3636
    %v4177 = vpack.c.b16 %v3640, %v3637
    %v4178 = vpack.c.b16 %v3644, %v3641
    %v4179 = vpack.c.b16 %v3645, %v3642
    %v4180 = vpack.c.b16 %v3646, %v3643
    %v4181 = vpack.c.b16 %v3650, %v3647
    %v4182 = vpack.c.b16 %v3651, %v3648
    %v4183 = vpack.c.b16 %v3652, %v3649
    %v4184 = vpack.c.b16 %v3656, %v3653
    %v4185 = vpack.c.b16 %v3657, %v3654
    %v4186 = vpack.c.b16 %v3658, %v3655
    %v4187 = vpack.c.b16 %v3662, %v3659
    %v4188 = vpack.c.b16 %v3663, %v3660
    %v4189 = vpack.c.b16 %v3664, %v3661
    %v4190 = vpack.c.b16 %v3668, %v3665
    %v4191 = vpack.c.b16 %v3669, %v3666
    %v4192 = vpack.c.b16 %v3670, %v3667
    %v4193 = vpack.c.b16 %v3674, %v3671
    %v4194 = vpack.c.b16 %v3675, %v3672
    %v4195 = vpack.c.b16 %v3676, %v3673
    %v4196 = vpack.c.b16 %v3680, %v3677
    %v4197 = vpack.c.b16 %v3681, %v3678
    %v4198 = vpack.c.b16 %v3682, %v3679
    %v4199 = vpack.c.b16 %v3686, %v3683
    %v4200 = vpack.c.b16 %v3687, %v3684
    %v4201 = vpack.c.b16 %v3688, %v3685
    %v4202 = vpack.c.b16 %v3692, %v3689
    %v4203 = vpack.c.b16 %v3693, %v3690
    %v4204 = vpack.c.b16 %v3694, %v3691
    %v4205 = vpack.c.b16 %v3698, %v3695
    %v4206 = vpack.c.b16 %v3699, %v3696
    %v4207 = vpack.c.b16 %v3700, %v3697
    %v4208 = vpack.c.b16 %v3704, %v3701
    %v4209 = vpack.c.b16 %v3705, %v3702
    %v4210 = vpack.c.b16 %v3706, %v3703
    %v4211 = vpack.c.b16 %v3710, %v3707
    %v4212 = vpack.c.b16 %v3711, %v3708
    %v4213 = vpack.c.b16 %v3712, %v3709
    %v4214 = vpack.c.b16 %v3716, %v3713
    %v4215 = vpack.c.b16 %v3717, %v3714
    %v4216 = vpack.c.b16 %v3718, %v3715
    %v4217 = vpack.c.b16 %v3722, %v3719
    %v4218 = vpack.c.b16 %v3723, %v3720
    %v4219 = vpack.c.b16 %v3724, %v3721
    %v4220 = vpack.c.b16 %v3728, %v3725
    %v4221 = vpack.c.b16 %v3729, %v3726
    %v4222 = vpack.c.b16 %v3730, %v3727
    %v4223 = vpack.c.b16 %v3734, %v3731
    %v4224 = vpack.c.b16 %v3735, %v3732
    %v4225 = vpack.c.b16 %v3736, %v3733
    %v4226 = vpack.c.b16 %v3740, %v3737
    %v4227 = vpack.c.b16 %v3741, %v3738
    %v4228 = vpack.c.b16 %v3742, %v3739
    %v4229 = vpack.c.b16 %v3746, %v3743
    %v4230 = vpack.c.b16 %v3747, %v3744
    %v4231 = vpack.c.b16 %v3748, %v3745
    %v4232 = vpack.c.b16 %v3752, %v3749
    %v4233 = vpack.c.b16 %v3753, %v3750
    %v4234 = vpack.c.b16 %v3754, %v3751
    %v4235 = vpack.c.b16 %v3758, %v3755
    %v4236 = vpack.c.b16 %v3759, %v3756
    %v4237 = vpack.c.b16 %v3760, %v3757
    %v4238 = vpack.c.b16 %v3764, %v3761
    %v4239 = vpack.c.b16 %v3765, %v3762
    %v4240 = vpack.c.b16 %v3766, %v3763
    %v4241 = vpack.c.b16 %v3770, %v3767
    %v4242 = vpack.c.b16 %v3771, %v3768
    %v4243 = vpack.c.b16 %v3772, %v3769
    %v4244 = vpack.c.b16 %v3776, %v3773
    %v4245 = vpack.c.b16 %v3777, %v3774
    %v4246 = vpack.c.b16 %v3778, %v3775
    %v4247 = vpack.c.b16 %v3782, %v3779
    %v4248 = vpack.c.b16 %v3783, %v3780
    %v4249 = vpack.c.b16 %v3784, %v3781
    %v4250 = vpack.c.b16 %v3788, %v3785
    %v4251 = vpack.c.b16 %v3789, %v3786
    %v4252 = vpack.c.b16 %v3790, %v3787
    %v4253 = vpack.c.b16 %v3794, %v3791
    %v4254 = vpack.c.b16 %v3795, %v3792
    %v4255 = vpack.c.b16 %v3796, %v3793
    %v4256 = vpack.c.b16 %v3800, %v3797
    %v4257 = vpack.c.b16 %v3801, %v3798
    %v4258 = vpack.c.b16 %v3802, %v3799
    %v4259 = vpack.c.b16 %v3806, %v3803
    %v4260 = vpack.c.b16 %v3807, %v3804
    %v4261 = vpack.c.b16 %v3808, %v3805
    %v4262 = vpack.c.b16 %v3812, %v3809
    %v4263 = vpack.c.b16 %v3813, %v3810
    %v4264 = vpack.c.b16 %v3814, %v3811
    %v4265 = vpack.c.b16 %v3818, %v3815
    %v4266 = vpack.c.b16 %v3819, %v3816
    %v4267 = vpack.c.b16 %v3820, %v3817
    %v4268 = vpack.c.b16 %v3824, %v3821
    %v4269 = vpack.c.b16 %v3825, %v3822
    %v4270 = vpack.c.b16 %v3826, %v3823
    %v4271 = vpack.c.b16 %v3830, %v3827
    %v4272 = vpack.c.b16 %v3831, %v3828
    %v4273 = vpack.c.b16 %v3832, %v3829
    %v4274 = vpack.c.b16 %v3836, %v3833
    %v4275 = vpack.c.b16 %v3837, %v3834
    %v4276 = vpack.c.b16 %v3838, %v3835
    %v4277 = vpack.c.b16 %v3842, %v3839
    %v4278 = vpack.c.b16 %v3843, %v3840
    %v4279 = vpack.c.b16 %v3844, %v3841
    %v4280 = vpack.c.b16 %v3848, %v3845
    %v4281 = vpack.c.b16 %v3849, %v3846
    %v4282 = vpack.c.b16 %v3850, %v3847
    %v4283 = vpack.c.b16 %v3854, %v3851
    %v4284 = vpack.c.b16 %v3855, %v3852
    %v4285 = vpack.c.b16 %v3856, %v3853
    %v4286 = vpack.c.b16 %v3860, %v3857
    %v4287 = vpack.c.b16 %v3861, %v3858
    %v4288 = vpack.c.b16 %v3862, %v3859
    %v4289 = vpack.c.b16 %v3866, %v3863
    %v4290 = vpack.c.b16 %v3867, %v3864
    %v4291 = vpack.c.b16 %v3868, %v3865
    %v4292 = vpack.c.b16 %v3872, %v3869
    %v4293 = vpack.c.b16 %v3873, %v3870
    %v4294 = vpack.c.b16 %v3874, %v3871
    %v4295 = vpack.c.b16 %v3878, %v3875
    %v4296 = vpack.c.b16 %v3879, %v3876
    %v4297 = vpack.c.b16 %v3880, %v3877
    %v4298 = vpack.c.b16 %v3884, %v3881
    %v4299 = vpack.c.b16 %v3885, %v3882
    %v4300 = vpack.c.b16 %v3886, %v3883
    %v4301 = vpack.c.b16 %v3890, %v3887
    %v4302 = vpack.c.b16 %v3891, %v3888
    %v4303 = vpack.c.b16 %v3892, %v3889
    %v4304 = vpack.c.b16 %v3896, %v3893
    %v4305 = vpack.c.b16 %v3897, %v3894
    %v4306 = vpack.c.b16 %v3898, %v3895
    %v4307 = vpack.c.b16 %v3902, %v3899
    %v4308 = vpack.c.b16 %v3903, %v3900
    %v4309 = vpack.c.b16 %v3904, %v3901
    %v4310 = vpack.c.b16 %v3908, %v3905
    %v4311 = vpack.c.b16 %v3909, %v3906
    %v4312 = vpack.c.b16 %v3910, %v3907
    %v4313 = vpack.c.b16 %v3914, %v3911
    %v4314 = vpack.c.b16 %v3915, %v3912
    %v4315 = vpack.c.b16 %v3916, %v3913
    %v4316 = vpack.c.b16 %v3920, %v3917
    %v4317 = vpack.c.b16 %v3921, %v3918
    %v4318 = vpack.c.b16 %v3922, %v3919
    %v4319 = vpack.c.b16 %v3926, %v3923
    %v4320 = vpack.c.b16 %v3927, %v3924
    %v4321 = vpack.c.b16 %v3928, %v3925
    %v4322 = vpack.c.b16 %v3932, %v3929
    %v4323 = vpack.c.b16 %v3933, %v3930
    %v4324 = vpack.c.b16 %v3934, %v3931
    %v4325 = vpack.c.b16 %v3938, %v3935
    %v4326 = vpack.c.b16 %v3939, %v3936
    %v4327 = vpack.c.b16 %v3940, %v3937
    %v4328 = vpack.c.b16 %v3944, %v3941
    %v4329 = vpack.c.b16 %v3945, %v3942
    %v4330 = vpack.c.b16 %v3946, %v3943
    %v4331 = vpack.c.b16 %v3950, %v3947
    %v4332 = vpack.c.b16 %v3951, %v3948
    %v4333 = vpack.c.b16 %v3952, %v3949
    %v4334 = vpack.c.b16 %v3956, %v3953
    %v4335 = vpack.c.b16 %v3957, %v3954
    %v4336 = vpack.c.b16 %v3958, %v3955
    %v4337 = vpack.c.b16 %v3962, %v3959
    %v4338 = vpack.c.b16 %v3963, %v3960
    %v4339 = vpack.c.b16 %v3964, %v3961
    %v4340 = vpack.c.b16 %v3968, %v3965
    %v4341 = vpack.c.b16 %v3969, %v3966
    %v4342 = vpack.c.b16 %v3970, %v3967
    %v4343 = vpack.c.b16 %v3974, %v3971
    %v4344 = vpack.c.b16 %v3975, %v3972
    %v4345 = vpack.c.b16 %v3976, %v3973
    %v4346 = vpack.c.b16 %v3980, %v3977
    %v4347 = vpack.c.b16 %v3981, %v3978
    %v4348 = vpack.c.b16 %v3982, %v3979
    %v4349 = vpack.c.b16 %v3986, %v3983
    %v4350 = vpack.c.b16 %v3987, %v3984
    %v4351 = vpack.c.b16 %v3988, %v3985
    %v4352 = vpack.c.b16 %v3992, %v3989
    %v4353 = vpack.c.b16 %v3993, %v3990
    %v4354 = vpack.c.b16 %v3994, %v3991
    %v4355 = vpack.c.b16 %v3998, %v3995
    %v4356 = vpack.c.b16 %v3999, %v3996
    %v4357 = vpack.c.b16 %v4000, %v3997
    %v4358 = vpack.c.b16 %v4004, %v4001
    %v4359 = vpack.c.b16 %v4005, %v4002
    %v4360 = vpack.c.b16 %v4006, %v4003
    %v4361 = vpack.c.b16 %v4010, %v4007
    %v4362 = vpack.c.b16 %v4011, %v4008
    %v4363 = vpack.c.b16 %v4012, %v4009
    %v4364 = vpack.c.b16 %v4016, %v4013
    %v4365 = vpack.c.b16 %v4017, %v4014
    %v4366 = vpack.c.b16 %v4018, %v4015
    %v4367 = vpack.c.b16 %v4022, %v4019
    %v4368 = vpack.c.b16 %v4023, %v4020
    %v4369 = vpack.c.b16 %v4024, %v4021
    %v4370 = vpack.c.b16 %v4028, %v4025
    %v4371 = vpack.c.b16 %v4029, %v4026
    %v4372 = vpack.c.b16 %v4030, %v4027
    %v4373 = vpack.c.b16 %v4034, %v4031
    %v4374 = vpack.c.b16 %v4035, %v4032
    %v4375 = vpack.c.b16 %v4036, %v4033
    %v4376 = vpack.c.b16 %v4040, %v4037
    %v4377 = vpack.c.b16 %v4041, %v4038
    %v4378 = vpack.c.b16 %v4042, %v4039
    %v4379 = vpack.c.b16 %v4046, %v4043
    %v4380 = vpack.c.b16 %v4047, %v4044
    %v4381 = vpack.c.b16 %v4048, %v4045
    %v4382 = vpack.c.b16 %v4052, %v4049
    %v4383 = vpack.c.b16 %v4053, %v4050
    %v4384 = vpack.c.b16 %v4054, %v4051
    %v4385 = vpack.c.b16 %v4058, %v4055
    %v4386 = vpack.c.b16 %v4059, %v4056
    %v4387 = vpack.c.b16 %v4060, %v4057
    %v4388 = vpack.c.b16 %v4064, %v4061
    %v4389 = vpack.c.b16 %v4065, %v4062
    %v4390 = vpack.c.b16 %v4066, %v4063
    %v4391 = vpack.c.b16 %v4070, %v4067
    %v4392 = vpack.c.b16 %v4071, %v4068
    %v4393 = vpack.c.b16 %v4072, %v4069
    %v4394 = vpack.c.b16 %v4076, %v4073
    %v4395 = vpack.c.b16 %v4077, %v4074
    %v4396 = vpack.c.b16 %v4078, %v4075
    %v4397 = vpack.c.b16 %v4082, %v4079
    %v4398 = vpack.c.b16 %v4083, %v4080
    %v4399 = vpack.c.b16 %v4084, %v4081
    %v4400 = vpack.c.b16 %v4088, %v4085
    %v4401 = vpack.c.b16 %v4089, %v4086
    %v4402 = vpack.c.b16 %v4090, %v4087
    %v4403 = vpack.c.b16 %v4094, %v4091
    %v4404 = vpack.c.b16 %v4095, %v4092
    %v4405 = vpack.c.b16 %v4096, %v4093
    %v4406 = vpack.c.b16 %v4100, %v4097
    %v4407 = vpack.c.b16 %v4101, %v4098
    %v4408 = vpack.c.b16 %v4102, %v4099
    %v4409 = vpack.c.b16 %v4106, %v4103
    %v4410 = vpack.c.b16 %v4107, %v4104
    %v4411 = vpack.c.b16 %v4108, %v4105
    %v4412 = vpack.c.b16 %v4112, %v4109
    %v4413 = vpack.c.b16 %v4113, %v4110
    %v4414 = vpack.c.b16 %v4114, %v4111
    %v4415 = vpack.c.b16 %v4118, %v4115
    %v4416 = vpack.c.b16 %v4119, %v4116
    %v4417 = vpack.c.b16 %v4120, %v4117
    %v4418 = vpack.c.b16 %v4124, %v4121
    %v4419 = vpack.c.b16 %v4125, %v4122
    %v4420 = vpack.c.b16 %v4126, %v4123
    %v4421 = vpack.c.b16 %v4130, %v4127
    %v4422 = vpack.c.b16 %v4131, %v4128
    %v4423 = vpack.c.b16 %v4132, %v4129
    %v4424 = vpack.c.b16 %v4136, %v4133
    %v4425 = vpack.c.b16 %v4137, %v4134
    %v4426 = vpack.c.b16 %v4138, %v4135
    %4715 = vmatprep.subr.bf16.mxu0 %v4161
    %4716 = vmatpush1.bf16.msra.mxu0 %v4160
    %4717 = vmatprep.subr.bf16.mxu0 %v4158
    %4718 = vmatpush1.bf16.msra.mxu0 %v4157
    %4719 = vmatprep.subr.bf16.mxu0 %v4155
    %4720 = vmatpush1.bf16.msra.mxu0 %v4154
    %4721 = vmatprep.subr.bf16.mxu0 %v4152
    %4722 = vmatpush1.bf16.msra.mxu0 %v4151
    %4723 = vmatprep.subr.bf16.mxu0 %v4149
    %4724 = vmatpush1.bf16.msra.mxu0 %v4148
    %4725 = vmatprep.subr.bf16.mxu0 %v4146
    %4726 = vmatpush1.bf16.msra.mxu0 %v4145
    %4727 = vmatprep.subr.bf16.mxu0 %v4143
    %4728 = vmatpush1.bf16.msra.mxu0 %v4142
    %4729 = vmatprep.subr.bf16.mxu0 %v4140
    %4730 = vmatpush1.bf16.msra.mxu0 %v4139
    %4731 = vmatprep.subr.bf16.mxu0 %v4185
    %4732 = vmatpush2.bf16.msra.mxu0 %v4184
    %4733 = vmatprep.subr.bf16.mxu0 %v4182
    %4734 = vmatpush2.bf16.msra.mxu0 %v4181
    %4735 = vmatprep.subr.bf16.mxu0 %v4179
    %4736 = vmatpush2.bf16.msra.mxu0 %v4178
    %4737 = vmatprep.subr.bf16.mxu0 %v4176
    %4738 = vmatpush2.bf16.msra.mxu0 %v4175
    %4739 = vmatprep.subr.bf16.mxu0 %v4173
    %4740 = vmatpush2.bf16.msra.mxu0 %v4172
    %4741 = vmatprep.subr.bf16.mxu0 %v4170
    %4742 = vmatpush2.bf16.msra.mxu0 %v4169
    %4743 = vmatprep.subr.bf16.mxu0 %v4167
    %4744 = vmatpush2.bf16.msra.mxu0 %v4166
    %4745 = vmatprep.subr.bf16.mxu0 %v4164
    %4746 = vmatpush2.bf16.msra.mxu0 %v4163
    %4747 = vmatprep.mubr.bf16.mxu0 %v3152
    %4748 = vmatmul.mubr.bf16.gmra.mxu0 %v3151
    %v4749 = vpop.f32.mrf.mxu0
    %v4750 = vadd.f32 %v3167, %v4749
    %v4751 = vpop.f32.mrf.mxu0
    %v4752 = vadd.f32 %v3171, %v4751
    %v4753 = vpop.f32.mrf.mxu0
    %v4754 = vpop.f32.mrf.mxu0
    %4755 = vdwg.mxu0
    %4756 = vmatprep.subr.bf16.mxu0 %v4209
    %4757 = vmatpush1.bf16.msra.mxu0 %v4208
    %4758 = vmatprep.subr.bf16.mxu0 %v4206
    %4759 = vmatpush1.bf16.msra.mxu0 %v4205
    %4760 = vmatprep.subr.bf16.mxu0 %v4203
    %4761 = vmatpush1.bf16.msra.mxu0 %v4202
    %4762 = vmatprep.subr.bf16.mxu0 %v4200
    %4763 = vmatpush1.bf16.msra.mxu0 %v4199
    %4764 = vmatprep.subr.bf16.mxu0 %v4197
    %4765 = vmatpush1.bf16.msra.mxu0 %v4196
    %4766 = vmatprep.subr.bf16.mxu0 %v4194
    %4767 = vmatpush1.bf16.msra.mxu0 %v4193
    %4768 = vmatprep.subr.bf16.mxu0 %v4191
    %4769 = vmatpush1.bf16.msra.mxu0 %v4190
    %4770 = vmatprep.subr.bf16.mxu0 %v4188
    %4771 = vmatpush1.bf16.msra.mxu0 %v4187
    %4772 = vmatprep.subr.bf16.mxu0 %v4233
    %4773 = vmatpush2.bf16.msra.mxu0 %v4232
    %4774 = vmatprep.subr.bf16.mxu0 %v4230
    %4775 = vmatpush2.bf16.msra.mxu0 %v4229
    %4776 = vmatprep.subr.bf16.mxu0 %v4227
    %4777 = vmatpush2.bf16.msra.mxu0 %v4226
    %4778 = vmatprep.subr.bf16.mxu0 %v4224
    %4779 = vmatpush2.bf16.msra.mxu0 %v4223
    %4780 = vmatprep.subr.bf16.mxu0 %v4221
    %4781 = vmatpush2.bf16.msra.mxu0 %v4220
    %4782 = vmatprep.subr.bf16.mxu0 %v4218
    %4783 = vmatpush2.bf16.msra.mxu0 %v4217
    %4784 = vmatprep.subr.bf16.mxu0 %v4215
    %4785 = vmatpush2.bf16.msra.mxu0 %v4214
    %4786 = vmatprep.subr.bf16.mxu0 %v4212
    %4787 = vmatpush2.bf16.msra.mxu0 %v4211
    %4788 = vmatprep.mubr.bf16.mxu0 %v3154
    %4789 = vmatmul.mubr.bf16.gmra.mxu0 %v3153
    %v4790 = vpop.f32.mrf.mxu0
    %v4791 = vadd.f32 %v4750, %v4790
    %v4792 = vpop.f32.mrf.mxu0
    %v4793 = vadd.f32 %v4752, %v4792
    %v4794 = vpop.f32.mrf.mxu0
    %v4795 = vpop.f32.mrf.mxu0
    %4796 = vdwg.mxu0
    %4797 = vmatprep.subr.bf16.mxu0 %v4257
    %4798 = vmatpush1.bf16.msra.mxu0 %v4256
    %4799 = vmatprep.subr.bf16.mxu0 %v4254
    %4800 = vmatpush1.bf16.msra.mxu0 %v4253
    %4801 = vmatprep.subr.bf16.mxu0 %v4251
    %4802 = vmatpush1.bf16.msra.mxu0 %v4250
    %4803 = vmatprep.subr.bf16.mxu0 %v4248
    %4804 = vmatpush1.bf16.msra.mxu0 %v4247
    %4805 = vmatprep.subr.bf16.mxu0 %v4245
    %4806 = vmatpush1.bf16.msra.mxu0 %v4244
    %4807 = vmatprep.subr.bf16.mxu0 %v4242
    %4808 = vmatpush1.bf16.msra.mxu0 %v4241
    %4809 = vmatprep.subr.bf16.mxu0 %v4239
    %4810 = vmatpush1.bf16.msra.mxu0 %v4238
    %4811 = vmatprep.subr.bf16.mxu0 %v4236
    %4812 = vmatpush1.bf16.msra.mxu0 %v4235
    %4813 = vmatprep.subr.bf16.mxu0 %v4281
    %4814 = vmatpush2.bf16.msra.mxu0 %v4280
    %4815 = vmatprep.subr.bf16.mxu0 %v4278
    %4816 = vmatpush2.bf16.msra.mxu0 %v4277
    %4817 = vmatprep.subr.bf16.mxu0 %v4275
    %4818 = vmatpush2.bf16.msra.mxu0 %v4274
    %4819 = vmatprep.subr.bf16.mxu0 %v4272
    %4820 = vmatpush2.bf16.msra.mxu0 %v4271
    %4821 = vmatprep.subr.bf16.mxu0 %v4269
    %4822 = vmatpush2.bf16.msra.mxu0 %v4268
    %4823 = vmatprep.subr.bf16.mxu0 %v4266
    %4824 = vmatpush2.bf16.msra.mxu0 %v4265
    %4825 = vmatprep.subr.bf16.mxu0 %v4263
    %4826 = vmatpush2.bf16.msra.mxu0 %v4262
    %4827 = vmatprep.subr.bf16.mxu0 %v4260
    %4828 = vmatpush2.bf16.msra.mxu0 %v4259
    %4829 = vmatprep.mubr.bf16.mxu0 %v3156
    %4830 = vmatmul.mubr.bf16.gmra.mxu0 %v3155
    %v4831 = vpop.f32.mrf.mxu0
    %v4832 = vadd.f32 %v4791, %v4831
    %v4833 = vpop.f32.mrf.mxu0
    %v4834 = vadd.f32 %v4793, %v4833
    %v4835 = vpop.f32.mrf.mxu0
    %v4836 = vpop.f32.mrf.mxu0
    %4837 = vdwg.mxu0
    %4838 = vmatprep.subr.bf16.mxu0 %v4305
    %4839 = vmatpush1.bf16.msra.mxu0 %v4304
    %4840 = vmatprep.subr.bf16.mxu0 %v4302
    %4841 = vmatpush1.bf16.msra.mxu0 %v4301
    %4842 = vmatprep.subr.bf16.mxu0 %v4299
    %4843 = vmatpush1.bf16.msra.mxu0 %v4298
    %4844 = vmatprep.subr.bf16.mxu0 %v4296
    %4845 = vmatpush1.bf16.msra.mxu0 %v4295
    %4846 = vmatprep.subr.bf16.mxu0 %v4293
    %4847 = vmatpush1.bf16.msra.mxu0 %v4292
    %4848 = vmatprep.subr.bf16.mxu0 %v4290
    %4849 = vmatpush1.bf16.msra.mxu0 %v4289
    %4850 = vmatprep.subr.bf16.mxu0 %v4287
    %4851 = vmatpush1.bf16.msra.mxu0 %v4286
    %4852 = vmatprep.subr.bf16.mxu0 %v4284
    %4853 = vmatpush1.bf16.msra.mxu0 %v4283
    %4854 = vmatprep.subr.bf16.mxu0 %v4329
    %4855 = vmatpush2.bf16.msra.mxu0 %v4328
    %4856 = vmatprep.subr.bf16.mxu0 %v4326
    %4857 = vmatpush2.bf16.msra.mxu0 %v4325
    %4858 = vmatprep.subr.bf16.mxu0 %v4323
    %4859 = vmatpush2.bf16.msra.mxu0 %v4322
    %4860 = vmatprep.subr.bf16.mxu0 %v4320
    %4861 = vmatpush2.bf16.msra.mxu0 %v4319
    %4862 = vmatprep.subr.bf16.mxu0 %v4317
    %4863 = vmatpush2.bf16.msra.mxu0 %v4316
    %4864 = vmatprep.subr.bf16.mxu0 %v4314
    %4865 = vmatpush2.bf16.msra.mxu0 %v4313
    %4866 = vmatprep.subr.bf16.mxu0 %v4311
    %4867 = vmatpush2.bf16.msra.mxu0 %v4310
    %4868 = vmatprep.subr.bf16.mxu0 %v4308
    %4869 = vmatpush2.bf16.msra.mxu0 %v4307
    %4870 = vmatprep.mubr.bf16.mxu0 %v3158
    %4871 = vmatmul.mubr.bf16.gmra.mxu0 %v3157
    %v4872 = vpop.f32.mrf.mxu0
    %v4873 = vadd.f32 %v4832, %v4872
    %v4874 = vpop.f32.mrf.mxu0
    %v4875 = vadd.f32 %v4834, %v4874
    %v4876 = vpop.f32.mrf.mxu0
    %v4877 = vpop.f32.mrf.mxu0
    %4878 = vdwg.mxu0
    %4879 = vmatprep.subr.bf16.mxu0 %v4353
    %4880 = vmatpush1.bf16.msra.mxu0 %v4352
    %4881 = vmatprep.subr.bf16.mxu0 %v4350
    %4882 = vmatpush1.bf16.msra.mxu0 %v4349
    %4883 = vmatprep.subr.bf16.mxu0 %v4347
    %4884 = vmatpush1.bf16.msra.mxu0 %v4346
    %4885 = vmatprep.subr.bf16.mxu0 %v4344
    %4886 = vmatpush1.bf16.msra.mxu0 %v4343
    %4887 = vmatprep.subr.bf16.mxu0 %v4341
    %4888 = vmatpush1.bf16.msra.mxu0 %v4340
    %4889 = vmatprep.subr.bf16.mxu0 %v4338
    %4890 = vmatpush1.bf16.msra.mxu0 %v4337
    %4891 = vmatprep.subr.bf16.mxu0 %v4335
    %4892 = vmatpush1.bf16.msra.mxu0 %v4334
    %4893 = vmatprep.subr.bf16.mxu0 %v4332
    %4894 = vmatpush1.bf16.msra.mxu0 %v4331
    %4895 = vmatprep.subr.bf16.mxu0 %v4377
    %4896 = vmatpush2.bf16.msra.mxu0 %v4376
    %4897 = vmatprep.subr.bf16.mxu0 %v4374
    %4898 = vmatpush2.bf16.msra.mxu0 %v4373
    %4899 = vmatprep.subr.bf16.mxu0 %v4371
    %4900 = vmatpush2.bf16.msra.mxu0 %v4370
    %4901 = vmatprep.subr.bf16.mxu0 %v4368
    %4902 = vmatpush2.bf16.msra.mxu0 %v4367
    %4903 = vmatprep.subr.bf16.mxu0 %v4365
    %4904 = vmatpush2.bf16.msra.mxu0 %v4364
    %4905 = vmatprep.subr.bf16.mxu0 %v4362
    %4906 = vmatpush2.bf16.msra.mxu0 %v4361
    %4907 = vmatprep.subr.bf16.mxu0 %v4359
    %4908 = vmatpush2.bf16.msra.mxu0 %v4358
    %4909 = vmatprep.subr.bf16.mxu0 %v4356
    %4910 = vmatpush2.bf16.msra.mxu0 %v4355
    %4911 = vmatprep.mubr.bf16.mxu0 %v3160
    %4912 = vmatmul.mubr.bf16.gmra.mxu0 %v3159
    %v4913 = vpop.f32.mrf.mxu0
    %v4914 = vadd.f32 %v4873, %v4913
    %v4915 = vpop.f32.mrf.mxu0
    %v4916 = vadd.f32 %v4875, %v4915
    %v4917 = vpop.f32.mrf.mxu0
    %v4918 = vpop.f32.mrf.mxu0
    %4919 = vdwg.mxu0
    %4920 = vmatprep.subr.bf16.mxu0 %v4401
    %4921 = vmatpush1.bf16.msra.mxu0 %v4400
    %4922 = vmatprep.subr.bf16.mxu0 %v4398
    %4923 = vmatpush1.bf16.msra.mxu0 %v4397
    %4924 = vmatprep.subr.bf16.mxu0 %v4395
    %4925 = vmatpush1.bf16.msra.mxu0 %v4394
    %4926 = vmatprep.subr.bf16.mxu0 %v4392
    %4927 = vmatpush1.bf16.msra.mxu0 %v4391
    %4928 = vmatprep.subr.bf16.mxu0 %v4389
    %4929 = vmatpush1.bf16.msra.mxu0 %v4388
    %4930 = vmatprep.subr.bf16.mxu0 %v4386
    %4931 = vmatpush1.bf16.msra.mxu0 %v4385
    %4932 = vmatprep.subr.bf16.mxu0 %v4383
    %4933 = vmatpush1.bf16.msra.mxu0 %v4382
    %4934 = vmatprep.subr.bf16.mxu0 %v4380
    %4935 = vmatpush1.bf16.msra.mxu0 %v4379
    %4936 = vmatprep.subr.bf16.mxu0 %v4425
    %4937 = vmatpush2.bf16.msra.mxu0 %v4424
    %4938 = vmatprep.subr.bf16.mxu0 %v4422
    %4939 = vmatpush2.bf16.msra.mxu0 %v4421
    %4940 = vmatprep.subr.bf16.mxu0 %v4419
    %4941 = vmatpush2.bf16.msra.mxu0 %v4418
    %4942 = vmatprep.subr.bf16.mxu0 %v4416
    %4943 = vmatpush2.bf16.msra.mxu0 %v4415
    %4944 = vmatprep.subr.bf16.mxu0 %v4413
    %4945 = vmatpush2.bf16.msra.mxu0 %v4412
    %4946 = vmatprep.subr.bf16.mxu0 %v4410
    %4947 = vmatpush2.bf16.msra.mxu0 %v4409
    %4948 = vmatprep.subr.bf16.mxu0 %v4407
    %4949 = vmatpush2.bf16.msra.mxu0 %v4406
    %4950 = vmatprep.subr.bf16.mxu0 %v4404
    %4951 = vmatpush2.bf16.msra.mxu0 %v4403
    %4952 = vmatprep.mubr.bf16.mxu0 %v3162
    %4953 = vmatmul.mubr.bf16.gmra.mxu0 %v3161
    %v4954 = vpop.f32.mrf.mxu0
    %v4955 = vadd.f32 %v4914, %v4954
    %v4956 = vpop.f32.mrf.mxu0
    %v4957 = vadd.f32 %v4916, %v4956
    %v4958 = vpop.f32.mrf.mxu0
    %v4959 = vpop.f32.mrf.mxu0
    %4960 = vdwg.mxu0
    %4961 = vmatprep.subr.bf16.mxu0 0
    %4962 = vmatpush1.bf16.msra.mxu0 %v4162
    %4963 = vmatprep.subr.bf16.mxu0 0
    %4964 = vmatpush1.bf16.msra.mxu0 %v4159
    %4965 = vmatprep.subr.bf16.mxu0 0
    %4966 = vmatpush1.bf16.msra.mxu0 %v4156
    %4967 = vmatprep.subr.bf16.mxu0 0
    %4968 = vmatpush1.bf16.msra.mxu0 %v4153
    %4969 = vmatprep.subr.bf16.mxu0 0
    %4970 = vmatpush1.bf16.msra.mxu0 %v4150
    %4971 = vmatprep.subr.bf16.mxu0 0
    %4972 = vmatpush1.bf16.msra.mxu0 %v4147
    %4973 = vmatprep.subr.bf16.mxu0 0
    %4974 = vmatpush1.bf16.msra.mxu0 %v4144
    %4975 = vmatprep.subr.bf16.mxu0 0
    %4976 = vmatpush1.bf16.msra.mxu0 %v4141
    %4977 = vmatprep.subr.bf16.mxu0 0
    %4978 = vmatpush2.bf16.msra.mxu0 %v4186
    %4979 = vmatprep.subr.bf16.mxu0 0
    %4980 = vmatpush2.bf16.msra.mxu0 %v4183
    %4981 = vmatprep.subr.bf16.mxu0 0
    %4982 = vmatpush2.bf16.msra.mxu0 %v4180
    %4983 = vmatprep.subr.bf16.mxu0 0
    %4984 = vmatpush2.bf16.msra.mxu0 %v4177
    %4985 = vmatprep.subr.bf16.mxu0 0
    %4986 = vmatpush2.bf16.msra.mxu0 %v4174
    %4987 = vmatprep.subr.bf16.mxu0 0
    %4988 = vmatpush2.bf16.msra.mxu0 %v4171
    %4989 = vmatprep.subr.bf16.mxu0 0
    %4990 = vmatpush2.bf16.msra.mxu0 %v4168
    %4991 = vmatprep.subr.bf16.mxu0 0
    %4992 = vmatpush2.bf16.msra.mxu0 %v4165
    %4993 = vmatprep.mubr.bf16.mxu0 %v3152
    %4994 = vmatmul.mubr.bf16.gmra.mxu0 %v3151
    %v4995 = vpop.f32.mrf.mxu0
    %v4996 = vadd.f32 %v3175, %v4995
    %v4997 = vpop.f32.mrf.mxu0
    %v4998 = vpop.f32.mrf.mxu0
    %v4999 = vpop.f32.mrf.mxu0
    %5000 = vdwg.mxu0
    %5001 = vmatprep.subr.bf16.mxu0 0
    %5002 = vmatpush1.bf16.msra.mxu0 %v4210
    %5003 = vmatprep.subr.bf16.mxu0 0
    %5004 = vmatpush1.bf16.msra.mxu0 %v4207
    %5005 = vmatprep.subr.bf16.mxu0 0
    %5006 = vmatpush1.bf16.msra.mxu0 %v4204
    %5007 = vmatprep.subr.bf16.mxu0 0
    %5008 = vmatpush1.bf16.msra.mxu0 %v4201
    %5009 = vmatprep.subr.bf16.mxu0 0
    %5010 = vmatpush1.bf16.msra.mxu0 %v4198
    %5011 = vmatprep.subr.bf16.mxu0 0
    %5012 = vmatpush1.bf16.msra.mxu0 %v4195
    %5013 = vmatprep.subr.bf16.mxu0 0
    %5014 = vmatpush1.bf16.msra.mxu0 %v4192
    %5015 = vmatprep.subr.bf16.mxu0 0
    %5016 = vmatpush1.bf16.msra.mxu0 %v4189
    %5017 = vmatprep.subr.bf16.mxu0 0
    %5018 = vmatpush2.bf16.msra.mxu0 %v4234
    %5019 = vmatprep.subr.bf16.mxu0 0
    %5020 = vmatpush2.bf16.msra.mxu0 %v4231
    %5021 = vmatprep.subr.bf16.mxu0 0
    %5022 = vmatpush2.bf16.msra.mxu0 %v4228
    %5023 = vmatprep.subr.bf16.mxu0 0
    %5024 = vmatpush2.bf16.msra.mxu0 %v4225
    %5025 = vmatprep.subr.bf16.mxu0 0
    %5026 = vmatpush2.bf16.msra.mxu0 %v4222
    %5027 = vmatprep.subr.bf16.mxu0 0
    %5028 = vmatpush2.bf16.msra.mxu0 %v4219
    %5029 = vmatprep.subr.bf16.mxu0 0
    %5030 = vmatpush2.bf16.msra.mxu0 %v4216
    %5031 = vmatprep.subr.bf16.mxu0 0
    %5032 = vmatpush2.bf16.msra.mxu0 %v4213
    %5033 = vmatprep.mubr.bf16.mxu0 %v3154
    %5034 = vmatmul.mubr.bf16.gmra.mxu0 %v3153
    %v5035 = vpop.f32.mrf.mxu0
    %v5036 = vadd.f32 %v4996, %v5035
    %v5037 = vpop.f32.mrf.mxu0
    %v5038 = vpop.f32.mrf.mxu0
    %v5039 = vpop.f32.mrf.mxu0
    %5040 = vdwg.mxu0
    %5041 = vmatprep.subr.bf16.mxu0 0
    %5042 = vmatpush1.bf16.msra.mxu0 %v4258
    %5043 = vmatprep.subr.bf16.mxu0 0
    %5044 = vmatpush1.bf16.msra.mxu0 %v4255
    %5045 = vmatprep.subr.bf16.mxu0 0
    %5046 = vmatpush1.bf16.msra.mxu0 %v4252
    %5047 = vmatprep.subr.bf16.mxu0 0
    %5048 = vmatpush1.bf16.msra.mxu0 %v4249
    %5049 = vmatprep.subr.bf16.mxu0 0
    %5050 = vmatpush1.bf16.msra.mxu0 %v4246
    %5051 = vmatprep.subr.bf16.mxu0 0
    %5052 = vmatpush1.bf16.msra.mxu0 %v4243
    %5053 = vmatprep.subr.bf16.mxu0 0
    %5054 = vmatpush1.bf16.msra.mxu0 %v4240
    %5055 = vmatprep.subr.bf16.mxu0 0
    %5056 = vmatpush1.bf16.msra.mxu0 %v4237
    %5057 = vmatprep.subr.bf16.mxu0 0
    %5058 = vmatpush2.bf16.msra.mxu0 %v4282
    %5059 = vmatprep.subr.bf16.mxu0 0
    %5060 = vmatpush2.bf16.msra.mxu0 %v4279
    %5061 = vmatprep.subr.bf16.mxu0 0
    %5062 = vmatpush2.bf16.msra.mxu0 %v4276
    %5063 = vmatprep.subr.bf16.mxu0 0
    %5064 = vmatpush2.bf16.msra.mxu0 %v4273
    %5065 = vmatprep.subr.bf16.mxu0 0
    %5066 = vmatpush2.bf16.msra.mxu0 %v4270
    %5067 = vmatprep.subr.bf16.mxu0 0
    %5068 = vmatpush2.bf16.msra.mxu0 %v4267
    %5069 = vmatprep.subr.bf16.mxu0 0
    %5070 = vmatpush2.bf16.msra.mxu0 %v4264
    %5071 = vmatprep.subr.bf16.mxu0 0
    %5072 = vmatpush2.bf16.msra.mxu0 %v4261
    %5073 = vmatprep.mubr.bf16.mxu0 %v3156
    %5074 = vmatmul.mubr.bf16.gmra.mxu0 %v3155
    %v5075 = vpop.f32.mrf.mxu0
    %v5076 = vadd.f32 %v5036, %v5075
    %v5077 = vpop.f32.mrf.mxu0
    %v5078 = vpop.f32.mrf.mxu0
    %v5079 = vpop.f32.mrf.mxu0
    %5080 = vdwg.mxu0
    %5081 = vmatprep.subr.bf16.mxu0 0
    %5082 = vmatpush1.bf16.msra.mxu0 %v4306
    %5083 = vmatprep.subr.bf16.mxu0 0
    %5084 = vmatpush1.bf16.msra.mxu0 %v4303
    %5085 = vmatprep.subr.bf16.mxu0 0
    %5086 = vmatpush1.bf16.msra.mxu0 %v4300
    %5087 = vmatprep.subr.bf16.mxu0 0
    %5088 = vmatpush1.bf16.msra.mxu0 %v4297
    %5089 = vmatprep.subr.bf16.mxu0 0
    %5090 = vmatpush1.bf16.msra.mxu0 %v4294
    %5091 = vmatprep.subr.bf16.mxu0 0
    %5092 = vmatpush1.bf16.msra.mxu0 %v4291
    %5093 = vmatprep.subr.bf16.mxu0 0
    %5094 = vmatpush1.bf16.msra.mxu0 %v4288
    %5095 = vmatprep.subr.bf16.mxu0 0
    %5096 = vmatpush1.bf16.msra.mxu0 %v4285
    %5097 = vmatprep.subr.bf16.mxu0 0
    %5098 = vmatpush2.bf16.msra.mxu0 %v4330
    %5099 = vmatprep.subr.bf16.mxu0 0
    %5100 = vmatpush2.bf16.msra.mxu0 %v4327
    %5101 = vmatprep.subr.bf16.mxu0 0
    %5102 = vmatpush2.bf16.msra.mxu0 %v4324
    %5103 = vmatprep.subr.bf16.mxu0 0
    %5104 = vmatpush2.bf16.msra.mxu0 %v4321
    %5105 = vmatprep.subr.bf16.mxu0 0
    %5106 = vmatpush2.bf16.msra.mxu0 %v4318
    %5107 = vmatprep.subr.bf16.mxu0 0
    %5108 = vmatpush2.bf16.msra.mxu0 %v4315
    %5109 = vmatprep.subr.bf16.mxu0 0
    %5110 = vmatpush2.bf16.msra.mxu0 %v4312
    %5111 = vmatprep.subr.bf16.mxu0 0
    %5112 = vmatpush2.bf16.msra.mxu0 %v4309
    %5113 = vmatprep.mubr.bf16.mxu0 %v3158
    %5114 = vmatmul.mubr.bf16.gmra.mxu0 %v3157
    %v5115 = vpop.f32.mrf.mxu0
    %v5116 = vadd.f32 %v5076, %v5115
    %v5117 = vpop.f32.mrf.mxu0
    %v5118 = vpop.f32.mrf.mxu0
    %v5119 = vpop.f32.mrf.mxu0
    %5120 = vdwg.mxu0
    %5121 = vmatprep.subr.bf16.mxu0 0
    %5122 = vmatpush1.bf16.msra.mxu0 %v4354
    %5123 = vmatprep.subr.bf16.mxu0 0
    %5124 = vmatpush1.bf16.msra.mxu0 %v4351
    %5125 = vmatprep.subr.bf16.mxu0 0
    %5126 = vmatpush1.bf16.msra.mxu0 %v4348
    %5127 = vmatprep.subr.bf16.mxu0 0
    %5128 = vmatpush1.bf16.msra.mxu0 %v4345
    %5129 = vmatprep.subr.bf16.mxu0 0
    %5130 = vmatpush1.bf16.msra.mxu0 %v4342
    %5131 = vmatprep.subr.bf16.mxu0 0
    %5132 = vmatpush1.bf16.msra.mxu0 %v4339
    %5133 = vmatprep.subr.bf16.mxu0 0
    %5134 = vmatpush1.bf16.msra.mxu0 %v4336
    %5135 = vmatprep.subr.bf16.mxu0 0
    %5136 = vmatpush1.bf16.msra.mxu0 %v4333
    %5137 = vmatprep.subr.bf16.mxu0 0
    %5138 = vmatpush2.bf16.msra.mxu0 %v4378
    %5139 = vmatprep.subr.bf16.mxu0 0
    %5140 = vmatpush2.bf16.msra.mxu0 %v4375
    %5141 = vmatprep.subr.bf16.mxu0 0
    %5142 = vmatpush2.bf16.msra.mxu0 %v4372
    %5143 = vmatprep.subr.bf16.mxu0 0
    %5144 = vmatpush2.bf16.msra.mxu0 %v4369
    %5145 = vmatprep.subr.bf16.mxu0 0
    %5146 = vmatpush2.bf16.msra.mxu0 %v4366
    %5147 = vmatprep.subr.bf16.mxu0 0
    %5148 = vmatpush2.bf16.msra.mxu0 %v4363
    %5149 = vmatprep.subr.bf16.mxu0 0
    %5150 = vmatpush2.bf16.msra.mxu0 %v4360
    %5151 = vmatprep.subr.bf16.mxu0 0
    %5152 = vmatpush2.bf16.msra.mxu0 %v4357
    %5153 = vmatprep.mubr.bf16.mxu0 %v3160
    %5154 = vmatmul.mubr.bf16.gmra.mxu0 %v3159
    %v5155 = vpop.f32.mrf.mxu0
    %v5156 = vadd.f32 %v5116, %v5155
    %v5157 = vpop.f32.mrf.mxu0
    %v5158 = vpop.f32.mrf.mxu0
    %v5159 = vpop.f32.mrf.mxu0
    %5160 = vdwg.mxu0
    %5161 = vmatprep.subr.bf16.mxu0 0
    %5162 = vmatpush1.bf16.msra.mxu0 %v4402
    %5163 = vmatprep.subr.bf16.mxu0 0
    %5164 = vmatpush1.bf16.msra.mxu0 %v4399
    %5165 = vmatprep.subr.bf16.mxu0 0
    %5166 = vmatpush1.bf16.msra.mxu0 %v4396
    %5167 = vmatprep.subr.bf16.mxu0 0
    %5168 = vmatpush1.bf16.msra.mxu0 %v4393
    %5169 = vmatprep.subr.bf16.mxu0 0
    %5170 = vmatpush1.bf16.msra.mxu0 %v4390
    %5171 = vmatprep.subr.bf16.mxu0 0
    %5172 = vmatpush1.bf16.msra.mxu0 %v4387
    %5173 = vmatprep.subr.bf16.mxu0 0
    %5174 = vmatpush1.bf16.msra.mxu0 %v4384
    %5175 = vmatprep.subr.bf16.mxu0 0
    %5176 = vmatpush1.bf16.msra.mxu0 %v4381
    %5177 = vmatprep.subr.bf16.mxu0 0
    %5178 = vmatpush2.bf16.msra.mxu0 %v4426
    %5179 = vmatprep.subr.bf16.mxu0 0
    %5180 = vmatpush2.bf16.msra.mxu0 %v4423
    %5181 = vmatprep.subr.bf16.mxu0 0
    %5182 = vmatpush2.bf16.msra.mxu0 %v4420
    %5183 = vmatprep.subr.bf16.mxu0 0
    %5184 = vmatpush2.bf16.msra.mxu0 %v4417
    %5185 = vmatprep.subr.bf16.mxu0 0
    %5186 = vmatpush2.bf16.msra.mxu0 %v4414
    %5187 = vmatprep.subr.bf16.mxu0 0
    %5188 = vmatpush2.bf16.msra.mxu0 %v4411
    %5189 = vmatprep.subr.bf16.mxu0 0
    %5190 = vmatpush2.bf16.msra.mxu0 %v4408
    %5191 = vmatprep.subr.bf16.mxu0 0
    %5192 = vmatpush2.bf16.msra.mxu0 %v4405
    %5193 = vmatprep.mubr.bf16.mxu0 %v3162
    %5194 = vmatmul.mubr.bf16.gmra.mxu0 %v3161
    %v5195 = vpop.f32.mrf.mxu0
    %v5196 = vadd.f32 %v5156, %v5195
    %v5197 = vpop.f32.mrf.mxu0
    %v5198 = vpop.f32.mrf.mxu0
    %v5199 = vpop.f32.mrf.mxu0
    %5200 = vdwg.mxu0
    %v5201 = vpack.c.bf16 %v2342, %v2342
    %v5202 = vpack.c.bf16 %v2344, %v2344
    %v5203 = vpack.c.bf16 %v2413, %v2413
    %v5204 = vpack.c.bf16 %v2415, %v2415
    %v5205 = vpack.c.bf16 %v2484, %v2484
    %v5206 = vpack.c.bf16 %v2486, %v2486
    %v5207 = vpack.c.bf16 %v2555, %v2555
    %v5208 = vpack.c.bf16 %v2557, %v2557
    %v5209 = vpack.c.bf16 %v2626, %v2626
    %v5210 = vpack.c.bf16 %v2628, %v2628
    %v5211 = vpack.c.bf16 %v2697, %v2697
    %v5212 = vpack.c.bf16 %v2699, %v2699
    %v5405 = vunpack.c.l.b16 %v1890
    %v5406 = vunpack.c.h.b16 %v1890
    %v5407 = vunpack.c.l.b16 %v1891
    %v5408 = vunpack.c.h.b16 %v1891
    %v5409 = vunpack.c.l.b16 %v1892
    %v5410 = vunpack.c.h.b16 %v1892
    %v5411 = vunpack.c.l.b16 %v1893
    %v5412 = vunpack.c.h.b16 %v1893
    %v5413 = vunpack.c.l.b16 %v1894
    %v5414 = vunpack.c.h.b16 %v1894
    %v5415 = vunpack.c.l.b16 %v1895
    %v5416 = vunpack.c.h.b16 %v1895
    %v5417 = vunpack.c.l.b16 %v1896
    %v5418 = vunpack.c.h.b16 %v1896
    %v5419 = vunpack.c.l.b16 %v1897
    %v5420 = vunpack.c.h.b16 %v1897
    %v5421 = vunpack.c.l.b16 %v1898
    %v5422 = vunpack.c.h.b16 %v1898
    %v5423 = vunpack.c.l.b16 %v1899
    %v5424 = vunpack.c.h.b16 %v1899
    %v5425 = vunpack.c.l.b16 %v1900
    %v5426 = vunpack.c.h.b16 %v1900
    %v5427 = vunpack.c.l.b16 %v1901
    %v5428 = vunpack.c.h.b16 %v1901
    %v5429 = vunpack.c.l.b16 %v1902
    %v5430 = vunpack.c.h.b16 %v1902
    %v5431 = vunpack.c.l.b16 %v1903
    %v5432 = vunpack.c.h.b16 %v1903
    %v5433 = vunpack.c.l.b16 %v1904
    %v5434 = vunpack.c.h.b16 %v1904
    %v5435 = vunpack.c.l.b16 %v1905
    %v5436 = vunpack.c.h.b16 %v1905
    %v5437 = vunpack.c.l.b16 %v1906
    %v5438 = vunpack.c.h.b16 %v1906
    %v5439 = vunpack.c.l.b16 %v1907
    %v5440 = vunpack.c.h.b16 %v1907
    %v5441 = vunpack.c.l.b16 %v1908
    %v5442 = vunpack.c.h.b16 %v1908
    %v5443 = vunpack.c.l.b16 %v1909
    %v5444 = vunpack.c.h.b16 %v1909
    %v5445 = vunpack.c.l.b16 %v1910
    %v5446 = vunpack.c.h.b16 %v1910
    %v5447 = vunpack.c.l.b16 %v1911
    %v5448 = vunpack.c.h.b16 %v1911
    %v5449 = vunpack.c.l.b16 %v1912
    %v5450 = vunpack.c.h.b16 %v1912
    %v5451 = vunpack.c.l.b16 %v1913
    %v5452 = vunpack.c.h.b16 %v1913
    %v5453 = vunpack.c.l.b16 %v1914
    %v5454 = vunpack.c.h.b16 %v1914
    %v5455 = vunpack.c.l.b16 %v1915
    %v5456 = vunpack.c.h.b16 %v1915
    %v5457 = vunpack.c.l.b16 %v1916
    %v5458 = vunpack.c.h.b16 %v1916
    %v5459 = vunpack.c.l.b16 %v1917
    %v5460 = vunpack.c.h.b16 %v1917
    %v5461 = vunpack.c.l.b16 %v1918
    %v5462 = vunpack.c.h.b16 %v1918
    %v5463 = vunpack.c.l.b16 %v1919
    %v5464 = vunpack.c.h.b16 %v1919
    %v5465 = vunpack.c.l.b16 %v1920
    %v5466 = vunpack.c.h.b16 %v1920
    %v5467 = vunpack.c.l.b16 %v1921
    %v5468 = vunpack.c.h.b16 %v1921
    %v5469 = vunpack.c.l.b16 %v1922
    %v5470 = vunpack.c.h.b16 %v1922
    %v5471 = vunpack.c.l.b16 %v1923
    %v5472 = vunpack.c.h.b16 %v1923
    %v5473 = vunpack.c.l.b16 %v1924
    %v5474 = vunpack.c.h.b16 %v1924
    %v5475 = vunpack.c.l.b16 %v1925
    %v5476 = vunpack.c.h.b16 %v1925
    %v5477 = vunpack.c.l.b16 %v1926
    %v5478 = vunpack.c.h.b16 %v1926
    %v5479 = vunpack.c.l.b16 %v1927
    %v5480 = vunpack.c.h.b16 %v1927
    %v5481 = vunpack.c.l.b16 %v1928
    %v5482 = vunpack.c.h.b16 %v1928
    %v5483 = vunpack.c.l.b16 %v1929
    %v5484 = vunpack.c.h.b16 %v1929
    %v5485 = vunpack.c.l.b16 %v1930
    %v5486 = vunpack.c.h.b16 %v1930
    %v5487 = vunpack.c.l.b16 %v1931
    %v5488 = vunpack.c.h.b16 %v1931
    %v5489 = vunpack.c.l.b16 %v1932
    %v5490 = vunpack.c.h.b16 %v1932
    %v5491 = vunpack.c.l.b16 %v1933
    %v5492 = vunpack.c.h.b16 %v1933
    %v5493 = vunpack.c.l.b16 %v1934
    %v5494 = vunpack.c.h.b16 %v1934
    %v5495 = vunpack.c.l.b16 %v1935
    %v5496 = vunpack.c.h.b16 %v1935
    %v5497 = vunpack.c.l.b16 %v1936
    %v5498 = vunpack.c.h.b16 %v1936
    %v5499 = vunpack.c.l.b16 %v1937
    %v5500 = vunpack.c.h.b16 %v1937
    %v5501 = vunpack.c.l.b16 %v1938
    %v5502 = vunpack.c.h.b16 %v1938
    %v5503 = vunpack.c.l.b16 %v1939
    %v5504 = vunpack.c.h.b16 %v1939
    %v5505 = vunpack.c.l.b16 %v1940
    %v5506 = vunpack.c.h.b16 %v1940
    %v5507 = vunpack.c.l.b16 %v1941
    %v5508 = vunpack.c.h.b16 %v1941
    %v5509 = vunpack.c.l.b16 %v1942
    %v5510 = vunpack.c.h.b16 %v1942
    %v5511 = vunpack.c.l.b16 %v1943
    %v5512 = vunpack.c.h.b16 %v1943
    %v5513 = vunpack.c.l.b16 %v1944
    %v5514 = vunpack.c.h.b16 %v1944
    %v5515 = vunpack.c.l.b16 %v1945
    %v5516 = vunpack.c.h.b16 %v1945
    %v5517 = vunpack.c.l.b16 %v1946
    %v5518 = vunpack.c.h.b16 %v1946
    %v5519 = vunpack.c.l.b16 %v1947
    %v5520 = vunpack.c.h.b16 %v1947
    %v5521 = vunpack.c.l.b16 %v1948
    %v5522 = vunpack.c.h.b16 %v1948
    %v5523 = vunpack.c.l.b16 %v1949
    %v5524 = vunpack.c.h.b16 %v1949
    %v5525 = vunpack.c.l.b16 %v1950
    %v5526 = vunpack.c.h.b16 %v1950
    %v5527 = vunpack.c.l.b16 %v1951
    %v5528 = vunpack.c.h.b16 %v1951
    %v5529 = vunpack.c.l.b16 %v1952
    %v5530 = vunpack.c.h.b16 %v1952
    %v5531 = vunpack.c.l.b16 %v1953
    %v5532 = vunpack.c.h.b16 %v1953
    %v5533 = vunpack.c.l.b16 %v1954
    %v5534 = vunpack.c.h.b16 %v1954
    %v5535 = vunpack.c.l.b16 %v1955
    %v5536 = vunpack.c.h.b16 %v1955
    %v5537 = vunpack.c.l.b16 %v1956
    %v5538 = vunpack.c.h.b16 %v1956
    %v5539 = vunpack.c.l.b16 %v1957
    %v5540 = vunpack.c.h.b16 %v1957
    %v5541 = vunpack.c.l.b16 %v1958
    %v5542 = vunpack.c.h.b16 %v1958
    %v5543 = vunpack.c.l.b16 %v1959
    %v5544 = vunpack.c.h.b16 %v1959
    %v5545 = vunpack.c.l.b16 %v1960
    %v5546 = vunpack.c.h.b16 %v1960
    %v5547 = vunpack.c.l.b16 %v1961
    %v5548 = vunpack.c.h.b16 %v1961
    %v5549 = vunpack.c.l.b16 %v1962
    %v5550 = vunpack.c.h.b16 %v1962
    %v5551 = vunpack.c.l.b16 %v1963
    %v5552 = vunpack.c.h.b16 %v1963
    %v5553 = vunpack.c.l.b16 %v1964
    %v5554 = vunpack.c.h.b16 %v1964
    %v5555 = vunpack.c.l.b16 %v1965
    %v5556 = vunpack.c.h.b16 %v1965
    %v5557 = vunpack.c.l.b16 %v1966
    %v5558 = vunpack.c.h.b16 %v1966
    %v5559 = vunpack.c.l.b16 %v1967
    %v5560 = vunpack.c.h.b16 %v1967
    %v5561 = vunpack.c.l.b16 %v1968
    %v5562 = vunpack.c.h.b16 %v1968
    %v5563 = vunpack.c.l.b16 %v1969
    %v5564 = vunpack.c.h.b16 %v1969
    %v5565 = vunpack.c.l.b16 %v1970
    %v5566 = vunpack.c.h.b16 %v1970
    %v5567 = vunpack.c.l.b16 %v1971
    %v5568 = vunpack.c.h.b16 %v1971
    %v5569 = vunpack.c.l.b16 %v1972
    %v5570 = vunpack.c.h.b16 %v1972
    %v5571 = vunpack.c.l.b16 %v1973
    %v5572 = vunpack.c.h.b16 %v1973
    %v5573 = vunpack.c.l.b16 %v1974
    %v5574 = vunpack.c.h.b16 %v1974
    %v5575 = vunpack.c.l.b16 %v1975
    %v5576 = vunpack.c.h.b16 %v1975
    %v5577 = vunpack.c.l.b16 %v1976
    %v5578 = vunpack.c.h.b16 %v1976
    %v5579 = vunpack.c.l.b16 %v1977
    %v5580 = vunpack.c.h.b16 %v1977
    %v5581 = vunpack.c.l.b16 %v1978
    %v5582 = vunpack.c.h.b16 %v1978
    %v5583 = vunpack.c.l.b16 %v1979
    %v5584 = vunpack.c.h.b16 %v1979
    %v5585 = vunpack.c.l.b16 %v1980
    %v5586 = vunpack.c.h.b16 %v1980
    %v5587 = vunpack.c.l.b16 %v1981
    %v5588 = vunpack.c.h.b16 %v1981
    %v5589 = vunpack.c.l.b16 %v1982
    %v5590 = vunpack.c.h.b16 %v1982
    %v5591 = vunpack.c.l.b16 %v1983
    %v5592 = vunpack.c.h.b16 %v1983
    %v5593 = vunpack.c.l.b16 %v1984
    %v5594 = vunpack.c.h.b16 %v1984
    %v5595 = vunpack.c.l.b16 %v1985
    %v5596 = vunpack.c.h.b16 %v1985
    %v5597 = vunpack.c.l.b16 %v1986
    %v5598 = vunpack.c.h.b16 %v1986
    %v5599 = vunpack.c.l.b16 %v1987
    %v5600 = vunpack.c.h.b16 %v1987
    %v5601 = vunpack.c.l.b16 %v1988
    %v5602 = vunpack.c.h.b16 %v1988
    %v5603 = vunpack.c.l.b16 %v1989
    %v5604 = vunpack.c.h.b16 %v1989
    %v5605 = vunpack.c.l.b16 %v1990
    %v5606 = vunpack.c.h.b16 %v1990
    %v5607 = vunpack.c.l.b16 %v1991
    %v5608 = vunpack.c.h.b16 %v1991
    %v5609 = vunpack.c.l.b16 %v1992
    %v5610 = vunpack.c.h.b16 %v1992
    %v5611 = vunpack.c.l.b16 %v1993
    %v5612 = vunpack.c.h.b16 %v1993
    %v5613 = vunpack.c.l.b16 %v1994
    %v5614 = vunpack.c.h.b16 %v1994
    %v5615 = vunpack.c.l.b16 %v1995
    %v5616 = vunpack.c.h.b16 %v1995
    %v5617 = vunpack.c.l.b16 %v1996
    %v5618 = vunpack.c.h.b16 %v1996
    %v5619 = vunpack.c.l.b16 %v1997
    %v5620 = vunpack.c.h.b16 %v1997
    %v5621 = vunpack.c.l.b16 %v1998
    %v5622 = vunpack.c.h.b16 %v1998
    %v5623 = vunpack.c.l.b16 %v1999
    %v5624 = vunpack.c.h.b16 %v1999
    %v5625 = vunpack.c.l.b16 %v2000
    %v5626 = vunpack.c.h.b16 %v2000
    %v5627 = vunpack.c.l.b16 %v2001
    %v5628 = vunpack.c.h.b16 %v2001
    %v5629 = vunpack.c.l.b16 %v2002
    %v5630 = vunpack.c.h.b16 %v2002
    %v5631 = vunpack.c.l.b16 %v2003
    %v5632 = vunpack.c.h.b16 %v2003
    %v5633 = vunpack.c.l.b16 %v2004
    %v5634 = vunpack.c.h.b16 %v2004
    %v5635 = vunpack.c.l.b16 %v2005
    %v5636 = vunpack.c.h.b16 %v2005
    %v5637 = vunpack.c.l.b16 %v2006
    %v5638 = vunpack.c.h.b16 %v2006
    %v5639 = vunpack.c.l.b16 %v2007
    %v5640 = vunpack.c.h.b16 %v2007
    %v5641 = vunpack.c.l.b16 %v2008
    %v5642 = vunpack.c.h.b16 %v2008
    %v5643 = vunpack.c.l.b16 %v2009
    %v5644 = vunpack.c.h.b16 %v2009
    %v5645 = vunpack.c.l.b16 %v2010
    %v5646 = vunpack.c.h.b16 %v2010
    %v5647 = vunpack.c.l.b16 %v2011
    %v5648 = vunpack.c.h.b16 %v2011
    %v5649 = vunpack.c.l.b16 %v2012
    %v5650 = vunpack.c.h.b16 %v2012
    %v5651 = vunpack.c.l.b16 %v2013
    %v5652 = vunpack.c.h.b16 %v2013
    %v5653 = vunpack.c.l.b16 %v2014
    %v5654 = vunpack.c.h.b16 %v2014
    %v5655 = vunpack.c.l.b16 %v2015
    %v5656 = vunpack.c.h.b16 %v2015
    %v5657 = vunpack.c.l.b16 %v2016
    %v5658 = vunpack.c.h.b16 %v2016
    %v5659 = vunpack.c.l.b16 %v2017
    %v5660 = vunpack.c.h.b16 %v2017
    %v5661 = vunpack.c.l.b16 %v2018
    %v5662 = vunpack.c.h.b16 %v2018
    %v5663 = vunpack.c.l.b16 %v2019
    %v5664 = vunpack.c.h.b16 %v2019
    %v5665 = vunpack.c.l.b16 %v2020
    %v5666 = vunpack.c.h.b16 %v2020
    %v5667 = vunpack.c.l.b16 %v2021
    %v5668 = vunpack.c.h.b16 %v2021
    %v5669 = vunpack.c.l.b16 %v2022
    %v5670 = vunpack.c.h.b16 %v2022
    %v5671 = vunpack.c.l.b16 %v2023
    %v5672 = vunpack.c.h.b16 %v2023
    %v5673 = vunpack.c.l.b16 %v2024
    %v5674 = vunpack.c.h.b16 %v2024
    %v5675 = vunpack.c.l.b16 %v2025
    %v5676 = vunpack.c.h.b16 %v2025
    %v5677 = vunpack.c.l.b16 %v2026
    %v5678 = vunpack.c.h.b16 %v2026
    %v5679 = vunpack.c.l.b16 %v2027
    %v5680 = vunpack.c.h.b16 %v2027
    %v5681 = vunpack.c.l.b16 %v2028
    %v5682 = vunpack.c.h.b16 %v2028
    %v5683 = vunpack.c.l.b16 %v2029
    %v5684 = vunpack.c.h.b16 %v2029
    %v5685 = vunpack.c.l.b16 %v2030
    %v5686 = vunpack.c.h.b16 %v2030
    %v5687 = vunpack.c.l.b16 %v2031
    %v5688 = vunpack.c.h.b16 %v2031
    %v5689 = vunpack.c.l.b16 %v2032
    %v5690 = vunpack.c.h.b16 %v2032
    %v5691 = vunpack.c.l.b16 %v2033
    %v5692 = vunpack.c.h.b16 %v2033
    %v5693 = vunpack.c.l.b16 %v2034
    %v5694 = vunpack.c.h.b16 %v2034
    %v5695 = vunpack.c.l.b16 %v2035
    %v5696 = vunpack.c.h.b16 %v2035
    %v5697 = vunpack.c.l.b16 %v2036
    %v5698 = vunpack.c.h.b16 %v2036
    %v5699 = vunpack.c.l.b16 %v2037
    %v5700 = vunpack.c.h.b16 %v2037
    %v5701 = vunpack.c.l.b16 %v2038
    %v5702 = vunpack.c.h.b16 %v2038
    %v5703 = vunpack.c.l.b16 %v2039
    %v5704 = vunpack.c.h.b16 %v2039
    %v5705 = vunpack.c.l.b16 %v2040
    %v5706 = vunpack.c.h.b16 %v2040
    %v5707 = vunpack.c.l.b16 %v2041
    %v5708 = vunpack.c.h.b16 %v2041
    %v5709 = vunpack.c.l.b16 %v2042
    %v5710 = vunpack.c.h.b16 %v2042
    %v5711 = vunpack.c.l.b16 %v2043
    %v5712 = vunpack.c.h.b16 %v2043
    %v5713 = vunpack.c.l.b16 %v2044
    %v5714 = vunpack.c.h.b16 %v2044
    %v5715 = vunpack.c.l.b16 %v2045
    %v5716 = vunpack.c.h.b16 %v2045
    %v5717 = vunpack.c.l.b16 %v2046
    %v5718 = vunpack.c.h.b16 %v2046
    %v5719 = vunpack.c.l.b16 %v2047
    %v5720 = vunpack.c.h.b16 %v2047
    %v5721 = vunpack.c.l.b16 %v2048
    %v5722 = vunpack.c.h.b16 %v2048
    %v5723 = vunpack.c.l.b16 %v2049
    %v5724 = vunpack.c.h.b16 %v2049
    %v5725 = vunpack.c.l.b16 %v2050
    %v5726 = vunpack.c.h.b16 %v2050
    %v5727 = vunpack.c.l.b16 %v2051
    %v5728 = vunpack.c.h.b16 %v2051
    %v5729 = vunpack.c.l.b16 %v2052
    %v5730 = vunpack.c.h.b16 %v2052
    %v5731 = vunpack.c.l.b16 %v2053
    %v5732 = vunpack.c.h.b16 %v2053
    %v5733 = vunpack.c.l.b16 %v2054
    %v5734 = vunpack.c.h.b16 %v2054
    %v5735 = vunpack.c.l.b16 %v2055
    %v5736 = vunpack.c.h.b16 %v2055
    %v5737 = vunpack.c.l.b16 %v2056
    %v5738 = vunpack.c.h.b16 %v2056
    %v5739 = vunpack.c.l.b16 %v2057
    %v5740 = vunpack.c.h.b16 %v2057
    %v5741 = vunpack.c.l.b16 %v2058
    %v5742 = vunpack.c.h.b16 %v2058
    %v5743 = vunpack.c.l.b16 %v2059
    %v5744 = vunpack.c.h.b16 %v2059
    %v5745 = vunpack.c.l.b16 %v2060
    %v5746 = vunpack.c.h.b16 %v2060
    %v5747 = vunpack.c.l.b16 %v2061
    %v5748 = vunpack.c.h.b16 %v2061
    %v5749 = vunpack.c.l.b16 %v2062
    %v5750 = vunpack.c.h.b16 %v2062
    %v5751 = vunpack.c.l.b16 %v2063
    %v5752 = vunpack.c.h.b16 %v2063
    %v5753 = vunpack.c.l.b16 %v2064
    %v5754 = vunpack.c.h.b16 %v2064
    %v5755 = vunpack.c.l.b16 %v2065
    %v5756 = vunpack.c.h.b16 %v2065
    %v5757 = vunpack.c.l.b16 %v2066
    %v5758 = vunpack.c.h.b16 %v2066
    %v5759 = vunpack.c.l.b16 %v2067
    %v5760 = vunpack.c.h.b16 %v2067
    %v5761 = vunpack.c.l.b16 %v2068
    %v5762 = vunpack.c.h.b16 %v2068
    %v5763 = vunpack.c.l.b16 %v2069
    %v5764 = vunpack.c.h.b16 %v2069
    %v5765 = vunpack.c.l.b16 %v2070
    %v5766 = vunpack.c.h.b16 %v2070
    %v5767 = vunpack.c.l.b16 %v2071
    %v5768 = vunpack.c.h.b16 %v2071
    %v5769 = vunpack.c.l.b16 %v2072
    %v5770 = vunpack.c.h.b16 %v2072
    %v5771 = vunpack.c.l.b16 %v2073
    %v5772 = vunpack.c.h.b16 %v2073
    %v5773 = vunpack.c.l.b16 %v2074
    %v5774 = vunpack.c.h.b16 %v2074
    %v5775 = vunpack.c.l.b16 %v2075
    %v5776 = vunpack.c.h.b16 %v2075
    %v5777 = vunpack.c.l.b16 %v2076
    %v5778 = vunpack.c.h.b16 %v2076
    %v5779 = vunpack.c.l.b16 %v2077
    %v5780 = vunpack.c.h.b16 %v2077
    %v5781 = vunpack.c.l.b16 %v2078
    %v5782 = vunpack.c.h.b16 %v2078
    %v5783 = vunpack.c.l.b16 %v2079
    %v5784 = vunpack.c.h.b16 %v2079
    %v5785 = vunpack.c.l.b16 %v2080
    %v5786 = vunpack.c.h.b16 %v2080
    %v5787 = vunpack.c.l.b16 %v2081
    %v5788 = vunpack.c.h.b16 %v2081
    %v5789 = vpack.c.b16 %v5407, %v5405
    %v5790 = vpack.c.b16 %v5408, %v5406
    %v5791 = vpack.c.b16 %v5411, %v5409
    %v5792 = vpack.c.b16 %v5412, %v5410
    %v5793 = vpack.c.b16 %v5415, %v5413
    %v5794 = vpack.c.b16 %v5416, %v5414
    %v5795 = vpack.c.b16 %v5419, %v5417
    %v5796 = vpack.c.b16 %v5420, %v5418
    %v5797 = vpack.c.b16 %v5423, %v5421
    %v5798 = vpack.c.b16 %v5424, %v5422
    %v5799 = vpack.c.b16 %v5427, %v5425
    %v5800 = vpack.c.b16 %v5428, %v5426
    %v5801 = vpack.c.b16 %v5431, %v5429
    %v5802 = vpack.c.b16 %v5432, %v5430
    %v5803 = vpack.c.b16 %v5435, %v5433
    %v5804 = vpack.c.b16 %v5436, %v5434
    %v5805 = vpack.c.b16 %v5439, %v5437
    %v5806 = vpack.c.b16 %v5440, %v5438
    %v5807 = vpack.c.b16 %v5443, %v5441
    %v5808 = vpack.c.b16 %v5444, %v5442
    %v5809 = vpack.c.b16 %v5447, %v5445
    %v5810 = vpack.c.b16 %v5448, %v5446
    %v5811 = vpack.c.b16 %v5451, %v5449
    %v5812 = vpack.c.b16 %v5452, %v5450
    %v5813 = vpack.c.b16 %v5455, %v5453
    %v5814 = vpack.c.b16 %v5456, %v5454
    %v5815 = vpack.c.b16 %v5459, %v5457
    %v5816 = vpack.c.b16 %v5460, %v5458
    %v5817 = vpack.c.b16 %v5463, %v5461
    %v5818 = vpack.c.b16 %v5464, %v5462
    %v5819 = vpack.c.b16 %v5467, %v5465
    %v5820 = vpack.c.b16 %v5468, %v5466
    %v5821 = vpack.c.b16 %v5471, %v5469
    %v5822 = vpack.c.b16 %v5472, %v5470
    %v5823 = vpack.c.b16 %v5475, %v5473
    %v5824 = vpack.c.b16 %v5476, %v5474
    %v5825 = vpack.c.b16 %v5479, %v5477
    %v5826 = vpack.c.b16 %v5480, %v5478
    %v5827 = vpack.c.b16 %v5483, %v5481
    %v5828 = vpack.c.b16 %v5484, %v5482
    %v5829 = vpack.c.b16 %v5487, %v5485
    %v5830 = vpack.c.b16 %v5488, %v5486
    %v5831 = vpack.c.b16 %v5491, %v5489
    %v5832 = vpack.c.b16 %v5492, %v5490
    %v5833 = vpack.c.b16 %v5495, %v5493
    %v5834 = vpack.c.b16 %v5496, %v5494
    %v5835 = vpack.c.b16 %v5499, %v5497
    %v5836 = vpack.c.b16 %v5500, %v5498
    %v5837 = vpack.c.b16 %v5503, %v5501
    %v5838 = vpack.c.b16 %v5504, %v5502
    %v5839 = vpack.c.b16 %v5507, %v5505
    %v5840 = vpack.c.b16 %v5508, %v5506
    %v5841 = vpack.c.b16 %v5511, %v5509
    %v5842 = vpack.c.b16 %v5512, %v5510
    %v5843 = vpack.c.b16 %v5515, %v5513
    %v5844 = vpack.c.b16 %v5516, %v5514
    %v5845 = vpack.c.b16 %v5519, %v5517
    %v5846 = vpack.c.b16 %v5520, %v5518
    %v5847 = vpack.c.b16 %v5523, %v5521
    %v5848 = vpack.c.b16 %v5524, %v5522
    %v5849 = vpack.c.b16 %v5527, %v5525
    %v5850 = vpack.c.b16 %v5528, %v5526
    %v5851 = vpack.c.b16 %v5531, %v5529
    %v5852 = vpack.c.b16 %v5532, %v5530
    %v5853 = vpack.c.b16 %v5535, %v5533
    %v5854 = vpack.c.b16 %v5536, %v5534
    %v5855 = vpack.c.b16 %v5539, %v5537
    %v5856 = vpack.c.b16 %v5540, %v5538
    %v5857 = vpack.c.b16 %v5543, %v5541
    %v5858 = vpack.c.b16 %v5544, %v5542
    %v5859 = vpack.c.b16 %v5547, %v5545
    %v5860 = vpack.c.b16 %v5548, %v5546
    %v5861 = vpack.c.b16 %v5551, %v5549
    %v5862 = vpack.c.b16 %v5552, %v5550
    %v5863 = vpack.c.b16 %v5555, %v5553
    %v5864 = vpack.c.b16 %v5556, %v5554
    %v5865 = vpack.c.b16 %v5559, %v5557
    %v5866 = vpack.c.b16 %v5560, %v5558
    %v5867 = vpack.c.b16 %v5563, %v5561
    %v5868 = vpack.c.b16 %v5564, %v5562
    %v5869 = vpack.c.b16 %v5567, %v5565
    %v5870 = vpack.c.b16 %v5568, %v5566
    %v5871 = vpack.c.b16 %v5571, %v5569
    %v5872 = vpack.c.b16 %v5572, %v5570
    %v5873 = vpack.c.b16 %v5575, %v5573
    %v5874 = vpack.c.b16 %v5576, %v5574
    %v5875 = vpack.c.b16 %v5579, %v5577
    %v5876 = vpack.c.b16 %v5580, %v5578
    %v5877 = vpack.c.b16 %v5583, %v5581
    %v5878 = vpack.c.b16 %v5584, %v5582
    %v5879 = vpack.c.b16 %v5587, %v5585
    %v5880 = vpack.c.b16 %v5588, %v5586
    %v5881 = vpack.c.b16 %v5591, %v5589
    %v5882 = vpack.c.b16 %v5592, %v5590
    %v5883 = vpack.c.b16 %v5595, %v5593
    %v5884 = vpack.c.b16 %v5596, %v5594
    %v5885 = vpack.c.b16 %v5599, %v5597
    %v5886 = vpack.c.b16 %v5600, %v5598
    %v5887 = vpack.c.b16 %v5603, %v5601
    %v5888 = vpack.c.b16 %v5604, %v5602
    %v5889 = vpack.c.b16 %v5607, %v5605
    %v5890 = vpack.c.b16 %v5608, %v5606
    %v5891 = vpack.c.b16 %v5611, %v5609
    %v5892 = vpack.c.b16 %v5612, %v5610
    %v5893 = vpack.c.b16 %v5615, %v5613
    %v5894 = vpack.c.b16 %v5616, %v5614
    %v5895 = vpack.c.b16 %v5619, %v5617
    %v5896 = vpack.c.b16 %v5620, %v5618
    %v5897 = vpack.c.b16 %v5623, %v5621
    %v5898 = vpack.c.b16 %v5624, %v5622
    %v5899 = vpack.c.b16 %v5627, %v5625
    %v5900 = vpack.c.b16 %v5628, %v5626
    %v5901 = vpack.c.b16 %v5631, %v5629
    %v5902 = vpack.c.b16 %v5632, %v5630
    %v5903 = vpack.c.b16 %v5635, %v5633
    %v5904 = vpack.c.b16 %v5636, %v5634
    %v5905 = vpack.c.b16 %v5639, %v5637
    %v5906 = vpack.c.b16 %v5640, %v5638
    %v5907 = vpack.c.b16 %v5643, %v5641
    %v5908 = vpack.c.b16 %v5644, %v5642
    %v5909 = vpack.c.b16 %v5647, %v5645
    %v5910 = vpack.c.b16 %v5648, %v5646
    %v5911 = vpack.c.b16 %v5651, %v5649
    %v5912 = vpack.c.b16 %v5652, %v5650
    %v5913 = vpack.c.b16 %v5655, %v5653
    %v5914 = vpack.c.b16 %v5656, %v5654
    %v5915 = vpack.c.b16 %v5659, %v5657
    %v5916 = vpack.c.b16 %v5660, %v5658
    %v5917 = vpack.c.b16 %v5663, %v5661
    %v5918 = vpack.c.b16 %v5664, %v5662
    %v5919 = vpack.c.b16 %v5667, %v5665
    %v5920 = vpack.c.b16 %v5668, %v5666
    %v5921 = vpack.c.b16 %v5671, %v5669
    %v5922 = vpack.c.b16 %v5672, %v5670
    %v5923 = vpack.c.b16 %v5675, %v5673
    %v5924 = vpack.c.b16 %v5676, %v5674
    %v5925 = vpack.c.b16 %v5679, %v5677
    %v5926 = vpack.c.b16 %v5680, %v5678
    %v5927 = vpack.c.b16 %v5683, %v5681
    %v5928 = vpack.c.b16 %v5684, %v5682
    %v5929 = vpack.c.b16 %v5687, %v5685
    %v5930 = vpack.c.b16 %v5688, %v5686
    %v5931 = vpack.c.b16 %v5691, %v5689
    %v5932 = vpack.c.b16 %v5692, %v5690
    %v5933 = vpack.c.b16 %v5695, %v5693
    %v5934 = vpack.c.b16 %v5696, %v5694
    %v5935 = vpack.c.b16 %v5699, %v5697
    %v5936 = vpack.c.b16 %v5700, %v5698
    %v5937 = vpack.c.b16 %v5703, %v5701
    %v5938 = vpack.c.b16 %v5704, %v5702
    %v5939 = vpack.c.b16 %v5707, %v5705
    %v5940 = vpack.c.b16 %v5708, %v5706
    %v5941 = vpack.c.b16 %v5711, %v5709
    %v5942 = vpack.c.b16 %v5712, %v5710
    %v5943 = vpack.c.b16 %v5715, %v5713
    %v5944 = vpack.c.b16 %v5716, %v5714
    %v5945 = vpack.c.b16 %v5719, %v5717
    %v5946 = vpack.c.b16 %v5720, %v5718
    %v5947 = vpack.c.b16 %v5723, %v5721
    %v5948 = vpack.c.b16 %v5724, %v5722
    %v5949 = vpack.c.b16 %v5727, %v5725
    %v5950 = vpack.c.b16 %v5728, %v5726
    %v5951 = vpack.c.b16 %v5731, %v5729
    %v5952 = vpack.c.b16 %v5732, %v5730
    %v5953 = vpack.c.b16 %v5735, %v5733
    %v5954 = vpack.c.b16 %v5736, %v5734
    %v5955 = vpack.c.b16 %v5739, %v5737
    %v5956 = vpack.c.b16 %v5740, %v5738
    %v5957 = vpack.c.b16 %v5743, %v5741
    %v5958 = vpack.c.b16 %v5744, %v5742
    %v5959 = vpack.c.b16 %v5747, %v5745
    %v5960 = vpack.c.b16 %v5748, %v5746
    %v5961 = vpack.c.b16 %v5751, %v5749
    %v5962 = vpack.c.b16 %v5752, %v5750
    %v5963 = vpack.c.b16 %v5755, %v5753
    %v5964 = vpack.c.b16 %v5756, %v5754
    %v5965 = vpack.c.b16 %v5759, %v5757
    %v5966 = vpack.c.b16 %v5760, %v5758
    %v5967 = vpack.c.b16 %v5763, %v5761
    %v5968 = vpack.c.b16 %v5764, %v5762
    %v5969 = vpack.c.b16 %v5767, %v5765
    %v5970 = vpack.c.b16 %v5768, %v5766
    %v5971 = vpack.c.b16 %v5771, %v5769
    %v5972 = vpack.c.b16 %v5772, %v5770
    %v5973 = vpack.c.b16 %v5775, %v5773
    %v5974 = vpack.c.b16 %v5776, %v5774
    %v5975 = vpack.c.b16 %v5779, %v5777
    %v5976 = vpack.c.b16 %v5780, %v5778
    %v5977 = vpack.c.b16 %v5783, %v5781
    %v5978 = vpack.c.b16 %v5784, %v5782
    %v5979 = vpack.c.b16 %v5787, %v5785
    %v5980 = vpack.c.b16 %v5788, %v5786
    %6173 = vmatprep.subr.bf16.mxu0 %v5804
    %6174 = vmatpush1.bf16.msra.mxu0 %v5803
    %6175 = vmatprep.subr.bf16.mxu0 %v5802
    %6176 = vmatpush1.bf16.msra.mxu0 %v5801
    %6177 = vmatprep.subr.bf16.mxu0 %v5800
    %6178 = vmatpush1.bf16.msra.mxu0 %v5799
    %6179 = vmatprep.subr.bf16.mxu0 %v5798
    %6180 = vmatpush1.bf16.msra.mxu0 %v5797
    %6181 = vmatprep.subr.bf16.mxu0 %v5796
    %6182 = vmatpush1.bf16.msra.mxu0 %v5795
    %6183 = vmatprep.subr.bf16.mxu0 %v5794
    %6184 = vmatpush1.bf16.msra.mxu0 %v5793
    %6185 = vmatprep.subr.bf16.mxu0 %v5792
    %6186 = vmatpush1.bf16.msra.mxu0 %v5791
    %6187 = vmatprep.subr.bf16.mxu0 %v5790
    %6188 = vmatpush1.bf16.msra.mxu0 %v5789
    %6189 = vmatprep.subr.bf16.mxu0 %v5820
    %6190 = vmatpush2.bf16.msra.mxu0 %v5819
    %6191 = vmatprep.subr.bf16.mxu0 %v5818
    %6192 = vmatpush2.bf16.msra.mxu0 %v5817
    %6193 = vmatprep.subr.bf16.mxu0 %v5816
    %6194 = vmatpush2.bf16.msra.mxu0 %v5815
    %6195 = vmatprep.subr.bf16.mxu0 %v5814
    %6196 = vmatpush2.bf16.msra.mxu0 %v5813
    %6197 = vmatprep.subr.bf16.mxu0 %v5812
    %6198 = vmatpush2.bf16.msra.mxu0 %v5811
    %6199 = vmatprep.subr.bf16.mxu0 %v5810
    %6200 = vmatpush2.bf16.msra.mxu0 %v5809
    %6201 = vmatprep.subr.bf16.mxu0 %v5808
    %6202 = vmatpush2.bf16.msra.mxu0 %v5807
    %6203 = vmatprep.subr.bf16.mxu0 %v5806
    %6204 = vmatpush2.bf16.msra.mxu0 %v5805
    %6205 = vmatprep.mubr.bf16.mxu0 %v5202
    %6206 = vmatmul.mubr.bf16.gmra.mxu0 %v5201
    %v6207 = vpop.f32.mrf.mxu0
    %v6208 = vadd.f32 0.0, %v6207
    %v6209 = vpop.f32.mrf.mxu0
    %v6210 = vadd.f32 0.0, %v6209
    %v6211 = vpop.f32.mrf.mxu0
    %v6212 = vpop.f32.mrf.mxu0
    %6213 = vdwg.mxu0
    %6214 = vmatprep.subr.bf16.mxu0 %v5836
    %6215 = vmatpush1.bf16.msra.mxu0 %v5835
    %6216 = vmatprep.subr.bf16.mxu0 %v5834
    %6217 = vmatpush1.bf16.msra.mxu0 %v5833
    %6218 = vmatprep.subr.bf16.mxu0 %v5832
    %6219 = vmatpush1.bf16.msra.mxu0 %v5831
    %6220 = vmatprep.subr.bf16.mxu0 %v5830
    %6221 = vmatpush1.bf16.msra.mxu0 %v5829
    %6222 = vmatprep.subr.bf16.mxu0 %v5828
    %6223 = vmatpush1.bf16.msra.mxu0 %v5827
    %6224 = vmatprep.subr.bf16.mxu0 %v5826
    %6225 = vmatpush1.bf16.msra.mxu0 %v5825
    %6226 = vmatprep.subr.bf16.mxu0 %v5824
    %6227 = vmatpush1.bf16.msra.mxu0 %v5823
    %6228 = vmatprep.subr.bf16.mxu0 %v5822
    %6229 = vmatpush1.bf16.msra.mxu0 %v5821
    %6230 = vmatprep.subr.bf16.mxu0 %v5852
    %6231 = vmatpush2.bf16.msra.mxu0 %v5851
    %6232 = vmatprep.subr.bf16.mxu0 %v5850
    %6233 = vmatpush2.bf16.msra.mxu0 %v5849
    %6234 = vmatprep.subr.bf16.mxu0 %v5848
    %6235 = vmatpush2.bf16.msra.mxu0 %v5847
    %6236 = vmatprep.subr.bf16.mxu0 %v5846
    %6237 = vmatpush2.bf16.msra.mxu0 %v5845
    %6238 = vmatprep.subr.bf16.mxu0 %v5844
    %6239 = vmatpush2.bf16.msra.mxu0 %v5843
    %6240 = vmatprep.subr.bf16.mxu0 %v5842
    %6241 = vmatpush2.bf16.msra.mxu0 %v5841
    %6242 = vmatprep.subr.bf16.mxu0 %v5840
    %6243 = vmatpush2.bf16.msra.mxu0 %v5839
    %6244 = vmatprep.subr.bf16.mxu0 %v5838
    %6245 = vmatpush2.bf16.msra.mxu0 %v5837
    %6246 = vmatprep.mubr.bf16.mxu0 %v5204
    %6247 = vmatmul.mubr.bf16.gmra.mxu0 %v5203
    %v6248 = vpop.f32.mrf.mxu0
    %v6249 = vadd.f32 %v6208, %v6248
    %v6250 = vpop.f32.mrf.mxu0
    %v6251 = vadd.f32 %v6210, %v6250
    %v6252 = vpop.f32.mrf.mxu0
    %v6253 = vpop.f32.mrf.mxu0
    %6254 = vdwg.mxu0
    %6255 = vmatprep.subr.bf16.mxu0 %v5868
    %6256 = vmatpush1.bf16.msra.mxu0 %v5867
    %6257 = vmatprep.subr.bf16.mxu0 %v5866
    %6258 = vmatpush1.bf16.msra.mxu0 %v5865
    %6259 = vmatprep.subr.bf16.mxu0 %v5864
    %6260 = vmatpush1.bf16.msra.mxu0 %v5863
    %6261 = vmatprep.subr.bf16.mxu0 %v5862
    %6262 = vmatpush1.bf16.msra.mxu0 %v5861
    %6263 = vmatprep.subr.bf16.mxu0 %v5860
    %6264 = vmatpush1.bf16.msra.mxu0 %v5859
    %6265 = vmatprep.subr.bf16.mxu0 %v5858
    %6266 = vmatpush1.bf16.msra.mxu0 %v5857
    %6267 = vmatprep.subr.bf16.mxu0 %v5856
    %6268 = vmatpush1.bf16.msra.mxu0 %v5855
    %6269 = vmatprep.subr.bf16.mxu0 %v5854
    %6270 = vmatpush1.bf16.msra.mxu0 %v5853
    %6271 = vmatprep.subr.bf16.mxu0 %v5884
    %6272 = vmatpush2.bf16.msra.mxu0 %v5883
    %6273 = vmatprep.subr.bf16.mxu0 %v5882
    %6274 = vmatpush2.bf16.msra.mxu0 %v5881
    %6275 = vmatprep.subr.bf16.mxu0 %v5880
    %6276 = vmatpush2.bf16.msra.mxu0 %v5879
    %6277 = vmatprep.subr.bf16.mxu0 %v5878
    %6278 = vmatpush2.bf16.msra.mxu0 %v5877
    %6279 = vmatprep.subr.bf16.mxu0 %v5876
    %6280 = vmatpush2.bf16.msra.mxu0 %v5875
    %6281 = vmatprep.subr.bf16.mxu0 %v5874
    %6282 = vmatpush2.bf16.msra.mxu0 %v5873
    %6283 = vmatprep.subr.bf16.mxu0 %v5872
    %6284 = vmatpush2.bf16.msra.mxu0 %v5871
    %6285 = vmatprep.subr.bf16.mxu0 %v5870
    %6286 = vmatpush2.bf16.msra.mxu0 %v5869
    %6287 = vmatprep.mubr.bf16.mxu0 %v5206
    %6288 = vmatmul.mubr.bf16.gmra.mxu0 %v5205
    %v6289 = vpop.f32.mrf.mxu0
    %v6290 = vadd.f32 %v6249, %v6289
    %v6291 = vpop.f32.mrf.mxu0
    %v6292 = vadd.f32 %v6251, %v6291
    %v6293 = vpop.f32.mrf.mxu0
    %v6294 = vpop.f32.mrf.mxu0
    %6295 = vdwg.mxu0
    %6296 = vmatprep.subr.bf16.mxu0 %v5900
    %6297 = vmatpush1.bf16.msra.mxu0 %v5899
    %6298 = vmatprep.subr.bf16.mxu0 %v5898
    %6299 = vmatpush1.bf16.msra.mxu0 %v5897
    %6300 = vmatprep.subr.bf16.mxu0 %v5896
    %6301 = vmatpush1.bf16.msra.mxu0 %v5895
    %6302 = vmatprep.subr.bf16.mxu0 %v5894
    %6303 = vmatpush1.bf16.msra.mxu0 %v5893
    %6304 = vmatprep.subr.bf16.mxu0 %v5892
    %6305 = vmatpush1.bf16.msra.mxu0 %v5891
    %6306 = vmatprep.subr.bf16.mxu0 %v5890
    %6307 = vmatpush1.bf16.msra.mxu0 %v5889
    %6308 = vmatprep.subr.bf16.mxu0 %v5888
    %6309 = vmatpush1.bf16.msra.mxu0 %v5887
    %6310 = vmatprep.subr.bf16.mxu0 %v5886
    %6311 = vmatpush1.bf16.msra.mxu0 %v5885
    %6312 = vmatprep.subr.bf16.mxu0 %v5916
    %6313 = vmatpush2.bf16.msra.mxu0 %v5915
    %6314 = vmatprep.subr.bf16.mxu0 %v5914
    %6315 = vmatpush2.bf16.msra.mxu0 %v5913
    %6316 = vmatprep.subr.bf16.mxu0 %v5912
    %6317 = vmatpush2.bf16.msra.mxu0 %v5911
    %6318 = vmatprep.subr.bf16.mxu0 %v5910
    %6319 = vmatpush2.bf16.msra.mxu0 %v5909
    %6320 = vmatprep.subr.bf16.mxu0 %v5908
    %6321 = vmatpush2.bf16.msra.mxu0 %v5907
    %6322 = vmatprep.subr.bf16.mxu0 %v5906
    %6323 = vmatpush2.bf16.msra.mxu0 %v5905
    %6324 = vmatprep.subr.bf16.mxu0 %v5904
    %6325 = vmatpush2.bf16.msra.mxu0 %v5903
    %6326 = vmatprep.subr.bf16.mxu0 %v5902
    %6327 = vmatpush2.bf16.msra.mxu0 %v5901
    %6328 = vmatprep.mubr.bf16.mxu0 %v5208
    %6329 = vmatmul.mubr.bf16.gmra.mxu0 %v5207
    %v6330 = vpop.f32.mrf.mxu0
    %v6331 = vadd.f32 %v6290, %v6330
    %v6332 = vpop.f32.mrf.mxu0
    %v6333 = vadd.f32 %v6292, %v6332
    %v6334 = vpop.f32.mrf.mxu0
    %v6335 = vpop.f32.mrf.mxu0
    %6336 = vdwg.mxu0
    %6337 = vmatprep.subr.bf16.mxu0 %v5932
    %6338 = vmatpush1.bf16.msra.mxu0 %v5931
    %6339 = vmatprep.subr.bf16.mxu0 %v5930
    %6340 = vmatpush1.bf16.msra.mxu0 %v5929
    %6341 = vmatprep.subr.bf16.mxu0 %v5928
    %6342 = vmatpush1.bf16.msra.mxu0 %v5927
    %6343 = vmatprep.subr.bf16.mxu0 %v5926
    %6344 = vmatpush1.bf16.msra.mxu0 %v5925
    %6345 = vmatprep.subr.bf16.mxu0 %v5924
    %6346 = vmatpush1.bf16.msra.mxu0 %v5923
    %6347 = vmatprep.subr.bf16.mxu0 %v5922
    %6348 = vmatpush1.bf16.msra.mxu0 %v5921
    %6349 = vmatprep.subr.bf16.mxu0 %v5920
    %6350 = vmatpush1.bf16.msra.mxu0 %v5919
    %6351 = vmatprep.subr.bf16.mxu0 %v5918
    %6352 = vmatpush1.bf16.msra.mxu0 %v5917
    %6353 = vmatprep.subr.bf16.mxu0 %v5948
    %6354 = vmatpush2.bf16.msra.mxu0 %v5947
    %6355 = vmatprep.subr.bf16.mxu0 %v5946
    %6356 = vmatpush2.bf16.msra.mxu0 %v5945
    %6357 = vmatprep.subr.bf16.mxu0 %v5944
    %6358 = vmatpush2.bf16.msra.mxu0 %v5943
    %6359 = vmatprep.subr.bf16.mxu0 %v5942
    %6360 = vmatpush2.bf16.msra.mxu0 %v5941
    %6361 = vmatprep.subr.bf16.mxu0 %v5940
    %6362 = vmatpush2.bf16.msra.mxu0 %v5939
    %6363 = vmatprep.subr.bf16.mxu0 %v5938
    %6364 = vmatpush2.bf16.msra.mxu0 %v5937
    %6365 = vmatprep.subr.bf16.mxu0 %v5936
    %6366 = vmatpush2.bf16.msra.mxu0 %v5935
    %6367 = vmatprep.subr.bf16.mxu0 %v5934
    %6368 = vmatpush2.bf16.msra.mxu0 %v5933
    %6369 = vmatprep.mubr.bf16.mxu0 %v5210
    %6370 = vmatmul.mubr.bf16.gmra.mxu0 %v5209
    %v6371 = vpop.f32.mrf.mxu0
    %v6372 = vadd.f32 %v6331, %v6371
    %v6373 = vpop.f32.mrf.mxu0
    %v6374 = vadd.f32 %v6333, %v6373
    %v6375 = vpop.f32.mrf.mxu0
    %v6376 = vpop.f32.mrf.mxu0
    %6377 = vdwg.mxu0
    %6378 = vmatprep.subr.bf16.mxu0 %v5964
    %6379 = vmatpush1.bf16.msra.mxu0 %v5963
    %6380 = vmatprep.subr.bf16.mxu0 %v5962
    %6381 = vmatpush1.bf16.msra.mxu0 %v5961
    %6382 = vmatprep.subr.bf16.mxu0 %v5960
    %6383 = vmatpush1.bf16.msra.mxu0 %v5959
    %6384 = vmatprep.subr.bf16.mxu0 %v5958
    %6385 = vmatpush1.bf16.msra.mxu0 %v5957
    %6386 = vmatprep.subr.bf16.mxu0 %v5956
    %6387 = vmatpush1.bf16.msra.mxu0 %v5955
    %6388 = vmatprep.subr.bf16.mxu0 %v5954
    %6389 = vmatpush1.bf16.msra.mxu0 %v5953
    %6390 = vmatprep.subr.bf16.mxu0 %v5952
    %6391 = vmatpush1.bf16.msra.mxu0 %v5951
    %6392 = vmatprep.subr.bf16.mxu0 %v5950
    %6393 = vmatpush1.bf16.msra.mxu0 %v5949
    %6394 = vmatprep.subr.bf16.mxu0 %v5980
    %6395 = vmatpush2.bf16.msra.mxu0 %v5979
    %6396 = vmatprep.subr.bf16.mxu0 %v5978
    %6397 = vmatpush2.bf16.msra.mxu0 %v5977
    %6398 = vmatprep.subr.bf16.mxu0 %v5976
    %6399 = vmatpush2.bf16.msra.mxu0 %v5975
    %6400 = vmatprep.subr.bf16.mxu0 %v5974
    %6401 = vmatpush2.bf16.msra.mxu0 %v5973
    %6402 = vmatprep.subr.bf16.mxu0 %v5972
    %6403 = vmatpush2.bf16.msra.mxu0 %v5971
    %6404 = vmatprep.subr.bf16.mxu0 %v5970
    %6405 = vmatpush2.bf16.msra.mxu0 %v5969
    %6406 = vmatprep.subr.bf16.mxu0 %v5968
    %6407 = vmatpush2.bf16.msra.mxu0 %v5967
    %6408 = vmatprep.subr.bf16.mxu0 %v5966
    %6409 = vmatpush2.bf16.msra.mxu0 %v5965
    %6410 = vmatprep.mubr.bf16.mxu0 %v5212
    %6411 = vmatmul.mubr.bf16.gmra.mxu0 %v5211
    %v6412 = vpop.f32.mrf.mxu0
    %v6413 = vadd.f32 %v6372, %v6412
    %v6414 = vpop.f32.mrf.mxu0
    %v6415 = vadd.f32 %v6374, %v6414
    %v6416 = vpop.f32.mrf.mxu0
    %v6417 = vpop.f32.mrf.mxu0
    %6418 = vdwg.mxu0
    %v6419 = vpack.c.bf16 %v3139, %v3139
    %v6420 = vpack.c.bf16 %v3140, %v3140
    %v6421 = vpack.c.bf16 %v3141, %v3141
    %v6422 = vpack.c.bf16 %v3142, %v3142
    %v6423 = vpack.c.bf16 %v3143, %v3143
    %v6424 = vpack.c.bf16 %v3144, %v3144
    %v6425 = vpack.c.bf16 %v3145, %v3145
    %v6426 = vpack.c.bf16 %v3146, %v3146
    %v6427 = vpack.c.bf16 %v3147, %v3147
    %v6428 = vpack.c.bf16 %v3148, %v3148
    %v6429 = vpack.c.bf16 %v3149, %v3149
    %v6430 = vpack.c.bf16 %v3150, %v3150
    %v6623 = vunpack.c.l.b16 %v2082
    %v6624 = vunpack.c.l.b16 %v2083
    %v6625 = vunpack.c.l.b16 %v2084
    %v6626 = vunpack.c.l.b16 %v2085
    %v6627 = vunpack.c.l.b16 %v2086
    %v6628 = vunpack.c.l.b16 %v2087
    %v6629 = vunpack.c.l.b16 %v2088
    %v6630 = vunpack.c.l.b16 %v2089
    %v6631 = vunpack.c.l.b16 %v2090
    %v6632 = vunpack.c.l.b16 %v2091
    %v6633 = vunpack.c.l.b16 %v2092
    %v6634 = vunpack.c.l.b16 %v2093
    %v6635 = vunpack.c.l.b16 %v2094
    %v6636 = vunpack.c.l.b16 %v2095
    %v6637 = vunpack.c.l.b16 %v2096
    %v6638 = vunpack.c.l.b16 %v2097
    %v6639 = vunpack.c.l.b16 %v2098
    %v6640 = vunpack.c.l.b16 %v2099
    %v6641 = vunpack.c.l.b16 %v2100
    %v6642 = vunpack.c.l.b16 %v2101
    %v6643 = vunpack.c.l.b16 %v2102
    %v6644 = vunpack.c.l.b16 %v2103
    %v6645 = vunpack.c.l.b16 %v2104
    %v6646 = vunpack.c.l.b16 %v2105
    %v6647 = vunpack.c.l.b16 %v2106
    %v6648 = vunpack.c.l.b16 %v2107
    %v6649 = vunpack.c.l.b16 %v2108
    %v6650 = vunpack.c.l.b16 %v2109
    %v6651 = vunpack.c.l.b16 %v2110
    %v6652 = vunpack.c.l.b16 %v2111
    %v6653 = vunpack.c.l.b16 %v2112
    %v6654 = vunpack.c.l.b16 %v2113
    %v6655 = vunpack.c.l.b16 %v2114
    %v6656 = vunpack.c.l.b16 %v2115
    %v6657 = vunpack.c.l.b16 %v2116
    %v6658 = vunpack.c.l.b16 %v2117
    %v6659 = vunpack.c.l.b16 %v2118
    %v6660 = vunpack.c.l.b16 %v2119
    %v6661 = vunpack.c.l.b16 %v2120
    %v6662 = vunpack.c.l.b16 %v2121
    %v6663 = vunpack.c.l.b16 %v2122
    %v6664 = vunpack.c.l.b16 %v2123
    %v6665 = vunpack.c.l.b16 %v2124
    %v6666 = vunpack.c.l.b16 %v2125
    %v6667 = vunpack.c.l.b16 %v2126
    %v6668 = vunpack.c.l.b16 %v2127
    %v6669 = vunpack.c.l.b16 %v2128
    %v6670 = vunpack.c.l.b16 %v2129
    %v6671 = vunpack.c.l.b16 %v2130
    %v6672 = vunpack.c.l.b16 %v2131
    %v6673 = vunpack.c.l.b16 %v2132
    %v6674 = vunpack.c.l.b16 %v2133
    %v6675 = vunpack.c.l.b16 %v2134
    %v6676 = vunpack.c.l.b16 %v2135
    %v6677 = vunpack.c.l.b16 %v2136
    %v6678 = vunpack.c.l.b16 %v2137
    %v6679 = vunpack.c.l.b16 %v2138
    %v6680 = vunpack.c.l.b16 %v2139
    %v6681 = vunpack.c.l.b16 %v2140
    %v6682 = vunpack.c.l.b16 %v2141
    %v6683 = vunpack.c.l.b16 %v2142
    %v6684 = vunpack.c.l.b16 %v2143
    %v6685 = vunpack.c.l.b16 %v2144
    %v6686 = vunpack.c.l.b16 %v2145
    %v6687 = vunpack.c.l.b16 %v2146
    %v6688 = vunpack.c.l.b16 %v2147
    %v6689 = vunpack.c.l.b16 %v2148
    %v6690 = vunpack.c.l.b16 %v2149
    %v6691 = vunpack.c.l.b16 %v2150
    %v6692 = vunpack.c.l.b16 %v2151
    %v6693 = vunpack.c.l.b16 %v2152
    %v6694 = vunpack.c.l.b16 %v2153
    %v6695 = vunpack.c.l.b16 %v2154
    %v6696 = vunpack.c.l.b16 %v2155
    %v6697 = vunpack.c.l.b16 %v2156
    %v6698 = vunpack.c.l.b16 %v2157
    %v6699 = vunpack.c.l.b16 %v2158
    %v6700 = vunpack.c.l.b16 %v2159
    %v6701 = vunpack.c.l.b16 %v2160
    %v6702 = vunpack.c.l.b16 %v2161
    %v6703 = vunpack.c.l.b16 %v2162
    %v6704 = vunpack.c.l.b16 %v2163
    %v6705 = vunpack.c.l.b16 %v2164
    %v6706 = vunpack.c.l.b16 %v2165
    %v6707 = vunpack.c.l.b16 %v2166
    %v6708 = vunpack.c.l.b16 %v2167
    %v6709 = vunpack.c.l.b16 %v2168
    %v6710 = vunpack.c.l.b16 %v2169
    %v6711 = vunpack.c.l.b16 %v2170
    %v6712 = vunpack.c.l.b16 %v2171
    %v6713 = vunpack.c.l.b16 %v2172
    %v6714 = vunpack.c.l.b16 %v2173
    %v6715 = vunpack.c.l.b16 %v2174
    %v6716 = vunpack.c.l.b16 %v2175
    %v6717 = vunpack.c.l.b16 %v2176
    %v6718 = vunpack.c.l.b16 %v2177
    %v6719 = vunpack.c.l.b16 %v2178
    %v6720 = vunpack.c.l.b16 %v2179
    %v6721 = vunpack.c.l.b16 %v2180
    %v6722 = vunpack.c.l.b16 %v2181
    %v6723 = vunpack.c.l.b16 %v2182
    %v6724 = vunpack.c.l.b16 %v2183
    %v6725 = vunpack.c.l.b16 %v2184
    %v6726 = vunpack.c.l.b16 %v2185
    %v6727 = vunpack.c.l.b16 %v2186
    %v6728 = vunpack.c.l.b16 %v2187
    %v6729 = vunpack.c.l.b16 %v2188
    %v6730 = vunpack.c.l.b16 %v2189
    %v6731 = vunpack.c.l.b16 %v2190
    %v6732 = vunpack.c.l.b16 %v2191
    %v6733 = vunpack.c.l.b16 %v2192
    %v6734 = vunpack.c.l.b16 %v2193
    %v6735 = vunpack.c.l.b16 %v2194
    %v6736 = vunpack.c.l.b16 %v2195
    %v6737 = vunpack.c.l.b16 %v2196
    %v6738 = vunpack.c.l.b16 %v2197
    %v6739 = vunpack.c.l.b16 %v2198
    %v6740 = vunpack.c.l.b16 %v2199
    %v6741 = vunpack.c.l.b16 %v2200
    %v6742 = vunpack.c.l.b16 %v2201
    %v6743 = vunpack.c.l.b16 %v2202
    %v6744 = vunpack.c.l.b16 %v2203
    %v6745 = vunpack.c.l.b16 %v2204
    %v6746 = vunpack.c.l.b16 %v2205
    %v6747 = vunpack.c.l.b16 %v2206
    %v6748 = vunpack.c.l.b16 %v2207
    %v6749 = vunpack.c.l.b16 %v2208
    %v6750 = vunpack.c.l.b16 %v2209
    %v6751 = vunpack.c.l.b16 %v2210
    %v6752 = vunpack.c.l.b16 %v2211
    %v6753 = vunpack.c.l.b16 %v2212
    %v6754 = vunpack.c.l.b16 %v2213
    %v6755 = vunpack.c.l.b16 %v2214
    %v6756 = vunpack.c.l.b16 %v2215
    %v6757 = vunpack.c.l.b16 %v2216
    %v6758 = vunpack.c.l.b16 %v2217
    %v6759 = vunpack.c.l.b16 %v2218
    %v6760 = vunpack.c.l.b16 %v2219
    %v6761 = vunpack.c.l.b16 %v2220
    %v6762 = vunpack.c.l.b16 %v2221
    %v6763 = vunpack.c.l.b16 %v2222
    %v6764 = vunpack.c.l.b16 %v2223
    %v6765 = vunpack.c.l.b16 %v2224
    %v6766 = vunpack.c.l.b16 %v2225
    %v6767 = vunpack.c.l.b16 %v2226
    %v6768 = vunpack.c.l.b16 %v2227
    %v6769 = vunpack.c.l.b16 %v2228
    %v6770 = vunpack.c.l.b16 %v2229
    %v6771 = vunpack.c.l.b16 %v2230
    %v6772 = vunpack.c.l.b16 %v2231
    %v6773 = vunpack.c.l.b16 %v2232
    %v6774 = vunpack.c.l.b16 %v2233
    %v6775 = vunpack.c.l.b16 %v2234
    %v6776 = vunpack.c.l.b16 %v2235
    %v6777 = vunpack.c.l.b16 %v2236
    %v6778 = vunpack.c.l.b16 %v2237
    %v6779 = vunpack.c.l.b16 %v2238
    %v6780 = vunpack.c.l.b16 %v2239
    %v6781 = vunpack.c.l.b16 %v2240
    %v6782 = vunpack.c.l.b16 %v2241
    %v6783 = vunpack.c.l.b16 %v2242
    %v6784 = vunpack.c.l.b16 %v2243
    %v6785 = vunpack.c.l.b16 %v2244
    %v6786 = vunpack.c.l.b16 %v2245
    %v6787 = vunpack.c.l.b16 %v2246
    %v6788 = vunpack.c.l.b16 %v2247
    %v6789 = vunpack.c.l.b16 %v2248
    %v6790 = vunpack.c.l.b16 %v2249
    %v6791 = vunpack.c.l.b16 %v2250
    %v6792 = vunpack.c.l.b16 %v2251
    %v6793 = vunpack.c.l.b16 %v2252
    %v6794 = vunpack.c.l.b16 %v2253
    %v6795 = vunpack.c.l.b16 %v2254
    %v6796 = vunpack.c.l.b16 %v2255
    %v6797 = vunpack.c.l.b16 %v2256
    %v6798 = vunpack.c.l.b16 %v2257
    %v6799 = vunpack.c.l.b16 %v2258
    %v6800 = vunpack.c.l.b16 %v2259
    %v6801 = vunpack.c.l.b16 %v2260
    %v6802 = vunpack.c.l.b16 %v2261
    %v6803 = vunpack.c.l.b16 %v2262
    %v6804 = vunpack.c.l.b16 %v2263
    %v6805 = vunpack.c.l.b16 %v2264
    %v6806 = vunpack.c.l.b16 %v2265
    %v6807 = vunpack.c.l.b16 %v2266
    %v6808 = vunpack.c.l.b16 %v2267
    %v6809 = vunpack.c.l.b16 %v2268
    %v6810 = vunpack.c.l.b16 %v2269
    %v6811 = vunpack.c.l.b16 %v2270
    %v6812 = vunpack.c.l.b16 %v2271
    %v6813 = vunpack.c.l.b16 %v2272
    %v6814 = vunpack.c.l.b16 %v2273
    %v6815 = vpack.c.b16 %v6624, %v6623
    %v6816 = vpack.c.b16 %v6626, %v6625
    %v6817 = vpack.c.b16 %v6628, %v6627
    %v6818 = vpack.c.b16 %v6630, %v6629
    %v6819 = vpack.c.b16 %v6632, %v6631
    %v6820 = vpack.c.b16 %v6634, %v6633
    %v6821 = vpack.c.b16 %v6636, %v6635
    %v6822 = vpack.c.b16 %v6638, %v6637
    %v6823 = vpack.c.b16 %v6640, %v6639
    %v6824 = vpack.c.b16 %v6642, %v6641
    %v6825 = vpack.c.b16 %v6644, %v6643
    %v6826 = vpack.c.b16 %v6646, %v6645
    %v6827 = vpack.c.b16 %v6648, %v6647
    %v6828 = vpack.c.b16 %v6650, %v6649
    %v6829 = vpack.c.b16 %v6652, %v6651
    %v6830 = vpack.c.b16 %v6654, %v6653
    %v6831 = vpack.c.b16 %v6656, %v6655
    %v6832 = vpack.c.b16 %v6658, %v6657
    %v6833 = vpack.c.b16 %v6660, %v6659
    %v6834 = vpack.c.b16 %v6662, %v6661
    %v6835 = vpack.c.b16 %v6664, %v6663
    %v6836 = vpack.c.b16 %v6666, %v6665
    %v6837 = vpack.c.b16 %v6668, %v6667
    %v6838 = vpack.c.b16 %v6670, %v6669
    %v6839 = vpack.c.b16 %v6672, %v6671
    %v6840 = vpack.c.b16 %v6674, %v6673
    %v6841 = vpack.c.b16 %v6676, %v6675
    %v6842 = vpack.c.b16 %v6678, %v6677
    %v6843 = vpack.c.b16 %v6680, %v6679
    %v6844 = vpack.c.b16 %v6682, %v6681
    %v6845 = vpack.c.b16 %v6684, %v6683
    %v6846 = vpack.c.b16 %v6686, %v6685
    %v6847 = vpack.c.b16 %v6688, %v6687
    %v6848 = vpack.c.b16 %v6690, %v6689
    %v6849 = vpack.c.b16 %v6692, %v6691
    %v6850 = vpack.c.b16 %v6694, %v6693
    %v6851 = vpack.c.b16 %v6696, %v6695
    %v6852 = vpack.c.b16 %v6698, %v6697
    %v6853 = vpack.c.b16 %v6700, %v6699
    %v6854 = vpack.c.b16 %v6702, %v6701
    %v6855 = vpack.c.b16 %v6704, %v6703
    %v6856 = vpack.c.b16 %v6706, %v6705
    %v6857 = vpack.c.b16 %v6708, %v6707
    %v6858 = vpack.c.b16 %v6710, %v6709
    %v6859 = vpack.c.b16 %v6712, %v6711
    %v6860 = vpack.c.b16 %v6714, %v6713
    %v6861 = vpack.c.b16 %v6716, %v6715
    %v6862 = vpack.c.b16 %v6718, %v6717
    %v6863 = vpack.c.b16 %v6720, %v6719
    %v6864 = vpack.c.b16 %v6722, %v6721
    %v6865 = vpack.c.b16 %v6724, %v6723
    %v6866 = vpack.c.b16 %v6726, %v6725
    %v6867 = vpack.c.b16 %v6728, %v6727
    %v6868 = vpack.c.b16 %v6730, %v6729
    %v6869 = vpack.c.b16 %v6732, %v6731
    %v6870 = vpack.c.b16 %v6734, %v6733
    %v6871 = vpack.c.b16 %v6736, %v6735
    %v6872 = vpack.c.b16 %v6738, %v6737
    %v6873 = vpack.c.b16 %v6740, %v6739
    %v6874 = vpack.c.b16 %v6742, %v6741
    %v6875 = vpack.c.b16 %v6744, %v6743
    %v6876 = vpack.c.b16 %v6746, %v6745
    %v6877 = vpack.c.b16 %v6748, %v6747
    %v6878 = vpack.c.b16 %v6750, %v6749
    %v6879 = vpack.c.b16 %v6752, %v6751
    %v6880 = vpack.c.b16 %v6754, %v6753
    %v6881 = vpack.c.b16 %v6756, %v6755
    %v6882 = vpack.c.b16 %v6758, %v6757
    %v6883 = vpack.c.b16 %v6760, %v6759
    %v6884 = vpack.c.b16 %v6762, %v6761
    %v6885 = vpack.c.b16 %v6764, %v6763
    %v6886 = vpack.c.b16 %v6766, %v6765
    %v6887 = vpack.c.b16 %v6768, %v6767
    %v6888 = vpack.c.b16 %v6770, %v6769
    %v6889 = vpack.c.b16 %v6772, %v6771
    %v6890 = vpack.c.b16 %v6774, %v6773
    %v6891 = vpack.c.b16 %v6776, %v6775
    %v6892 = vpack.c.b16 %v6778, %v6777
    %v6893 = vpack.c.b16 %v6780, %v6779
    %v6894 = vpack.c.b16 %v6782, %v6781
    %v6895 = vpack.c.b16 %v6784, %v6783
    %v6896 = vpack.c.b16 %v6786, %v6785
    %v6897 = vpack.c.b16 %v6788, %v6787
    %v6898 = vpack.c.b16 %v6790, %v6789
    %v6899 = vpack.c.b16 %v6792, %v6791
    %v6900 = vpack.c.b16 %v6794, %v6793
    %v6901 = vpack.c.b16 %v6796, %v6795
    %v6902 = vpack.c.b16 %v6798, %v6797
    %v6903 = vpack.c.b16 %v6800, %v6799
    %v6904 = vpack.c.b16 %v6802, %v6801
    %v6905 = vpack.c.b16 %v6804, %v6803
    %v6906 = vpack.c.b16 %v6806, %v6805
    %v6907 = vpack.c.b16 %v6808, %v6807
    %v6908 = vpack.c.b16 %v6810, %v6809
    %v6909 = vpack.c.b16 %v6812, %v6811
    %v6910 = vpack.c.b16 %v6814, %v6813
    %7007 = vmatprep.subr.bf16.mxu0 0
    %7008 = vmatpush1.bf16.msra.mxu0 %v6822
    %7009 = vmatprep.subr.bf16.mxu0 0
    %7010 = vmatpush1.bf16.msra.mxu0 %v6821
    %7011 = vmatprep.subr.bf16.mxu0 0
    %7012 = vmatpush1.bf16.msra.mxu0 %v6820
    %7013 = vmatprep.subr.bf16.mxu0 0
    %7014 = vmatpush1.bf16.msra.mxu0 %v6819
    %7015 = vmatprep.subr.bf16.mxu0 0
    %7016 = vmatpush1.bf16.msra.mxu0 %v6818
    %7017 = vmatprep.subr.bf16.mxu0 0
    %7018 = vmatpush1.bf16.msra.mxu0 %v6817
    %7019 = vmatprep.subr.bf16.mxu0 0
    %7020 = vmatpush1.bf16.msra.mxu0 %v6816
    %7021 = vmatprep.subr.bf16.mxu0 0
    %7022 = vmatpush1.bf16.msra.mxu0 %v6815
    %7023 = vmatprep.subr.bf16.mxu0 0
    %7024 = vmatpush2.bf16.msra.mxu0 %v6830
    %7025 = vmatprep.subr.bf16.mxu0 0
    %7026 = vmatpush2.bf16.msra.mxu0 %v6829
    %7027 = vmatprep.subr.bf16.mxu0 0
    %7028 = vmatpush2.bf16.msra.mxu0 %v6828
    %7029 = vmatprep.subr.bf16.mxu0 0
    %7030 = vmatpush2.bf16.msra.mxu0 %v6827
    %7031 = vmatprep.subr.bf16.mxu0 0
    %7032 = vmatpush2.bf16.msra.mxu0 %v6826
    %7033 = vmatprep.subr.bf16.mxu0 0
    %7034 = vmatpush2.bf16.msra.mxu0 %v6825
    %7035 = vmatprep.subr.bf16.mxu0 0
    %7036 = vmatpush2.bf16.msra.mxu0 %v6824
    %7037 = vmatprep.subr.bf16.mxu0 0
    %7038 = vmatpush2.bf16.msra.mxu0 %v6823
    %7039 = vmatprep.mubr.bf16.mxu0 %v6420
    %7040 = vmatmul.mubr.bf16.gmra.mxu0 %v6419
    %v7041 = vpop.f32.mrf.mxu0
    %v7042 = vadd.f32 0.0, %v7041
    %v7043 = vpop.f32.mrf.mxu0
    %v7044 = vpop.f32.mrf.mxu0
    %v7045 = vpop.f32.mrf.mxu0
    %7046 = vdwg.mxu0
    %7047 = vmatprep.subr.bf16.mxu0 0
    %7048 = vmatpush1.bf16.msra.mxu0 %v6838
    %7049 = vmatprep.subr.bf16.mxu0 0
    %7050 = vmatpush1.bf16.msra.mxu0 %v6837
    %7051 = vmatprep.subr.bf16.mxu0 0
    %7052 = vmatpush1.bf16.msra.mxu0 %v6836
    %7053 = vmatprep.subr.bf16.mxu0 0
    %7054 = vmatpush1.bf16.msra.mxu0 %v6835
    %7055 = vmatprep.subr.bf16.mxu0 0
    %7056 = vmatpush1.bf16.msra.mxu0 %v6834
    %7057 = vmatprep.subr.bf16.mxu0 0
    %7058 = vmatpush1.bf16.msra.mxu0 %v6833
    %7059 = vmatprep.subr.bf16.mxu0 0
    %7060 = vmatpush1.bf16.msra.mxu0 %v6832
    %7061 = vmatprep.subr.bf16.mxu0 0
    %7062 = vmatpush1.bf16.msra.mxu0 %v6831
    %7063 = vmatprep.subr.bf16.mxu0 0
    %7064 = vmatpush2.bf16.msra.mxu0 %v6846
    %7065 = vmatprep.subr.bf16.mxu0 0
    %7066 = vmatpush2.bf16.msra.mxu0 %v6845
    %7067 = vmatprep.subr.bf16.mxu0 0
    %7068 = vmatpush2.bf16.msra.mxu0 %v6844
    %7069 = vmatprep.subr.bf16.mxu0 0
    %7070 = vmatpush2.bf16.msra.mxu0 %v6843
    %7071 = vmatprep.subr.bf16.mxu0 0
    %7072 = vmatpush2.bf16.msra.mxu0 %v6842
    %7073 = vmatprep.subr.bf16.mxu0 0
    %7074 = vmatpush2.bf16.msra.mxu0 %v6841
    %7075 = vmatprep.subr.bf16.mxu0 0
    %7076 = vmatpush2.bf16.msra.mxu0 %v6840
    %7077 = vmatprep.subr.bf16.mxu0 0
    %7078 = vmatpush2.bf16.msra.mxu0 %v6839
    %7079 = vmatprep.mubr.bf16.mxu0 %v6422
    %7080 = vmatmul.mubr.bf16.gmra.mxu0 %v6421
    %v7081 = vpop.f32.mrf.mxu0
    %v7082 = vadd.f32 %v7042, %v7081
    %v7083 = vpop.f32.mrf.mxu0
    %v7084 = vpop.f32.mrf.mxu0
    %v7085 = vpop.f32.mrf.mxu0
    %7086 = vdwg.mxu0
    %7087 = vmatprep.subr.bf16.mxu0 0
    %7088 = vmatpush1.bf16.msra.mxu0 %v6854
    %7089 = vmatprep.subr.bf16.mxu0 0
    %7090 = vmatpush1.bf16.msra.mxu0 %v6853
    %7091 = vmatprep.subr.bf16.mxu0 0
    %7092 = vmatpush1.bf16.msra.mxu0 %v6852
    %7093 = vmatprep.subr.bf16.mxu0 0
    %7094 = vmatpush1.bf16.msra.mxu0 %v6851
    %7095 = vmatprep.subr.bf16.mxu0 0
    %7096 = vmatpush1.bf16.msra.mxu0 %v6850
    %7097 = vmatprep.subr.bf16.mxu0 0
    %7098 = vmatpush1.bf16.msra.mxu0 %v6849
    %7099 = vmatprep.subr.bf16.mxu0 0
    %7100 = vmatpush1.bf16.msra.mxu0 %v6848
    %7101 = vmatprep.subr.bf16.mxu0 0
    %7102 = vmatpush1.bf16.msra.mxu0 %v6847
    %7103 = vmatprep.subr.bf16.mxu0 0
    %7104 = vmatpush2.bf16.msra.mxu0 %v6862
    %7105 = vmatprep.subr.bf16.mxu0 0
    %7106 = vmatpush2.bf16.msra.mxu0 %v6861
    %7107 = vmatprep.subr.bf16.mxu0 0
    %7108 = vmatpush2.bf16.msra.mxu0 %v6860
    %7109 = vmatprep.subr.bf16.mxu0 0
    %7110 = vmatpush2.bf16.msra.mxu0 %v6859
    %7111 = vmatprep.subr.bf16.mxu0 0
    %7112 = vmatpush2.bf16.msra.mxu0 %v6858
    %7113 = vmatprep.subr.bf16.mxu0 0
    %7114 = vmatpush2.bf16.msra.mxu0 %v6857
    %7115 = vmatprep.subr.bf16.mxu0 0
    %7116 = vmatpush2.bf16.msra.mxu0 %v6856
    %7117 = vmatprep.subr.bf16.mxu0 0
    %7118 = vmatpush2.bf16.msra.mxu0 %v6855
    %7119 = vmatprep.mubr.bf16.mxu0 %v6424
    %7120 = vmatmul.mubr.bf16.gmra.mxu0 %v6423
    %v7121 = vpop.f32.mrf.mxu0
    %v7122 = vadd.f32 %v7082, %v7121
    %v7123 = vpop.f32.mrf.mxu0
    %v7124 = vpop.f32.mrf.mxu0
    %v7125 = vpop.f32.mrf.mxu0
    %7126 = vdwg.mxu0
    %7127 = vmatprep.subr.bf16.mxu0 0
    %7128 = vmatpush1.bf16.msra.mxu0 %v6870
    %7129 = vmatprep.subr.bf16.mxu0 0
    %7130 = vmatpush1.bf16.msra.mxu0 %v6869
    %7131 = vmatprep.subr.bf16.mxu0 0
    %7132 = vmatpush1.bf16.msra.mxu0 %v6868
    %7133 = vmatprep.subr.bf16.mxu0 0
    %7134 = vmatpush1.bf16.msra.mxu0 %v6867
    %7135 = vmatprep.subr.bf16.mxu0 0
    %7136 = vmatpush1.bf16.msra.mxu0 %v6866
    %7137 = vmatprep.subr.bf16.mxu0 0
    %7138 = vmatpush1.bf16.msra.mxu0 %v6865
    %7139 = vmatprep.subr.bf16.mxu0 0
    %7140 = vmatpush1.bf16.msra.mxu0 %v6864
    %7141 = vmatprep.subr.bf16.mxu0 0
    %7142 = vmatpush1.bf16.msra.mxu0 %v6863
    %7143 = vmatprep.subr.bf16.mxu0 0
    %7144 = vmatpush2.bf16.msra.mxu0 %v6878
    %7145 = vmatprep.subr.bf16.mxu0 0
    %7146 = vmatpush2.bf16.msra.mxu0 %v6877
    %7147 = vmatprep.subr.bf16.mxu0 0
    %7148 = vmatpush2.bf16.msra.mxu0 %v6876
    %7149 = vmatprep.subr.bf16.mxu0 0
    %7150 = vmatpush2.bf16.msra.mxu0 %v6875
    %7151 = vmatprep.subr.bf16.mxu0 0
    %7152 = vmatpush2.bf16.msra.mxu0 %v6874
    %7153 = vmatprep.subr.bf16.mxu0 0
    %7154 = vmatpush2.bf16.msra.mxu0 %v6873
    %7155 = vmatprep.subr.bf16.mxu0 0
    %7156 = vmatpush2.bf16.msra.mxu0 %v6872
    %7157 = vmatprep.subr.bf16.mxu0 0
    %7158 = vmatpush2.bf16.msra.mxu0 %v6871
    %7159 = vmatprep.mubr.bf16.mxu0 %v6426
    %7160 = vmatmul.mubr.bf16.gmra.mxu0 %v6425
    %v7161 = vpop.f32.mrf.mxu0
    %v7162 = vadd.f32 %v7122, %v7161
    %v7163 = vpop.f32.mrf.mxu0
    %v7164 = vpop.f32.mrf.mxu0
    %v7165 = vpop.f32.mrf.mxu0
    %7166 = vdwg.mxu0
    %7167 = vmatprep.subr.bf16.mxu0 0
    %7168 = vmatpush1.bf16.msra.mxu0 %v6886
    %7169 = vmatprep.subr.bf16.mxu0 0
    %7170 = vmatpush1.bf16.msra.mxu0 %v6885
    %7171 = vmatprep.subr.bf16.mxu0 0
    %7172 = vmatpush1.bf16.msra.mxu0 %v6884
    %7173 = vmatprep.subr.bf16.mxu0 0
    %7174 = vmatpush1.bf16.msra.mxu0 %v6883
    %7175 = vmatprep.subr.bf16.mxu0 0
    %7176 = vmatpush1.bf16.msra.mxu0 %v6882
    %7177 = vmatprep.subr.bf16.mxu0 0
    %7178 = vmatpush1.bf16.msra.mxu0 %v6881
    %7179 = vmatprep.subr.bf16.mxu0 0
    %7180 = vmatpush1.bf16.msra.mxu0 %v6880
    %7181 = vmatprep.subr.bf16.mxu0 0
    %7182 = vmatpush1.bf16.msra.mxu0 %v6879
    %7183 = vmatprep.subr.bf16.mxu0 0
    %7184 = vmatpush2.bf16.msra.mxu0 %v6894
    %7185 = vmatprep.subr.bf16.mxu0 0
    %7186 = vmatpush2.bf16.msra.mxu0 %v6893
    %7187 = vmatprep.subr.bf16.mxu0 0
    %7188 = vmatpush2.bf16.msra.mxu0 %v6892
    %7189 = vmatprep.subr.bf16.mxu0 0
    %7190 = vmatpush2.bf16.msra.mxu0 %v6891
    %7191 = vmatprep.subr.bf16.mxu0 0
    %7192 = vmatpush2.bf16.msra.mxu0 %v6890
    %7193 = vmatprep.subr.bf16.mxu0 0
    %7194 = vmatpush2.bf16.msra.mxu0 %v6889
    %7195 = vmatprep.subr.bf16.mxu0 0
    %7196 = vmatpush2.bf16.msra.mxu0 %v6888
    %7197 = vmatprep.subr.bf16.mxu0 0
    %7198 = vmatpush2.bf16.msra.mxu0 %v6887
    %7199 = vmatprep.mubr.bf16.mxu0 %v6428
    %7200 = vmatmul.mubr.bf16.gmra.mxu0 %v6427
    %v7201 = vpop.f32.mrf.mxu0
    %v7202 = vadd.f32 %v7162, %v7201
    %v7203 = vpop.f32.mrf.mxu0
    %v7204 = vpop.f32.mrf.mxu0
    %v7205 = vpop.f32.mrf.mxu0
    %7206 = vdwg.mxu0
    %7207 = vmatprep.subr.bf16.mxu0 0
    %7208 = vmatpush1.bf16.msra.mxu0 %v6902
    %7209 = vmatprep.subr.bf16.mxu0 0
    %7210 = vmatpush1.bf16.msra.mxu0 %v6901
    %7211 = vmatprep.subr.bf16.mxu0 0
    %7212 = vmatpush1.bf16.msra.mxu0 %v6900
    %7213 = vmatprep.subr.bf16.mxu0 0
    %7214 = vmatpush1.bf16.msra.mxu0 %v6899
    %7215 = vmatprep.subr.bf16.mxu0 0
    %7216 = vmatpush1.bf16.msra.mxu0 %v6898
    %7217 = vmatprep.subr.bf16.mxu0 0
    %7218 = vmatpush1.bf16.msra.mxu0 %v6897
    %7219 = vmatprep.subr.bf16.mxu0 0
    %7220 = vmatpush1.bf16.msra.mxu0 %v6896
    %7221 = vmatprep.subr.bf16.mxu0 0
    %7222 = vmatpush1.bf16.msra.mxu0 %v6895
    %7223 = vmatprep.subr.bf16.mxu0 0
    %7224 = vmatpush2.bf16.msra.mxu0 %v6910
    %7225 = vmatprep.subr.bf16.mxu0 0
    %7226 = vmatpush2.bf16.msra.mxu0 %v6909
    %7227 = vmatprep.subr.bf16.mxu0 0
    %7228 = vmatpush2.bf16.msra.mxu0 %v6908
    %7229 = vmatprep.subr.bf16.mxu0 0
    %7230 = vmatpush2.bf16.msra.mxu0 %v6907
    %7231 = vmatprep.subr.bf16.mxu0 0
    %7232 = vmatpush2.bf16.msra.mxu0 %v6906
    %7233 = vmatprep.subr.bf16.mxu0 0
    %7234 = vmatpush2.bf16.msra.mxu0 %v6905
    %7235 = vmatprep.subr.bf16.mxu0 0
    %7236 = vmatpush2.bf16.msra.mxu0 %v6904
    %7237 = vmatprep.subr.bf16.mxu0 0
    %7238 = vmatpush2.bf16.msra.mxu0 %v6903
    %7239 = vmatprep.mubr.bf16.mxu0 %v6430
    %7240 = vmatmul.mubr.bf16.gmra.mxu0 %v6429
    %v7241 = vpop.f32.mrf.mxu0
    %v7242 = vadd.f32 %v7202, %v7241
    %v7243 = vpop.f32.mrf.mxu0
    %v7244 = vpop.f32.mrf.mxu0
    %v7245 = vpop.f32.mrf.mxu0
    %7246 = vdwg.mxu0
    %v7247 = vadd.f32 %v4957, %v6413
    %v7248 = vadd.f32 %v5196, %v6415
    %v7249 = vadd.f32 %v7248, %v7242
    %v7250 = vld [vmem:[#allocation22] sm:$0x7]
    %v7251 = vld [vmem:[#allocation23] sm:$0x7]
    %v7252 = vrot.slane %v4955, 4
    %v7253 = vadd.f32 %v4955, %v7252
    %v7254 = vrot.slane %v7253, 2
    %v7255 = vadd.f32 %v7253, %v7254
    %v7256 = vrot.slane %v7255, 1
    %v7257 = vadd.f32 %v7255, %v7256
    %v7258 = vrot.slane %v7247, 4
    %v7259 = vadd.f32 %v7247, %v7258
    %v7260 = vrot.slane %v7259, 2
    %v7261 = vadd.f32 %v7259, %v7260
    %v7262 = vrot.slane %v7261, 1
    %v7263 = vadd.f32 %v7261, %v7262
    %v7264 = vrot.slane %v7249, 4
    %v7265 = vadd.f32 %v7249, %v7264
    %v7266 = vrot.slane %v7265, 2
    %v7267 = vadd.f32 %v7265, %v7266
    %v7268 = vrot.slane %v7267, 1
    %v7269 = vadd.f32 %v7267, %v7268
    %v7270 = vmul.f32 %v7257, %v1189
    %v7271 = vmul.f32 %v7263, %v1189
    %v7272 = vmul.f32 %v7269, %v1189
    %v7273 = vsub.f32 %v4955, %v7270
    %v7274 = vsub.f32 %v7247, %v7271
    %v7275 = vsub.f32 %v7249, %v7272
    %v7276 = vmul.f32 %v7273, %v7273
    %v7277 = vmul.f32 %v7274, %v7274
    %v7278 = vmul.f32 %v7275, %v7275
    %v7279 = vrot.slane %v7276, 4
    %v7280 = vadd.f32 %v7276, %v7279
    %v7281 = vrot.slane %v7280, 2
    %v7282 = vadd.f32 %v7280, %v7281
    %v7283 = vrot.slane %v7282, 1
    %v7284 = vadd.f32 %v7282, %v7283
    %v7285 = vrot.slane %v7277, 4
    %v7286 = vadd.f32 %v7277, %v7285
    %v7287 = vrot.slane %v7286, 2
    %v7288 = vadd.f32 %v7286, %v7287
    %v7289 = vrot.slane %v7288, 1
    %v7290 = vadd.f32 %v7288, %v7289
    %v7291 = vrot.slane %v7278, 4
    %v7292 = vadd.f32 %v7278, %v7291
    %v7293 = vrot.slane %v7292, 2
    %v7294 = vadd.f32 %v7292, %v7293
    %v7295 = vrot.slane %v7294, 1
    %v7296 = vadd.f32 %v7294, %v7295
    %v7297 = vmul.f32 %v7284, %v1189
    %v7298 = vmul.f32 %v7290, %v1189
    %v7299 = vmul.f32 %v7296, %v1189
    %v7300 = vadd.f32 %v7297, 1e-05
    %v7301 = vadd.f32 %v7298, 1e-05
    %v7302 = vadd.f32 %v7299, 1e-05
    %v7303 = vrsqrt.pop %v7300
    %v7304 = vrsqrt.pop %v7301
    %v7305 = vrsqrt.pop %v7302
    %v7306 = vmul.f32 %v7273, %v7303
    %v7307 = vmul.f32 %v7274, %v7304
    %v7308 = vmul.f32 %v7275, %v7305
    %v7310 = vlaneseq
    %v7311 = vshrl.u32 %v7310, 7
    %v7312 = vsub.s32 0, %v7311
    %v7313 = vrot.slane %v7250, %v7312
    %v7314 = vlaneseq
    %v7315 = vshrl.u32 %v7314, 7
    %v7316 = vsub.s32 1, %v7315
    %v7317 = vrot.slane %v7250, %v7316
    %v7318 = vlaneseq
    %v7319 = vshrl.u32 %v7318, 7
    %v7320 = vsub.s32 2, %v7319
    %v7321 = vrot.slane %v7250, %v7320
    %v7325 = vmul.f32 %v7306, %v7313
    %v7326 = vmul.f32 %v7307, %v7317
    %v7327 = vmul.f32 %v7308, %v7321
    %v7329 = vlaneseq
    %v7330 = vshrl.u32 %v7329, 7
    %v7331 = vsub.s32 0, %v7330
    %v7332 = vrot.slane %v7251, %v7331
    %v7333 = vlaneseq
    %v7334 = vshrl.u32 %v7333, 7
    %v7335 = vsub.s32 1, %v7334
    %v7336 = vrot.slane %v7251, %v7335
    %v7337 = vlaneseq
    %v7338 = vshrl.u32 %v7337, 7
    %v7339 = vsub.s32 2, %v7338
    %v7340 = vrot.slane %v7251, %v7339
    %v7344 = vadd.f32 %v7325, %v7332
    %v7345 = vadd.f32 %v7326, %v7336
    %v7346 = vadd.f32 %v7327, %v7340
    %v7347 = vld [vmem:[%s14] sm:$0xff]
    %v7348 = vld [vmem:[%s14 + $0x8] sm:$0xff]
    %v7349 = vld [vmem:[%s14 + $0x10] sm:$0xff]
    %v7350 = vld [vmem:[%s14 + $0x18] sm:$0xff]
    %v7351 = vld [vmem:[%s14 + $0x20] sm:$0xff]
    %v7352 = vld [vmem:[%s14 + $0x28] sm:$0xff]
    %v7353 = vld [vmem:[%s14 + $0x30] sm:$0xff]
    %v7354 = vld [vmem:[%s14 + $0x38] sm:$0xff]
    %v7355 = vld [vmem:[%s14 + $0x40] sm:$0xff]
    %v7356 = vld [vmem:[%s14 + $0x48] sm:$0xff]
    %v7357 = vld [vmem:[%s14 + $0x50] sm:$0xff]
    %v7358 = vld [vmem:[%s14 + $0x58] sm:$0xff]
    %v7359 = vld [vmem:[%s14 + $0x60] sm:$0xff]
    %v7360 = vld [vmem:[%s14 + $0x68] sm:$0xff]
    %v7361 = vld [vmem:[%s14 + $0x70] sm:$0xff]
    %v7362 = vld [vmem:[%s14 + $0x78] sm:$0xff]
    %v7363 = vld [vmem:[%s14 + $0x80] sm:$0xff]
    %v7364 = vld [vmem:[%s14 + $0x88] sm:$0xff]
    %v7365 = vld [vmem:[%s14 + $0x90] sm:$0xff]
    %v7366 = vld [vmem:[%s14 + $0x98] sm:$0xff]
    %v7367 = vld [vmem:[%s14 + $0xa0] sm:$0xff]
    %v7368 = vld [vmem:[%s14 + $0xa8] sm:$0xff]
    %v7369 = vld [vmem:[%s14 + $0xb0] sm:$0xff]
    %v7370 = vld [vmem:[%s14 + $0xb8] sm:$0xff]
    %v7371 = vld [vmem:[%s14 + $0xc0] sm:$0xff]
    %v7372 = vld [vmem:[%s14 + $0xc8] sm:$0xff]
    %v7373 = vld [vmem:[%s14 + $0xd0] sm:$0xff]
    %v7374 = vld [vmem:[%s14 + $0xd8] sm:$0xff]
    %v7375 = vld [vmem:[%s14 + $0xe0] sm:$0xff]
    %v7376 = vld [vmem:[%s14 + $0xe8] sm:$0xff]
    %v7377 = vld [vmem:[%s14 + $0xf0] sm:$0xff]
    %v7378 = vld [vmem:[%s14 + $0xf8] sm:$0xff]
    %v7379 = vld [vmem:[%s14 + $0x100] sm:$0xff]
    %v7380 = vld [vmem:[%s14 + $0x108] sm:$0xff]
    %v7381 = vld [vmem:[%s14 + $0x110] sm:$0xff]
    %v7382 = vld [vmem:[%s14 + $0x118] sm:$0xff]
    %v7383 = vld [vmem:[%s14 + $0x120] sm:$0xff]
    %v7384 = vld [vmem:[%s14 + $0x128] sm:$0xff]
    %v7385 = vld [vmem:[%s14 + $0x130] sm:$0xff]
    %v7386 = vld [vmem:[%s14 + $0x138] sm:$0xff]
    %v7387 = vld [vmem:[%s14 + $0x140] sm:$0xff]
    %v7388 = vld [vmem:[%s14 + $0x148] sm:$0xff]
    %v7389 = vld [vmem:[%s14 + $0x150] sm:$0xff]
    %v7390 = vld [vmem:[%s14 + $0x158] sm:$0xff]
    %v7391 = vld [vmem:[%s14 + $0x160] sm:$0xff]
    %v7392 = vld [vmem:[%s14 + $0x168] sm:$0xff]
    %v7393 = vld [vmem:[%s14 + $0x170] sm:$0xff]
    %v7394 = vld [vmem:[%s14 + $0x178] sm:$0xff]
    %v7395 = vld [vmem:[#allocation25] sm:$0x1]
    %v7397 = vlaneseq
    %v7398 = vshrl.u32 %v7397, 7
    %v7399 = vsub.s32 0, %v7398
    %v7400 = vrot.slane %v7395, %v7399
    %7402 = vmatprep.subr.mxu0 0.0
    %7403 = vmatpush1.msra.mxu0 %v7362
    %7404 = vmatprep.subr.mxu0 0.0
    %7405 = vmatpush1.msra.mxu0 %v7361
    %7406 = vmatprep.subr.mxu0 0.0
    %7407 = vmatpush1.msra.mxu0 %v7360
    %7408 = vmatprep.subr.mxu0 0.0
    %7409 = vmatpush1.msra.mxu0 %v7359
    %7410 = vmatprep.subr.mxu0 0.0
    %7411 = vmatpush1.msra.mxu0 %v7358
    %7412 = vmatprep.subr.mxu0 0.0
    %7413 = vmatpush1.msra.mxu0 %v7357
    %7414 = vmatprep.subr.mxu0 0.0
    %7415 = vmatpush1.msra.mxu0 %v7356
    %7416 = vmatprep.subr.mxu0 0.0
    %7417 = vmatpush1.msra.mxu0 %v7355
    %7418 = vmatprep.subr.mxu0 0.0
    %7419 = vmatpush1.msra.mxu0 %v7354
    %7420 = vmatprep.subr.mxu0 0.0
    %7421 = vmatpush1.msra.mxu0 %v7353
    %7422 = vmatprep.subr.mxu0 0.0
    %7423 = vmatpush1.msra.mxu0 %v7352
    %7424 = vmatprep.subr.mxu0 0.0
    %7425 = vmatpush1.msra.mxu0 %v7351
    %7426 = vmatprep.subr.mxu0 0.0
    %7427 = vmatpush1.msra.mxu0 %v7350
    %7428 = vmatprep.subr.mxu0 0.0
    %7429 = vmatpush1.msra.mxu0 %v7349
    %7430 = vmatprep.subr.mxu0 0.0
    %7431 = vmatpush1.msra.mxu0 %v7348
    %7432 = vmatprep.subr.mxu0 0.0
    %7433 = vmatpush1.msra.mxu0 %v7347
    %7434 = vmatprep.subr.mxu0 0.0
    %7435 = vmatpush2.msra.mxu0 %v7378
    %7436 = vmatprep.subr.mxu0 0.0
    %7437 = vmatpush2.msra.mxu0 %v7377
    %7438 = vmatprep.subr.mxu0 0.0
    %7439 = vmatpush2.msra.mxu0 %v7376
    %7440 = vmatprep.subr.mxu0 0.0
    %7441 = vmatpush2.msra.mxu0 %v7375
    %7442 = vmatprep.subr.mxu0 0.0
    %7443 = vmatpush2.msra.mxu0 %v7374
    %7444 = vmatprep.subr.mxu0 0.0
    %7445 = vmatpush2.msra.mxu0 %v7373
    %7446 = vmatprep.subr.mxu0 0.0
    %7447 = vmatpush2.msra.mxu0 %v7372
    %7448 = vmatprep.subr.mxu0 0.0
    %7449 = vmatpush2.msra.mxu0 %v7371
    %7450 = vmatprep.subr.mxu0 0.0
    %7451 = vmatpush2.msra.mxu0 %v7370
    %7452 = vmatprep.subr.mxu0 0.0
    %7453 = vmatpush2.msra.mxu0 %v7369
    %7454 = vmatprep.subr.mxu0 0.0
    %7455 = vmatpush2.msra.mxu0 %v7368
    %7456 = vmatprep.subr.mxu0 0.0
    %7457 = vmatpush2.msra.mxu0 %v7367
    %7458 = vmatprep.subr.mxu0 0.0
    %7459 = vmatpush2.msra.mxu0 %v7366
    %7460 = vmatprep.subr.mxu0 0.0
    %7461 = vmatpush2.msra.mxu0 %v7365
    %7462 = vmatprep.subr.mxu0 0.0
    %7463 = vmatpush2.msra.mxu0 %v7364
    %7464 = vmatprep.subr.mxu0 0.0
    %7465 = vmatpush2.msra.mxu0 %v7363
    %7466 = vmatprep.mubr.f32.mxu0 %v7345
    %7467 = vmatmul.mubr.f32.gmra.mxu0 %v7344
    %v7468 = vpop.f32.mrf.mxu0
    %v7469 = vadd.f32 %v7400, %v7468
    %v7470 = vpop.f32.mrf.mxu0
    %7471 = vdwg.mxu0
    %7472 = vmatprep.subr.mxu0 0.0
    %7473 = vmatpush1.msra.mxu0 %v7394
    %7474 = vmatprep.subr.mxu0 0.0
    %7475 = vmatpush1.msra.mxu0 %v7393
    %7476 = vmatprep.subr.mxu0 0.0
    %7477 = vmatpush1.msra.mxu0 %v7392
    %7478 = vmatprep.subr.mxu0 0.0
    %7479 = vmatpush1.msra.mxu0 %v7391
    %7480 = vmatprep.subr.mxu0 0.0
    %7481 = vmatpush1.msra.mxu0 %v7390
    %7482 = vmatprep.subr.mxu0 0.0
    %7483 = vmatpush1.msra.mxu0 %v7389
    %7484 = vmatprep.subr.mxu0 0.0
    %7485 = vmatpush1.msra.mxu0 %v7388
    %7486 = vmatprep.subr.mxu0 0.0
    %7487 = vmatpush1.msra.mxu0 %v7387
    %7488 = vmatprep.subr.mxu0 0.0
    %7489 = vmatpush1.msra.mxu0 %v7386
    %7490 = vmatprep.subr.mxu0 0.0
    %7491 = vmatpush1.msra.mxu0 %v7385
    %7492 = vmatprep.subr.mxu0 0.0
    %7493 = vmatpush1.msra.mxu0 %v7384
    %7494 = vmatprep.subr.mxu0 0.0
    %7495 = vmatpush1.msra.mxu0 %v7383
    %7496 = vmatprep.subr.mxu0 0.0
    %7497 = vmatpush1.msra.mxu0 %v7382
    %7498 = vmatprep.subr.mxu0 0.0
    %7499 = vmatpush1.msra.mxu0 %v7381
    %7500 = vmatprep.subr.mxu0 0.0
    %7501 = vmatpush1.msra.mxu0 %v7380
    %7502 = vmatprep.subr.mxu0 0.0
    %7503 = vmatpush1.msra.mxu0 %v7379
    %7504 = vmatprep.subr.mxu0 0.0
    %7505 = vmatpush2.msra.mxu0 0.0
    %7506 = vmatprep.subr.mxu0 0.0
    %7507 = vmatpush2.msra.mxu0 0.0
    %7508 = vmatprep.subr.mxu0 0.0
    %7509 = vmatpush2.msra.mxu0 0.0
    %7510 = vmatprep.subr.mxu0 0.0
    %7511 = vmatpush2.msra.mxu0 0.0
    %7512 = vmatprep.subr.mxu0 0.0
    %7513 = vmatpush2.msra.mxu0 0.0
    %7514 = vmatprep.subr.mxu0 0.0
    %7515 = vmatpush2.msra.mxu0 0.0
    %7516 = vmatprep.subr.mxu0 0.0
    %7517 = vmatpush2.msra.mxu0 0.0
    %7518 = vmatprep.subr.mxu0 0.0
    %7519 = vmatpush2.msra.mxu0 0.0
    %7520 = vmatprep.subr.mxu0 0.0
    %7521 = vmatpush2.msra.mxu0 0.0
    %7522 = vmatprep.subr.mxu0 0.0
    %7523 = vmatpush2.msra.mxu0 0.0
    %7524 = vmatprep.subr.mxu0 0.0
    %7525 = vmatpush2.msra.mxu0 0.0
    %7526 = vmatprep.subr.mxu0 0.0
    %7527 = vmatpush2.msra.mxu0 0.0
    %7528 = vmatprep.subr.mxu0 0.0
    %7529 = vmatpush2.msra.mxu0 0.0
    %7530 = vmatprep.subr.mxu0 0.0
    %7531 = vmatpush2.msra.mxu0 0.0
    %7532 = vmatprep.subr.mxu0 0.0
    %7533 = vmatpush2.msra.mxu0 0.0
    %7534 = vmatprep.subr.mxu0 0.0
    %7535 = vmatpush2.msra.mxu0 0.0
    %7536 = vmatprep.mubr.f32.mxu0 0.0
    %7537 = vmatmul.mubr.f32.gmra.mxu0 %v7346
    %v7538 = vpop.f32.mrf.mxu0
    %v7539 = vadd.f32 %v7469, %v7538
    %v7540 = vpop.f32.mrf.mxu0
    %7541 = vdwg.mxu0
    %vm7542 = vcmask 80896
    %v7543 = vsel %vm7542, %v7539, -inf
    %7544 = vmax.xlane.f32.xlu0 %v7543
    %v7545 = vpop.xlane.xlu0 %7544
    %v7546 = vsub.f32 %v7539, %v7545
    %v7547 = vmul.f32 %v7546, 1.442695
    %v7548 = vpow.pop %v7547
    %v7549 = vsel %vm7542, %v7548, 0.0
    %7550 = vadd.xlane.f32.xlu0 %v7549
    %v7551 = vpop.xlane.xlu0 %7550
    %v7552 = vlog2.pop %v7551
    %v7553 = vmul.f32 %v7552, 0.6931472
    %v7554 = vadd.f32 %v7545, %v7553
    %v7555 = vsub.f32 %v7539, %v7554
    %7556 = vst.msk [vmem:[#allocation26] sm:$0xff] %vm7542, %v7555
    // Predicated region
    $region126: #{tpu_custom_call.1} parent=1 // pred_check
      _
    $region127: #{tpu_custom_call.1} parent=1 // pred_check_branch
      %7558 = sbr.rel (0) target = $region129
    $region128: #{tpu_custom_call.1} parent=1 // pred_region
      %s7560 = ssub.s32 128, 128
      %7561 = vsyncadd [#allocation4], %s7560
      %s7563 = sshll.u32 [#allocation26], 4
      %s7564 = int_to_ptr.vmem [resolvable:$true] %s7563
      %7566 = dma.vmem_to_hbm [thread:$0]  %s7564, 128, %s16, [#allocation4]
    $region129: #{tpu_custom_call.1} parent=1 // pred_fallthru
      _
    // Predicated region
    $region130: #{tpu_custom_call.1} parent=1 // pred_check
      _
    $region131: #{tpu_custom_call.1} parent=1 // pred_check_branch
      %7568 = sbr.rel (0) target = $region133
    $region132: #{tpu_custom_call.1} parent=1 // pred_region
      %7569 = dma.done [#allocation4], 128
    $region133: #{tpu_custom_call.1} parent=1 // pred_fallthru
      _
    %7570 = vsyncpa [#allocation3], 1
    %7571 = vsyncpa [#allocation6], 1
    %7572 = vsyncpa [#allocation9], 1
    %7573 = vsyncpa [#allocation12], 1
    %7574 = vsyncpa [#allocation15], 1
    %7575 = vsyncpa [#allocation18], 1
    %7576 = vsyncpa [#allocation21], 1
    %7577 = vsyncpa [#allocation24], 1
    %7578 = vsyncpa [#allocation4], 1

</llo_original>
